<compile_context>
chip_gen: v6e
topology: v6e:2x2x1
jax: 0.10.0
libtpu: 0.0.40
codegen_flags: <defaults>
</compile_context>

<pallas_src>
import functools

import jax
import jax.numpy as jnp
from jax import lax
from jax.experimental import pallas as pl
from jax.experimental.pallas import tpu as pltpu

H1 = 1000    # fc1-out / fc33-out / fc4-in (fixed by the module)
H2 = 500     # fc11-out / fc21-in / fc3-out (fixed by the module)
H1P = 1024   # MXU/lane-aligned padded widths
H2P = 512


def _round_up(v, m):
    return ((v + m - 1) // m) * m


# ----------------------------------------------------------------------------
# Fused kernel: encoder + reparameterization + leapfrog(decoder, analytic dU/dz)
# ----------------------------------------------------------------------------
def _hvae_kernel(scalars_ref,                     # (2,) f32 SMEM: [eps_lf, beta_zero_sqrt]
                 x_ref, eps0_ref, gamma_ref,      # (BT, Dp), (BT, L), (BT, L)
                 w1_ref, b1_ref, w11_ref, b11_ref, w2122_ref, b2122_ref,
                 w3_ref, b3_ref, w33_ref, b33_ref, w4_ref, b4_ref,
                 w3t_ref, w33t_ref, w4t_ref,      # pre-transposed decoder weights
                 recon_ref, small_ref,            # (BT, Dp), (BT, SLAB)
                 *, n_lf):
    f32 = jnp.float32
    bf16 = jnp.bfloat16
    L = eps0_ref.shape[1]

    eps_lf = scalars_ref[0]
    b0 = scalars_ref[1]                           # beta_zero_sqrt
    half_eps = eps_lf * 0.5                       # hoisted out of the loop
    inv_b0 = 1.0 / b0

    def dot_fwd(a, w_ref):                        # (B, in) @ (in, out) -> (B, out), f32 acc
        return lax.dot_general(a.astype(bf16), w_ref[...],
                               (((1,), (0,)), ((), ())),
                               preferred_element_type=f32)

    x = x_ref[...]

    # ---- encoder: relu(fc1) -> relu(fc11) -> [fc21 | fc22] (fused weight) ----
    h1 = jnp.maximum(dot_fwd(x, w1_ref) + b1_ref[...], 0.0)
    h2 = jnp.maximum(dot_fwd(h1, w11_ref) + b11_ref[...], 0.0)
    stats = dot_fwd(h2, w2122_ref) + b2122_ref[...]             # (B, 2L) = [mu | logvar]
    mu = stats[:, :L]
    log_var = stats[:, L:2 * L]

    # ---- reparameterize + HVAE momentum init ----
    std = jnp.exp(0.5 * log_var)
    z0 = mu + eps0_ref[...] * std
    rho = gamma_ref[...] * inv_b0
    z = z0

    # ---- decoder + hand-derived dU/dz (activations stay resident in-kernel) ----
    def decode(zc):
        h3a = jnp.maximum(dot_fwd(zc, w3_ref) + b3_ref[...], 0.0)
        h3b = jnp.maximum(dot_fwd(h3a, w33_ref) + b33_ref[...], 0.0)
        logits = dot_fwd(h3b, w4_ref) + b4_ref[...]
        return jax.nn.sigmoid(logits), h3a, h3b

    def grad_u(recon, h3a, h3b, zc):
        # U = sum_b [ BCE(recon_b, x_b; sum) - log N(z_b; 0, I) ]
        # Backward path uses pre-transposed weights -> forward-orientation dots.
        d4 = recon - x                                           # BCE-through-sigmoid
        d3 = dot_fwd(d4, w4t_ref) * (h3b > 0.0).astype(f32)
        d2 = dot_fwd(d3, w33t_ref) * (h3a > 0.0).astype(f32)
        return dot_fwd(d2, w3t_ref) + zc                         # + prior grad (z)

    recon, h3a, h3b = decode(z)
    g = grad_u(recon, h3a, h3b, z)                               # computed once, then carried

    # ---- leapfrog with tempering (statically unrolled; n_lf is small) ----
    # Tempering follows this module's _tempering(): beta = 1/((1-1/b0)*(k/K)^2 + 1/b0).
    beta_sqrt_old = b0
    for k in range(n_lf):
        rho_ = rho - half_eps * g
        z = z + eps_lf * rho_
        recon, h3a, h3b = decode(z)
        g = grad_u(recon, h3a, h3b, z)                           # reused as next iter's first grad
        rho__ = rho_ - half_eps * g
        frac = ((k + 1) / n_lf) ** 2                             # static
        beta_sqrt = 1.0 / ((1.0 - inv_b0) * frac + inv_b0)
        rho = (beta_sqrt_old / beta_sqrt) * rho__
        beta_sqrt_old = beta_sqrt

    # ---- outputs: lane-dense recon + one padded slab for the small tensors ----
    recon_ref[...] = recon
    small_ref[...] = jnp.zeros_like(small_ref)                   # full-lane unmasked fill
    small_ref[:, 0:2 * L] = stats                                # [mu | logvar]
    small_ref[:, 2 * L:3 * L] = z
    small_ref[:, 3 * L:4 * L] = z0
    small_ref[:, 4 * L:5 * L] = rho


# ----------------------------------------------------------------------------
# Generation-aware tuning
# ----------------------------------------------------------------------------
def _tpu_generation():
    try:
        kind = jax.devices()[0].device_kind.lower()
    except Exception:
        kind = ""
    if "v7" in kind:
        return "v7x"
    if "v6" in kind:
        return "v6e"
    if "v5" in kind:
        return "v5e"
    return "unknown"


def _vmem_limit_bytes(gen):
    if gen in ("v5e", "v6e"):
        return 96 * 1024 * 1024       # 128 MiB physical
    return 48 * 1024 * 1024           # v7x: 64 MiB physical per TC; unknown: conservative


def _pick_batch_tile(B, gen):
    if B < 128:
        return _round_up(B, 16)       # bf16 operands pack 16 rows per sublane-packed vreg
    if gen == "v6e" and B >= 256:
        return 256                    # fill the 256x256 MXU
    if gen == "v7x" and B >= 512:
        return 256                    # keeps nbt >= 2 so both TCs get grid steps
    return 128


# ----------------------------------------------------------------------------
# pallas_call wrapper
# ----------------------------------------------------------------------------
def hvae_pallas_call(params, x_pad, eps0_pad, gamma_pad, scalars, *, n_lf, bt, gen):
    BP, Dp = x_pad.shape
    L = eps0_pad.shape[1]
    nbt = BP // bt
    SLAB = _round_up(5 * L, 128)

    def tiled(*tail):
        nd = len(tail)
        return pl.BlockSpec((bt,) + tail, lambda i, _nd=nd: (i,) + (0,) * _nd)

    def resident(*shape):             # constant block -> loaded once, stays in VMEM
        nd = len(shape)
        return pl.BlockSpec(shape, lambda i, _nd=nd: (0,) * _nd)

    in_specs = [
        pl.BlockSpec(memory_space=pltpu.MemorySpace.SMEM),       # [eps_lf, beta_zero_sqrt]
        tiled(Dp), tiled(L), tiled(L),
        resident(Dp, H1P), resident(1, H1P),
        resident(H1P, H2P), resident(1, H2P),
        resident(H2P, 2 * L), resident(1, 2 * L),
        resident(L, H2P), resident(1, H2P),
        resident(H2P, H1P), resident(1, H1P),
        resident(H1P, Dp), resident(1, Dp),
        resident(H2P, L), resident(H1P, H2P), resident(Dp, H1P),
    ]
    out_specs = (tiled(Dp), tiled(SLAB))
    out_shape = (jax.ShapeDtypeStruct((BP, Dp), jnp.float32),
                 jax.ShapeDtypeStruct((BP, SLAB), jnp.float32))

    # Advisory cost estimate so XLA schedules the RNG / reshape glue around the call.
    enc = 2 * (Dp * H1P + H1P * H2P + H2P * 2 * L)
    dec = 2 * (L * H2P + H2P * H1P + H1P * Dp)
    grd = 2 * (Dp * H1P + H1P * H2P + H2P * L)
    flops = BP * (enc + (n_lf + 1) * (dec + grd))
    transcendentals = BP * (L + (n_lf + 1) * Dp)
    w_bytes = 2 * (Dp * H1P + H1P * H2P + H2P * 2 * L + L * H2P + H2P * H1P + H1P * Dp
                   + H2P * L + H1P * H2P + Dp * H1P)
    b_bytes = 4 * (2 * H1P + 2 * H2P + 2 * L + Dp)
    io_bytes = 4 * BP * (Dp + 2 * L) + 4 * BP * (Dp + SLAB) + 8
    cost = pl.CostEstimate(flops=int(flops),
                           transcendentals=int(transcendentals),
                           bytes_accessed=int(w_bytes + b_bytes + io_bytes))

    return pl.pallas_call(
        functools.partial(_hvae_kernel, n_lf=n_lf),
        grid=(nbt,),
        in_specs=in_specs,
        out_specs=out_specs,
        out_shape=out_shape,
        compiler_params=pltpu.CompilerParams(
            dimension_semantics=("parallel",),       # batch tiles shard across TCs (v7x)
            vmem_limit_bytes=_vmem_limit_bytes(gen)),
        cost_estimate=cost,
    )(scalars, x_pad, eps0_pad, gamma_pad,
      params["w1"], params["b1"], params["w11"], params["b11"],
      params["w2122"], params["b2122"],
      params["w3"], params["b3"], params["w33"], params["b33"],
      params["w4"], params["b4"],
      params["w3t"], params["w33t"], params["w4t"])


# ----------------------------------------------------------------------------
# Parameters: PyTorch-style Linear init at true sizes; kernel params are
# zero-padded to 128-aligned widths (bf16 weights, f32 biases) with
# pre-transposed decoder weights.  Returns (kernel_params, f32_reference_params).
# ----------------------------------------------------------------------------
def init_params(key, D, L):
    def linear(k, fin, fout):
        kw, kb = jax.random.split(k)
        bound = 1.0 / (fin ** 0.5)
        w = jax.random.uniform(kw, (fout, fin), jnp.float32, -bound, bound)
        b = jax.random.uniform(kb, (fout,), jnp.float32, -bound, bound)
        return w.T, b                               # (in, out), (out,)

    ks = jax.random.split(key, 7)
    w1, b1 = linear(ks[0], D, H1)
    w11, b11 = linear(ks[1], H1, H2)
    w21, b21 = linear(ks[2], H2, L)
    w22, b22 = linear(ks[3], H2, L)
    w3, b3 = linear(ks[4], L, H2)
    w33, b33 = linear(ks[5], H2, H1)
    w4, b4 = linear(ks[6], H1, D)

    ref = dict(w1=w1, b1=b1, w11=w11, b11=b11, w21=w21, b21=b21, w22=w22, b22=b22,
               w3=w3, b3=b3, w33=w33, b33=b33, w4=w4, b4=b4)

    Dp = _round_up(D, 128)
    bf = jnp.bfloat16

    def padw(w, rin, rout):
        return jnp.pad(w, ((0, rin - w.shape[0]), (0, rout - w.shape[1])))

    def padb(b, rout):
        return jnp.pad(b, ((0, rout - b.shape[0]),)).reshape(1, rout)

    w1p = padw(w1, Dp, H1P)
    w11p = padw(w11, H1P, H2P)
    w2122p = padw(jnp.concatenate([w21, w22], axis=1), H2P, 2 * L)
    w3p = padw(w3, L, H2P)
    w33p = padw(w33, H2P, H1P)
    w4p = padw(w4, H1P, Dp)

    kparams = dict(
        w1=w1p.astype(bf), b1=padb(b1, H1P),
        w11=w11p.astype(bf), b11=padb(b11, H2P),
        w2122=w2122p.astype(bf),
        b2122=jnp.concatenate([b21, b22]).reshape(1, 2 * L),
        w3=w3p.astype(bf), b3=padb(b3, H2P),
        w33=w33p.astype(bf), b33=padb(b33, H1P),
        w4=w4p.astype(bf), b4=padb(b4, Dp),
        w3t=w3p.T.astype(bf), w33t=w33p.T.astype(bf), w4t=w4p.T.astype(bf),
    )
    return kparams, ref


# ----------------------------------------------------------------------------
# HVAE.forward glue
# ----------------------------------------------------------------------------
def hvae_forward(kparams, x, key, *, n_lf, eps_lf, beta_zero_sqrt, n_channels, hw):
    """Returns (recon_x, z, z0, rho, eps0, gamma, mu, log_var) like HVAE.forward."""
    B = x.shape[0]
    x_flat = x.reshape(B, -1).astype(jnp.float32)
    D = x_flat.shape[1]
    L = kparams["w3"].shape[0]
    Dp = kparams["w4"].shape[1]

    k_eps, k_gamma = jax.random.split(key)
    eps0 = jax.random.normal(k_eps, (B, L), jnp.float32)
    gamma = jax.random.normal(k_gamma, (B, L), jnp.float32)

    gen = _tpu_generation()
    bt = _pick_batch_tile(B, gen)
    BP = _round_up(B, bt)
    padB = BP - B

    # Row padding (batch) and feature padding (D -> Dp) are exact: padded weight
    # rows/cols and biases are zero and padded rows are discarded afterwards.
    xp = jnp.pad(x_flat, ((0, padB), (0, Dp - D)))
    e0p = jnp.pad(eps0, ((0, padB), (0, 0)))
    gp = jnp.pad(gamma, ((0, padB), (0, 0)))
    scalars = jnp.array([eps_lf, beta_zero_sqrt], jnp.float32)

    recon_p, small_p = hvae_pallas_call(kparams, xp, e0p, gp, scalars,
                                        n_lf=n_lf, bt=bt, gen=gen)

    recon = recon_p[:B, :D]
    mu = small_p[:B, 0:L]
    log_var = small_p[:B, L:2 * L]
    z = small_p[:B, 2 * L:3 * L]
    z0 = small_p[:B, 3 * L:4 * L]
    rho = small_p[:B, 4 * L:5 * L]
    recon_x = recon.reshape(B, n_channels, hw, hw)   # _decode_mlp output shape (NCHW)
    return recon_x, z, z0, rho, eps0, gamma, mu, log_var


# ----------------------------------------------------------------------------
# Pure-JAX f32 reference (autodiff gradient, same leapfrog / tempering schedule)
# ----------------------------------------------------------------------------
def hvae_reference(p, x, eps0, gamma, *, n_lf, eps_lf, beta_zero_sqrt):
    B = x.shape[0]
    xf = x.reshape(B, -1).astype(jnp.float32)
    relu = jax.nn.relu

    h = relu(xf @ p["w1"] + p["b1"])
    h = relu(h @ p["w11"] + p["b11"])
    mu = h @ p["w21"] + p["b21"]
    log_var = h @ p["w22"] + p["b22"]
    std = jnp.exp(0.5 * log_var)
    z0 = mu + eps0 * std

    def decode_logits(z):
        h3 = relu(z @ p["w3"] + p["b3"])
        h3 = relu(h3 @ p["w33"] + p["b33"])
        return h3 @ p["w4"] + p["b4"]

    def U(z):                                         # -log p(x, z) up to z-independent consts
        logits = decode_logits(z)
        bce = -(xf * jax.nn.log_sigmoid(logits) + (1.0 - xf) * jax.nn.log_sigmoid(-logits))
        return jnp.sum(bce) + 0.5 * jnp.sum(z ** 2)

    grad_U = jax.grad(U)

    b0 = beta_zero_sqrt
    rho = gamma / b0
    z = z0
    beta_old = b0
    for k in range(n_lf):
        g = grad_U(z)
        rho_ = rho - 0.5 * eps_lf * g
        z = z + eps_lf * rho_
        g = grad_U(z)
        rho__ = rho_ - 0.5 * eps_lf * g
        beta = 1.0 / ((1.0 - 1.0 / b0) * ((k + 1) / n_lf) ** 2 + 1.0 / b0)
        rho = (beta_old / beta) * rho__
        beta_old = beta
    recon = jax.nn.sigmoid(decode_logits(z))
    return recon.reshape(x.shape), z, z0, rho, mu, log_var


if __name__ == "__main__":
    # Small, module-consistent config: 8x8 single-channel input (input_dim=64),
    # latent_dim=8, batch=2; hidden sizes 1000/500 are fixed by the module.
    B, C, HW = 2, 1, 8
    D = C * HW * HW
    L = 8
    n_lf = 2
    eps_lf = 0.01
    beta_zero_sqrt = 0.3

    root = jax.random.PRNGKey(0)
    k_params, k_x, k_noise = jax.random.split(root, 3)

    kparams, refparams = init_params(k_params, D, L)
    x = jax.random.uniform(k_x, (B, C, HW, HW), jnp.float32)     # data in [0, 1]

    outs = hvae_forward(kparams, x, k_noise,
                        n_lf=n_lf, eps_lf=eps_lf,
                        beta_zero_sqrt=beta_zero_sqrt,
                        n_channels=C, hw=HW)
    outs = jax.block_until_ready(outs)

    recon_x, z, z0, rho, eps0, gamma, mu, log_var = outs
    assert recon_x.shape == (B, C, HW, HW)
    assert z.shape == (B, L) and z0.shape == (B, L) and rho.shape == (B, L)
    assert mu.shape == (B, L) and log_var.shape == (B, L)
    assert bool(jnp.all(jnp.isfinite(recon_x)))

    # f32 reference check (kernel uses bf16 MXU weights -> loose tolerance).
    with jax.default_matmul_precision("float32"):
        r_recon, r_z, r_z0, r_rho, r_mu, r_lv = hvae_reference(
            refparams, x, eps0, gamma,
            n_lf=n_lf, eps_lf=eps_lf, beta_zero_sqrt=beta_zero_sqrt)
    for got, want in ((recon_x, r_recon), (z, r_z), (z0, r_z0),
                      (rho, r_rho), (mu, r_mu), (log_var, r_lv)):
        assert float(jnp.max(jnp.abs(got - want))) < 1e-1

    print("KERNEL_OK")
</pallas_src>

<mosaic_0001>
module attributes {stable_mosaic.version = 11 : i64} {
  func.func @_hvae_kernel(%arg0: i32, %arg1: memref<2xf32, #tpu.memory_space<smem>>, %arg2: memref<16x128xf32, #tpu.memory_space<vmem>>, %arg3: memref<16x8xf32, #tpu.memory_space<vmem>>, %arg4: memref<16x8xf32, #tpu.memory_space<vmem>>, %arg5: memref<128x1024xbf16, #tpu.memory_space<vmem>>, %arg6: memref<1x1024xf32, #tpu.memory_space<vmem>>, %arg7: memref<1024x512xbf16, #tpu.memory_space<vmem>>, %arg8: memref<1x512xf32, #tpu.memory_space<vmem>>, %arg9: memref<512x16xbf16, #tpu.memory_space<vmem>>, %arg10: memref<1x16xf32, #tpu.memory_space<vmem>>, %arg11: memref<8x512xbf16, #tpu.memory_space<vmem>>, %arg12: memref<1x512xf32, #tpu.memory_space<vmem>>, %arg13: memref<512x1024xbf16, #tpu.memory_space<vmem>>, %arg14: memref<1x1024xf32, #tpu.memory_space<vmem>>, %arg15: memref<1024x128xbf16, #tpu.memory_space<vmem>>, %arg16: memref<1x128xf32, #tpu.memory_space<vmem>>, %arg17: memref<512x8xbf16, #tpu.memory_space<vmem>>, %arg18: memref<1024x512xbf16, #tpu.memory_space<vmem>>, %arg19: memref<128x1024xbf16, #tpu.memory_space<vmem>>, %arg20: memref<16x128xf32, #tpu.memory_space<vmem>>, %arg21: memref<16x128xf32, #tpu.memory_space<vmem>>) attributes {dimension_semantics = [#tpu.dimension_semantics<parallel>], iteration_bounds = array<i64: 1>, scalar_prefetch = 0 : i64, scratch_operands = 0 : i64, tpu.core_type = #tpu.core_type<tc>, window_params = [{transform_indices = @transform_0, window_bounds = array<i64: 2>}, {transform_indices = @transform_1, window_bounds = array<i64: 16, 128>}, {transform_indices = @transform_2, window_bounds = array<i64: 16, 8>}, {transform_indices = @transform_3, window_bounds = array<i64: 16, 8>}, {pipeline_mode = #tpu.pipeline_mode<synchronous>, transform_indices = @transform_4, window_bounds = array<i64: 128, 1024>}, {pipeline_mode = #tpu.pipeline_mode<synchronous>, transform_indices = @transform_5, window_bounds = array<i64: 1, 1024>}, {pipeline_mode = #tpu.pipeline_mode<synchronous>, transform_indices = @transform_6, window_bounds = array<i64: 1024, 512>}, {pipeline_mode = #tpu.pipeline_mode<synchronous>, transform_indices = @transform_7, window_bounds = array<i64: 1, 512>}, {pipeline_mode = #tpu.pipeline_mode<synchronous>, transform_indices = @transform_8, window_bounds = array<i64: 512, 16>}, {pipeline_mode = #tpu.pipeline_mode<synchronous>, transform_indices = @transform_9, window_bounds = array<i64: 1, 16>}, {pipeline_mode = #tpu.pipeline_mode<synchronous>, transform_indices = @transform_10, window_bounds = array<i64: 8, 512>}, {pipeline_mode = #tpu.pipeline_mode<synchronous>, transform_indices = @transform_11, window_bounds = array<i64: 1, 512>}, {pipeline_mode = #tpu.pipeline_mode<synchronous>, transform_indices = @transform_12, window_bounds = array<i64: 512, 1024>}, {pipeline_mode = #tpu.pipeline_mode<synchronous>, transform_indices = @transform_13, window_bounds = array<i64: 1, 1024>}, {pipeline_mode = #tpu.pipeline_mode<synchronous>, transform_indices = @transform_14, window_bounds = array<i64: 1024, 128>}, {pipeline_mode = #tpu.pipeline_mode<synchronous>, transform_indices = @transform_15, window_bounds = array<i64: 1, 128>}, {pipeline_mode = #tpu.pipeline_mode<synchronous>, transform_indices = @transform_16, window_bounds = array<i64: 512, 8>}, {pipeline_mode = #tpu.pipeline_mode<synchronous>, transform_indices = @transform_17, window_bounds = array<i64: 1024, 512>}, {pipeline_mode = #tpu.pipeline_mode<synchronous>, transform_indices = @transform_18, window_bounds = array<i64: 128, 1024>}, {transform_indices = @transform_19, window_bounds = array<i64: 16, 128>}, {transform_indices = @transform_20, window_bounds = array<i64: 16, 128>}]} {
    %c0 = arith.constant 0 : index
    %0 = memref.load %arg1[%c0] : memref<2xf32, #tpu.memory_space<smem>>
    %c1 = arith.constant 1 : index
    %1 = memref.load %arg1[%c1] : memref<2xf32, #tpu.memory_space<smem>>
    %cst = arith.constant 5.000000e-01 : f32
    %2 = arith.mulf %0, %cst : f32
    %cst_0 = arith.constant 1.000000e+00 : f32
    %3 = arith.divf %cst_0, %1 : f32
    %c0_1 = arith.constant 0 : index
    %c0_2 = arith.constant 0 : index
    %4 = vector.load %arg2[%c0_1, %c0_2] : memref<16x128xf32, #tpu.memory_space<vmem>>, vector<16x128xf32>
    %5 = arith.truncf %4 : vector<16x128xf32> to vector<16x128xbf16>
    %c0_3 = arith.constant 0 : index
    %c0_4 = arith.constant 0 : index
    %6 = vector.load %arg5[%c0_3, %c0_4] : memref<128x1024xbf16, #tpu.memory_space<vmem>>, vector<128x1024xbf16>
    %cst_5 = arith.constant dense<0.000000e+00> : vector<16x1024xf32>
    %7 = tpu.matmul %5, %6, %cst_5 {dimension_numbers = #tpu.dot_dimension_numbers<[1], [0], [0], [1], [0, 0, 1, 1], [], []>} : vector<16x128xbf16>, vector<128x1024xbf16>, vector<16x1024xf32> -> vector<16x1024xf32>
    %c0_6 = arith.constant 0 : index
    %c0_7 = arith.constant 0 : index
    %8 = vector.load %arg6[%c0_6, %c0_7] : memref<1x1024xf32, #tpu.memory_space<vmem>>, vector<1x1024xf32>
    %9 = vector.broadcast %8 : vector<1x1024xf32> to vector<16x1024xf32>
    %10 = arith.addf %7, %9 : vector<16x1024xf32>
    %cst_8 = arith.constant 0.000000e+00 : f32
    %11 = vector.broadcast %cst_8 : f32 to vector<16x1024xf32>
    %12 = arith.maximumf %10, %11 : vector<16x1024xf32>
    %13 = arith.truncf %12 : vector<16x1024xf32> to vector<16x1024xbf16>
    %c0_9 = arith.constant 0 : index
    %c0_10 = arith.constant 0 : index
    %14 = vector.load %arg7[%c0_9, %c0_10] : memref<1024x512xbf16, #tpu.memory_space<vmem>>, vector<1024x512xbf16>
    %cst_11 = arith.constant dense<0.000000e+00> : vector<16x512xf32>
    %15 = tpu.matmul %13, %14, %cst_11 {dimension_numbers = #tpu.dot_dimension_numbers<[1], [0], [0], [1], [0, 0, 1, 1], [], []>} : vector<16x1024xbf16>, vector<1024x512xbf16>, vector<16x512xf32> -> vector<16x512xf32>
    %c0_12 = arith.constant 0 : index
    %c0_13 = arith.constant 0 : index
    %16 = vector.load %arg8[%c0_12, %c0_13] : memref<1x512xf32, #tpu.memory_space<vmem>>, vector<1x512xf32>
    %17 = vector.broadcast %16 : vector<1x512xf32> to vector<16x512xf32>
    %18 = arith.addf %15, %17 : vector<16x512xf32>
    %cst_14 = arith.constant 0.000000e+00 : f32
    %19 = vector.broadcast %cst_14 : f32 to vector<16x512xf32>
    %20 = arith.maximumf %18, %19 : vector<16x512xf32>
    %21 = arith.truncf %20 : vector<16x512xf32> to vector<16x512xbf16>
    %c0_15 = arith.constant 0 : index
    %c0_16 = arith.constant 0 : index
    %22 = vector.load %arg9[%c0_15, %c0_16] : memref<512x16xbf16, #tpu.memory_space<vmem>>, vector<512x16xbf16>
    %cst_17 = arith.constant dense<0.000000e+00> : vector<16x16xf32>
    %23 = tpu.matmul %21, %22, %cst_17 {dimension_numbers = #tpu.dot_dimension_numbers<[1], [0], [0], [1], [0, 0, 1, 1], [], []>} : vector<16x512xbf16>, vector<512x16xbf16>, vector<16x16xf32> -> vector<16x16xf32>
    %c0_18 = arith.constant 0 : index
    %c0_19 = arith.constant 0 : index
    %24 = vector.load %arg10[%c0_18, %c0_19] : memref<1x16xf32, #tpu.memory_space<vmem>>, vector<1x16xf32>
    %25 = vector.broadcast %24 : vector<1x16xf32> to vector<16x16xf32>
    %26 = arith.addf %23, %25 : vector<16x16xf32>
    %27 = vector.extract_strided_slice %26 {offsets = [0, 0], sizes = [16, 8], strides = [1, 1]} : vector<16x16xf32> to vector<16x8xf32>
    %28 = vector.extract_strided_slice %26 {offsets = [0, 8], sizes = [16, 8], strides = [1, 1]} : vector<16x16xf32> to vector<16x8xf32>
    %cst_20 = arith.constant 5.000000e-01 : f32
    %29 = vector.broadcast %cst_20 : f32 to vector<16x8xf32>
    %30 = arith.mulf %29, %28 : vector<16x8xf32>
    %31 = math.exp %30 : vector<16x8xf32>
    %c0_21 = arith.constant 0 : index
    %c0_22 = arith.constant 0 : index
    %32 = vector.load %arg3[%c0_21, %c0_22] : memref<16x8xf32, #tpu.memory_space<vmem>>, vector<16x8xf32>
    %33 = arith.mulf %32, %31 : vector<16x8xf32>
    %34 = arith.addf %27, %33 : vector<16x8xf32>
    %c0_23 = arith.constant 0 : index
    %c0_24 = arith.constant 0 : index
    %35 = vector.load %arg4[%c0_23, %c0_24] : memref<16x8xf32, #tpu.memory_space<vmem>>, vector<16x8xf32>
    %36 = vector.broadcast %3 : f32 to vector<16x8xf32>
    %37 = arith.mulf %35, %36 : vector<16x8xf32>
    %38 = arith.truncf %34 : vector<16x8xf32> to vector<16x8xbf16>
    %c0_25 = arith.constant 0 : index
    %c0_26 = arith.constant 0 : index
    %39 = vector.load %arg11[%c0_25, %c0_26] : memref<8x512xbf16, #tpu.memory_space<vmem>>, vector<8x512xbf16>
    %cst_27 = arith.constant dense<0.000000e+00> : vector<16x512xf32>
    %40 = tpu.matmul %38, %39, %cst_27 {dimension_numbers = #tpu.dot_dimension_numbers<[1], [0], [0], [1], [0, 0, 1, 1], [], []>} : vector<16x8xbf16>, vector<8x512xbf16>, vector<16x512xf32> -> vector<16x512xf32>
    %c0_28 = arith.constant 0 : index
    %c0_29 = arith.constant 0 : index
    %41 = vector.load %arg12[%c0_28, %c0_29] : memref<1x512xf32, #tpu.memory_space<vmem>>, vector<1x512xf32>
    %42 = vector.broadcast %41 : vector<1x512xf32> to vector<16x512xf32>
    %43 = arith.addf %40, %42 : vector<16x512xf32>
    %cst_30 = arith.constant 0.000000e+00 : f32
    %44 = vector.broadcast %cst_30 : f32 to vector<16x512xf32>
    %45 = arith.maximumf %43, %44 : vector<16x512xf32>
    %46 = arith.truncf %45 : vector<16x512xf32> to vector<16x512xbf16>
    %c0_31 = arith.constant 0 : index
    %c0_32 = arith.constant 0 : index
    %47 = vector.load %arg13[%c0_31, %c0_32] : memref<512x1024xbf16, #tpu.memory_space<vmem>>, vector<512x1024xbf16>
    %cst_33 = arith.constant dense<0.000000e+00> : vector<16x1024xf32>
    %48 = tpu.matmul %46, %47, %cst_33 {dimension_numbers = #tpu.dot_dimension_numbers<[1], [0], [0], [1], [0, 0, 1, 1], [], []>} : vector<16x512xbf16>, vector<512x1024xbf16>, vector<16x1024xf32> -> vector<16x1024xf32>
    %c0_34 = arith.constant 0 : index
    %c0_35 = arith.constant 0 : index
    %49 = vector.load %arg14[%c0_34, %c0_35] : memref<1x1024xf32, #tpu.memory_space<vmem>>, vector<1x1024xf32>
    %50 = vector.broadcast %49 : vector<1x1024xf32> to vector<16x1024xf32>
    %51 = arith.addf %48, %50 : vector<16x1024xf32>
    %cst_36 = arith.constant 0.000000e+00 : f32
    %52 = vector.broadcast %cst_36 : f32 to vector<16x1024xf32>
    %53 = arith.maximumf %51, %52 : vector<16x1024xf32>
    %54 = arith.truncf %53 : vector<16x1024xf32> to vector<16x1024xbf16>
    %c0_37 = arith.constant 0 : index
    %c0_38 = arith.constant 0 : index
    %55 = vector.load %arg15[%c0_37, %c0_38] : memref<1024x128xbf16, #tpu.memory_space<vmem>>, vector<1024x128xbf16>
    %cst_39 = arith.constant dense<0.000000e+00> : vector<16x128xf32>
    %56 = tpu.matmul %54, %55, %cst_39 {dimension_numbers = #tpu.dot_dimension_numbers<[1], [0], [0], [1], [0, 0, 1, 1], [], []>} : vector<16x1024xbf16>, vector<1024x128xbf16>, vector<16x128xf32> -> vector<16x128xf32>
    %c0_40 = arith.constant 0 : index
    %c0_41 = arith.constant 0 : index
    %57 = vector.load %arg16[%c0_40, %c0_41] : memref<1x128xf32, #tpu.memory_space<vmem>>, vector<1x128xf32>
    %58 = vector.broadcast %57 : vector<1x128xf32> to vector<16x128xf32>
    %59 = arith.addf %56, %58 : vector<16x128xf32>
    %60 = arith.negf %59 : vector<16x128xf32>
    %61 = math.exp %60 : vector<16x128xf32>
    %cst_42 = arith.constant 1.000000e+00 : f32
    %62 = vector.broadcast %cst_42 : f32 to vector<16x128xf32>
    %63 = arith.addf %62, %61 : vector<16x128xf32>
    %64 = arith.divf %62, %63 : vector<16x128xf32>
    %65 = arith.subf %64, %4 : vector<16x128xf32>
    %66 = arith.truncf %65 : vector<16x128xf32> to vector<16x128xbf16>
    %c0_43 = arith.constant 0 : index
    %c0_44 = arith.constant 0 : index
    %67 = vector.load %arg19[%c0_43, %c0_44] : memref<128x1024xbf16, #tpu.memory_space<vmem>>, vector<128x1024xbf16>
    %cst_45 = arith.constant dense<0.000000e+00> : vector<16x1024xf32>
    %68 = tpu.matmul %66, %67, %cst_45 {dimension_numbers = #tpu.dot_dimension_numbers<[1], [0], [0], [1], [0, 0, 1, 1], [], []>} : vector<16x128xbf16>, vector<128x1024xbf16>, vector<16x1024xf32> -> vector<16x1024xf32>
    %cst_46 = arith.constant 0.000000e+00 : f32
    %69 = vector.broadcast %cst_46 : f32 to vector<16x1024xf32>
    %70 = arith.cmpf ogt, %53, %69 : vector<16x1024xf32>
    %71 = arith.extui %70 : vector<16x1024xi1> to vector<16x1024xi32>
    %72 = arith.sitofp %71 : vector<16x1024xi32> to vector<16x1024xf32>
    %73 = arith.mulf %68, %72 : vector<16x1024xf32>
    %74 = arith.truncf %73 : vector<16x1024xf32> to vector<16x1024xbf16>
    %c0_47 = arith.constant 0 : index
    %c0_48 = arith.constant 0 : index
    %75 = vector.load %arg18[%c0_47, %c0_48] : memref<1024x512xbf16, #tpu.memory_space<vmem>>, vector<1024x512xbf16>
    %cst_49 = arith.constant dense<0.000000e+00> : vector<16x512xf32>
    %76 = tpu.matmul %74, %75, %cst_49 {dimension_numbers = #tpu.dot_dimension_numbers<[1], [0], [0], [1], [0, 0, 1, 1], [], []>} : vector<16x1024xbf16>, vector<1024x512xbf16>, vector<16x512xf32> -> vector<16x512xf32>
    %cst_50 = arith.constant 0.000000e+00 : f32
    %77 = vector.broadcast %cst_50 : f32 to vector<16x512xf32>
    %78 = arith.cmpf ogt, %45, %77 : vector<16x512xf32>
    %79 = arith.extui %78 : vector<16x512xi1> to vector<16x512xi32>
    %80 = arith.sitofp %79 : vector<16x512xi32> to vector<16x512xf32>
    %81 = arith.mulf %76, %80 : vector<16x512xf32>
    %82 = arith.truncf %81 : vector<16x512xf32> to vector<16x512xbf16>
    %c0_51 = arith.constant 0 : index
    %c0_52 = arith.constant 0 : index
    %83 = vector.load %arg17[%c0_51, %c0_52] : memref<512x8xbf16, #tpu.memory_space<vmem>>, vector<512x8xbf16>
    %cst_53 = arith.constant dense<0.000000e+00> : vector<16x8xf32>
    %84 = tpu.matmul %82, %83, %cst_53 {dimension_numbers = #tpu.dot_dimension_numbers<[1], [0], [0], [1], [0, 0, 1, 1], [], []>} : vector<16x512xbf16>, vector<512x8xbf16>, vector<16x8xf32> -> vector<16x8xf32>
    %85 = arith.addf %84, %34 : vector<16x8xf32>
    %86 = vector.broadcast %2 : f32 to vector<16x8xf32>
    %87 = arith.mulf %86, %85 : vector<16x8xf32>
    %88 = arith.subf %37, %87 : vector<16x8xf32>
    %89 = vector.broadcast %0 : f32 to vector<16x8xf32>
    %90 = arith.mulf %89, %88 : vector<16x8xf32>
    %91 = arith.addf %34, %90 : vector<16x8xf32>
    %92 = arith.truncf %91 : vector<16x8xf32> to vector<16x8xbf16>
    %c0_54 = arith.constant 0 : index
    %c0_55 = arith.constant 0 : index
    %93 = vector.load %arg11[%c0_54, %c0_55] : memref<8x512xbf16, #tpu.memory_space<vmem>>, vector<8x512xbf16>
    %cst_56 = arith.constant dense<0.000000e+00> : vector<16x512xf32>
    %94 = tpu.matmul %92, %93, %cst_56 {dimension_numbers = #tpu.dot_dimension_numbers<[1], [0], [0], [1], [0, 0, 1, 1], [], []>} : vector<16x8xbf16>, vector<8x512xbf16>, vector<16x512xf32> -> vector<16x512xf32>
    %c0_57 = arith.constant 0 : index
    %c0_58 = arith.constant 0 : index
    %95 = vector.load %arg12[%c0_57, %c0_58] : memref<1x512xf32, #tpu.memory_space<vmem>>, vector<1x512xf32>
    %96 = vector.broadcast %95 : vector<1x512xf32> to vector<16x512xf32>
    %97 = arith.addf %94, %96 : vector<16x512xf32>
    %cst_59 = arith.constant 0.000000e+00 : f32
    %98 = vector.broadcast %cst_59 : f32 to vector<16x512xf32>
    %99 = arith.maximumf %97, %98 : vector<16x512xf32>
    %100 = arith.truncf %99 : vector<16x512xf32> to vector<16x512xbf16>
    %c0_60 = arith.constant 0 : index
    %c0_61 = arith.constant 0 : index
    %101 = vector.load %arg13[%c0_60, %c0_61] : memref<512x1024xbf16, #tpu.memory_space<vmem>>, vector<512x1024xbf16>
    %cst_62 = arith.constant dense<0.000000e+00> : vector<16x1024xf32>
    %102 = tpu.matmul %100, %101, %cst_62 {dimension_numbers = #tpu.dot_dimension_numbers<[1], [0], [0], [1], [0, 0, 1, 1], [], []>} : vector<16x512xbf16>, vector<512x1024xbf16>, vector<16x1024xf32> -> vector<16x1024xf32>
    %c0_63 = arith.constant 0 : index
    %c0_64 = arith.constant 0 : index
    %103 = vector.load %arg14[%c0_63, %c0_64] : memref<1x1024xf32, #tpu.memory_space<vmem>>, vector<1x1024xf32>
    %104 = vector.broadcast %103 : vector<1x1024xf32> to vector<16x1024xf32>
    %105 = arith.addf %102, %104 : vector<16x1024xf32>
    %cst_65 = arith.constant 0.000000e+00 : f32
    %106 = vector.broadcast %cst_65 : f32 to vector<16x1024xf32>
    %107 = arith.maximumf %105, %106 : vector<16x1024xf32>
    %108 = arith.truncf %107 : vector<16x1024xf32> to vector<16x1024xbf16>
    %c0_66 = arith.constant 0 : index
    %c0_67 = arith.constant 0 : index
    %109 = vector.load %arg15[%c0_66, %c0_67] : memref<1024x128xbf16, #tpu.memory_space<vmem>>, vector<1024x128xbf16>
    %cst_68 = arith.constant dense<0.000000e+00> : vector<16x128xf32>
    %110 = tpu.matmul %108, %109, %cst_68 {dimension_numbers = #tpu.dot_dimension_numbers<[1], [0], [0], [1], [0, 0, 1, 1], [], []>} : vector<16x1024xbf16>, vector<1024x128xbf16>, vector<16x128xf32> -> vector<16x128xf32>
    %c0_69 = arith.constant 0 : index
    %c0_70 = arith.constant 0 : index
    %111 = vector.load %arg16[%c0_69, %c0_70] : memref<1x128xf32, #tpu.memory_space<vmem>>, vector<1x128xf32>
    %112 = vector.broadcast %111 : vector<1x128xf32> to vector<16x128xf32>
    %113 = arith.addf %110, %112 : vector<16x128xf32>
    %114 = arith.negf %113 : vector<16x128xf32>
    %115 = math.exp %114 : vector<16x128xf32>
    %cst_71 = arith.constant 1.000000e+00 : f32
    %116 = vector.broadcast %cst_71 : f32 to vector<16x128xf32>
    %117 = arith.addf %116, %115 : vector<16x128xf32>
    %118 = arith.divf %116, %117 : vector<16x128xf32>
    %119 = arith.subf %118, %4 : vector<16x128xf32>
    %120 = arith.truncf %119 : vector<16x128xf32> to vector<16x128xbf16>
    %c0_72 = arith.constant 0 : index
    %c0_73 = arith.constant 0 : index
    %121 = vector.load %arg19[%c0_72, %c0_73] : memref<128x1024xbf16, #tpu.memory_space<vmem>>, vector<128x1024xbf16>
    %cst_74 = arith.constant dense<0.000000e+00> : vector<16x1024xf32>
    %122 = tpu.matmul %120, %121, %cst_74 {dimension_numbers = #tpu.dot_dimension_numbers<[1], [0], [0], [1], [0, 0, 1, 1], [], []>} : vector<16x128xbf16>, vector<128x1024xbf16>, vector<16x1024xf32> -> vector<16x1024xf32>
    %cst_75 = arith.constant 0.000000e+00 : f32
    %123 = vector.broadcast %cst_75 : f32 to vector<16x1024xf32>
    %124 = arith.cmpf ogt, %107, %123 : vector<16x1024xf32>
    %125 = arith.extui %124 : vector<16x1024xi1> to vector<16x1024xi32>
    %126 = arith.sitofp %125 : vector<16x1024xi32> to vector<16x1024xf32>
    %127 = arith.mulf %122, %126 : vector<16x1024xf32>
    %128 = arith.truncf %127 : vector<16x1024xf32> to vector<16x1024xbf16>
    %c0_76 = arith.constant 0 : index
    %c0_77 = arith.constant 0 : index
    %129 = vector.load %arg18[%c0_76, %c0_77] : memref<1024x512xbf16, #tpu.memory_space<vmem>>, vector<1024x512xbf16>
    %cst_78 = arith.constant dense<0.000000e+00> : vector<16x512xf32>
    %130 = tpu.matmul %128, %129, %cst_78 {dimension_numbers = #tpu.dot_dimension_numbers<[1], [0], [0], [1], [0, 0, 1, 1], [], []>} : vector<16x1024xbf16>, vector<1024x512xbf16>, vector<16x512xf32> -> vector<16x512xf32>
    %cst_79 = arith.constant 0.000000e+00 : f32
    %131 = vector.broadcast %cst_79 : f32 to vector<16x512xf32>
    %132 = arith.cmpf ogt, %99, %131 : vector<16x512xf32>
    %133 = arith.extui %132 : vector<16x512xi1> to vector<16x512xi32>
    %134 = arith.sitofp %133 : vector<16x512xi32> to vector<16x512xf32>
    %135 = arith.mulf %130, %134 : vector<16x512xf32>
    %136 = arith.truncf %135 : vector<16x512xf32> to vector<16x512xbf16>
    %c0_80 = arith.constant 0 : index
    %c0_81 = arith.constant 0 : index
    %137 = vector.load %arg17[%c0_80, %c0_81] : memref<512x8xbf16, #tpu.memory_space<vmem>>, vector<512x8xbf16>
    %cst_82 = arith.constant dense<0.000000e+00> : vector<16x8xf32>
    %138 = tpu.matmul %136, %137, %cst_82 {dimension_numbers = #tpu.dot_dimension_numbers<[1], [0], [0], [1], [0, 0, 1, 1], [], []>} : vector<16x512xbf16>, vector<512x8xbf16>, vector<16x8xf32> -> vector<16x8xf32>
    %139 = arith.addf %138, %91 : vector<16x8xf32>
    %140 = vector.broadcast %2 : f32 to vector<16x8xf32>
    %141 = arith.mulf %140, %139 : vector<16x8xf32>
    %142 = arith.subf %88, %141 : vector<16x8xf32>
    %cst_83 = arith.constant 1.000000e+00 : f32
    %143 = arith.subf %cst_83, %3 : f32
    %cst_84 = arith.constant 2.500000e-01 : f32
    %144 = arith.mulf %143, %cst_84 : f32
    %145 = arith.addf %144, %3 : f32
    %cst_85 = arith.constant 1.000000e+00 : f32
    %146 = arith.divf %cst_85, %145 : f32
    %147 = arith.divf %1, %146 : f32
    %148 = vector.broadcast %147 : f32 to vector<16x8xf32>
    %149 = arith.mulf %148, %142 : vector<16x8xf32>
    %150 = vector.broadcast %2 : f32 to vector<16x8xf32>
    %151 = arith.mulf %150, %139 : vector<16x8xf32>
    %152 = arith.subf %149, %151 : vector<16x8xf32>
    %153 = vector.broadcast %0 : f32 to vector<16x8xf32>
    %154 = arith.mulf %153, %152 : vector<16x8xf32>
    %155 = arith.addf %91, %154 : vector<16x8xf32>
    %156 = arith.truncf %155 : vector<16x8xf32> to vector<16x8xbf16>
    %c0_86 = arith.constant 0 : index
    %c0_87 = arith.constant 0 : index
    %157 = vector.load %arg11[%c0_86, %c0_87] : memref<8x512xbf16, #tpu.memory_space<vmem>>, vector<8x512xbf16>
    %cst_88 = arith.constant dense<0.000000e+00> : vector<16x512xf32>
    %158 = tpu.matmul %156, %157, %cst_88 {dimension_numbers = #tpu.dot_dimension_numbers<[1], [0], [0], [1], [0, 0, 1, 1], [], []>} : vector<16x8xbf16>, vector<8x512xbf16>, vector<16x512xf32> -> vector<16x512xf32>
    %c0_89 = arith.constant 0 : index
    %c0_90 = arith.constant 0 : index
    %159 = vector.load %arg12[%c0_89, %c0_90] : memref<1x512xf32, #tpu.memory_space<vmem>>, vector<1x512xf32>
    %160 = vector.broadcast %159 : vector<1x512xf32> to vector<16x512xf32>
    %161 = arith.addf %158, %160 : vector<16x512xf32>
    %cst_91 = arith.constant 0.000000e+00 : f32
    %162 = vector.broadcast %cst_91 : f32 to vector<16x512xf32>
    %163 = arith.maximumf %161, %162 : vector<16x512xf32>
    %164 = arith.truncf %163 : vector<16x512xf32> to vector<16x512xbf16>
    %c0_92 = arith.constant 0 : index
    %c0_93 = arith.constant 0 : index
    %165 = vector.load %arg13[%c0_92, %c0_93] : memref<512x1024xbf16, #tpu.memory_space<vmem>>, vector<512x1024xbf16>
    %cst_94 = arith.constant dense<0.000000e+00> : vector<16x1024xf32>
    %166 = tpu.matmul %164, %165, %cst_94 {dimension_numbers = #tpu.dot_dimension_numbers<[1], [0], [0], [1], [0, 0, 1, 1], [], []>} : vector<16x512xbf16>, vector<512x1024xbf16>, vector<16x1024xf32> -> vector<16x1024xf32>
    %c0_95 = arith.constant 0 : index
    %c0_96 = arith.constant 0 : index
    %167 = vector.load %arg14[%c0_95, %c0_96] : memref<1x1024xf32, #tpu.memory_space<vmem>>, vector<1x1024xf32>
    %168 = vector.broadcast %167 : vector<1x1024xf32> to vector<16x1024xf32>
    %169 = arith.addf %166, %168 : vector<16x1024xf32>
    %cst_97 = arith.constant 0.000000e+00 : f32
    %170 = vector.broadcast %cst_97 : f32 to vector<16x1024xf32>
    %171 = arith.maximumf %169, %170 : vector<16x1024xf32>
    %172 = arith.truncf %171 : vector<16x1024xf32> to vector<16x1024xbf16>
    %c0_98 = arith.constant 0 : index
    %c0_99 = arith.constant 0 : index
    %173 = vector.load %arg15[%c0_98, %c0_99] : memref<1024x128xbf16, #tpu.memory_space<vmem>>, vector<1024x128xbf16>
    %cst_100 = arith.constant dense<0.000000e+00> : vector<16x128xf32>
    %174 = tpu.matmul %172, %173, %cst_100 {dimension_numbers = #tpu.dot_dimension_numbers<[1], [0], [0], [1], [0, 0, 1, 1], [], []>} : vector<16x1024xbf16>, vector<1024x128xbf16>, vector<16x128xf32> -> vector<16x128xf32>
    %c0_101 = arith.constant 0 : index
    %c0_102 = arith.constant 0 : index
    %175 = vector.load %arg16[%c0_101, %c0_102] : memref<1x128xf32, #tpu.memory_space<vmem>>, vector<1x128xf32>
    %176 = vector.broadcast %175 : vector<1x128xf32> to vector<16x128xf32>
    %177 = arith.addf %174, %176 : vector<16x128xf32>
    %178 = arith.negf %177 : vector<16x128xf32>
    %179 = math.exp %178 : vector<16x128xf32>
    %cst_103 = arith.constant 1.000000e+00 : f32
    %180 = vector.broadcast %cst_103 : f32 to vector<16x128xf32>
    %181 = arith.addf %180, %179 : vector<16x128xf32>
    %182 = arith.divf %180, %181 : vector<16x128xf32>
    %183 = arith.subf %182, %4 : vector<16x128xf32>
    %184 = arith.truncf %183 : vector<16x128xf32> to vector<16x128xbf16>
    %c0_104 = arith.constant 0 : index
    %c0_105 = arith.constant 0 : index
    %185 = vector.load %arg19[%c0_104, %c0_105] : memref<128x1024xbf16, #tpu.memory_space<vmem>>, vector<128x1024xbf16>
    %cst_106 = arith.constant dense<0.000000e+00> : vector<16x1024xf32>
    %186 = tpu.matmul %184, %185, %cst_106 {dimension_numbers = #tpu.dot_dimension_numbers<[1], [0], [0], [1], [0, 0, 1, 1], [], []>} : vector<16x128xbf16>, vector<128x1024xbf16>, vector<16x1024xf32> -> vector<16x1024xf32>
    %cst_107 = arith.constant 0.000000e+00 : f32
    %187 = vector.broadcast %cst_107 : f32 to vector<16x1024xf32>
    %188 = arith.cmpf ogt, %171, %187 : vector<16x1024xf32>
    %189 = arith.extui %188 : vector<16x1024xi1> to vector<16x1024xi32>
    %190 = arith.sitofp %189 : vector<16x1024xi32> to vector<16x1024xf32>
    %191 = arith.mulf %186, %190 : vector<16x1024xf32>
    %192 = arith.truncf %191 : vector<16x1024xf32> to vector<16x1024xbf16>
    %c0_108 = arith.constant 0 : index
    %c0_109 = arith.constant 0 : index
    %193 = vector.load %arg18[%c0_108, %c0_109] : memref<1024x512xbf16, #tpu.memory_space<vmem>>, vector<1024x512xbf16>
    %cst_110 = arith.constant dense<0.000000e+00> : vector<16x512xf32>
    %194 = tpu.matmul %192, %193, %cst_110 {dimension_numbers = #tpu.dot_dimension_numbers<[1], [0], [0], [1], [0, 0, 1, 1], [], []>} : vector<16x1024xbf16>, vector<1024x512xbf16>, vector<16x512xf32> -> vector<16x512xf32>
    %cst_111 = arith.constant 0.000000e+00 : f32
    %195 = vector.broadcast %cst_111 : f32 to vector<16x512xf32>
    %196 = arith.cmpf ogt, %163, %195 : vector<16x512xf32>
    %197 = arith.extui %196 : vector<16x512xi1> to vector<16x512xi32>
    %198 = arith.sitofp %197 : vector<16x512xi32> to vector<16x512xf32>
    %199 = arith.mulf %194, %198 : vector<16x512xf32>
    %200 = arith.truncf %199 : vector<16x512xf32> to vector<16x512xbf16>
    %c0_112 = arith.constant 0 : index
    %c0_113 = arith.constant 0 : index
    %201 = vector.load %arg17[%c0_112, %c0_113] : memref<512x8xbf16, #tpu.memory_space<vmem>>, vector<512x8xbf16>
    %cst_114 = arith.constant dense<0.000000e+00> : vector<16x8xf32>
    %202 = tpu.matmul %200, %201, %cst_114 {dimension_numbers = #tpu.dot_dimension_numbers<[1], [0], [0], [1], [0, 0, 1, 1], [], []>} : vector<16x512xbf16>, vector<512x8xbf16>, vector<16x8xf32> -> vector<16x8xf32>
    %203 = arith.addf %202, %155 : vector<16x8xf32>
    %204 = vector.broadcast %2 : f32 to vector<16x8xf32>
    %205 = arith.mulf %204, %203 : vector<16x8xf32>
    %206 = arith.subf %152, %205 : vector<16x8xf32>
    %cst_115 = arith.constant 1.000000e+00 : f32
    %207 = arith.subf %cst_115, %3 : f32
    %cst_116 = arith.constant 1.000000e+00 : f32
    %208 = arith.mulf %207, %cst_116 : f32
    %209 = arith.addf %208, %3 : f32
    %cst_117 = arith.constant 1.000000e+00 : f32
    %210 = arith.divf %cst_117, %209 : f32
    %211 = arith.divf %146, %210 : f32
    %212 = vector.broadcast %211 : f32 to vector<16x8xf32>
    %213 = arith.mulf %212, %206 : vector<16x8xf32>
    %c0_118 = arith.constant 0 : index
    %c0_119 = arith.constant 0 : index
    %214 = vector.load %arg20[%c0_118, %c0_119] : memref<16x128xf32, #tpu.memory_space<vmem>>, vector<16x128xf32>
    tpu.vector_store %arg20[%c0_118, %c0_119], %182 {strides = array<i32>} : memref<16x128xf32, #tpu.memory_space<vmem>>, vector<16x128xf32>,
    %cst_120 = arith.constant 0.000000e+00 : f32
    %215 = vector.broadcast %cst_120 : f32 to vector<16x128xf32>
    %c0_121 = arith.constant 0 : index
    %c0_122 = arith.constant 0 : index
    %216 = vector.load %arg21[%c0_121, %c0_122] : memref<16x128xf32, #tpu.memory_space<vmem>>, vector<16x128xf32>
    tpu.vector_store %arg21[%c0_121, %c0_122], %215 {strides = array<i32>} : memref<16x128xf32, #tpu.memory_space<vmem>>, vector<16x128xf32>,
    %c0_123 = arith.constant 0 : index
    %c0_124 = arith.constant 0 : index
    %217 = vector.load %arg21[%c0_123, %c0_124] : memref<16x128xf32, #tpu.memory_space<vmem>>, vector<16x16xf32>
    tpu.vector_store %arg21[%c0_123, %c0_124], %26 {strides = array<i32>} : memref<16x128xf32, #tpu.memory_space<vmem>>, vector<16x16xf32>,
    %c0_125 = arith.constant 0 : index
    %c16 = arith.constant 16 : index
    %218 = vector.load %arg21[%c0_125, %c16] : memref<16x128xf32, #tpu.memory_space<vmem>>, vector<16x8xf32>
    tpu.vector_store %arg21[%c0_125, %c16], %155 {strides = array<i32>} : memref<16x128xf32, #tpu.memory_space<vmem>>, vector<16x8xf32>,
    %c0_126 = arith.constant 0 : index
    %c24 = arith.constant 24 : index
    %219 = vector.load %arg21[%c0_126, %c24] : memref<16x128xf32, #tpu.memory_space<vmem>>, vector<16x8xf32>
    tpu.vector_store %arg21[%c0_126, %c24], %34 {strides = array<i32>} : memref<16x128xf32, #tpu.memory_space<vmem>>, vector<16x8xf32>,
    %c0_127 = arith.constant 0 : index
    %c32 = arith.constant 32 : index
    %220 = vector.load %arg21[%c0_127, %c32] : memref<16x128xf32, #tpu.memory_space<vmem>>, vector<16x8xf32>
    tpu.vector_store %arg21[%c0_127, %c32], %213 {strides = array<i32>} : memref<16x128xf32, #tpu.memory_space<vmem>>, vector<16x8xf32>,
    return
  }
  func.func @transform_0(%arg0: i32) -> i32 {
    %c0_i32 = arith.constant 0 : i32
    %c0_i32_0 = arith.constant 0 : i32
    return %c0_i32 : i32
  }
  func.func @transform_1(%arg0: i32) -> (i32, i32) {
    %c0_i32 = arith.constant 0 : i32
    %c0_i32_0 = arith.constant 0 : i32
    return %arg0, %c0_i32 : i32, i32
  }
  func.func @transform_2(%arg0: i32) -> (i32, i32) {
    %c0_i32 = arith.constant 0 : i32
    %c0_i32_0 = arith.constant 0 : i32
    return %arg0, %c0_i32 : i32, i32
  }
  func.func @transform_3(%arg0: i32) -> (i32, i32) {
    %c0_i32 = arith.constant 0 : i32
    %c0_i32_0 = arith.constant 0 : i32
    return %arg0, %c0_i32 : i32, i32
  }
  func.func @transform_4(%arg0: i32) -> (i32, i32) {
    %c0_i32 = arith.constant 0 : i32
    %c0_i32_0 = arith.constant 0 : i32
    %c0_i32_1 = arith.constant 0 : i32
    return %c0_i32, %c0_i32_0 : i32, i32
  }
  func.func @transform_5(%arg0: i32) -> (i32, i32) {
    %c0_i32 = arith.constant 0 : i32
    %c0_i32_0 = arith.constant 0 : i32
    %c0_i32_1 = arith.constant 0 : i32
    return %c0_i32, %c0_i32_0 : i32, i32
  }
  func.func @transform_6(%arg0: i32) -> (i32, i32) {
    %c0_i32 = arith.constant 0 : i32
    %c0_i32_0 = arith.constant 0 : i32
    %c0_i32_1 = arith.constant 0 : i32
    return %c0_i32, %c0_i32_0 : i32, i32
  }
  func.func @transform_7(%arg0: i32) -> (i32, i32) {
    %c0_i32 = arith.constant 0 : i32
    %c0_i32_0 = arith.constant 0 : i32
    %c0_i32_1 = arith.constant 0 : i32
    return %c0_i32, %c0_i32_0 : i32, i32
  }
  func.func @transform_8(%arg0: i32) -> (i32, i32) {
    %c0_i32 = arith.constant 0 : i32
    %c0_i32_0 = arith.constant 0 : i32
    %c0_i32_1 = arith.constant 0 : i32
    return %c0_i32, %c0_i32_0 : i32, i32
  }
  func.func @transform_9(%arg0: i32) -> (i32, i32) {
    %c0_i32 = arith.constant 0 : i32
    %c0_i32_0 = arith.constant 0 : i32
    %c0_i32_1 = arith.constant 0 : i32
    return %c0_i32, %c0_i32_0 : i32, i32
  }
  func.func @transform_10(%arg0: i32) -> (i32, i32) {
    %c0_i32 = arith.constant 0 : i32
    %c0_i32_0 = arith.constant 0 : i32
    %c0_i32_1 = arith.constant 0 : i32
    return %c0_i32, %c0_i32_0 : i32, i32
  }
  func.func @transform_11(%arg0: i32) -> (i32, i32) {
    %c0_i32 = arith.constant 0 : i32
    %c0_i32_0 = arith.constant 0 : i32
    %c0_i32_1 = arith.constant 0 : i32
    return %c0_i32, %c0_i32_0 : i32, i32
  }
  func.func @transform_12(%arg0: i32) -> (i32, i32) {
    %c0_i32 = arith.constant 0 : i32
    %c0_i32_0 = arith.constant 0 : i32
    %c0_i32_1 = arith.constant 0 : i32
    return %c0_i32, %c0_i32_0 : i32, i32
  }
  func.func @transform_13(%arg0: i32) -> (i32, i32) {
    %c0_i32 = arith.constant 0 : i32
    %c0_i32_0 = arith.constant 0 : i32
    %c0_i32_1 = arith.constant 0 : i32
    return %c0_i32, %c0_i32_0 : i32, i32
  }
  func.func @transform_14(%arg0: i32) -> (i32, i32) {
    %c0_i32 = arith.constant 0 : i32
    %c0_i32_0 = arith.constant 0 : i32
    %c0_i32_1 = arith.constant 0 : i32
    return %c0_i32, %c0_i32_0 : i32, i32
  }
  func.func @transform_15(%arg0: i32) -> (i32, i32) {
    %c0_i32 = arith.constant 0 : i32
    %c0_i32_0 = arith.constant 0 : i32
    %c0_i32_1 = arith.constant 0 : i32
    return %c0_i32, %c0_i32_0 : i32, i32
  }
  func.func @transform_16(%arg0: i32) -> (i32, i32) {
    %c0_i32 = arith.constant 0 : i32
    %c0_i32_0 = arith.constant 0 : i32
    %c0_i32_1 = arith.constant 0 : i32
    return %c0_i32, %c0_i32_0 : i32, i32
  }
  func.func @transform_17(%arg0: i32) -> (i32, i32) {
    %c0_i32 = arith.constant 0 : i32
    %c0_i32_0 = arith.constant 0 : i32
    %c0_i32_1 = arith.constant 0 : i32
    return %c0_i32, %c0_i32_0 : i32, i32
  }
  func.func @transform_18(%arg0: i32) -> (i32, i32) {
    %c0_i32 = arith.constant 0 : i32
    %c0_i32_0 = arith.constant 0 : i32
    %c0_i32_1 = arith.constant 0 : i32
    return %c0_i32, %c0_i32_0 : i32, i32
  }
  func.func @transform_19(%arg0: i32) -> (i32, i32) {
    %c0_i32 = arith.constant 0 : i32
    %c0_i32_0 = arith.constant 0 : i32
    return %arg0, %c0_i32 : i32, i32
  }
  func.func @transform_20(%arg0: i32) -> (i32, i32) {
    %c0_i32 = arith.constant 0 : i32
    %c0_i32_0 = arith.constant 0 : i32
    return %arg0, %c0_i32 : i32, i32
  }
}

</mosaic_0001>

<llo_original>
// kernel: tpu_custom_call.1
$region0: #{tpu_custom_call.1}
  #allocation0 [shape = 'u32[]', space=smem, size = 0x4, offset = 0x4, fixed_abs, tag = 'smem constant byte address 0x4 - core index']
  #allocation1 [shape = 'u32[144,128]{1,0:T(1,128)}', space=vmem, size = 0x12000, scoped, tag = 'internal scratch']
  %s0 = inlined_call_operand.vmem [shape: f32[2], index: 0, kind: input, shape index: {}]
  %s1 = inlined_call_operand.vmem [shape: f32[16,128], index: 1, kind: input, shape index: {}]
  %s2 = inlined_call_operand.vmem [shape: f32[16,8], index: 2, kind: input, shape index: {}]
  %s3 = inlined_call_operand.vmem [shape: f32[16,8], index: 3, kind: input, shape index: {}]
  %s4 = inlined_call_operand.vmem [shape: bf16[128,1024], index: 4, kind: input, shape index: {}]
  %s5 = inlined_call_operand.vmem [shape: f32[1,1024], index: 5, kind: input, shape index: {}]
  %s6 = inlined_call_operand.hbm [shape: bf16[1024,512], index: 6, kind: input, shape index: {}]
  %s7 = inlined_call_operand.vmem [shape: f32[1,512], index: 7, kind: input, shape index: {}]
  %s8 = inlined_call_operand.vmem [shape: bf16[512,16], index: 8, kind: input, shape index: {}]
  %s9 = inlined_call_operand.vmem [shape: f32[1,16], index: 9, kind: input, shape index: {}]
  %s10 = inlined_call_operand.vmem [shape: bf16[8,512], index: 10, kind: input, shape index: {}]
  %s11 = inlined_call_operand.vmem [shape: f32[1,512], index: 11, kind: input, shape index: {}]
  %s12 = inlined_call_operand.hbm [shape: bf16[512,1024], index: 12, kind: input, shape index: {}]
  %s13 = inlined_call_operand.vmem [shape: f32[1,1024], index: 13, kind: input, shape index: {}]
  %s14 = inlined_call_operand.hbm [shape: bf16[1024,128], index: 14, kind: input, shape index: {}]
  %s15 = inlined_call_operand.vmem [shape: f32[1,128], index: 15, kind: input, shape index: {}]
  %s16 = inlined_call_operand.vmem [shape: bf16[512,8], index: 16, kind: input, shape index: {}]
  %s17 = inlined_call_operand.hbm [shape: bf16[1024,512], index: 17, kind: input, shape index: {}]
  %s18 = inlined_call_operand.hbm [shape: bf16[128,1024], index: 18, kind: input, shape index: {}]
  %s19 = inlined_call_operand.hbm [shape: f32[16,128], index: 19, kind: output, shape index: {0}]
  %s20 = inlined_call_operand.hbm [shape: f32[16,128], index: 20, kind: output, shape index: {1}]
  %21 = xla_tuple %s19, %s20
  %s22 = sld [smem:[#allocation0]]
  $region118: #{tpu_custom_call.1} parent=0
    _
  %s24 = ssub.s32 1, %s22
  %s25 = scalar_select 0, %s24, %s22
  $region1: #{tpu_custom_call.1} parent=0
    #allocation2 [shape = 'u8[512]{0}', space=smem, size = 0x200, scoped, tag = 'input window, operand 0, single buffered']
    #allocation3 [shape = 's32[1]{0}', space=sflag, size = 0x4, scoped, tag = 'scoped memory for tpu_custom_call.1']
    #allocation4 [shape = 's32[1]{0}', space=sflag, size = 0x4, scoped, tag = 'scoped memory for tpu_custom_call.1']
    #allocation5 [shape = 's32[1]{0}', space=sflag, size = 0x4, scoped, tag = 'scoped memory for tpu_custom_call.1']
    #allocation6 [shape = 'u8[1048576]{0}', space=vmem, size = 0x100000, scoped, tag = 'input window, operand 6, single buffered']
    #allocation7 [shape = 'u8[1048576]{0}', space=vmem, size = 0x100000, scoped, tag = 'input window, operand 12, single buffered']
    #allocation8 [shape = 's32[1]{0}', space=sflag, size = 0x4, scoped, tag = 'scoped memory for tpu_custom_call.1']
    #allocation9 [shape = 'u8[262144]{0}', space=vmem, size = 0x40000, scoped, tag = 'input window, operand 14, single buffered']
    #allocation10 [shape = 'u8[1048576]{0}', space=vmem, size = 0x100000, scoped, tag = 'input window, operand 17, single buffered']
    #allocation11 [shape = 's32[1]{0}', space=sflag, size = 0x4, scoped, tag = 'scoped memory for tpu_custom_call.1']
    #allocation12 [shape = 'u8[262144]{0}', space=vmem, size = 0x40000, scoped, tag = 'input window, operand 18, single buffered']
    #allocation13 [shape = 'u8[8192]{0}', space=vmem, size = 0x2000, scoped, tag = 'output window, operand 0, single buffered']
    #allocation14 [shape = 'u8[8192]{0}', space=vmem, size = 0x2000, scoped, tag = 'output window, operand 1, single buffered']
    #allocation15 [shape = 's32[1]{0}', space=sflag, size = 0x4, scoped, tag = 'scoped memory for tpu_custom_call.1']
    %26 = vsyncpa [#allocation5], 0
    %27 = vsyncpa [#allocation3], 0
    %28 = vsyncpa [#allocation8], 0
    %29 = vsyncpa [#allocation11], 0
    %30 = vsyncpa [#allocation4], 0
    %31 = vsyncpa [#allocation15], 0
    // Predicated region
    $region2: #{tpu_custom_call.1} parent=1 // pred_check
      _
    $region3: #{tpu_custom_call.1} parent=1 // pred_check_branch
      %33 = sbr.rel (0) target = $region5
    $region4: #{tpu_custom_call.1} parent=1 // pred_region
      %s35 = ssub.s32 16, 16
      %36 = vsyncadd [#allocation5], %s35
      %s38 = sshll.u32 %s0, 4
      %s39 = int_to_ptr.vmem [resolvable:$true] %s38
      %41 = dma.vmem_to_smem %s39, 16, [#allocation2], [#allocation5]
    $region5: #{tpu_custom_call.1} parent=1 // pred_fallthru
      _
    // Predicated region
    $region6: #{tpu_custom_call.1} parent=1 // pred_check
      _
    $region7: #{tpu_custom_call.1} parent=1 // pred_check_branch
      %43 = sbr.rel (0) target = $region9
    $region8: #{tpu_custom_call.1} parent=1 // pred_region
      _
    $region9: #{tpu_custom_call.1} parent=1 // pred_fallthru
      _
    // Predicated region
    $region10: #{tpu_custom_call.1} parent=1 // pred_check
      _
    $region11: #{tpu_custom_call.1} parent=1 // pred_check_branch
      %45 = sbr.rel (0) target = $region13
    $region12: #{tpu_custom_call.1} parent=1 // pred_region
      _
    $region13: #{tpu_custom_call.1} parent=1 // pred_fallthru
      _
    // Predicated region
    $region14: #{tpu_custom_call.1} parent=1 // pred_check
      _
    $region15: #{tpu_custom_call.1} parent=1 // pred_check_branch
      %47 = sbr.rel (0) target = $region17
    $region16: #{tpu_custom_call.1} parent=1 // pred_region
      _
    $region17: #{tpu_custom_call.1} parent=1 // pred_fallthru
      _
    // Predicated region
    $region18: #{tpu_custom_call.1} parent=1 // pred_check
      _
    $region19: #{tpu_custom_call.1} parent=1 // pred_check_branch
      %49 = sbr.rel (0) target = $region21
    $region20: #{tpu_custom_call.1} parent=1 // pred_region
      _
    $region21: #{tpu_custom_call.1} parent=1 // pred_fallthru
      _
    // Predicated region
    $region22: #{tpu_custom_call.1} parent=1 // pred_check
      _
    $region23: #{tpu_custom_call.1} parent=1 // pred_check_branch
      %51 = sbr.rel (0) target = $region25
    $region24: #{tpu_custom_call.1} parent=1 // pred_region
      _
    $region25: #{tpu_custom_call.1} parent=1 // pred_fallthru
      _
    // Predicated region
    $region26: #{tpu_custom_call.1} parent=1 // pred_check
      _
    $region27: #{tpu_custom_call.1} parent=1 // pred_check_branch
      %53 = sbr.rel (0) target = $region29
    $region28: #{tpu_custom_call.1} parent=1 // pred_region
      %s55 = ssub.s32 32768, 32768
      %56 = vsyncadd [#allocation3], %s55
      %s57 = sshll.u32 [#allocation6], 4
      %s58 = int_to_ptr.vmem [resolvable:$true] %s57
      %63 = dma.hbm_to_vmem [thread:$0]  %s6, 32768, %s58, [#allocation3], 256, 256, 16
    $region29: #{tpu_custom_call.1} parent=1 // pred_fallthru
      _
    // Predicated region
    $region30: #{tpu_custom_call.1} parent=1 // pred_check
      _
    $region31: #{tpu_custom_call.1} parent=1 // pred_check_branch
      %65 = sbr.rel (0) target = $region33
    $region32: #{tpu_custom_call.1} parent=1 // pred_region
      _
    $region33: #{tpu_custom_call.1} parent=1 // pred_fallthru
      _
    // Predicated region
    $region34: #{tpu_custom_call.1} parent=1 // pred_check
      _
    $region35: #{tpu_custom_call.1} parent=1 // pred_check_branch
      %67 = sbr.rel (0) target = $region37
    $region36: #{tpu_custom_call.1} parent=1 // pred_region
      _
    $region37: #{tpu_custom_call.1} parent=1 // pred_fallthru
      _
    // Predicated region
    $region38: #{tpu_custom_call.1} parent=1 // pred_check
      _
    $region39: #{tpu_custom_call.1} parent=1 // pred_check_branch
      %69 = sbr.rel (0) target = $region41
    $region40: #{tpu_custom_call.1} parent=1 // pred_region
      _
    $region41: #{tpu_custom_call.1} parent=1 // pred_fallthru
      _
    // Predicated region
    $region42: #{tpu_custom_call.1} parent=1 // pred_check
      _
    $region43: #{tpu_custom_call.1} parent=1 // pred_check_branch
      %71 = sbr.rel (0) target = $region45
    $region44: #{tpu_custom_call.1} parent=1 // pred_region
      _
    $region45: #{tpu_custom_call.1} parent=1 // pred_fallthru
      _
    // Predicated region
    $region46: #{tpu_custom_call.1} parent=1 // pred_check
      _
    $region47: #{tpu_custom_call.1} parent=1 // pred_check_branch
      %73 = sbr.rel (0) target = $region49
    $region48: #{tpu_custom_call.1} parent=1 // pred_region
      _
    $region49: #{tpu_custom_call.1} parent=1 // pred_fallthru
      _
    // Predicated region
    $region50: #{tpu_custom_call.1} parent=1 // pred_check
      _
    $region51: #{tpu_custom_call.1} parent=1 // pred_check_branch
      %75 = sbr.rel (0) target = $region53
    $region52: #{tpu_custom_call.1} parent=1 // pred_region
      %s77 = ssub.s32 32768, 32768
      %78 = vsyncadd [#allocation8], %s77
      %s79 = sshll.u32 [#allocation7], 4
      %s80 = int_to_ptr.vmem [resolvable:$true] %s79
      %85 = dma.hbm_to_vmem [thread:$0]  %s12, 32768, %s80, [#allocation8], 512, 512, 32
    $region53: #{tpu_custom_call.1} parent=1 // pred_fallthru
      _
    // Predicated region
    $region54: #{tpu_custom_call.1} parent=1 // pred_check
      _
    $region55: #{tpu_custom_call.1} parent=1 // pred_check_branch
      %87 = sbr.rel (0) target = $region57
    $region56: #{tpu_custom_call.1} parent=1 // pred_region
      _
    $region57: #{tpu_custom_call.1} parent=1 // pred_fallthru
      _
    // Predicated region
    $region58: #{tpu_custom_call.1} parent=1 // pred_check
      _
    $region59: #{tpu_custom_call.1} parent=1 // pred_check_branch
      %89 = sbr.rel (0) target = $region61
    $region60: #{tpu_custom_call.1} parent=1 // pred_region
      %s91 = ssub.s32 8192, 8192
      %92 = vsyncadd [#allocation8], %s91
      %s93 = sshll.u32 [#allocation9], 4
      %s94 = int_to_ptr.vmem [resolvable:$true] %s93
      %99 = dma.hbm_to_vmem [thread:$0]  %s14, 8192, %s94, [#allocation8], 64, 64, 4
    $region61: #{tpu_custom_call.1} parent=1 // pred_fallthru
      _
    // Predicated region
    $region62: #{tpu_custom_call.1} parent=1 // pred_check
      _
    $region63: #{tpu_custom_call.1} parent=1 // pred_check_branch
      %101 = sbr.rel (0) target = $region65
    $region64: #{tpu_custom_call.1} parent=1 // pred_region
      _
    $region65: #{tpu_custom_call.1} parent=1 // pred_fallthru
      _
    // Predicated region
    $region66: #{tpu_custom_call.1} parent=1 // pred_check
      _
    $region67: #{tpu_custom_call.1} parent=1 // pred_check_branch
      %103 = sbr.rel (0) target = $region69
    $region68: #{tpu_custom_call.1} parent=1 // pred_region
      _
    $region69: #{tpu_custom_call.1} parent=1 // pred_fallthru
      _
    // Predicated region
    $region70: #{tpu_custom_call.1} parent=1 // pred_check
      _
    $region71: #{tpu_custom_call.1} parent=1 // pred_check_branch
      %105 = sbr.rel (0) target = $region73
    $region72: #{tpu_custom_call.1} parent=1 // pred_region
      %s107 = ssub.s32 32768, 32768
      %108 = vsyncadd [#allocation11], %s107
      %s109 = sshll.u32 [#allocation10], 4
      %s110 = int_to_ptr.vmem [resolvable:$true] %s109
      %115 = dma.hbm_to_vmem [thread:$0]  %s17, 32768, %s110, [#allocation11], 256, 256, 16
    $region73: #{tpu_custom_call.1} parent=1 // pred_fallthru
      _
    // Predicated region
    $region74: #{tpu_custom_call.1} parent=1 // pred_check
      _
    $region75: #{tpu_custom_call.1} parent=1 // pred_check_branch
      %117 = sbr.rel (0) target = $region77
    $region76: #{tpu_custom_call.1} parent=1 // pred_region
      %s119 = ssub.s32 8192, 8192
      %120 = vsyncadd [#allocation11], %s119
      %s121 = sshll.u32 [#allocation12], 4
      %s122 = int_to_ptr.vmem [resolvable:$true] %s121
      %127 = dma.hbm_to_vmem [thread:$0]  %s18, 8192, %s122, [#allocation11], 512, 512, 32
    $region77: #{tpu_custom_call.1} parent=1 // pred_fallthru
      _
    // Predicated region
    $region78: #{tpu_custom_call.1} parent=1 // pred_check
      _
    $region79: #{tpu_custom_call.1} parent=1 // pred_check_branch
      %129 = sbr.rel (0) target = $region81
    $region80: #{tpu_custom_call.1} parent=1 // pred_region
      %130 = dma.done [#allocation5], 16
    $region81: #{tpu_custom_call.1} parent=1 // pred_fallthru
      _
    // Predicated region
    $region82: #{tpu_custom_call.1} parent=1 // pred_check
      _
    $region83: #{tpu_custom_call.1} parent=1 // pred_check_branch
      %132 = sbr.rel (0) target = $region85
    $region84: #{tpu_custom_call.1} parent=1 // pred_region
      %133 = dma.done [#allocation3], 32768
    $region85: #{tpu_custom_call.1} parent=1 // pred_fallthru
      _
    // Predicated region
    $region86: #{tpu_custom_call.1} parent=1 // pred_check
      _
    $region87: #{tpu_custom_call.1} parent=1 // pred_check_branch
      %135 = sbr.rel (0) target = $region89
    $region88: #{tpu_custom_call.1} parent=1 // pred_region
      %136 = dma.done [#allocation8], 32768
    $region89: #{tpu_custom_call.1} parent=1 // pred_fallthru
      _
    // Predicated region
    $region90: #{tpu_custom_call.1} parent=1 // pred_check
      _
    $region91: #{tpu_custom_call.1} parent=1 // pred_check_branch
      %138 = sbr.rel (0) target = $region93
    $region92: #{tpu_custom_call.1} parent=1 // pred_region
      %139 = dma.done [#allocation8], 8192
    $region93: #{tpu_custom_call.1} parent=1 // pred_fallthru
      _
    // Predicated region
    $region94: #{tpu_custom_call.1} parent=1 // pred_check
      _
    $region95: #{tpu_custom_call.1} parent=1 // pred_check_branch
      %141 = sbr.rel (0) target = $region97
    $region96: #{tpu_custom_call.1} parent=1 // pred_region
      %142 = dma.done [#allocation11], 32768
    $region97: #{tpu_custom_call.1} parent=1 // pred_fallthru
      _
    // Predicated region
    $region98: #{tpu_custom_call.1} parent=1 // pred_check
      _
    $region99: #{tpu_custom_call.1} parent=1 // pred_check_branch
      %144 = sbr.rel (0) target = $region101
    $region100: #{tpu_custom_call.1} parent=1 // pred_region
      %145 = dma.done [#allocation11], 8192
    $region101: #{tpu_custom_call.1} parent=1 // pred_fallthru
      _
    %146 = sfence
    %s148 = sld [smem:[#allocation2]]
    %s149 = sld [smem:[#allocation2 + $0x1]]
    %s150 = smul.f32 %s148, 0.5
    %v151 = vstv %s149
    %v152 = vrcp.pop %v151
    %s153 = vtos %v152
    %v154 = vld [vmem:[%s1] sm:$0xff]
    %v155 = vld [vmem:[%s1 + $0x8] sm:$0xff]
    %v156 = vpack.c.bf16 %v155, %v154
    %v157 = vld [vmem:[%s4] sm:$0xff]
    %v158 = vld [vmem:[%s4 + $0x8] sm:$0xff]
    %v159 = vld [vmem:[%s4 + $0x10] sm:$0xff]
    %v160 = vld [vmem:[%s4 + $0x18] sm:$0xff]
    %v161 = vld [vmem:[%s4 + $0x20] sm:$0xff]
    %v162 = vld [vmem:[%s4 + $0x28] sm:$0xff]
    %v163 = vld [vmem:[%s4 + $0x30] sm:$0xff]
    %v164 = vld [vmem:[%s4 + $0x38] sm:$0xff]
    %v165 = vld [vmem:[%s4 + $0x40] sm:$0xff]
    %v166 = vld [vmem:[%s4 + $0x48] sm:$0xff]
    %v167 = vld [vmem:[%s4 + $0x50] sm:$0xff]
    %v168 = vld [vmem:[%s4 + $0x58] sm:$0xff]
    %v169 = vld [vmem:[%s4 + $0x60] sm:$0xff]
    %v170 = vld [vmem:[%s4 + $0x68] sm:$0xff]
    %v171 = vld [vmem:[%s4 + $0x70] sm:$0xff]
    %v172 = vld [vmem:[%s4 + $0x78] sm:$0xff]
    %v173 = vld [vmem:[%s4 + $0x80] sm:$0xff]
    %v174 = vld [vmem:[%s4 + $0x88] sm:$0xff]
    %v175 = vld [vmem:[%s4 + $0x90] sm:$0xff]
    %v176 = vld [vmem:[%s4 + $0x98] sm:$0xff]
    %v177 = vld [vmem:[%s4 + $0xa0] sm:$0xff]
    %v178 = vld [vmem:[%s4 + $0xa8] sm:$0xff]
    %v179 = vld [vmem:[%s4 + $0xb0] sm:$0xff]
    %v180 = vld [vmem:[%s4 + $0xb8] sm:$0xff]
    %v181 = vld [vmem:[%s4 + $0xc0] sm:$0xff]
    %v182 = vld [vmem:[%s4 + $0xc8] sm:$0xff]
    %v183 = vld [vmem:[%s4 + $0xd0] sm:$0xff]
    %v184 = vld [vmem:[%s4 + $0xd8] sm:$0xff]
    %v185 = vld [vmem:[%s4 + $0xe0] sm:$0xff]
    %v186 = vld [vmem:[%s4 + $0xe8] sm:$0xff]
    %v187 = vld [vmem:[%s4 + $0xf0] sm:$0xff]
    %v188 = vld [vmem:[%s4 + $0xf8] sm:$0xff]
    %v189 = vld [vmem:[%s4 + $0x100] sm:$0xff]
    %v190 = vld [vmem:[%s4 + $0x108] sm:$0xff]
    %v191 = vld [vmem:[%s4 + $0x110] sm:$0xff]
    %v192 = vld [vmem:[%s4 + $0x118] sm:$0xff]
    %v193 = vld [vmem:[%s4 + $0x120] sm:$0xff]
    %v194 = vld [vmem:[%s4 + $0x128] sm:$0xff]
    %v195 = vld [vmem:[%s4 + $0x130] sm:$0xff]
    %v196 = vld [vmem:[%s4 + $0x138] sm:$0xff]
    %v197 = vld [vmem:[%s4 + $0x140] sm:$0xff]
    %v198 = vld [vmem:[%s4 + $0x148] sm:$0xff]
    %v199 = vld [vmem:[%s4 + $0x150] sm:$0xff]
    %v200 = vld [vmem:[%s4 + $0x158] sm:$0xff]
    %v201 = vld [vmem:[%s4 + $0x160] sm:$0xff]
    %v202 = vld [vmem:[%s4 + $0x168] sm:$0xff]
    %v203 = vld [vmem:[%s4 + $0x170] sm:$0xff]
    %v204 = vld [vmem:[%s4 + $0x178] sm:$0xff]
    %v205 = vld [vmem:[%s4 + $0x180] sm:$0xff]
    %v206 = vld [vmem:[%s4 + $0x188] sm:$0xff]
    %v207 = vld [vmem:[%s4 + $0x190] sm:$0xff]
    %v208 = vld [vmem:[%s4 + $0x198] sm:$0xff]
    %v209 = vld [vmem:[%s4 + $0x1a0] sm:$0xff]
    %v210 = vld [vmem:[%s4 + $0x1a8] sm:$0xff]
    %v211 = vld [vmem:[%s4 + $0x1b0] sm:$0xff]
    %v212 = vld [vmem:[%s4 + $0x1b8] sm:$0xff]
    %v213 = vld [vmem:[%s4 + $0x1c0] sm:$0xff]
    %v214 = vld [vmem:[%s4 + $0x1c8] sm:$0xff]
    %v215 = vld [vmem:[%s4 + $0x1d0] sm:$0xff]
    %v216 = vld [vmem:[%s4 + $0x1d8] sm:$0xff]
    %v217 = vld [vmem:[%s4 + $0x1e0] sm:$0xff]
    %v218 = vld [vmem:[%s4 + $0x1e8] sm:$0xff]
    %v219 = vld [vmem:[%s4 + $0x1f0] sm:$0xff]
    %v220 = vld [vmem:[%s4 + $0x1f8] sm:$0xff]
    %v221 = vld [vmem:[%s5] sm:$0xff]
    %v223 = vlaneseq
    %v224 = vshrl.u32 %v223, 7
    %v225 = vsub.s32 0, %v224
    %v226 = vrot.slane %v221, %v225
    %v227 = vlaneseq
    %v228 = vshrl.u32 %v227, 7
    %v229 = vsub.s32 1, %v228
    %v230 = vrot.slane %v221, %v229
    %v231 = vlaneseq
    %v232 = vshrl.u32 %v231, 7
    %v233 = vsub.s32 2, %v232
    %v234 = vrot.slane %v221, %v233
    %v235 = vlaneseq
    %v236 = vshrl.u32 %v235, 7
    %v237 = vsub.s32 3, %v236
    %v238 = vrot.slane %v221, %v237
    %v239 = vlaneseq
    %v240 = vshrl.u32 %v239, 7
    %v241 = vsub.s32 4, %v240
    %v242 = vrot.slane %v221, %v241
    %v243 = vlaneseq
    %v244 = vshrl.u32 %v243, 7
    %v245 = vsub.s32 5, %v244
    %v246 = vrot.slane %v221, %v245
    %v247 = vlaneseq
    %v248 = vshrl.u32 %v247, 7
    %v249 = vsub.s32 6, %v248
    %v250 = vrot.slane %v221, %v249
    %v251 = vlaneseq
    %v252 = vshrl.u32 %v251, 7
    %v253 = vsub.s32 7, %v252
    %v254 = vrot.slane %v221, %v253
    %v327 = vunpack.c.l.b16 %v157
    %v328 = vunpack.c.h.b16 %v157
    %v329 = vunpack.c.l.b16 %v158
    %v330 = vunpack.c.h.b16 %v158
    %v331 = vunpack.c.l.b16 %v159
    %v332 = vunpack.c.h.b16 %v159
    %v333 = vunpack.c.l.b16 %v160
    %v334 = vunpack.c.h.b16 %v160
    %v335 = vunpack.c.l.b16 %v161
    %v336 = vunpack.c.h.b16 %v161
    %v337 = vunpack.c.l.b16 %v162
    %v338 = vunpack.c.h.b16 %v162
    %v339 = vunpack.c.l.b16 %v163
    %v340 = vunpack.c.h.b16 %v163
    %v341 = vunpack.c.l.b16 %v164
    %v342 = vunpack.c.h.b16 %v164
    %v343 = vunpack.c.l.b16 %v165
    %v344 = vunpack.c.h.b16 %v165
    %v345 = vunpack.c.l.b16 %v166
    %v346 = vunpack.c.h.b16 %v166
    %v347 = vunpack.c.l.b16 %v167
    %v348 = vunpack.c.h.b16 %v167
    %v349 = vunpack.c.l.b16 %v168
    %v350 = vunpack.c.h.b16 %v168
    %v351 = vunpack.c.l.b16 %v169
    %v352 = vunpack.c.h.b16 %v169
    %v353 = vunpack.c.l.b16 %v170
    %v354 = vunpack.c.h.b16 %v170
    %v355 = vunpack.c.l.b16 %v171
    %v356 = vunpack.c.h.b16 %v171
    %v357 = vunpack.c.l.b16 %v172
    %v358 = vunpack.c.h.b16 %v172
    %v359 = vunpack.c.l.b16 %v173
    %v360 = vunpack.c.h.b16 %v173
    %v361 = vunpack.c.l.b16 %v174
    %v362 = vunpack.c.h.b16 %v174
    %v363 = vunpack.c.l.b16 %v175
    %v364 = vunpack.c.h.b16 %v175
    %v365 = vunpack.c.l.b16 %v176
    %v366 = vunpack.c.h.b16 %v176
    %v367 = vunpack.c.l.b16 %v177
    %v368 = vunpack.c.h.b16 %v177
    %v369 = vunpack.c.l.b16 %v178
    %v370 = vunpack.c.h.b16 %v178
    %v371 = vunpack.c.l.b16 %v179
    %v372 = vunpack.c.h.b16 %v179
    %v373 = vunpack.c.l.b16 %v180
    %v374 = vunpack.c.h.b16 %v180
    %v375 = vunpack.c.l.b16 %v181
    %v376 = vunpack.c.h.b16 %v181
    %v377 = vunpack.c.l.b16 %v182
    %v378 = vunpack.c.h.b16 %v182
    %v379 = vunpack.c.l.b16 %v183
    %v380 = vunpack.c.h.b16 %v183
    %v381 = vunpack.c.l.b16 %v184
    %v382 = vunpack.c.h.b16 %v184
    %v383 = vunpack.c.l.b16 %v185
    %v384 = vunpack.c.h.b16 %v185
    %v385 = vunpack.c.l.b16 %v186
    %v386 = vunpack.c.h.b16 %v186
    %v387 = vunpack.c.l.b16 %v187
    %v388 = vunpack.c.h.b16 %v187
    %v389 = vunpack.c.l.b16 %v188
    %v390 = vunpack.c.h.b16 %v188
    %v391 = vunpack.c.l.b16 %v189
    %v392 = vunpack.c.h.b16 %v189
    %v393 = vunpack.c.l.b16 %v190
    %v394 = vunpack.c.h.b16 %v190
    %v395 = vunpack.c.l.b16 %v191
    %v396 = vunpack.c.h.b16 %v191
    %v397 = vunpack.c.l.b16 %v192
    %v398 = vunpack.c.h.b16 %v192
    %v399 = vunpack.c.l.b16 %v193
    %v400 = vunpack.c.h.b16 %v193
    %v401 = vunpack.c.l.b16 %v194
    %v402 = vunpack.c.h.b16 %v194
    %v403 = vunpack.c.l.b16 %v195
    %v404 = vunpack.c.h.b16 %v195
    %v405 = vunpack.c.l.b16 %v196
    %v406 = vunpack.c.h.b16 %v196
    %v407 = vunpack.c.l.b16 %v197
    %v408 = vunpack.c.h.b16 %v197
    %v409 = vunpack.c.l.b16 %v198
    %v410 = vunpack.c.h.b16 %v198
    %v411 = vunpack.c.l.b16 %v199
    %v412 = vunpack.c.h.b16 %v199
    %v413 = vunpack.c.l.b16 %v200
    %v414 = vunpack.c.h.b16 %v200
    %v415 = vunpack.c.l.b16 %v201
    %v416 = vunpack.c.h.b16 %v201
    %v417 = vunpack.c.l.b16 %v202
    %v418 = vunpack.c.h.b16 %v202
    %v419 = vunpack.c.l.b16 %v203
    %v420 = vunpack.c.h.b16 %v203
    %v421 = vunpack.c.l.b16 %v204
    %v422 = vunpack.c.h.b16 %v204
    %v423 = vunpack.c.l.b16 %v205
    %v424 = vunpack.c.h.b16 %v205
    %v425 = vunpack.c.l.b16 %v206
    %v426 = vunpack.c.h.b16 %v206
    %v427 = vunpack.c.l.b16 %v207
    %v428 = vunpack.c.h.b16 %v207
    %v429 = vunpack.c.l.b16 %v208
    %v430 = vunpack.c.h.b16 %v208
    %v431 = vunpack.c.l.b16 %v209
    %v432 = vunpack.c.h.b16 %v209
    %v433 = vunpack.c.l.b16 %v210
    %v434 = vunpack.c.h.b16 %v210
    %v435 = vunpack.c.l.b16 %v211
    %v436 = vunpack.c.h.b16 %v211
    %v437 = vunpack.c.l.b16 %v212
    %v438 = vunpack.c.h.b16 %v212
    %v439 = vunpack.c.l.b16 %v213
    %v440 = vunpack.c.h.b16 %v213
    %v441 = vunpack.c.l.b16 %v214
    %v442 = vunpack.c.h.b16 %v214
    %v443 = vunpack.c.l.b16 %v215
    %v444 = vunpack.c.h.b16 %v215
    %v445 = vunpack.c.l.b16 %v216
    %v446 = vunpack.c.h.b16 %v216
    %v447 = vunpack.c.l.b16 %v217
    %v448 = vunpack.c.h.b16 %v217
    %v449 = vunpack.c.l.b16 %v218
    %v450 = vunpack.c.h.b16 %v218
    %v451 = vunpack.c.l.b16 %v219
    %v452 = vunpack.c.h.b16 %v219
    %v453 = vunpack.c.l.b16 %v220
    %v454 = vunpack.c.h.b16 %v220
    %v455 = vpack.c.b16 %v335, %v327
    %v456 = vpack.c.b16 %v336, %v328
    %v457 = vpack.c.b16 %v337, %v329
    %v458 = vpack.c.b16 %v338, %v330
    %v459 = vpack.c.b16 %v339, %v331
    %v460 = vpack.c.b16 %v340, %v332
    %v461 = vpack.c.b16 %v341, %v333
    %v462 = vpack.c.b16 %v342, %v334
    %v463 = vpack.c.b16 %v351, %v343
    %v464 = vpack.c.b16 %v352, %v344
    %v465 = vpack.c.b16 %v353, %v345
    %v466 = vpack.c.b16 %v354, %v346
    %v467 = vpack.c.b16 %v355, %v347
    %v468 = vpack.c.b16 %v356, %v348
    %v469 = vpack.c.b16 %v357, %v349
    %v470 = vpack.c.b16 %v358, %v350
    %v471 = vpack.c.b16 %v367, %v359
    %v472 = vpack.c.b16 %v368, %v360
    %v473 = vpack.c.b16 %v369, %v361
    %v474 = vpack.c.b16 %v370, %v362
    %v475 = vpack.c.b16 %v371, %v363
    %v476 = vpack.c.b16 %v372, %v364
    %v477 = vpack.c.b16 %v373, %v365
    %v478 = vpack.c.b16 %v374, %v366
    %v479 = vpack.c.b16 %v383, %v375
    %v480 = vpack.c.b16 %v384, %v376
    %v481 = vpack.c.b16 %v385, %v377
    %v482 = vpack.c.b16 %v386, %v378
    %v483 = vpack.c.b16 %v387, %v379
    %v484 = vpack.c.b16 %v388, %v380
    %v485 = vpack.c.b16 %v389, %v381
    %v486 = vpack.c.b16 %v390, %v382
    %v487 = vpack.c.b16 %v399, %v391
    %v488 = vpack.c.b16 %v400, %v392
    %v489 = vpack.c.b16 %v401, %v393
    %v490 = vpack.c.b16 %v402, %v394
    %v491 = vpack.c.b16 %v403, %v395
    %v492 = vpack.c.b16 %v404, %v396
    %v493 = vpack.c.b16 %v405, %v397
    %v494 = vpack.c.b16 %v406, %v398
    %v495 = vpack.c.b16 %v415, %v407
    %v496 = vpack.c.b16 %v416, %v408
    %v497 = vpack.c.b16 %v417, %v409
    %v498 = vpack.c.b16 %v418, %v410
    %v499 = vpack.c.b16 %v419, %v411
    %v500 = vpack.c.b16 %v420, %v412
    %v501 = vpack.c.b16 %v421, %v413
    %v502 = vpack.c.b16 %v422, %v414
    %v503 = vpack.c.b16 %v431, %v423
    %v504 = vpack.c.b16 %v432, %v424
    %v505 = vpack.c.b16 %v433, %v425
    %v506 = vpack.c.b16 %v434, %v426
    %v507 = vpack.c.b16 %v435, %v427
    %v508 = vpack.c.b16 %v436, %v428
    %v509 = vpack.c.b16 %v437, %v429
    %v510 = vpack.c.b16 %v438, %v430
    %v511 = vpack.c.b16 %v447, %v439
    %v512 = vpack.c.b16 %v448, %v440
    %v513 = vpack.c.b16 %v449, %v441
    %v514 = vpack.c.b16 %v450, %v442
    %v515 = vpack.c.b16 %v451, %v443
    %v516 = vpack.c.b16 %v452, %v444
    %v517 = vpack.c.b16 %v453, %v445
    %v518 = vpack.c.b16 %v454, %v446
    %583 = vmatprep.subr.bf16.mxu0 %v512
    %584 = vmatpush1.bf16.msra.mxu0 %v511
    %585 = vmatprep.subr.bf16.mxu0 %v504
    %586 = vmatpush1.bf16.msra.mxu0 %v503
    %587 = vmatprep.subr.bf16.mxu0 %v496
    %588 = vmatpush1.bf16.msra.mxu0 %v495
    %589 = vmatprep.subr.bf16.mxu0 %v488
    %590 = vmatpush1.bf16.msra.mxu0 %v487
    %591 = vmatprep.subr.bf16.mxu0 %v480
    %592 = vmatpush1.bf16.msra.mxu0 %v479
    %593 = vmatprep.subr.bf16.mxu0 %v472
    %594 = vmatpush1.bf16.msra.mxu0 %v471
    %595 = vmatprep.subr.bf16.mxu0 %v464
    %596 = vmatpush1.bf16.msra.mxu0 %v463
    %597 = vmatprep.subr.bf16.mxu0 %v456
    %598 = vmatpush1.bf16.msra.mxu0 %v455
    %599 = vmatprep.subr.bf16.mxu0 0
    %600 = vmatpush2.bf16.msra.mxu0 0
    %601 = vmatprep.subr.bf16.mxu0 0
    %602 = vmatpush2.bf16.msra.mxu0 0
    %603 = vmatprep.subr.bf16.mxu0 0
    %604 = vmatpush2.bf16.msra.mxu0 0
    %605 = vmatprep.subr.bf16.mxu0 0
    %606 = vmatpush2.bf16.msra.mxu0 0
    %607 = vmatprep.subr.bf16.mxu0 0
    %608 = vmatpush2.bf16.msra.mxu0 0
    %609 = vmatprep.subr.bf16.mxu0 0
    %610 = vmatpush2.bf16.msra.mxu0 0
    %611 = vmatprep.subr.bf16.mxu0 0
    %612 = vmatpush2.bf16.msra.mxu0 0
    %613 = vmatprep.subr.bf16.mxu0 0
    %614 = vmatpush2.bf16.msra.mxu0 0
    %615 = vmatprep.mubr.bf16.mxu0 0
    %616 = vmatmul.mubr.bf16.gmra.mxu0 %v156
    %v617 = vpop.f32.mrf.mxu0
    %v618 = vadd.f32 %v226, %v617
    %v619 = vpop.f32.mrf.mxu0
    %v620 = vadd.f32 %v230, %v619
    %v621 = vpop.f32.mrf.mxu0
    %v622 = vadd.f32 %v226, %v621
    %v623 = vpop.f32.mrf.mxu0
    %v624 = vadd.f32 %v230, %v623
    %625 = vdwg.mxu0
    %626 = vmatprep.subr.bf16.mxu0 %v514
    %627 = vmatpush1.bf16.msra.mxu0 %v513
    %628 = vmatprep.subr.bf16.mxu0 %v506
    %629 = vmatpush1.bf16.msra.mxu0 %v505
    %630 = vmatprep.subr.bf16.mxu0 %v498
    %631 = vmatpush1.bf16.msra.mxu0 %v497
    %632 = vmatprep.subr.bf16.mxu0 %v490
    %633 = vmatpush1.bf16.msra.mxu0 %v489
    %634 = vmatprep.subr.bf16.mxu0 %v482
    %635 = vmatpush1.bf16.msra.mxu0 %v481
    %636 = vmatprep.subr.bf16.mxu0 %v474
    %637 = vmatpush1.bf16.msra.mxu0 %v473
    %638 = vmatprep.subr.bf16.mxu0 %v466
    %639 = vmatpush1.bf16.msra.mxu0 %v465
    %640 = vmatprep.subr.bf16.mxu0 %v458
    %641 = vmatpush1.bf16.msra.mxu0 %v457
    %642 = vmatprep.subr.bf16.mxu0 0
    %643 = vmatpush2.bf16.msra.mxu0 0
    %644 = vmatprep.subr.bf16.mxu0 0
    %645 = vmatpush2.bf16.msra.mxu0 0
    %646 = vmatprep.subr.bf16.mxu0 0
    %647 = vmatpush2.bf16.msra.mxu0 0
    %648 = vmatprep.subr.bf16.mxu0 0
    %649 = vmatpush2.bf16.msra.mxu0 0
    %650 = vmatprep.subr.bf16.mxu0 0
    %651 = vmatpush2.bf16.msra.mxu0 0
    %652 = vmatprep.subr.bf16.mxu0 0
    %653 = vmatpush2.bf16.msra.mxu0 0
    %654 = vmatprep.subr.bf16.mxu0 0
    %655 = vmatpush2.bf16.msra.mxu0 0
    %656 = vmatprep.subr.bf16.mxu0 0
    %657 = vmatpush2.bf16.msra.mxu0 0
    %658 = vmatprep.mubr.bf16.mxu0 0
    %659 = vmatmul.mubr.bf16.gmra.mxu0 %v156
    %v660 = vpop.f32.mrf.mxu0
    %v661 = vadd.f32 %v234, %v660
    %v662 = vpop.f32.mrf.mxu0
    %v663 = vadd.f32 %v238, %v662
    %v664 = vpop.f32.mrf.mxu0
    %v665 = vadd.f32 %v234, %v664
    %v666 = vpop.f32.mrf.mxu0
    %v667 = vadd.f32 %v238, %v666
    %668 = vdwg.mxu0
    %669 = vmatprep.subr.bf16.mxu0 %v516
    %670 = vmatpush1.bf16.msra.mxu0 %v515
    %671 = vmatprep.subr.bf16.mxu0 %v508
    %672 = vmatpush1.bf16.msra.mxu0 %v507
    %673 = vmatprep.subr.bf16.mxu0 %v500
    %674 = vmatpush1.bf16.msra.mxu0 %v499
    %675 = vmatprep.subr.bf16.mxu0 %v492
    %676 = vmatpush1.bf16.msra.mxu0 %v491
    %677 = vmatprep.subr.bf16.mxu0 %v484
    %678 = vmatpush1.bf16.msra.mxu0 %v483
    %679 = vmatprep.subr.bf16.mxu0 %v476
    %680 = vmatpush1.bf16.msra.mxu0 %v475
    %681 = vmatprep.subr.bf16.mxu0 %v468
    %682 = vmatpush1.bf16.msra.mxu0 %v467
    %683 = vmatprep.subr.bf16.mxu0 %v460
    %684 = vmatpush1.bf16.msra.mxu0 %v459
    %685 = vmatprep.subr.bf16.mxu0 0
    %686 = vmatpush2.bf16.msra.mxu0 0
    %687 = vmatprep.subr.bf16.mxu0 0
    %688 = vmatpush2.bf16.msra.mxu0 0
    %689 = vmatprep.subr.bf16.mxu0 0
    %690 = vmatpush2.bf16.msra.mxu0 0
    %691 = vmatprep.subr.bf16.mxu0 0
    %692 = vmatpush2.bf16.msra.mxu0 0
    %693 = vmatprep.subr.bf16.mxu0 0
    %694 = vmatpush2.bf16.msra.mxu0 0
    %695 = vmatprep.subr.bf16.mxu0 0
    %696 = vmatpush2.bf16.msra.mxu0 0
    %697 = vmatprep.subr.bf16.mxu0 0
    %698 = vmatpush2.bf16.msra.mxu0 0
    %699 = vmatprep.subr.bf16.mxu0 0
    %700 = vmatpush2.bf16.msra.mxu0 0
    %701 = vmatprep.mubr.bf16.mxu0 0
    %702 = vmatmul.mubr.bf16.gmra.mxu0 %v156
    %v703 = vpop.f32.mrf.mxu0
    %v704 = vadd.f32 %v242, %v703
    %v705 = vpop.f32.mrf.mxu0
    %v706 = vadd.f32 %v246, %v705
    %v707 = vpop.f32.mrf.mxu0
    %v708 = vadd.f32 %v242, %v707
    %v709 = vpop.f32.mrf.mxu0
    %v710 = vadd.f32 %v246, %v709
    %711 = vdwg.mxu0
    %712 = vmatprep.subr.bf16.mxu0 %v518
    %713 = vmatpush1.bf16.msra.mxu0 %v517
    %714 = vmatprep.subr.bf16.mxu0 %v510
    %715 = vmatpush1.bf16.msra.mxu0 %v509
    %716 = vmatprep.subr.bf16.mxu0 %v502
    %717 = vmatpush1.bf16.msra.mxu0 %v501
    %718 = vmatprep.subr.bf16.mxu0 %v494
    %719 = vmatpush1.bf16.msra.mxu0 %v493
    %720 = vmatprep.subr.bf16.mxu0 %v486
    %721 = vmatpush1.bf16.msra.mxu0 %v485
    %722 = vmatprep.subr.bf16.mxu0 %v478
    %723 = vmatpush1.bf16.msra.mxu0 %v477
    %724 = vmatprep.subr.bf16.mxu0 %v470
    %725 = vmatpush1.bf16.msra.mxu0 %v469
    %726 = vmatprep.subr.bf16.mxu0 %v462
    %727 = vmatpush1.bf16.msra.mxu0 %v461
    %728 = vmatprep.subr.bf16.mxu0 0
    %729 = vmatpush2.bf16.msra.mxu0 0
    %730 = vmatprep.subr.bf16.mxu0 0
    %731 = vmatpush2.bf16.msra.mxu0 0
    %732 = vmatprep.subr.bf16.mxu0 0
    %733 = vmatpush2.bf16.msra.mxu0 0
    %734 = vmatprep.subr.bf16.mxu0 0
    %735 = vmatpush2.bf16.msra.mxu0 0
    %736 = vmatprep.subr.bf16.mxu0 0
    %737 = vmatpush2.bf16.msra.mxu0 0
    %738 = vmatprep.subr.bf16.mxu0 0
    %739 = vmatpush2.bf16.msra.mxu0 0
    %740 = vmatprep.subr.bf16.mxu0 0
    %741 = vmatpush2.bf16.msra.mxu0 0
    %742 = vmatprep.subr.bf16.mxu0 0
    %743 = vmatpush2.bf16.msra.mxu0 0
    %744 = vmatprep.mubr.bf16.mxu0 0
    %745 = vmatmul.mubr.bf16.gmra.mxu0 %v156
    %v746 = vpop.f32.mrf.mxu0
    %v747 = vadd.f32 %v250, %v746
    %v748 = vpop.f32.mrf.mxu0
    %v749 = vadd.f32 %v254, %v748
    %v750 = vpop.f32.mrf.mxu0
    %v751 = vadd.f32 %v250, %v750
    %v752 = vpop.f32.mrf.mxu0
    %v753 = vadd.f32 %v254, %v752
    %754 = vdwg.mxu0
    %v755 = vmax.f32 %v618, 0.0
    %v756 = vmax.f32 %v620, 0.0
    %v757 = vmax.f32 %v661, 0.0
    %v758 = vmax.f32 %v663, 0.0
    %v759 = vmax.f32 %v704, 0.0
    %v760 = vmax.f32 %v706, 0.0
    %v761 = vmax.f32 %v747, 0.0
    %v762 = vmax.f32 %v749, 0.0
    %v763 = vmax.f32 %v622, 0.0
    %v764 = vmax.f32 %v624, 0.0
    %v765 = vmax.f32 %v665, 0.0
    %v766 = vmax.f32 %v667, 0.0
    %v767 = vmax.f32 %v708, 0.0
    %v768 = vmax.f32 %v710, 0.0
    %v769 = vmax.f32 %v751, 0.0
    %v770 = vmax.f32 %v753, 0.0
    %v771 = vpack.c.bf16 %v763, %v755
    %v772 = vpack.c.bf16 %v764, %v756
    %v773 = vpack.c.bf16 %v765, %v757
    %v774 = vpack.c.bf16 %v766, %v758
    %v775 = vpack.c.bf16 %v767, %v759
    %v776 = vpack.c.bf16 %v768, %v760
    %v777 = vpack.c.bf16 %v769, %v761
    %v778 = vpack.c.bf16 %v770, %v762
    %v779 = vld [vmem:[#allocation6] sm:$0xff]
    %v780 = vld [vmem:[#allocation6 + $0x8] sm:$0xff]
    %v781 = vld [vmem:[#allocation6 + $0x10] sm:$0xff]
    %v782 = vld [vmem:[#allocation6 + $0x18] sm:$0xff]
    %v783 = vld [vmem:[#allocation6 + $0x20] sm:$0xff]
    %v784 = vld [vmem:[#allocation6 + $0x28] sm:$0xff]
    %v785 = vld [vmem:[#allocation6 + $0x30] sm:$0xff]
    %v786 = vld [vmem:[#allocation6 + $0x38] sm:$0xff]
    %v787 = vld [vmem:[#allocation6 + $0x40] sm:$0xff]
    %v788 = vld [vmem:[#allocation6 + $0x48] sm:$0xff]
    %v789 = vld [vmem:[#allocation6 + $0x50] sm:$0xff]
    %v790 = vld [vmem:[#allocation6 + $0x58] sm:$0xff]
    %v791 = vld [vmem:[#allocation6 + $0x60] sm:$0xff]
    %v792 = vld [vmem:[#allocation6 + $0x68] sm:$0xff]
    %v793 = vld [vmem:[#allocation6 + $0x70] sm:$0xff]
    %v794 = vld [vmem:[#allocation6 + $0x78] sm:$0xff]
    %v795 = vld [vmem:[#allocation6 + $0x80] sm:$0xff]
    %v796 = vld [vmem:[#allocation6 + $0x88] sm:$0xff]
    %v797 = vld [vmem:[#allocation6 + $0x90] sm:$0xff]
    %v798 = vld [vmem:[#allocation6 + $0x98] sm:$0xff]
    %v799 = vld [vmem:[#allocation6 + $0xa0] sm:$0xff]
    %v800 = vld [vmem:[#allocation6 + $0xa8] sm:$0xff]
    %v801 = vld [vmem:[#allocation6 + $0xb0] sm:$0xff]
    %v802 = vld [vmem:[#allocation6 + $0xb8] sm:$0xff]
    %v803 = vld [vmem:[#allocation6 + $0xc0] sm:$0xff]
    %v804 = vld [vmem:[#allocation6 + $0xc8] sm:$0xff]
    %v805 = vld [vmem:[#allocation6 + $0xd0] sm:$0xff]
    %v806 = vld [vmem:[#allocation6 + $0xd8] sm:$0xff]
    %v807 = vld [vmem:[#allocation6 + $0xe0] sm:$0xff]
    %v808 = vld [vmem:[#allocation6 + $0xe8] sm:$0xff]
    %v809 = vld [vmem:[#allocation6 + $0xf0] sm:$0xff]
    %v810 = vld [vmem:[#allocation6 + $0xf8] sm:$0xff]
    %v811 = vld [vmem:[#allocation6 + $0x100] sm:$0xff]
    %v812 = vld [vmem:[#allocation6 + $0x108] sm:$0xff]
    %v813 = vld [vmem:[#allocation6 + $0x110] sm:$0xff]
    %v814 = vld [vmem:[#allocation6 + $0x118] sm:$0xff]
    %v815 = vld [vmem:[#allocation6 + $0x120] sm:$0xff]
    %v816 = vld [vmem:[#allocation6 + $0x128] sm:$0xff]
    %v817 = vld [vmem:[#allocation6 + $0x130] sm:$0xff]
    %v818 = vld [vmem:[#allocation6 + $0x138] sm:$0xff]
    %v819 = vld [vmem:[#allocation6 + $0x140] sm:$0xff]
    %v820 = vld [vmem:[#allocation6 + $0x148] sm:$0xff]
    %v821 = vld [vmem:[#allocation6 + $0x150] sm:$0xff]
    %v822 = vld [vmem:[#allocation6 + $0x158] sm:$0xff]
    %v823 = vld [vmem:[#allocation6 + $0x160] sm:$0xff]
    %v824 = vld [vmem:[#allocation6 + $0x168] sm:$0xff]
    %v825 = vld [vmem:[#allocation6 + $0x170] sm:$0xff]
    %v826 = vld [vmem:[#allocation6 + $0x178] sm:$0xff]
    %v827 = vld [vmem:[#allocation6 + $0x180] sm:$0xff]
    %v828 = vld [vmem:[#allocation6 + $0x188] sm:$0xff]
    %v829 = vld [vmem:[#allocation6 + $0x190] sm:$0xff]
    %v830 = vld [vmem:[#allocation6 + $0x198] sm:$0xff]
    %v831 = vld [vmem:[#allocation6 + $0x1a0] sm:$0xff]
    %v832 = vld [vmem:[#allocation6 + $0x1a8] sm:$0xff]
    %v833 = vld [vmem:[#allocation6 + $0x1b0] sm:$0xff]
    %v834 = vld [vmem:[#allocation6 + $0x1b8] sm:$0xff]
    %v835 = vld [vmem:[#allocation6 + $0x1c0] sm:$0xff]
    %v836 = vld [vmem:[#allocation6 + $0x1c8] sm:$0xff]
    %v837 = vld [vmem:[#allocation6 + $0x1d0] sm:$0xff]
    %v838 = vld [vmem:[#allocation6 + $0x1d8] sm:$0xff]
    %v839 = vld [vmem:[#allocation6 + $0x1e0] sm:$0xff]
    %v840 = vld [vmem:[#allocation6 + $0x1e8] sm:$0xff]
    %v841 = vld [vmem:[#allocation6 + $0x1f0] sm:$0xff]
    %v842 = vld [vmem:[#allocation6 + $0x1f8] sm:$0xff]
    %v843 = vld [vmem:[#allocation6 + $0x200] sm:$0xff]
    %v844 = vld [vmem:[#allocation6 + $0x208] sm:$0xff]
    %v845 = vld [vmem:[#allocation6 + $0x210] sm:$0xff]
    %v846 = vld [vmem:[#allocation6 + $0x218] sm:$0xff]
    %v847 = vld [vmem:[#allocation6 + $0x220] sm:$0xff]
    %v848 = vld [vmem:[#allocation6 + $0x228] sm:$0xff]
    %v849 = vld [vmem:[#allocation6 + $0x230] sm:$0xff]
    %v850 = vld [vmem:[#allocation6 + $0x238] sm:$0xff]
    %v851 = vld [vmem:[#allocation6 + $0x240] sm:$0xff]
    %v852 = vld [vmem:[#allocation6 + $0x248] sm:$0xff]
    %v853 = vld [vmem:[#allocation6 + $0x250] sm:$0xff]
    %v854 = vld [vmem:[#allocation6 + $0x258] sm:$0xff]
    %v855 = vld [vmem:[#allocation6 + $0x260] sm:$0xff]
    %v856 = vld [vmem:[#allocation6 + $0x268] sm:$0xff]
    %v857 = vld [vmem:[#allocation6 + $0x270] sm:$0xff]
    %v858 = vld [vmem:[#allocation6 + $0x278] sm:$0xff]
    %v859 = vld [vmem:[#allocation6 + $0x280] sm:$0xff]
    %v860 = vld [vmem:[#allocation6 + $0x288] sm:$0xff]
    %v861 = vld [vmem:[#allocation6 + $0x290] sm:$0xff]
    %v862 = vld [vmem:[#allocation6 + $0x298] sm:$0xff]
    %v863 = vld [vmem:[#allocation6 + $0x2a0] sm:$0xff]
    %v864 = vld [vmem:[#allocation6 + $0x2a8] sm:$0xff]
    %v865 = vld [vmem:[#allocation6 + $0x2b0] sm:$0xff]
    %v866 = vld [vmem:[#allocation6 + $0x2b8] sm:$0xff]
    %v867 = vld [vmem:[#allocation6 + $0x2c0] sm:$0xff]
    %v868 = vld [vmem:[#allocation6 + $0x2c8] sm:$0xff]
    %v869 = vld [vmem:[#allocation6 + $0x2d0] sm:$0xff]
    %v870 = vld [vmem:[#allocation6 + $0x2d8] sm:$0xff]
    %v871 = vld [vmem:[#allocation6 + $0x2e0] sm:$0xff]
    %v872 = vld [vmem:[#allocation6 + $0x2e8] sm:$0xff]
    %v873 = vld [vmem:[#allocation6 + $0x2f0] sm:$0xff]
    %v874 = vld [vmem:[#allocation6 + $0x2f8] sm:$0xff]
    %v875 = vld [vmem:[#allocation6 + $0x300] sm:$0xff]
    %v876 = vld [vmem:[#allocation6 + $0x308] sm:$0xff]
    %v877 = vld [vmem:[#allocation6 + $0x310] sm:$0xff]
    %v878 = vld [vmem:[#allocation6 + $0x318] sm:$0xff]
    %v879 = vld [vmem:[#allocation6 + $0x320] sm:$0xff]
    %v880 = vld [vmem:[#allocation6 + $0x328] sm:$0xff]
    %v881 = vld [vmem:[#allocation6 + $0x330] sm:$0xff]
    %v882 = vld [vmem:[#allocation6 + $0x338] sm:$0xff]
    %v883 = vld [vmem:[#allocation6 + $0x340] sm:$0xff]
    %v884 = vld [vmem:[#allocation6 + $0x348] sm:$0xff]
    %v885 = vld [vmem:[#allocation6 + $0x350] sm:$0xff]
    %v886 = vld [vmem:[#allocation6 + $0x358] sm:$0xff]
    %v887 = vld [vmem:[#allocation6 + $0x360] sm:$0xff]
    %v888 = vld [vmem:[#allocation6 + $0x368] sm:$0xff]
    %v889 = vld [vmem:[#allocation6 + $0x370] sm:$0xff]
    %v890 = vld [vmem:[#allocation6 + $0x378] sm:$0xff]
    %v891 = vld [vmem:[#allocation6 + $0x380] sm:$0xff]
    %v892 = vld [vmem:[#allocation6 + $0x388] sm:$0xff]
    %v893 = vld [vmem:[#allocation6 + $0x390] sm:$0xff]
    %v894 = vld [vmem:[#allocation6 + $0x398] sm:$0xff]
    %v895 = vld [vmem:[#allocation6 + $0x3a0] sm:$0xff]
    %v896 = vld [vmem:[#allocation6 + $0x3a8] sm:$0xff]
    %v897 = vld [vmem:[#allocation6 + $0x3b0] sm:$0xff]
    %v898 = vld [vmem:[#allocation6 + $0x3b8] sm:$0xff]
    %v899 = vld [vmem:[#allocation6 + $0x3c0] sm:$0xff]
    %v900 = vld [vmem:[#allocation6 + $0x3c8] sm:$0xff]
    %v901 = vld [vmem:[#allocation6 + $0x3d0] sm:$0xff]
    %v902 = vld [vmem:[#allocation6 + $0x3d8] sm:$0xff]
    %v903 = vld [vmem:[#allocation6 + $0x3e0] sm:$0xff]
    %v904 = vld [vmem:[#allocation6 + $0x3e8] sm:$0xff]
    %v905 = vld [vmem:[#allocation6 + $0x3f0] sm:$0xff]
    %v906 = vld [vmem:[#allocation6 + $0x3f8] sm:$0xff]
    %v907 = vld [vmem:[#allocation6 + $0x400] sm:$0xff]
    %v908 = vld [vmem:[#allocation6 + $0x408] sm:$0xff]
    %v909 = vld [vmem:[#allocation6 + $0x410] sm:$0xff]
    %v910 = vld [vmem:[#allocation6 + $0x418] sm:$0xff]
    %v911 = vld [vmem:[#allocation6 + $0x420] sm:$0xff]
    %v912 = vld [vmem:[#allocation6 + $0x428] sm:$0xff]
    %v913 = vld [vmem:[#allocation6 + $0x430] sm:$0xff]
    %v914 = vld [vmem:[#allocation6 + $0x438] sm:$0xff]
    %v915 = vld [vmem:[#allocation6 + $0x440] sm:$0xff]
    %v916 = vld [vmem:[#allocation6 + $0x448] sm:$0xff]
    %v917 = vld [vmem:[#allocation6 + $0x450] sm:$0xff]
    %v918 = vld [vmem:[#allocation6 + $0x458] sm:$0xff]
    %v919 = vld [vmem:[#allocation6 + $0x460] sm:$0xff]
    %v920 = vld [vmem:[#allocation6 + $0x468] sm:$0xff]
    %v921 = vld [vmem:[#allocation6 + $0x470] sm:$0xff]
    %v922 = vld [vmem:[#allocation6 + $0x478] sm:$0xff]
    %v923 = vld [vmem:[#allocation6 + $0x480] sm:$0xff]
    %v924 = vld [vmem:[#allocation6 + $0x488] sm:$0xff]
    %v925 = vld [vmem:[#allocation6 + $0x490] sm:$0xff]
    %v926 = vld [vmem:[#allocation6 + $0x498] sm:$0xff]
    %v927 = vld [vmem:[#allocation6 + $0x4a0] sm:$0xff]
    %v928 = vld [vmem:[#allocation6 + $0x4a8] sm:$0xff]
    %v929 = vld [vmem:[#allocation6 + $0x4b0] sm:$0xff]
    %v930 = vld [vmem:[#allocation6 + $0x4b8] sm:$0xff]
    %v931 = vld [vmem:[#allocation6 + $0x4c0] sm:$0xff]
    %v932 = vld [vmem:[#allocation6 + $0x4c8] sm:$0xff]
    %v933 = vld [vmem:[#allocation6 + $0x4d0] sm:$0xff]
    %v934 = vld [vmem:[#allocation6 + $0x4d8] sm:$0xff]
    %v935 = vld [vmem:[#allocation6 + $0x4e0] sm:$0xff]
    %v936 = vld [vmem:[#allocation6 + $0x4e8] sm:$0xff]
    %v937 = vld [vmem:[#allocation6 + $0x4f0] sm:$0xff]
    %v938 = vld [vmem:[#allocation6 + $0x4f8] sm:$0xff]
    %v939 = vld [vmem:[#allocation6 + $0x500] sm:$0xff]
    %v940 = vld [vmem:[#allocation6 + $0x508] sm:$0xff]
    %v941 = vld [vmem:[#allocation6 + $0x510] sm:$0xff]
    %v942 = vld [vmem:[#allocation6 + $0x518] sm:$0xff]
    %v943 = vld [vmem:[#allocation6 + $0x520] sm:$0xff]
    %v944 = vld [vmem:[#allocation6 + $0x528] sm:$0xff]
    %v945 = vld [vmem:[#allocation6 + $0x530] sm:$0xff]
    %v946 = vld [vmem:[#allocation6 + $0x538] sm:$0xff]
    %v947 = vld [vmem:[#allocation6 + $0x540] sm:$0xff]
    %v948 = vld [vmem:[#allocation6 + $0x548] sm:$0xff]
    %v949 = vld [vmem:[#allocation6 + $0x550] sm:$0xff]
    %v950 = vld [vmem:[#allocation6 + $0x558] sm:$0xff]
    %v951 = vld [vmem:[#allocation6 + $0x560] sm:$0xff]
    %v952 = vld [vmem:[#allocation6 + $0x568] sm:$0xff]
    %v953 = vld [vmem:[#allocation6 + $0x570] sm:$0xff]
    %v954 = vld [vmem:[#allocation6 + $0x578] sm:$0xff]
    %v955 = vld [vmem:[#allocation6 + $0x580] sm:$0xff]
    %v956 = vld [vmem:[#allocation6 + $0x588] sm:$0xff]
    %v957 = vld [vmem:[#allocation6 + $0x590] sm:$0xff]
    %v958 = vld [vmem:[#allocation6 + $0x598] sm:$0xff]
    %v959 = vld [vmem:[#allocation6 + $0x5a0] sm:$0xff]
    %v960 = vld [vmem:[#allocation6 + $0x5a8] sm:$0xff]
    %v961 = vld [vmem:[#allocation6 + $0x5b0] sm:$0xff]
    %v962 = vld [vmem:[#allocation6 + $0x5b8] sm:$0xff]
    %v963 = vld [vmem:[#allocation6 + $0x5c0] sm:$0xff]
    %v964 = vld [vmem:[#allocation6 + $0x5c8] sm:$0xff]
    %v965 = vld [vmem:[#allocation6 + $0x5d0] sm:$0xff]
    %v966 = vld [vmem:[#allocation6 + $0x5d8] sm:$0xff]
    %v967 = vld [vmem:[#allocation6 + $0x5e0] sm:$0xff]
    %v968 = vld [vmem:[#allocation6 + $0x5e8] sm:$0xff]
    %v969 = vld [vmem:[#allocation6 + $0x5f0] sm:$0xff]
    %v970 = vld [vmem:[#allocation6 + $0x5f8] sm:$0xff]
    %v971 = vld [vmem:[#allocation6 + $0x600] sm:$0xff]
    %v972 = vld [vmem:[#allocation6 + $0x608] sm:$0xff]
    %v973 = vld [vmem:[#allocation6 + $0x610] sm:$0xff]
    %v974 = vld [vmem:[#allocation6 + $0x618] sm:$0xff]
    %v975 = vld [vmem:[#allocation6 + $0x620] sm:$0xff]
    %v976 = vld [vmem:[#allocation6 + $0x628] sm:$0xff]
    %v977 = vld [vmem:[#allocation6 + $0x630] sm:$0xff]
    %v978 = vld [vmem:[#allocation6 + $0x638] sm:$0xff]
    %v979 = vld [vmem:[#allocation6 + $0x640] sm:$0xff]
    %v980 = vld [vmem:[#allocation6 + $0x648] sm:$0xff]
    %v981 = vld [vmem:[#allocation6 + $0x650] sm:$0xff]
    %v982 = vld [vmem:[#allocation6 + $0x658] sm:$0xff]
    %v983 = vld [vmem:[#allocation6 + $0x660] sm:$0xff]
    %v984 = vld [vmem:[#allocation6 + $0x668] sm:$0xff]
    %v985 = vld [vmem:[#allocation6 + $0x670] sm:$0xff]
    %v986 = vld [vmem:[#allocation6 + $0x678] sm:$0xff]
    %v987 = vld [vmem:[#allocation6 + $0x680] sm:$0xff]
    %v988 = vld [vmem:[#allocation6 + $0x688] sm:$0xff]
    %v989 = vld [vmem:[#allocation6 + $0x690] sm:$0xff]
    %v990 = vld [vmem:[#allocation6 + $0x698] sm:$0xff]
    %v991 = vld [vmem:[#allocation6 + $0x6a0] sm:$0xff]
    %v992 = vld [vmem:[#allocation6 + $0x6a8] sm:$0xff]
    %v993 = vld [vmem:[#allocation6 + $0x6b0] sm:$0xff]
    %v994 = vld [vmem:[#allocation6 + $0x6b8] sm:$0xff]
    %v995 = vld [vmem:[#allocation6 + $0x6c0] sm:$0xff]
    %v996 = vld [vmem:[#allocation6 + $0x6c8] sm:$0xff]
    %v997 = vld [vmem:[#allocation6 + $0x6d0] sm:$0xff]
    %v998 = vld [vmem:[#allocation6 + $0x6d8] sm:$0xff]
    %v999 = vld [vmem:[#allocation6 + $0x6e0] sm:$0xff]
    %v1000 = vld [vmem:[#allocation6 + $0x6e8] sm:$0xff]
    %v1001 = vld [vmem:[#allocation6 + $0x6f0] sm:$0xff]
    %v1002 = vld [vmem:[#allocation6 + $0x6f8] sm:$0xff]
    %v1003 = vld [vmem:[#allocation6 + $0x700] sm:$0xff]
    %v1004 = vld [vmem:[#allocation6 + $0x708] sm:$0xff]
    %v1005 = vld [vmem:[#allocation6 + $0x710] sm:$0xff]
    %v1006 = vld [vmem:[#allocation6 + $0x718] sm:$0xff]
    %v1007 = vld [vmem:[#allocation6 + $0x720] sm:$0xff]
    %v1008 = vld [vmem:[#allocation6 + $0x728] sm:$0xff]
    %v1009 = vld [vmem:[#allocation6 + $0x730] sm:$0xff]
    %v1010 = vld [vmem:[#allocation6 + $0x738] sm:$0xff]
    %v1011 = vld [vmem:[#allocation6 + $0x740] sm:$0xff]
    %v1012 = vld [vmem:[#allocation6 + $0x748] sm:$0xff]
    %v1013 = vld [vmem:[#allocation6 + $0x750] sm:$0xff]
    %v1014 = vld [vmem:[#allocation6 + $0x758] sm:$0xff]
    %v1015 = vld [vmem:[#allocation6 + $0x760] sm:$0xff]
    %v1016 = vld [vmem:[#allocation6 + $0x768] sm:$0xff]
    %v1017 = vld [vmem:[#allocation6 + $0x770] sm:$0xff]
    %v1018 = vld [vmem:[#allocation6 + $0x778] sm:$0xff]
    %v1019 = vld [vmem:[#allocation6 + $0x780] sm:$0xff]
    %v1020 = vld [vmem:[#allocation6 + $0x788] sm:$0xff]
    %v1021 = vld [vmem:[#allocation6 + $0x790] sm:$0xff]
    %v1022 = vld [vmem:[#allocation6 + $0x798] sm:$0xff]
    %v1023 = vld [vmem:[#allocation6 + $0x7a0] sm:$0xff]
    %v1024 = vld [vmem:[#allocation6 + $0x7a8] sm:$0xff]
    %v1025 = vld [vmem:[#allocation6 + $0x7b0] sm:$0xff]
    %v1026 = vld [vmem:[#allocation6 + $0x7b8] sm:$0xff]
    %v1027 = vld [vmem:[#allocation6 + $0x7c0] sm:$0xff]
    %v1028 = vld [vmem:[#allocation6 + $0x7c8] sm:$0xff]
    %v1029 = vld [vmem:[#allocation6 + $0x7d0] sm:$0xff]
    %v1030 = vld [vmem:[#allocation6 + $0x7d8] sm:$0xff]
    %v1031 = vld [vmem:[#allocation6 + $0x7e0] sm:$0xff]
    %v1032 = vld [vmem:[#allocation6 + $0x7e8] sm:$0xff]
    %v1033 = vld [vmem:[#allocation6 + $0x7f0] sm:$0xff]
    %v1034 = vld [vmem:[#allocation6 + $0x7f8] sm:$0xff]
    %v1035 = vld [vmem:[%s7] sm:$0xf]
    %v1037 = vlaneseq
    %v1038 = vshrl.u32 %v1037, 7
    %v1039 = vsub.s32 0, %v1038
    %v1040 = vrot.slane %v1035, %v1039
    %v1041 = vlaneseq
    %v1042 = vshrl.u32 %v1041, 7
    %v1043 = vsub.s32 1, %v1042
    %v1044 = vrot.slane %v1035, %v1043
    %v1045 = vlaneseq
    %v1046 = vshrl.u32 %v1045, 7
    %v1047 = vsub.s32 2, %v1046
    %v1048 = vrot.slane %v1035, %v1047
    %v1049 = vlaneseq
    %v1050 = vshrl.u32 %v1049, 7
    %v1051 = vsub.s32 3, %v1050
    %v1052 = vrot.slane %v1035, %v1051
    %v1313 = vunpack.c.l.b16 %v779
    %v1314 = vunpack.c.h.b16 %v779
    %v1315 = vunpack.c.l.b16 %v780
    %v1316 = vunpack.c.h.b16 %v780
    %v1317 = vunpack.c.l.b16 %v781
    %v1318 = vunpack.c.h.b16 %v781
    %v1319 = vunpack.c.l.b16 %v782
    %v1320 = vunpack.c.h.b16 %v782
    %v1321 = vunpack.c.l.b16 %v783
    %v1322 = vunpack.c.h.b16 %v783
    %v1323 = vunpack.c.l.b16 %v784
    %v1324 = vunpack.c.h.b16 %v784
    %v1325 = vunpack.c.l.b16 %v785
    %v1326 = vunpack.c.h.b16 %v785
    %v1327 = vunpack.c.l.b16 %v786
    %v1328 = vunpack.c.h.b16 %v786
    %v1329 = vunpack.c.l.b16 %v787
    %v1330 = vunpack.c.h.b16 %v787
    %v1331 = vunpack.c.l.b16 %v788
    %v1332 = vunpack.c.h.b16 %v788
    %v1333 = vunpack.c.l.b16 %v789
    %v1334 = vunpack.c.h.b16 %v789
    %v1335 = vunpack.c.l.b16 %v790
    %v1336 = vunpack.c.h.b16 %v790
    %v1337 = vunpack.c.l.b16 %v791
    %v1338 = vunpack.c.h.b16 %v791
    %v1339 = vunpack.c.l.b16 %v792
    %v1340 = vunpack.c.h.b16 %v792
    %v1341 = vunpack.c.l.b16 %v793
    %v1342 = vunpack.c.h.b16 %v793
    %v1343 = vunpack.c.l.b16 %v794
    %v1344 = vunpack.c.h.b16 %v794
    %v1345 = vunpack.c.l.b16 %v795
    %v1346 = vunpack.c.h.b16 %v795
    %v1347 = vunpack.c.l.b16 %v796
    %v1348 = vunpack.c.h.b16 %v796
    %v1349 = vunpack.c.l.b16 %v797
    %v1350 = vunpack.c.h.b16 %v797
    %v1351 = vunpack.c.l.b16 %v798
    %v1352 = vunpack.c.h.b16 %v798
    %v1353 = vunpack.c.l.b16 %v799
    %v1354 = vunpack.c.h.b16 %v799
    %v1355 = vunpack.c.l.b16 %v800
    %v1356 = vunpack.c.h.b16 %v800
    %v1357 = vunpack.c.l.b16 %v801
    %v1358 = vunpack.c.h.b16 %v801
    %v1359 = vunpack.c.l.b16 %v802
    %v1360 = vunpack.c.h.b16 %v802
    %v1361 = vunpack.c.l.b16 %v803
    %v1362 = vunpack.c.h.b16 %v803
    %v1363 = vunpack.c.l.b16 %v804
    %v1364 = vunpack.c.h.b16 %v804
    %v1365 = vunpack.c.l.b16 %v805
    %v1366 = vunpack.c.h.b16 %v805
    %v1367 = vunpack.c.l.b16 %v806
    %v1368 = vunpack.c.h.b16 %v806
    %v1369 = vunpack.c.l.b16 %v807
    %v1370 = vunpack.c.h.b16 %v807
    %v1371 = vunpack.c.l.b16 %v808
    %v1372 = vunpack.c.h.b16 %v808
    %v1373 = vunpack.c.l.b16 %v809
    %v1374 = vunpack.c.h.b16 %v809
    %v1375 = vunpack.c.l.b16 %v810
    %v1376 = vunpack.c.h.b16 %v810
    %v1377 = vunpack.c.l.b16 %v811
    %v1378 = vunpack.c.h.b16 %v811
    %v1379 = vunpack.c.l.b16 %v812
    %v1380 = vunpack.c.h.b16 %v812
    %v1381 = vunpack.c.l.b16 %v813
    %v1382 = vunpack.c.h.b16 %v813
    %v1383 = vunpack.c.l.b16 %v814
    %v1384 = vunpack.c.h.b16 %v814
    %v1385 = vunpack.c.l.b16 %v815
    %v1386 = vunpack.c.h.b16 %v815
    %v1387 = vunpack.c.l.b16 %v816
    %v1388 = vunpack.c.h.b16 %v816
    %v1389 = vunpack.c.l.b16 %v817
    %v1390 = vunpack.c.h.b16 %v817
    %v1391 = vunpack.c.l.b16 %v818
    %v1392 = vunpack.c.h.b16 %v818
    %v1393 = vunpack.c.l.b16 %v819
    %v1394 = vunpack.c.h.b16 %v819
    %v1395 = vunpack.c.l.b16 %v820
    %v1396 = vunpack.c.h.b16 %v820
    %v1397 = vunpack.c.l.b16 %v821
    %v1398 = vunpack.c.h.b16 %v821
    %v1399 = vunpack.c.l.b16 %v822
    %v1400 = vunpack.c.h.b16 %v822
    %v1401 = vunpack.c.l.b16 %v823
    %v1402 = vunpack.c.h.b16 %v823
    %v1403 = vunpack.c.l.b16 %v824
    %v1404 = vunpack.c.h.b16 %v824
    %v1405 = vunpack.c.l.b16 %v825
    %v1406 = vunpack.c.h.b16 %v825
    %v1407 = vunpack.c.l.b16 %v826
    %v1408 = vunpack.c.h.b16 %v826
    %v1409 = vunpack.c.l.b16 %v827
    %v1410 = vunpack.c.h.b16 %v827
    %v1411 = vunpack.c.l.b16 %v828
    %v1412 = vunpack.c.h.b16 %v828
    %v1413 = vunpack.c.l.b16 %v829
    %v1414 = vunpack.c.h.b16 %v829
    %v1415 = vunpack.c.l.b16 %v830
    %v1416 = vunpack.c.h.b16 %v830
    %v1417 = vunpack.c.l.b16 %v831
    %v1418 = vunpack.c.h.b16 %v831
    %v1419 = vunpack.c.l.b16 %v832
    %v1420 = vunpack.c.h.b16 %v832
    %v1421 = vunpack.c.l.b16 %v833
    %v1422 = vunpack.c.h.b16 %v833
    %v1423 = vunpack.c.l.b16 %v834
    %v1424 = vunpack.c.h.b16 %v834
    %v1425 = vunpack.c.l.b16 %v835
    %v1426 = vunpack.c.h.b16 %v835
    %v1427 = vunpack.c.l.b16 %v836
    %v1428 = vunpack.c.h.b16 %v836
    %v1429 = vunpack.c.l.b16 %v837
    %v1430 = vunpack.c.h.b16 %v837
    %v1431 = vunpack.c.l.b16 %v838
    %v1432 = vunpack.c.h.b16 %v838
    %v1433 = vunpack.c.l.b16 %v839
    %v1434 = vunpack.c.h.b16 %v839
    %v1435 = vunpack.c.l.b16 %v840
    %v1436 = vunpack.c.h.b16 %v840
    %v1437 = vunpack.c.l.b16 %v841
    %v1438 = vunpack.c.h.b16 %v841
    %v1439 = vunpack.c.l.b16 %v842
    %v1440 = vunpack.c.h.b16 %v842
    %v1441 = vunpack.c.l.b16 %v843
    %v1442 = vunpack.c.h.b16 %v843
    %v1443 = vunpack.c.l.b16 %v844
    %v1444 = vunpack.c.h.b16 %v844
    %v1445 = vunpack.c.l.b16 %v845
    %v1446 = vunpack.c.h.b16 %v845
    %v1447 = vunpack.c.l.b16 %v846
    %v1448 = vunpack.c.h.b16 %v846
    %v1449 = vunpack.c.l.b16 %v847
    %v1450 = vunpack.c.h.b16 %v847
    %v1451 = vunpack.c.l.b16 %v848
    %v1452 = vunpack.c.h.b16 %v848
    %v1453 = vunpack.c.l.b16 %v849
    %v1454 = vunpack.c.h.b16 %v849
    %v1455 = vunpack.c.l.b16 %v850
    %v1456 = vunpack.c.h.b16 %v850
    %v1457 = vunpack.c.l.b16 %v851
    %v1458 = vunpack.c.h.b16 %v851
    %v1459 = vunpack.c.l.b16 %v852
    %v1460 = vunpack.c.h.b16 %v852
    %v1461 = vunpack.c.l.b16 %v853
    %v1462 = vunpack.c.h.b16 %v853
    %v1463 = vunpack.c.l.b16 %v854
    %v1464 = vunpack.c.h.b16 %v854
    %v1465 = vunpack.c.l.b16 %v855
    %v1466 = vunpack.c.h.b16 %v855
    %v1467 = vunpack.c.l.b16 %v856
    %v1468 = vunpack.c.h.b16 %v856
    %v1469 = vunpack.c.l.b16 %v857
    %v1470 = vunpack.c.h.b16 %v857
    %v1471 = vunpack.c.l.b16 %v858
    %v1472 = vunpack.c.h.b16 %v858
    %v1473 = vunpack.c.l.b16 %v859
    %v1474 = vunpack.c.h.b16 %v859
    %v1475 = vunpack.c.l.b16 %v860
    %v1476 = vunpack.c.h.b16 %v860
    %v1477 = vunpack.c.l.b16 %v861
    %v1478 = vunpack.c.h.b16 %v861
    %v1479 = vunpack.c.l.b16 %v862
    %v1480 = vunpack.c.h.b16 %v862
    %v1481 = vunpack.c.l.b16 %v863
    %v1482 = vunpack.c.h.b16 %v863
    %v1483 = vunpack.c.l.b16 %v864
    %v1484 = vunpack.c.h.b16 %v864
    %v1485 = vunpack.c.l.b16 %v865
    %v1486 = vunpack.c.h.b16 %v865
    %v1487 = vunpack.c.l.b16 %v866
    %v1488 = vunpack.c.h.b16 %v866
    %v1489 = vunpack.c.l.b16 %v867
    %v1490 = vunpack.c.h.b16 %v867
    %v1491 = vunpack.c.l.b16 %v868
    %v1492 = vunpack.c.h.b16 %v868
    %v1493 = vunpack.c.l.b16 %v869
    %v1494 = vunpack.c.h.b16 %v869
    %v1495 = vunpack.c.l.b16 %v870
    %v1496 = vunpack.c.h.b16 %v870
    %v1497 = vunpack.c.l.b16 %v871
    %v1498 = vunpack.c.h.b16 %v871
    %v1499 = vunpack.c.l.b16 %v872
    %v1500 = vunpack.c.h.b16 %v872
    %v1501 = vunpack.c.l.b16 %v873
    %v1502 = vunpack.c.h.b16 %v873
    %v1503 = vunpack.c.l.b16 %v874
    %v1504 = vunpack.c.h.b16 %v874
    %v1505 = vunpack.c.l.b16 %v875
    %v1506 = vunpack.c.h.b16 %v875
    %v1507 = vunpack.c.l.b16 %v876
    %v1508 = vunpack.c.h.b16 %v876
    %v1509 = vunpack.c.l.b16 %v877
    %v1510 = vunpack.c.h.b16 %v877
    %v1511 = vunpack.c.l.b16 %v878
    %v1512 = vunpack.c.h.b16 %v878
    %v1513 = vunpack.c.l.b16 %v879
    %v1514 = vunpack.c.h.b16 %v879
    %v1515 = vunpack.c.l.b16 %v880
    %v1516 = vunpack.c.h.b16 %v880
    %v1517 = vunpack.c.l.b16 %v881
    %v1518 = vunpack.c.h.b16 %v881
    %v1519 = vunpack.c.l.b16 %v882
    %v1520 = vunpack.c.h.b16 %v882
    %v1521 = vunpack.c.l.b16 %v883
    %v1522 = vunpack.c.h.b16 %v883
    %v1523 = vunpack.c.l.b16 %v884
    %v1524 = vunpack.c.h.b16 %v884
    %v1525 = vunpack.c.l.b16 %v885
    %v1526 = vunpack.c.h.b16 %v885
    %v1527 = vunpack.c.l.b16 %v886
    %v1528 = vunpack.c.h.b16 %v886
    %v1529 = vunpack.c.l.b16 %v887
    %v1530 = vunpack.c.h.b16 %v887
    %v1531 = vunpack.c.l.b16 %v888
    %v1532 = vunpack.c.h.b16 %v888
    %v1533 = vunpack.c.l.b16 %v889
    %v1534 = vunpack.c.h.b16 %v889
    %v1535 = vunpack.c.l.b16 %v890
    %v1536 = vunpack.c.h.b16 %v890
    %v1537 = vunpack.c.l.b16 %v891
    %v1538 = vunpack.c.h.b16 %v891
    %v1539 = vunpack.c.l.b16 %v892
    %v1540 = vunpack.c.h.b16 %v892
    %v1541 = vunpack.c.l.b16 %v893
    %v1542 = vunpack.c.h.b16 %v893
    %v1543 = vunpack.c.l.b16 %v894
    %v1544 = vunpack.c.h.b16 %v894
    %v1545 = vunpack.c.l.b16 %v895
    %v1546 = vunpack.c.h.b16 %v895
    %v1547 = vunpack.c.l.b16 %v896
    %v1548 = vunpack.c.h.b16 %v896
    %v1549 = vunpack.c.l.b16 %v897
    %v1550 = vunpack.c.h.b16 %v897
    %v1551 = vunpack.c.l.b16 %v898
    %v1552 = vunpack.c.h.b16 %v898
    %v1553 = vunpack.c.l.b16 %v899
    %v1554 = vunpack.c.h.b16 %v899
    %v1555 = vunpack.c.l.b16 %v900
    %v1556 = vunpack.c.h.b16 %v900
    %v1557 = vunpack.c.l.b16 %v901
    %v1558 = vunpack.c.h.b16 %v901
    %v1559 = vunpack.c.l.b16 %v902
    %v1560 = vunpack.c.h.b16 %v902
    %v1561 = vunpack.c.l.b16 %v903
    %v1562 = vunpack.c.h.b16 %v903
    %v1563 = vunpack.c.l.b16 %v904
    %v1564 = vunpack.c.h.b16 %v904
    %v1565 = vunpack.c.l.b16 %v905
    %v1566 = vunpack.c.h.b16 %v905
    %v1567 = vunpack.c.l.b16 %v906
    %v1568 = vunpack.c.h.b16 %v906
    %v1569 = vunpack.c.l.b16 %v907
    %v1570 = vunpack.c.h.b16 %v907
    %v1571 = vunpack.c.l.b16 %v908
    %v1572 = vunpack.c.h.b16 %v908
    %v1573 = vunpack.c.l.b16 %v909
    %v1574 = vunpack.c.h.b16 %v909
    %v1575 = vunpack.c.l.b16 %v910
    %v1576 = vunpack.c.h.b16 %v910
    %v1577 = vunpack.c.l.b16 %v911
    %v1578 = vunpack.c.h.b16 %v911
    %v1579 = vunpack.c.l.b16 %v912
    %v1580 = vunpack.c.h.b16 %v912
    %v1581 = vunpack.c.l.b16 %v913
    %v1582 = vunpack.c.h.b16 %v913
    %v1583 = vunpack.c.l.b16 %v914
    %v1584 = vunpack.c.h.b16 %v914
    %v1585 = vunpack.c.l.b16 %v915
    %v1586 = vunpack.c.h.b16 %v915
    %v1587 = vunpack.c.l.b16 %v916
    %v1588 = vunpack.c.h.b16 %v916
    %v1589 = vunpack.c.l.b16 %v917
    %v1590 = vunpack.c.h.b16 %v917
    %v1591 = vunpack.c.l.b16 %v918
    %v1592 = vunpack.c.h.b16 %v918
    %v1593 = vunpack.c.l.b16 %v919
    %v1594 = vunpack.c.h.b16 %v919
    %v1595 = vunpack.c.l.b16 %v920
    %v1596 = vunpack.c.h.b16 %v920
    %v1597 = vunpack.c.l.b16 %v921
    %v1598 = vunpack.c.h.b16 %v921
    %v1599 = vunpack.c.l.b16 %v922
    %v1600 = vunpack.c.h.b16 %v922
    %v1601 = vunpack.c.l.b16 %v923
    %v1602 = vunpack.c.h.b16 %v923
    %v1603 = vunpack.c.l.b16 %v924
    %v1604 = vunpack.c.h.b16 %v924
    %v1605 = vunpack.c.l.b16 %v925
    %v1606 = vunpack.c.h.b16 %v925
    %v1607 = vunpack.c.l.b16 %v926
    %v1608 = vunpack.c.h.b16 %v926
    %v1609 = vunpack.c.l.b16 %v927
    %v1610 = vunpack.c.h.b16 %v927
    %v1611 = vunpack.c.l.b16 %v928
    %v1612 = vunpack.c.h.b16 %v928
    %v1613 = vunpack.c.l.b16 %v929
    %v1614 = vunpack.c.h.b16 %v929
    %v1615 = vunpack.c.l.b16 %v930
    %v1616 = vunpack.c.h.b16 %v930
    %v1617 = vunpack.c.l.b16 %v931
    %v1618 = vunpack.c.h.b16 %v931
    %v1619 = vunpack.c.l.b16 %v932
    %v1620 = vunpack.c.h.b16 %v932
    %v1621 = vunpack.c.l.b16 %v933
    %v1622 = vunpack.c.h.b16 %v933
    %v1623 = vunpack.c.l.b16 %v934
    %v1624 = vunpack.c.h.b16 %v934
    %v1625 = vunpack.c.l.b16 %v935
    %v1626 = vunpack.c.h.b16 %v935
    %v1627 = vunpack.c.l.b16 %v936
    %v1628 = vunpack.c.h.b16 %v936
    %v1629 = vunpack.c.l.b16 %v937
    %v1630 = vunpack.c.h.b16 %v937
    %v1631 = vunpack.c.l.b16 %v938
    %v1632 = vunpack.c.h.b16 %v938
    %v1633 = vunpack.c.l.b16 %v939
    %v1634 = vunpack.c.h.b16 %v939
    %v1635 = vunpack.c.l.b16 %v940
    %v1636 = vunpack.c.h.b16 %v940
    %v1637 = vunpack.c.l.b16 %v941
    %v1638 = vunpack.c.h.b16 %v941
    %v1639 = vunpack.c.l.b16 %v942
    %v1640 = vunpack.c.h.b16 %v942
    %v1641 = vunpack.c.l.b16 %v943
    %v1642 = vunpack.c.h.b16 %v943
    %v1643 = vunpack.c.l.b16 %v944
    %v1644 = vunpack.c.h.b16 %v944
    %v1645 = vunpack.c.l.b16 %v945
    %v1646 = vunpack.c.h.b16 %v945
    %v1647 = vunpack.c.l.b16 %v946
    %v1648 = vunpack.c.h.b16 %v946
    %v1649 = vunpack.c.l.b16 %v947
    %v1650 = vunpack.c.h.b16 %v947
    %v1651 = vunpack.c.l.b16 %v948
    %v1652 = vunpack.c.h.b16 %v948
    %v1653 = vunpack.c.l.b16 %v949
    %v1654 = vunpack.c.h.b16 %v949
    %v1655 = vunpack.c.l.b16 %v950
    %v1656 = vunpack.c.h.b16 %v950
    %v1657 = vunpack.c.l.b16 %v951
    %v1658 = vunpack.c.h.b16 %v951
    %v1659 = vunpack.c.l.b16 %v952
    %v1660 = vunpack.c.h.b16 %v952
    %v1661 = vunpack.c.l.b16 %v953
    %v1662 = vunpack.c.h.b16 %v953
    %v1663 = vunpack.c.l.b16 %v954
    %v1664 = vunpack.c.h.b16 %v954
    %v1665 = vunpack.c.l.b16 %v955
    %v1666 = vunpack.c.h.b16 %v955
    %v1667 = vunpack.c.l.b16 %v956
    %v1668 = vunpack.c.h.b16 %v956
    %v1669 = vunpack.c.l.b16 %v957
    %v1670 = vunpack.c.h.b16 %v957
    %v1671 = vunpack.c.l.b16 %v958
    %v1672 = vunpack.c.h.b16 %v958
    %v1673 = vunpack.c.l.b16 %v959
    %v1674 = vunpack.c.h.b16 %v959
    %v1675 = vunpack.c.l.b16 %v960
    %v1676 = vunpack.c.h.b16 %v960
    %v1677 = vunpack.c.l.b16 %v961
    %v1678 = vunpack.c.h.b16 %v961
    %v1679 = vunpack.c.l.b16 %v962
    %v1680 = vunpack.c.h.b16 %v962
    %v1681 = vunpack.c.l.b16 %v963
    %v1682 = vunpack.c.h.b16 %v963
    %v1683 = vunpack.c.l.b16 %v964
    %v1684 = vunpack.c.h.b16 %v964
    %v1685 = vunpack.c.l.b16 %v965
    %v1686 = vunpack.c.h.b16 %v965
    %v1687 = vunpack.c.l.b16 %v966
    %v1688 = vunpack.c.h.b16 %v966
    %v1689 = vunpack.c.l.b16 %v967
    %v1690 = vunpack.c.h.b16 %v967
    %v1691 = vunpack.c.l.b16 %v968
    %v1692 = vunpack.c.h.b16 %v968
    %v1693 = vunpack.c.l.b16 %v969
    %v1694 = vunpack.c.h.b16 %v969
    %v1695 = vunpack.c.l.b16 %v970
    %v1696 = vunpack.c.h.b16 %v970
    %v1697 = vunpack.c.l.b16 %v971
    %v1698 = vunpack.c.h.b16 %v971
    %v1699 = vunpack.c.l.b16 %v972
    %v1700 = vunpack.c.h.b16 %v972
    %v1701 = vunpack.c.l.b16 %v973
    %v1702 = vunpack.c.h.b16 %v973
    %v1703 = vunpack.c.l.b16 %v974
    %v1704 = vunpack.c.h.b16 %v974
    %v1705 = vunpack.c.l.b16 %v975
    %v1706 = vunpack.c.h.b16 %v975
    %v1707 = vunpack.c.l.b16 %v976
    %v1708 = vunpack.c.h.b16 %v976
    %v1709 = vunpack.c.l.b16 %v977
    %v1710 = vunpack.c.h.b16 %v977
    %v1711 = vunpack.c.l.b16 %v978
    %v1712 = vunpack.c.h.b16 %v978
    %v1713 = vunpack.c.l.b16 %v979
    %v1714 = vunpack.c.h.b16 %v979
    %v1715 = vunpack.c.l.b16 %v980
    %v1716 = vunpack.c.h.b16 %v980
    %v1717 = vunpack.c.l.b16 %v981
    %v1718 = vunpack.c.h.b16 %v981
    %v1719 = vunpack.c.l.b16 %v982
    %v1720 = vunpack.c.h.b16 %v982
    %v1721 = vunpack.c.l.b16 %v983
    %v1722 = vunpack.c.h.b16 %v983
    %v1723 = vunpack.c.l.b16 %v984
    %v1724 = vunpack.c.h.b16 %v984
    %v1725 = vunpack.c.l.b16 %v985
    %v1726 = vunpack.c.h.b16 %v985
    %v1727 = vunpack.c.l.b16 %v986
    %v1728 = vunpack.c.h.b16 %v986
    %v1729 = vunpack.c.l.b16 %v987
    %v1730 = vunpack.c.h.b16 %v987
    %v1731 = vunpack.c.l.b16 %v988
    %v1732 = vunpack.c.h.b16 %v988
    %v1733 = vunpack.c.l.b16 %v989
    %v1734 = vunpack.c.h.b16 %v989
    %v1735 = vunpack.c.l.b16 %v990
    %v1736 = vunpack.c.h.b16 %v990
    %v1737 = vunpack.c.l.b16 %v991
    %v1738 = vunpack.c.h.b16 %v991
    %v1739 = vunpack.c.l.b16 %v992
    %v1740 = vunpack.c.h.b16 %v992
    %v1741 = vunpack.c.l.b16 %v993
    %v1742 = vunpack.c.h.b16 %v993
    %v1743 = vunpack.c.l.b16 %v994
    %v1744 = vunpack.c.h.b16 %v994
    %v1745 = vunpack.c.l.b16 %v995
    %v1746 = vunpack.c.h.b16 %v995
    %v1747 = vunpack.c.l.b16 %v996
    %v1748 = vunpack.c.h.b16 %v996
    %v1749 = vunpack.c.l.b16 %v997
    %v1750 = vunpack.c.h.b16 %v997
    %v1751 = vunpack.c.l.b16 %v998
    %v1752 = vunpack.c.h.b16 %v998
    %v1753 = vunpack.c.l.b16 %v999
    %v1754 = vunpack.c.h.b16 %v999
    %v1755 = vunpack.c.l.b16 %v1000
    %v1756 = vunpack.c.h.b16 %v1000
    %v1757 = vunpack.c.l.b16 %v1001
    %v1758 = vunpack.c.h.b16 %v1001
    %v1759 = vunpack.c.l.b16 %v1002
    %v1760 = vunpack.c.h.b16 %v1002
    %v1761 = vunpack.c.l.b16 %v1003
    %v1762 = vunpack.c.h.b16 %v1003
    %v1763 = vunpack.c.l.b16 %v1004
    %v1764 = vunpack.c.h.b16 %v1004
    %v1765 = vunpack.c.l.b16 %v1005
    %v1766 = vunpack.c.h.b16 %v1005
    %v1767 = vunpack.c.l.b16 %v1006
    %v1768 = vunpack.c.h.b16 %v1006
    %v1769 = vunpack.c.l.b16 %v1007
    %v1770 = vunpack.c.h.b16 %v1007
    %v1771 = vunpack.c.l.b16 %v1008
    %v1772 = vunpack.c.h.b16 %v1008
    %v1773 = vunpack.c.l.b16 %v1009
    %v1774 = vunpack.c.h.b16 %v1009
    %v1775 = vunpack.c.l.b16 %v1010
    %v1776 = vunpack.c.h.b16 %v1010
    %v1777 = vunpack.c.l.b16 %v1011
    %v1778 = vunpack.c.h.b16 %v1011
    %v1779 = vunpack.c.l.b16 %v1012
    %v1780 = vunpack.c.h.b16 %v1012
    %v1781 = vunpack.c.l.b16 %v1013
    %v1782 = vunpack.c.h.b16 %v1013
    %v1783 = vunpack.c.l.b16 %v1014
    %v1784 = vunpack.c.h.b16 %v1014
    %v1785 = vunpack.c.l.b16 %v1015
    %v1786 = vunpack.c.h.b16 %v1015
    %v1787 = vunpack.c.l.b16 %v1016
    %v1788 = vunpack.c.h.b16 %v1016
    %v1789 = vunpack.c.l.b16 %v1017
    %v1790 = vunpack.c.h.b16 %v1017
    %v1791 = vunpack.c.l.b16 %v1018
    %v1792 = vunpack.c.h.b16 %v1018
    %v1793 = vunpack.c.l.b16 %v1019
    %v1794 = vunpack.c.h.b16 %v1019
    %v1795 = vunpack.c.l.b16 %v1020
    %v1796 = vunpack.c.h.b16 %v1020
    %v1797 = vunpack.c.l.b16 %v1021
    %v1798 = vunpack.c.h.b16 %v1021
    %v1799 = vunpack.c.l.b16 %v1022
    %v1800 = vunpack.c.h.b16 %v1022
    %v1801 = vunpack.c.l.b16 %v1023
    %v1802 = vunpack.c.h.b16 %v1023
    %v1803 = vunpack.c.l.b16 %v1024
    %v1804 = vunpack.c.h.b16 %v1024
    %v1805 = vunpack.c.l.b16 %v1025
    %v1806 = vunpack.c.h.b16 %v1025
    %v1807 = vunpack.c.l.b16 %v1026
    %v1808 = vunpack.c.h.b16 %v1026
    %v1809 = vunpack.c.l.b16 %v1027
    %v1810 = vunpack.c.h.b16 %v1027
    %v1811 = vunpack.c.l.b16 %v1028
    %v1812 = vunpack.c.h.b16 %v1028
    %v1813 = vunpack.c.l.b16 %v1029
    %v1814 = vunpack.c.h.b16 %v1029
    %v1815 = vunpack.c.l.b16 %v1030
    %v1816 = vunpack.c.h.b16 %v1030
    %v1817 = vunpack.c.l.b16 %v1031
    %v1818 = vunpack.c.h.b16 %v1031
    %v1819 = vunpack.c.l.b16 %v1032
    %v1820 = vunpack.c.h.b16 %v1032
    %v1821 = vunpack.c.l.b16 %v1033
    %v1822 = vunpack.c.h.b16 %v1033
    %v1823 = vunpack.c.l.b16 %v1034
    %v1824 = vunpack.c.h.b16 %v1034
    %v1825 = vpack.c.b16 %v1317, %v1313
    %v1826 = vpack.c.b16 %v1318, %v1314
    %v1827 = vpack.c.b16 %v1319, %v1315
    %v1828 = vpack.c.b16 %v1320, %v1316
    %v1829 = vpack.c.b16 %v1325, %v1321
    %v1830 = vpack.c.b16 %v1326, %v1322
    %v1831 = vpack.c.b16 %v1327, %v1323
    %v1832 = vpack.c.b16 %v1328, %v1324
    %v1833 = vpack.c.b16 %v1333, %v1329
    %v1834 = vpack.c.b16 %v1334, %v1330
    %v1835 = vpack.c.b16 %v1335, %v1331
    %v1836 = vpack.c.b16 %v1336, %v1332
    %v1837 = vpack.c.b16 %v1341, %v1337
    %v1838 = vpack.c.b16 %v1342, %v1338
    %v1839 = vpack.c.b16 %v1343, %v1339
    %v1840 = vpack.c.b16 %v1344, %v1340
    %v1841 = vpack.c.b16 %v1349, %v1345
    %v1842 = vpack.c.b16 %v1350, %v1346
    %v1843 = vpack.c.b16 %v1351, %v1347
    %v1844 = vpack.c.b16 %v1352, %v1348
    %v1845 = vpack.c.b16 %v1357, %v1353
    %v1846 = vpack.c.b16 %v1358, %v1354
    %v1847 = vpack.c.b16 %v1359, %v1355
    %v1848 = vpack.c.b16 %v1360, %v1356
    %v1849 = vpack.c.b16 %v1365, %v1361
    %v1850 = vpack.c.b16 %v1366, %v1362
    %v1851 = vpack.c.b16 %v1367, %v1363
    %v1852 = vpack.c.b16 %v1368, %v1364
    %v1853 = vpack.c.b16 %v1373, %v1369
    %v1854 = vpack.c.b16 %v1374, %v1370
    %v1855 = vpack.c.b16 %v1375, %v1371
    %v1856 = vpack.c.b16 %v1376, %v1372
    %v1857 = vpack.c.b16 %v1381, %v1377
    %v1858 = vpack.c.b16 %v1382, %v1378
    %v1859 = vpack.c.b16 %v1383, %v1379
    %v1860 = vpack.c.b16 %v1384, %v1380
    %v1861 = vpack.c.b16 %v1389, %v1385
    %v1862 = vpack.c.b16 %v1390, %v1386
    %v1863 = vpack.c.b16 %v1391, %v1387
    %v1864 = vpack.c.b16 %v1392, %v1388
    %v1865 = vpack.c.b16 %v1397, %v1393
    %v1866 = vpack.c.b16 %v1398, %v1394
    %v1867 = vpack.c.b16 %v1399, %v1395
    %v1868 = vpack.c.b16 %v1400, %v1396
    %v1869 = vpack.c.b16 %v1405, %v1401
    %v1870 = vpack.c.b16 %v1406, %v1402
    %v1871 = vpack.c.b16 %v1407, %v1403
    %v1872 = vpack.c.b16 %v1408, %v1404
    %v1873 = vpack.c.b16 %v1413, %v1409
    %v1874 = vpack.c.b16 %v1414, %v1410
    %v1875 = vpack.c.b16 %v1415, %v1411
    %v1876 = vpack.c.b16 %v1416, %v1412
    %v1877 = vpack.c.b16 %v1421, %v1417
    %v1878 = vpack.c.b16 %v1422, %v1418
    %v1879 = vpack.c.b16 %v1423, %v1419
    %v1880 = vpack.c.b16 %v1424, %v1420
    %v1881 = vpack.c.b16 %v1429, %v1425
    %v1882 = vpack.c.b16 %v1430, %v1426
    %v1883 = vpack.c.b16 %v1431, %v1427
    %v1884 = vpack.c.b16 %v1432, %v1428
    %v1885 = vpack.c.b16 %v1437, %v1433
    %v1886 = vpack.c.b16 %v1438, %v1434
    %v1887 = vpack.c.b16 %v1439, %v1435
    %v1888 = vpack.c.b16 %v1440, %v1436
    %v1889 = vpack.c.b16 %v1445, %v1441
    %v1890 = vpack.c.b16 %v1446, %v1442
    %v1891 = vpack.c.b16 %v1447, %v1443
    %v1892 = vpack.c.b16 %v1448, %v1444
    %v1893 = vpack.c.b16 %v1453, %v1449
    %v1894 = vpack.c.b16 %v1454, %v1450
    %v1895 = vpack.c.b16 %v1455, %v1451
    %v1896 = vpack.c.b16 %v1456, %v1452
    %v1897 = vpack.c.b16 %v1461, %v1457
    %v1898 = vpack.c.b16 %v1462, %v1458
    %v1899 = vpack.c.b16 %v1463, %v1459
    %v1900 = vpack.c.b16 %v1464, %v1460
    %v1901 = vpack.c.b16 %v1469, %v1465
    %v1902 = vpack.c.b16 %v1470, %v1466
    %v1903 = vpack.c.b16 %v1471, %v1467
    %v1904 = vpack.c.b16 %v1472, %v1468
    %v1905 = vpack.c.b16 %v1477, %v1473
    %v1906 = vpack.c.b16 %v1478, %v1474
    %v1907 = vpack.c.b16 %v1479, %v1475
    %v1908 = vpack.c.b16 %v1480, %v1476
    %v1909 = vpack.c.b16 %v1485, %v1481
    %v1910 = vpack.c.b16 %v1486, %v1482
    %v1911 = vpack.c.b16 %v1487, %v1483
    %v1912 = vpack.c.b16 %v1488, %v1484
    %v1913 = vpack.c.b16 %v1493, %v1489
    %v1914 = vpack.c.b16 %v1494, %v1490
    %v1915 = vpack.c.b16 %v1495, %v1491
    %v1916 = vpack.c.b16 %v1496, %v1492
    %v1917 = vpack.c.b16 %v1501, %v1497
    %v1918 = vpack.c.b16 %v1502, %v1498
    %v1919 = vpack.c.b16 %v1503, %v1499
    %v1920 = vpack.c.b16 %v1504, %v1500
    %v1921 = vpack.c.b16 %v1509, %v1505
    %v1922 = vpack.c.b16 %v1510, %v1506
    %v1923 = vpack.c.b16 %v1511, %v1507
    %v1924 = vpack.c.b16 %v1512, %v1508
    %v1925 = vpack.c.b16 %v1517, %v1513
    %v1926 = vpack.c.b16 %v1518, %v1514
    %v1927 = vpack.c.b16 %v1519, %v1515
    %v1928 = vpack.c.b16 %v1520, %v1516
    %v1929 = vpack.c.b16 %v1525, %v1521
    %v1930 = vpack.c.b16 %v1526, %v1522
    %v1931 = vpack.c.b16 %v1527, %v1523
    %v1932 = vpack.c.b16 %v1528, %v1524
    %v1933 = vpack.c.b16 %v1533, %v1529
    %v1934 = vpack.c.b16 %v1534, %v1530
    %v1935 = vpack.c.b16 %v1535, %v1531
    %v1936 = vpack.c.b16 %v1536, %v1532
    %v1937 = vpack.c.b16 %v1541, %v1537
    %v1938 = vpack.c.b16 %v1542, %v1538
    %v1939 = vpack.c.b16 %v1543, %v1539
    %v1940 = vpack.c.b16 %v1544, %v1540
    %v1941 = vpack.c.b16 %v1549, %v1545
    %v1942 = vpack.c.b16 %v1550, %v1546
    %v1943 = vpack.c.b16 %v1551, %v1547
    %v1944 = vpack.c.b16 %v1552, %v1548
    %v1945 = vpack.c.b16 %v1557, %v1553
    %v1946 = vpack.c.b16 %v1558, %v1554
    %v1947 = vpack.c.b16 %v1559, %v1555
    %v1948 = vpack.c.b16 %v1560, %v1556
    %v1949 = vpack.c.b16 %v1565, %v1561
    %v1950 = vpack.c.b16 %v1566, %v1562
    %v1951 = vpack.c.b16 %v1567, %v1563
    %v1952 = vpack.c.b16 %v1568, %v1564
    %v1953 = vpack.c.b16 %v1573, %v1569
    %v1954 = vpack.c.b16 %v1574, %v1570
    %v1955 = vpack.c.b16 %v1575, %v1571
    %v1956 = vpack.c.b16 %v1576, %v1572
    %v1957 = vpack.c.b16 %v1581, %v1577
    %v1958 = vpack.c.b16 %v1582, %v1578
    %v1959 = vpack.c.b16 %v1583, %v1579
    %v1960 = vpack.c.b16 %v1584, %v1580
    %v1961 = vpack.c.b16 %v1589, %v1585
    %v1962 = vpack.c.b16 %v1590, %v1586
    %v1963 = vpack.c.b16 %v1591, %v1587
    %v1964 = vpack.c.b16 %v1592, %v1588
    %v1965 = vpack.c.b16 %v1597, %v1593
    %v1966 = vpack.c.b16 %v1598, %v1594
    %v1967 = vpack.c.b16 %v1599, %v1595
    %v1968 = vpack.c.b16 %v1600, %v1596
    %v1969 = vpack.c.b16 %v1605, %v1601
    %v1970 = vpack.c.b16 %v1606, %v1602
    %v1971 = vpack.c.b16 %v1607, %v1603
    %v1972 = vpack.c.b16 %v1608, %v1604
    %v1973 = vpack.c.b16 %v1613, %v1609
    %v1974 = vpack.c.b16 %v1614, %v1610
    %v1975 = vpack.c.b16 %v1615, %v1611
    %v1976 = vpack.c.b16 %v1616, %v1612
    %v1977 = vpack.c.b16 %v1621, %v1617
    %v1978 = vpack.c.b16 %v1622, %v1618
    %v1979 = vpack.c.b16 %v1623, %v1619
    %v1980 = vpack.c.b16 %v1624, %v1620
    %v1981 = vpack.c.b16 %v1629, %v1625
    %v1982 = vpack.c.b16 %v1630, %v1626
    %v1983 = vpack.c.b16 %v1631, %v1627
    %v1984 = vpack.c.b16 %v1632, %v1628
    %v1985 = vpack.c.b16 %v1637, %v1633
    %v1986 = vpack.c.b16 %v1638, %v1634
    %v1987 = vpack.c.b16 %v1639, %v1635
    %v1988 = vpack.c.b16 %v1640, %v1636
    %v1989 = vpack.c.b16 %v1645, %v1641
    %v1990 = vpack.c.b16 %v1646, %v1642
    %v1991 = vpack.c.b16 %v1647, %v1643
    %v1992 = vpack.c.b16 %v1648, %v1644
    %v1993 = vpack.c.b16 %v1653, %v1649
    %v1994 = vpack.c.b16 %v1654, %v1650
    %v1995 = vpack.c.b16 %v1655, %v1651
    %v1996 = vpack.c.b16 %v1656, %v1652
    %v1997 = vpack.c.b16 %v1661, %v1657
    %v1998 = vpack.c.b16 %v1662, %v1658
    %v1999 = vpack.c.b16 %v1663, %v1659
    %v2000 = vpack.c.b16 %v1664, %v1660
    %v2001 = vpack.c.b16 %v1669, %v1665
    %v2002 = vpack.c.b16 %v1670, %v1666
    %v2003 = vpack.c.b16 %v1671, %v1667
    %v2004 = vpack.c.b16 %v1672, %v1668
    %v2005 = vpack.c.b16 %v1677, %v1673
    %v2006 = vpack.c.b16 %v1678, %v1674
    %v2007 = vpack.c.b16 %v1679, %v1675
    %v2008 = vpack.c.b16 %v1680, %v1676
    %v2009 = vpack.c.b16 %v1685, %v1681
    %v2010 = vpack.c.b16 %v1686, %v1682
    %v2011 = vpack.c.b16 %v1687, %v1683
    %v2012 = vpack.c.b16 %v1688, %v1684
    %v2013 = vpack.c.b16 %v1693, %v1689
    %v2014 = vpack.c.b16 %v1694, %v1690
    %v2015 = vpack.c.b16 %v1695, %v1691
    %v2016 = vpack.c.b16 %v1696, %v1692
    %v2017 = vpack.c.b16 %v1701, %v1697
    %v2018 = vpack.c.b16 %v1702, %v1698
    %v2019 = vpack.c.b16 %v1703, %v1699
    %v2020 = vpack.c.b16 %v1704, %v1700
    %v2021 = vpack.c.b16 %v1709, %v1705
    %v2022 = vpack.c.b16 %v1710, %v1706
    %v2023 = vpack.c.b16 %v1711, %v1707
    %v2024 = vpack.c.b16 %v1712, %v1708
    %v2025 = vpack.c.b16 %v1717, %v1713
    %v2026 = vpack.c.b16 %v1718, %v1714
    %v2027 = vpack.c.b16 %v1719, %v1715
    %v2028 = vpack.c.b16 %v1720, %v1716
    %v2029 = vpack.c.b16 %v1725, %v1721
    %v2030 = vpack.c.b16 %v1726, %v1722
    %v2031 = vpack.c.b16 %v1727, %v1723
    %v2032 = vpack.c.b16 %v1728, %v1724
    %v2033 = vpack.c.b16 %v1733, %v1729
    %v2034 = vpack.c.b16 %v1734, %v1730
    %v2035 = vpack.c.b16 %v1735, %v1731
    %v2036 = vpack.c.b16 %v1736, %v1732
    %v2037 = vpack.c.b16 %v1741, %v1737
    %v2038 = vpack.c.b16 %v1742, %v1738
    %v2039 = vpack.c.b16 %v1743, %v1739
    %v2040 = vpack.c.b16 %v1744, %v1740
    %v2041 = vpack.c.b16 %v1749, %v1745
    %v2042 = vpack.c.b16 %v1750, %v1746
    %v2043 = vpack.c.b16 %v1751, %v1747
    %v2044 = vpack.c.b16 %v1752, %v1748
    %v2045 = vpack.c.b16 %v1757, %v1753
    %v2046 = vpack.c.b16 %v1758, %v1754
    %v2047 = vpack.c.b16 %v1759, %v1755
    %v2048 = vpack.c.b16 %v1760, %v1756
    %v2049 = vpack.c.b16 %v1765, %v1761
    %v2050 = vpack.c.b16 %v1766, %v1762
    %v2051 = vpack.c.b16 %v1767, %v1763
    %v2052 = vpack.c.b16 %v1768, %v1764
    %v2053 = vpack.c.b16 %v1773, %v1769
    %v2054 = vpack.c.b16 %v1774, %v1770
    %v2055 = vpack.c.b16 %v1775, %v1771
    %v2056 = vpack.c.b16 %v1776, %v1772
    %v2057 = vpack.c.b16 %v1781, %v1777
    %v2058 = vpack.c.b16 %v1782, %v1778
    %v2059 = vpack.c.b16 %v1783, %v1779
    %v2060 = vpack.c.b16 %v1784, %v1780
    %v2061 = vpack.c.b16 %v1789, %v1785
    %v2062 = vpack.c.b16 %v1790, %v1786
    %v2063 = vpack.c.b16 %v1791, %v1787
    %v2064 = vpack.c.b16 %v1792, %v1788
    %v2065 = vpack.c.b16 %v1797, %v1793
    %v2066 = vpack.c.b16 %v1798, %v1794
    %v2067 = vpack.c.b16 %v1799, %v1795
    %v2068 = vpack.c.b16 %v1800, %v1796
    %v2069 = vpack.c.b16 %v1805, %v1801
    %v2070 = vpack.c.b16 %v1806, %v1802
    %v2071 = vpack.c.b16 %v1807, %v1803
    %v2072 = vpack.c.b16 %v1808, %v1804
    %v2073 = vpack.c.b16 %v1813, %v1809
    %v2074 = vpack.c.b16 %v1814, %v1810
    %v2075 = vpack.c.b16 %v1815, %v1811
    %v2076 = vpack.c.b16 %v1816, %v1812
    %v2077 = vpack.c.b16 %v1821, %v1817
    %v2078 = vpack.c.b16 %v1822, %v1818
    %v2079 = vpack.c.b16 %v1823, %v1819
    %v2080 = vpack.c.b16 %v1824, %v1820
    %2337 = vmatprep.subr.bf16.mxu0 %v1854
    %2338 = vmatpush1.bf16.msra.mxu0 %v1853
    %2339 = vmatprep.subr.bf16.mxu0 %v1850
    %2340 = vmatpush1.bf16.msra.mxu0 %v1849
    %2341 = vmatprep.subr.bf16.mxu0 %v1846
    %2342 = vmatpush1.bf16.msra.mxu0 %v1845
    %2343 = vmatprep.subr.bf16.mxu0 %v1842
    %2344 = vmatpush1.bf16.msra.mxu0 %v1841
    %2345 = vmatprep.subr.bf16.mxu0 %v1838
    %2346 = vmatpush1.bf16.msra.mxu0 %v1837
    %2347 = vmatprep.subr.bf16.mxu0 %v1834
    %2348 = vmatpush1.bf16.msra.mxu0 %v1833
    %2349 = vmatprep.subr.bf16.mxu0 %v1830
    %2350 = vmatpush1.bf16.msra.mxu0 %v1829
    %2351 = vmatprep.subr.bf16.mxu0 %v1826
    %2352 = vmatpush1.bf16.msra.mxu0 %v1825
    %2353 = vmatprep.subr.bf16.mxu0 %v1886
    %2354 = vmatpush2.bf16.msra.mxu0 %v1885
    %2355 = vmatprep.subr.bf16.mxu0 %v1882
    %2356 = vmatpush2.bf16.msra.mxu0 %v1881
    %2357 = vmatprep.subr.bf16.mxu0 %v1878
    %2358 = vmatpush2.bf16.msra.mxu0 %v1877
    %2359 = vmatprep.subr.bf16.mxu0 %v1874
    %2360 = vmatpush2.bf16.msra.mxu0 %v1873
    %2361 = vmatprep.subr.bf16.mxu0 %v1870
    %2362 = vmatpush2.bf16.msra.mxu0 %v1869
    %2363 = vmatprep.subr.bf16.mxu0 %v1866
    %2364 = vmatpush2.bf16.msra.mxu0 %v1865
    %2365 = vmatprep.subr.bf16.mxu0 %v1862
    %2366 = vmatpush2.bf16.msra.mxu0 %v1861
    %2367 = vmatprep.subr.bf16.mxu0 %v1858
    %2368 = vmatpush2.bf16.msra.mxu0 %v1857
    %2369 = vmatprep.mubr.bf16.mxu0 %v772
    %2370 = vmatmul.mubr.bf16.gmra.mxu0 %v771
    %v2371 = vpop.f32.mrf.mxu0
    %v2372 = vadd.f32 %v1040, %v2371
    %v2373 = vpop.f32.mrf.mxu0
    %v2374 = vadd.f32 %v1044, %v2373
    %v2375 = vpop.f32.mrf.mxu0
    %v2376 = vadd.f32 %v1040, %v2375
    %v2377 = vpop.f32.mrf.mxu0
    %v2378 = vadd.f32 %v1044, %v2377
    %2379 = vdwg.mxu0
    %2380 = vmatprep.subr.bf16.mxu0 %v1918
    %2381 = vmatpush1.bf16.msra.mxu0 %v1917
    %2382 = vmatprep.subr.bf16.mxu0 %v1914
    %2383 = vmatpush1.bf16.msra.mxu0 %v1913
    %2384 = vmatprep.subr.bf16.mxu0 %v1910
    %2385 = vmatpush1.bf16.msra.mxu0 %v1909
    %2386 = vmatprep.subr.bf16.mxu0 %v1906
    %2387 = vmatpush1.bf16.msra.mxu0 %v1905
    %2388 = vmatprep.subr.bf16.mxu0 %v1902
    %2389 = vmatpush1.bf16.msra.mxu0 %v1901
    %2390 = vmatprep.subr.bf16.mxu0 %v1898
    %2391 = vmatpush1.bf16.msra.mxu0 %v1897
    %2392 = vmatprep.subr.bf16.mxu0 %v1894
    %2393 = vmatpush1.bf16.msra.mxu0 %v1893
    %2394 = vmatprep.subr.bf16.mxu0 %v1890
    %2395 = vmatpush1.bf16.msra.mxu0 %v1889
    %2396 = vmatprep.subr.bf16.mxu0 %v1950
    %2397 = vmatpush2.bf16.msra.mxu0 %v1949
    %2398 = vmatprep.subr.bf16.mxu0 %v1946
    %2399 = vmatpush2.bf16.msra.mxu0 %v1945
    %2400 = vmatprep.subr.bf16.mxu0 %v1942
    %2401 = vmatpush2.bf16.msra.mxu0 %v1941
    %2402 = vmatprep.subr.bf16.mxu0 %v1938
    %2403 = vmatpush2.bf16.msra.mxu0 %v1937
    %2404 = vmatprep.subr.bf16.mxu0 %v1934
    %2405 = vmatpush2.bf16.msra.mxu0 %v1933
    %2406 = vmatprep.subr.bf16.mxu0 %v1930
    %2407 = vmatpush2.bf16.msra.mxu0 %v1929
    %2408 = vmatprep.subr.bf16.mxu0 %v1926
    %2409 = vmatpush2.bf16.msra.mxu0 %v1925
    %2410 = vmatprep.subr.bf16.mxu0 %v1922
    %2411 = vmatpush2.bf16.msra.mxu0 %v1921
    %2412 = vmatprep.mubr.bf16.mxu0 %v774
    %2413 = vmatmul.mubr.bf16.gmra.mxu0 %v773
    %v2414 = vpop.f32.mrf.mxu0
    %v2415 = vadd.f32 %v2372, %v2414
    %v2416 = vpop.f32.mrf.mxu0
    %v2417 = vadd.f32 %v2374, %v2416
    %v2418 = vpop.f32.mrf.mxu0
    %v2419 = vadd.f32 %v2376, %v2418
    %v2420 = vpop.f32.mrf.mxu0
    %v2421 = vadd.f32 %v2378, %v2420
    %2422 = vdwg.mxu0
    %2423 = vmatprep.subr.bf16.mxu0 %v1982
    %2424 = vmatpush1.bf16.msra.mxu0 %v1981
    %2425 = vmatprep.subr.bf16.mxu0 %v1978
    %2426 = vmatpush1.bf16.msra.mxu0 %v1977
    %2427 = vmatprep.subr.bf16.mxu0 %v1974
    %2428 = vmatpush1.bf16.msra.mxu0 %v1973
    %2429 = vmatprep.subr.bf16.mxu0 %v1970
    %2430 = vmatpush1.bf16.msra.mxu0 %v1969
    %2431 = vmatprep.subr.bf16.mxu0 %v1966
    %2432 = vmatpush1.bf16.msra.mxu0 %v1965
    %2433 = vmatprep.subr.bf16.mxu0 %v1962
    %2434 = vmatpush1.bf16.msra.mxu0 %v1961
    %2435 = vmatprep.subr.bf16.mxu0 %v1958
    %2436 = vmatpush1.bf16.msra.mxu0 %v1957
    %2437 = vmatprep.subr.bf16.mxu0 %v1954
    %2438 = vmatpush1.bf16.msra.mxu0 %v1953
    %2439 = vmatprep.subr.bf16.mxu0 %v2014
    %2440 = vmatpush2.bf16.msra.mxu0 %v2013
    %2441 = vmatprep.subr.bf16.mxu0 %v2010
    %2442 = vmatpush2.bf16.msra.mxu0 %v2009
    %2443 = vmatprep.subr.bf16.mxu0 %v2006
    %2444 = vmatpush2.bf16.msra.mxu0 %v2005
    %2445 = vmatprep.subr.bf16.mxu0 %v2002
    %2446 = vmatpush2.bf16.msra.mxu0 %v2001
    %2447 = vmatprep.subr.bf16.mxu0 %v1998
    %2448 = vmatpush2.bf16.msra.mxu0 %v1997
    %2449 = vmatprep.subr.bf16.mxu0 %v1994
    %2450 = vmatpush2.bf16.msra.mxu0 %v1993
    %2451 = vmatprep.subr.bf16.mxu0 %v1990
    %2452 = vmatpush2.bf16.msra.mxu0 %v1989
    %2453 = vmatprep.subr.bf16.mxu0 %v1986
    %2454 = vmatpush2.bf16.msra.mxu0 %v1985
    %2455 = vmatprep.mubr.bf16.mxu0 %v776
    %2456 = vmatmul.mubr.bf16.gmra.mxu0 %v775
    %v2457 = vpop.f32.mrf.mxu0
    %v2458 = vadd.f32 %v2415, %v2457
    %v2459 = vpop.f32.mrf.mxu0
    %v2460 = vadd.f32 %v2417, %v2459
    %v2461 = vpop.f32.mrf.mxu0
    %v2462 = vadd.f32 %v2419, %v2461
    %v2463 = vpop.f32.mrf.mxu0
    %v2464 = vadd.f32 %v2421, %v2463
    %2465 = vdwg.mxu0
    %2466 = vmatprep.subr.bf16.mxu0 %v2046
    %2467 = vmatpush1.bf16.msra.mxu0 %v2045
    %2468 = vmatprep.subr.bf16.mxu0 %v2042
    %2469 = vmatpush1.bf16.msra.mxu0 %v2041
    %2470 = vmatprep.subr.bf16.mxu0 %v2038
    %2471 = vmatpush1.bf16.msra.mxu0 %v2037
    %2472 = vmatprep.subr.bf16.mxu0 %v2034
    %2473 = vmatpush1.bf16.msra.mxu0 %v2033
    %2474 = vmatprep.subr.bf16.mxu0 %v2030
    %2475 = vmatpush1.bf16.msra.mxu0 %v2029
    %2476 = vmatprep.subr.bf16.mxu0 %v2026
    %2477 = vmatpush1.bf16.msra.mxu0 %v2025
    %2478 = vmatprep.subr.bf16.mxu0 %v2022
    %2479 = vmatpush1.bf16.msra.mxu0 %v2021
    %2480 = vmatprep.subr.bf16.mxu0 %v2018
    %2481 = vmatpush1.bf16.msra.mxu0 %v2017
    %2482 = vmatprep.subr.bf16.mxu0 %v2078
    %2483 = vmatpush2.bf16.msra.mxu0 %v2077
    %2484 = vmatprep.subr.bf16.mxu0 %v2074
    %2485 = vmatpush2.bf16.msra.mxu0 %v2073
    %2486 = vmatprep.subr.bf16.mxu0 %v2070
    %2487 = vmatpush2.bf16.msra.mxu0 %v2069
    %2488 = vmatprep.subr.bf16.mxu0 %v2066
    %2489 = vmatpush2.bf16.msra.mxu0 %v2065
    %2490 = vmatprep.subr.bf16.mxu0 %v2062
    %2491 = vmatpush2.bf16.msra.mxu0 %v2061
    %2492 = vmatprep.subr.bf16.mxu0 %v2058
    %2493 = vmatpush2.bf16.msra.mxu0 %v2057
    %2494 = vmatprep.subr.bf16.mxu0 %v2054
    %2495 = vmatpush2.bf16.msra.mxu0 %v2053
    %2496 = vmatprep.subr.bf16.mxu0 %v2050
    %2497 = vmatpush2.bf16.msra.mxu0 %v2049
    %2498 = vmatprep.mubr.bf16.mxu0 %v778
    %2499 = vmatmul.mubr.bf16.gmra.mxu0 %v777
    %v2500 = vpop.f32.mrf.mxu0
    %v2501 = vadd.f32 %v2458, %v2500
    %v2502 = vpop.f32.mrf.mxu0
    %v2503 = vadd.f32 %v2460, %v2502
    %v2504 = vpop.f32.mrf.mxu0
    %v2505 = vadd.f32 %v2462, %v2504
    %v2506 = vpop.f32.mrf.mxu0
    %v2507 = vadd.f32 %v2464, %v2506
    %2508 = vdwg.mxu0
    %2509 = vmatprep.subr.bf16.mxu0 %v1856
    %2510 = vmatpush1.bf16.msra.mxu0 %v1855
    %2511 = vmatprep.subr.bf16.mxu0 %v1852
    %2512 = vmatpush1.bf16.msra.mxu0 %v1851
    %2513 = vmatprep.subr.bf16.mxu0 %v1848
    %2514 = vmatpush1.bf16.msra.mxu0 %v1847
    %2515 = vmatprep.subr.bf16.mxu0 %v1844
    %2516 = vmatpush1.bf16.msra.mxu0 %v1843
    %2517 = vmatprep.subr.bf16.mxu0 %v1840
    %2518 = vmatpush1.bf16.msra.mxu0 %v1839
    %2519 = vmatprep.subr.bf16.mxu0 %v1836
    %2520 = vmatpush1.bf16.msra.mxu0 %v1835
    %2521 = vmatprep.subr.bf16.mxu0 %v1832
    %2522 = vmatpush1.bf16.msra.mxu0 %v1831
    %2523 = vmatprep.subr.bf16.mxu0 %v1828
    %2524 = vmatpush1.bf16.msra.mxu0 %v1827
    %2525 = vmatprep.subr.bf16.mxu0 %v1888
    %2526 = vmatpush2.bf16.msra.mxu0 %v1887
    %2527 = vmatprep.subr.bf16.mxu0 %v1884
    %2528 = vmatpush2.bf16.msra.mxu0 %v1883
    %2529 = vmatprep.subr.bf16.mxu0 %v1880
    %2530 = vmatpush2.bf16.msra.mxu0 %v1879
    %2531 = vmatprep.subr.bf16.mxu0 %v1876
    %2532 = vmatpush2.bf16.msra.mxu0 %v1875
    %2533 = vmatprep.subr.bf16.mxu0 %v1872
    %2534 = vmatpush2.bf16.msra.mxu0 %v1871
    %2535 = vmatprep.subr.bf16.mxu0 %v1868
    %2536 = vmatpush2.bf16.msra.mxu0 %v1867
    %2537 = vmatprep.subr.bf16.mxu0 %v1864
    %2538 = vmatpush2.bf16.msra.mxu0 %v1863
    %2539 = vmatprep.subr.bf16.mxu0 %v1860
    %2540 = vmatpush2.bf16.msra.mxu0 %v1859
    %2541 = vmatprep.mubr.bf16.mxu0 %v772
    %2542 = vmatmul.mubr.bf16.gmra.mxu0 %v771
    %v2543 = vpop.f32.mrf.mxu0
    %v2544 = vadd.f32 %v1048, %v2543
    %v2545 = vpop.f32.mrf.mxu0
    %v2546 = vadd.f32 %v1052, %v2545
    %v2547 = vpop.f32.mrf.mxu0
    %v2548 = vadd.f32 %v1048, %v2547
    %v2549 = vpop.f32.mrf.mxu0
    %v2550 = vadd.f32 %v1052, %v2549
    %2551 = vdwg.mxu0
    %2552 = vmatprep.subr.bf16.mxu0 %v1920
    %2553 = vmatpush1.bf16.msra.mxu0 %v1919
    %2554 = vmatprep.subr.bf16.mxu0 %v1916
    %2555 = vmatpush1.bf16.msra.mxu0 %v1915
    %2556 = vmatprep.subr.bf16.mxu0 %v1912
    %2557 = vmatpush1.bf16.msra.mxu0 %v1911
    %2558 = vmatprep.subr.bf16.mxu0 %v1908
    %2559 = vmatpush1.bf16.msra.mxu0 %v1907
    %2560 = vmatprep.subr.bf16.mxu0 %v1904
    %2561 = vmatpush1.bf16.msra.mxu0 %v1903
    %2562 = vmatprep.subr.bf16.mxu0 %v1900
    %2563 = vmatpush1.bf16.msra.mxu0 %v1899
    %2564 = vmatprep.subr.bf16.mxu0 %v1896
    %2565 = vmatpush1.bf16.msra.mxu0 %v1895
    %2566 = vmatprep.subr.bf16.mxu0 %v1892
    %2567 = vmatpush1.bf16.msra.mxu0 %v1891
    %2568 = vmatprep.subr.bf16.mxu0 %v1952
    %2569 = vmatpush2.bf16.msra.mxu0 %v1951
    %2570 = vmatprep.subr.bf16.mxu0 %v1948
    %2571 = vmatpush2.bf16.msra.mxu0 %v1947
    %2572 = vmatprep.subr.bf16.mxu0 %v1944
    %2573 = vmatpush2.bf16.msra.mxu0 %v1943
    %2574 = vmatprep.subr.bf16.mxu0 %v1940
    %2575 = vmatpush2.bf16.msra.mxu0 %v1939
    %2576 = vmatprep.subr.bf16.mxu0 %v1936
    %2577 = vmatpush2.bf16.msra.mxu0 %v1935
    %2578 = vmatprep.subr.bf16.mxu0 %v1932
    %2579 = vmatpush2.bf16.msra.mxu0 %v1931
    %2580 = vmatprep.subr.bf16.mxu0 %v1928
    %2581 = vmatpush2.bf16.msra.mxu0 %v1927
    %2582 = vmatprep.subr.bf16.mxu0 %v1924
    %2583 = vmatpush2.bf16.msra.mxu0 %v1923
    %2584 = vmatprep.mubr.bf16.mxu0 %v774
    %2585 = vmatmul.mubr.bf16.gmra.mxu0 %v773
    %v2586 = vpop.f32.mrf.mxu0
    %v2587 = vadd.f32 %v2544, %v2586
    %v2588 = vpop.f32.mrf.mxu0
    %v2589 = vadd.f32 %v2546, %v2588
    %v2590 = vpop.f32.mrf.mxu0
    %v2591 = vadd.f32 %v2548, %v2590
    %v2592 = vpop.f32.mrf.mxu0
    %v2593 = vadd.f32 %v2550, %v2592
    %2594 = vdwg.mxu0
    %2595 = vmatprep.subr.bf16.mxu0 %v1984
    %2596 = vmatpush1.bf16.msra.mxu0 %v1983
    %2597 = vmatprep.subr.bf16.mxu0 %v1980
    %2598 = vmatpush1.bf16.msra.mxu0 %v1979
    %2599 = vmatprep.subr.bf16.mxu0 %v1976
    %2600 = vmatpush1.bf16.msra.mxu0 %v1975
    %2601 = vmatprep.subr.bf16.mxu0 %v1972
    %2602 = vmatpush1.bf16.msra.mxu0 %v1971
    %2603 = vmatprep.subr.bf16.mxu0 %v1968
    %2604 = vmatpush1.bf16.msra.mxu0 %v1967
    %2605 = vmatprep.subr.bf16.mxu0 %v1964
    %2606 = vmatpush1.bf16.msra.mxu0 %v1963
    %2607 = vmatprep.subr.bf16.mxu0 %v1960
    %2608 = vmatpush1.bf16.msra.mxu0 %v1959
    %2609 = vmatprep.subr.bf16.mxu0 %v1956
    %2610 = vmatpush1.bf16.msra.mxu0 %v1955
    %2611 = vmatprep.subr.bf16.mxu0 %v2016
    %2612 = vmatpush2.bf16.msra.mxu0 %v2015
    %2613 = vmatprep.subr.bf16.mxu0 %v2012
    %2614 = vmatpush2.bf16.msra.mxu0 %v2011
    %2615 = vmatprep.subr.bf16.mxu0 %v2008
    %2616 = vmatpush2.bf16.msra.mxu0 %v2007
    %2617 = vmatprep.subr.bf16.mxu0 %v2004
    %2618 = vmatpush2.bf16.msra.mxu0 %v2003
    %2619 = vmatprep.subr.bf16.mxu0 %v2000
    %2620 = vmatpush2.bf16.msra.mxu0 %v1999
    %2621 = vmatprep.subr.bf16.mxu0 %v1996
    %2622 = vmatpush2.bf16.msra.mxu0 %v1995
    %2623 = vmatprep.subr.bf16.mxu0 %v1992
    %2624 = vmatpush2.bf16.msra.mxu0 %v1991
    %2625 = vmatprep.subr.bf16.mxu0 %v1988
    %2626 = vmatpush2.bf16.msra.mxu0 %v1987
    %2627 = vmatprep.mubr.bf16.mxu0 %v776
    %2628 = vmatmul.mubr.bf16.gmra.mxu0 %v775
    %v2629 = vpop.f32.mrf.mxu0
    %v2630 = vadd.f32 %v2587, %v2629
    %v2631 = vpop.f32.mrf.mxu0
    %v2632 = vadd.f32 %v2589, %v2631
    %v2633 = vpop.f32.mrf.mxu0
    %v2634 = vadd.f32 %v2591, %v2633
    %v2635 = vpop.f32.mrf.mxu0
    %v2636 = vadd.f32 %v2593, %v2635
    %2637 = vdwg.mxu0
    %2638 = vmatprep.subr.bf16.mxu0 %v2048
    %2639 = vmatpush1.bf16.msra.mxu0 %v2047
    %2640 = vmatprep.subr.bf16.mxu0 %v2044
    %2641 = vmatpush1.bf16.msra.mxu0 %v2043
    %2642 = vmatprep.subr.bf16.mxu0 %v2040
    %2643 = vmatpush1.bf16.msra.mxu0 %v2039
    %2644 = vmatprep.subr.bf16.mxu0 %v2036
    %2645 = vmatpush1.bf16.msra.mxu0 %v2035
    %2646 = vmatprep.subr.bf16.mxu0 %v2032
    %2647 = vmatpush1.bf16.msra.mxu0 %v2031
    %2648 = vmatprep.subr.bf16.mxu0 %v2028
    %2649 = vmatpush1.bf16.msra.mxu0 %v2027
    %2650 = vmatprep.subr.bf16.mxu0 %v2024
    %2651 = vmatpush1.bf16.msra.mxu0 %v2023
    %2652 = vmatprep.subr.bf16.mxu0 %v2020
    %2653 = vmatpush1.bf16.msra.mxu0 %v2019
    %2654 = vmatprep.subr.bf16.mxu0 %v2080
    %2655 = vmatpush2.bf16.msra.mxu0 %v2079
    %2656 = vmatprep.subr.bf16.mxu0 %v2076
    %2657 = vmatpush2.bf16.msra.mxu0 %v2075
    %2658 = vmatprep.subr.bf16.mxu0 %v2072
    %2659 = vmatpush2.bf16.msra.mxu0 %v2071
    %2660 = vmatprep.subr.bf16.mxu0 %v2068
    %2661 = vmatpush2.bf16.msra.mxu0 %v2067
    %2662 = vmatprep.subr.bf16.mxu0 %v2064
    %2663 = vmatpush2.bf16.msra.mxu0 %v2063
    %2664 = vmatprep.subr.bf16.mxu0 %v2060
    %2665 = vmatpush2.bf16.msra.mxu0 %v2059
    %2666 = vmatprep.subr.bf16.mxu0 %v2056
    %2667 = vmatpush2.bf16.msra.mxu0 %v2055
    %2668 = vmatprep.subr.bf16.mxu0 %v2052
    %2669 = vmatpush2.bf16.msra.mxu0 %v2051
    %2670 = vmatprep.mubr.bf16.mxu0 %v778
    %2671 = vmatmul.mubr.bf16.gmra.mxu0 %v777
    %v2672 = vpop.f32.mrf.mxu0
    %v2673 = vadd.f32 %v2630, %v2672
    %v2674 = vpop.f32.mrf.mxu0
    %v2675 = vadd.f32 %v2632, %v2674
    %v2676 = vpop.f32.mrf.mxu0
    %v2677 = vadd.f32 %v2634, %v2676
    %v2678 = vpop.f32.mrf.mxu0
    %v2679 = vadd.f32 %v2636, %v2678
    %2680 = vdwg.mxu0
    %v2681 = vmax.f32 %v2501, 0.0
    %v2682 = vmax.f32 %v2503, 0.0
    %v2683 = vmax.f32 %v2673, 0.0
    %v2684 = vmax.f32 %v2675, 0.0
    %v2685 = vmax.f32 %v2505, 0.0
    %v2686 = vmax.f32 %v2507, 0.0
    %v2687 = vmax.f32 %v2677, 0.0
    %v2688 = vmax.f32 %v2679, 0.0
    %v2689 = vpack.c.bf16 %v2685, %v2681
    %v2690 = vpack.c.bf16 %v2686, %v2682
    %v2691 = vpack.c.bf16 %v2687, %v2683
    %v2692 = vpack.c.bf16 %v2688, %v2684
    %v2693 = vld [vmem:[%s8] sm:$0xf]
    %v2694 = vld [vmem:[%s8 + $0x4] sm:$0xf]
    %v2695 = vld [vmem:[%s8 + $0x8] sm:$0xf]
    %v2696 = vld [vmem:[%s8 + $0xc] sm:$0xf]
    %v2697 = vld [vmem:[%s8 + $0x10] sm:$0xf]
    %v2698 = vld [vmem:[%s8 + $0x14] sm:$0xf]
    %v2699 = vld [vmem:[%s8 + $0x18] sm:$0xf]
    %v2700 = vld [vmem:[%s8 + $0x1c] sm:$0xf]
    %v2701 = vld [vmem:[%s8 + $0x20] sm:$0xf]
    %v2702 = vld [vmem:[%s8 + $0x24] sm:$0xf]
    %v2703 = vld [vmem:[%s8 + $0x28] sm:$0xf]
    %v2704 = vld [vmem:[%s8 + $0x2c] sm:$0xf]
    %v2705 = vld [vmem:[%s8 + $0x30] sm:$0xf]
    %v2706 = vld [vmem:[%s8 + $0x34] sm:$0xf]
    %v2707 = vld [vmem:[%s8 + $0x38] sm:$0xf]
    %v2708 = vld [vmem:[%s8 + $0x3c] sm:$0xf]
    %v2709 = vld [vmem:[%s8 + $0x40] sm:$0xf]
    %v2710 = vld [vmem:[%s8 + $0x44] sm:$0xf]
    %v2711 = vld [vmem:[%s8 + $0x48] sm:$0xf]
    %v2712 = vld [vmem:[%s8 + $0x4c] sm:$0xf]
    %v2713 = vld [vmem:[%s8 + $0x50] sm:$0xf]
    %v2714 = vld [vmem:[%s8 + $0x54] sm:$0xf]
    %v2715 = vld [vmem:[%s8 + $0x58] sm:$0xf]
    %v2716 = vld [vmem:[%s8 + $0x5c] sm:$0xf]
    %v2717 = vld [vmem:[%s8 + $0x60] sm:$0xf]
    %v2718 = vld [vmem:[%s8 + $0x64] sm:$0xf]
    %v2719 = vld [vmem:[%s8 + $0x68] sm:$0xf]
    %v2720 = vld [vmem:[%s8 + $0x6c] sm:$0xf]
    %v2721 = vld [vmem:[%s8 + $0x70] sm:$0xf]
    %v2722 = vld [vmem:[%s8 + $0x74] sm:$0xf]
    %v2723 = vld [vmem:[%s8 + $0x78] sm:$0xf]
    %v2724 = vld [vmem:[%s8 + $0x7c] sm:$0xf]
    %v2725 = vld [vmem:[%s8 + $0x80] sm:$0xf]
    %v2726 = vld [vmem:[%s8 + $0x84] sm:$0xf]
    %v2727 = vld [vmem:[%s8 + $0x88] sm:$0xf]
    %v2728 = vld [vmem:[%s8 + $0x8c] sm:$0xf]
    %v2729 = vld [vmem:[%s8 + $0x90] sm:$0xf]
    %v2730 = vld [vmem:[%s8 + $0x94] sm:$0xf]
    %v2731 = vld [vmem:[%s8 + $0x98] sm:$0xf]
    %v2732 = vld [vmem:[%s8 + $0x9c] sm:$0xf]
    %v2733 = vld [vmem:[%s8 + $0xa0] sm:$0xf]
    %v2734 = vld [vmem:[%s8 + $0xa4] sm:$0xf]
    %v2735 = vld [vmem:[%s8 + $0xa8] sm:$0xf]
    %v2736 = vld [vmem:[%s8 + $0xac] sm:$0xf]
    %v2737 = vld [vmem:[%s8 + $0xb0] sm:$0xf]
    %v2738 = vld [vmem:[%s8 + $0xb4] sm:$0xf]
    %v2739 = vld [vmem:[%s8 + $0xb8] sm:$0xf]
    %v2740 = vld [vmem:[%s8 + $0xbc] sm:$0xf]
    %v2741 = vld [vmem:[%s8 + $0xc0] sm:$0xf]
    %v2742 = vld [vmem:[%s8 + $0xc4] sm:$0xf]
    %v2743 = vld [vmem:[%s8 + $0xc8] sm:$0xf]
    %v2744 = vld [vmem:[%s8 + $0xcc] sm:$0xf]
    %v2745 = vld [vmem:[%s8 + $0xd0] sm:$0xf]
    %v2746 = vld [vmem:[%s8 + $0xd4] sm:$0xf]
    %v2747 = vld [vmem:[%s8 + $0xd8] sm:$0xf]
    %v2748 = vld [vmem:[%s8 + $0xdc] sm:$0xf]
    %v2749 = vld [vmem:[%s8 + $0xe0] sm:$0xf]
    %v2750 = vld [vmem:[%s8 + $0xe4] sm:$0xf]
    %v2751 = vld [vmem:[%s8 + $0xe8] sm:$0xf]
    %v2752 = vld [vmem:[%s8 + $0xec] sm:$0xf]
    %v2753 = vld [vmem:[%s8 + $0xf0] sm:$0xf]
    %v2754 = vld [vmem:[%s8 + $0xf4] sm:$0xf]
    %v2755 = vld [vmem:[%s8 + $0xf8] sm:$0xf]
    %v2756 = vld [vmem:[%s8 + $0xfc] sm:$0xf]
    %v2757 = vld [vmem:[%s9] sm:$0x1]
    %v2759 = vlaneseq
    %v2760 = vshrl.u32 %v2759, 7
    %v2761 = vsub.s32 0, %v2760
    %v2762 = vrot.slane %v2757, %v2761
    %v2828 = vunpack.c.l.b16 %v2693
    %v2829 = vunpack.c.l.b16 %v2694
    %v2830 = vunpack.c.l.b16 %v2695
    %v2831 = vunpack.c.l.b16 %v2696
    %v2832 = vunpack.c.l.b16 %v2697
    %v2833 = vunpack.c.l.b16 %v2698
    %v2834 = vunpack.c.l.b16 %v2699
    %v2835 = vunpack.c.l.b16 %v2700
    %v2836 = vunpack.c.l.b16 %v2701
    %v2837 = vunpack.c.l.b16 %v2702
    %v2838 = vunpack.c.l.b16 %v2703
    %v2839 = vunpack.c.l.b16 %v2704
    %v2840 = vunpack.c.l.b16 %v2705
    %v2841 = vunpack.c.l.b16 %v2706
    %v2842 = vunpack.c.l.b16 %v2707
    %v2843 = vunpack.c.l.b16 %v2708
    %v2844 = vunpack.c.l.b16 %v2709
    %v2845 = vunpack.c.l.b16 %v2710
    %v2846 = vunpack.c.l.b16 %v2711
    %v2847 = vunpack.c.l.b16 %v2712
    %v2848 = vunpack.c.l.b16 %v2713
    %v2849 = vunpack.c.l.b16 %v2714
    %v2850 = vunpack.c.l.b16 %v2715
    %v2851 = vunpack.c.l.b16 %v2716
    %v2852 = vunpack.c.l.b16 %v2717
    %v2853 = vunpack.c.l.b16 %v2718
    %v2854 = vunpack.c.l.b16 %v2719
    %v2855 = vunpack.c.l.b16 %v2720
    %v2856 = vunpack.c.l.b16 %v2721
    %v2857 = vunpack.c.l.b16 %v2722
    %v2858 = vunpack.c.l.b16 %v2723
    %v2859 = vunpack.c.l.b16 %v2724
    %v2860 = vunpack.c.l.b16 %v2725
    %v2861 = vunpack.c.l.b16 %v2726
    %v2862 = vunpack.c.l.b16 %v2727
    %v2863 = vunpack.c.l.b16 %v2728
    %v2864 = vunpack.c.l.b16 %v2729
    %v2865 = vunpack.c.l.b16 %v2730
    %v2866 = vunpack.c.l.b16 %v2731
    %v2867 = vunpack.c.l.b16 %v2732
    %v2868 = vunpack.c.l.b16 %v2733
    %v2869 = vunpack.c.l.b16 %v2734
    %v2870 = vunpack.c.l.b16 %v2735
    %v2871 = vunpack.c.l.b16 %v2736
    %v2872 = vunpack.c.l.b16 %v2737
    %v2873 = vunpack.c.l.b16 %v2738
    %v2874 = vunpack.c.l.b16 %v2739
    %v2875 = vunpack.c.l.b16 %v2740
    %v2876 = vunpack.c.l.b16 %v2741
    %v2877 = vunpack.c.l.b16 %v2742
    %v2878 = vunpack.c.l.b16 %v2743
    %v2879 = vunpack.c.l.b16 %v2744
    %v2880 = vunpack.c.l.b16 %v2745
    %v2881 = vunpack.c.l.b16 %v2746
    %v2882 = vunpack.c.l.b16 %v2747
    %v2883 = vunpack.c.l.b16 %v2748
    %v2884 = vunpack.c.l.b16 %v2749
    %v2885 = vunpack.c.l.b16 %v2750
    %v2886 = vunpack.c.l.b16 %v2751
    %v2887 = vunpack.c.l.b16 %v2752
    %v2888 = vunpack.c.l.b16 %v2753
    %v2889 = vunpack.c.l.b16 %v2754
    %v2890 = vunpack.c.l.b16 %v2755
    %v2891 = vunpack.c.l.b16 %v2756
    %v2892 = vpack.c.b16 %v2829, %v2828
    %v2893 = vpack.c.b16 %v2831, %v2830
    %v2894 = vpack.c.b16 %v2833, %v2832
    %v2895 = vpack.c.b16 %v2835, %v2834
    %v2896 = vpack.c.b16 %v2837, %v2836
    %v2897 = vpack.c.b16 %v2839, %v2838
    %v2898 = vpack.c.b16 %v2841, %v2840
    %v2899 = vpack.c.b16 %v2843, %v2842
    %v2900 = vpack.c.b16 %v2845, %v2844
    %v2901 = vpack.c.b16 %v2847, %v2846
    %v2902 = vpack.c.b16 %v2849, %v2848
    %v2903 = vpack.c.b16 %v2851, %v2850
    %v2904 = vpack.c.b16 %v2853, %v2852
    %v2905 = vpack.c.b16 %v2855, %v2854
    %v2906 = vpack.c.b16 %v2857, %v2856
    %v2907 = vpack.c.b16 %v2859, %v2858
    %v2908 = vpack.c.b16 %v2861, %v2860
    %v2909 = vpack.c.b16 %v2863, %v2862
    %v2910 = vpack.c.b16 %v2865, %v2864
    %v2911 = vpack.c.b16 %v2867, %v2866
    %v2912 = vpack.c.b16 %v2869, %v2868
    %v2913 = vpack.c.b16 %v2871, %v2870
    %v2914 = vpack.c.b16 %v2873, %v2872
    %v2915 = vpack.c.b16 %v2875, %v2874
    %v2916 = vpack.c.b16 %v2877, %v2876
    %v2917 = vpack.c.b16 %v2879, %v2878
    %v2918 = vpack.c.b16 %v2881, %v2880
    %v2919 = vpack.c.b16 %v2883, %v2882
    %v2920 = vpack.c.b16 %v2885, %v2884
    %v2921 = vpack.c.b16 %v2887, %v2886
    %v2922 = vpack.c.b16 %v2889, %v2888
    %v2923 = vpack.c.b16 %v2891, %v2890
    %2956 = vmatprep.subr.bf16.mxu0 0
    %2957 = vmatpush1.bf16.msra.mxu0 %v2899
    %2958 = vmatprep.subr.bf16.mxu0 0
    %2959 = vmatpush1.bf16.msra.mxu0 %v2898
    %2960 = vmatprep.subr.bf16.mxu0 0
    %2961 = vmatpush1.bf16.msra.mxu0 %v2897
    %2962 = vmatprep.subr.bf16.mxu0 0
    %2963 = vmatpush1.bf16.msra.mxu0 %v2896
    %2964 = vmatprep.subr.bf16.mxu0 0
    %2965 = vmatpush1.bf16.msra.mxu0 %v2895
    %2966 = vmatprep.subr.bf16.mxu0 0
    %2967 = vmatpush1.bf16.msra.mxu0 %v2894
    %2968 = vmatprep.subr.bf16.mxu0 0
    %2969 = vmatpush1.bf16.msra.mxu0 %v2893
    %2970 = vmatprep.subr.bf16.mxu0 0
    %2971 = vmatpush1.bf16.msra.mxu0 %v2892
    %2972 = vmatprep.subr.bf16.mxu0 0
    %2973 = vmatpush2.bf16.msra.mxu0 %v2907
    %2974 = vmatprep.subr.bf16.mxu0 0
    %2975 = vmatpush2.bf16.msra.mxu0 %v2906
    %2976 = vmatprep.subr.bf16.mxu0 0
    %2977 = vmatpush2.bf16.msra.mxu0 %v2905
    %2978 = vmatprep.subr.bf16.mxu0 0
    %2979 = vmatpush2.bf16.msra.mxu0 %v2904
    %2980 = vmatprep.subr.bf16.mxu0 0
    %2981 = vmatpush2.bf16.msra.mxu0 %v2903
    %2982 = vmatprep.subr.bf16.mxu0 0
    %2983 = vmatpush2.bf16.msra.mxu0 %v2902
    %2984 = vmatprep.subr.bf16.mxu0 0
    %2985 = vmatpush2.bf16.msra.mxu0 %v2901
    %2986 = vmatprep.subr.bf16.mxu0 0
    %2987 = vmatpush2.bf16.msra.mxu0 %v2900
    %2988 = vmatprep.mubr.bf16.mxu0 %v2690
    %2989 = vmatmul.mubr.bf16.gmra.mxu0 %v2689
    %v2990 = vpop.f32.mrf.mxu0
    %v2991 = vadd.f32 %v2762, %v2990
    %v2992 = vpop.f32.mrf.mxu0
    %v2993 = vpop.f32.mrf.mxu0
    %v2994 = vadd.f32 %v2762, %v2993
    %v2995 = vpop.f32.mrf.mxu0
    %2996 = vdwg.mxu0
    %2997 = vmatprep.subr.bf16.mxu0 0
    %2998 = vmatpush1.bf16.msra.mxu0 %v2915
    %2999 = vmatprep.subr.bf16.mxu0 0
    %3000 = vmatpush1.bf16.msra.mxu0 %v2914
    %3001 = vmatprep.subr.bf16.mxu0 0
    %3002 = vmatpush1.bf16.msra.mxu0 %v2913
    %3003 = vmatprep.subr.bf16.mxu0 0
    %3004 = vmatpush1.bf16.msra.mxu0 %v2912
    %3005 = vmatprep.subr.bf16.mxu0 0
    %3006 = vmatpush1.bf16.msra.mxu0 %v2911
    %3007 = vmatprep.subr.bf16.mxu0 0
    %3008 = vmatpush1.bf16.msra.mxu0 %v2910
    %3009 = vmatprep.subr.bf16.mxu0 0
    %3010 = vmatpush1.bf16.msra.mxu0 %v2909
    %3011 = vmatprep.subr.bf16.mxu0 0
    %3012 = vmatpush1.bf16.msra.mxu0 %v2908
    %3013 = vmatprep.subr.bf16.mxu0 0
    %3014 = vmatpush2.bf16.msra.mxu0 %v2923
    %3015 = vmatprep.subr.bf16.mxu0 0
    %3016 = vmatpush2.bf16.msra.mxu0 %v2922
    %3017 = vmatprep.subr.bf16.mxu0 0
    %3018 = vmatpush2.bf16.msra.mxu0 %v2921
    %3019 = vmatprep.subr.bf16.mxu0 0
    %3020 = vmatpush2.bf16.msra.mxu0 %v2920
    %3021 = vmatprep.subr.bf16.mxu0 0
    %3022 = vmatpush2.bf16.msra.mxu0 %v2919
    %3023 = vmatprep.subr.bf16.mxu0 0
    %3024 = vmatpush2.bf16.msra.mxu0 %v2918
    %3025 = vmatprep.subr.bf16.mxu0 0
    %3026 = vmatpush2.bf16.msra.mxu0 %v2917
    %3027 = vmatprep.subr.bf16.mxu0 0
    %3028 = vmatpush2.bf16.msra.mxu0 %v2916
    %3029 = vmatprep.mubr.bf16.mxu0 %v2692
    %3030 = vmatmul.mubr.bf16.gmra.mxu0 %v2691
    %v3031 = vpop.f32.mrf.mxu0
    %v3032 = vadd.f32 %v2991, %v3031
    %v3033 = vpop.f32.mrf.mxu0
    %v3034 = vpop.f32.mrf.mxu0
    %v3035 = vadd.f32 %v2994, %v3034
    %v3036 = vpop.f32.mrf.mxu0
    %3037 = vdwg.mxu0
    %v3038 = vmul.f32 %v3032, 0.5
    %v3039 = vmul.f32 %v3035, 0.5
    %v3040 = vmul.f32 %v3038, 1.442695
    %v3041 = vpow.pop %v3040
    %v3042 = vmul.f32 %v3039, 1.442695
    %v3043 = vpow.pop %v3042
    %v3044 = vld [vmem:[%s2] sm:$0xff]
    %v3045 = vld [vmem:[%s2 + $0x8] sm:$0xff]
    %3048 = vrot.lane.b32.xlu0 %v3041, 120
    %v3049 = vpop.permute.xlu0 %3048
    %3050 = vrot.lane.b32.xlu0 %v3043, 120
    %v3051 = vpop.permute.xlu0 %3050
    %v3054 = vmul.f32 %v3044, %v3049
    %v3055 = vmul.f32 %v3045, %v3051
    %v3056 = vadd.f32 %v3032, %v3054
    %v3057 = vadd.f32 %v3035, %v3055
    %v3058 = vld [vmem:[%s3] sm:$0xff]
    %v3059 = vld [vmem:[%s3 + $0x8] sm:$0xff]
    %v3060 = vstv %s153
    %v3061 = vmul.f32 %v3058, %v3060
    %v3062 = vmul.f32 %v3059, %v3060
    %v3063 = vpack.c.bf16 %v3057, %v3056
    %v3064 = vld [vmem:[%s10] sm:$0xff]
    %v3065 = vld [vmem:[%s10 + $0x8] sm:$0xff]
    %v3066 = vld [vmem:[%s11] sm:$0xf]
    %v3068 = vlaneseq
    %v3069 = vshrl.u32 %v3068, 7
    %v3070 = vsub.s32 0, %v3069
    %v3071 = vrot.slane %v3066, %v3070
    %v3072 = vlaneseq
    %v3073 = vshrl.u32 %v3072, 7
    %v3074 = vsub.s32 1, %v3073
    %v3075 = vrot.slane %v3066, %v3074
    %v3076 = vlaneseq
    %v3077 = vshrl.u32 %v3076, 7
    %v3078 = vsub.s32 2, %v3077
    %v3079 = vrot.slane %v3066, %v3078
    %v3080 = vlaneseq
    %v3081 = vshrl.u32 %v3080, 7
    %v3082 = vsub.s32 3, %v3081
    %v3083 = vrot.slane %v3066, %v3082
    %v3090 = vunpack.c.l.b16 %v3064
    %v3091 = vunpack.c.h.b16 %v3064
    %v3092 = vunpack.c.l.b16 %v3065
    %v3093 = vunpack.c.h.b16 %v3065
    %v3094 = vpack.c.b16 %v3090, %v3090
    %v3095 = vpack.c.b16 %v3091, %v3091
    %v3096 = vpack.c.b16 %v3092, %v3092
    %v3097 = vpack.c.b16 %v3093, %v3093
    %vm3098 = vcmask 64512
    %v3100 = vsel %vm3098, %v3063, 0
    %vm3102 = vcmask 1043456
    %v3104 = vsel %vm3102, %v3094, 0
    %v3107 = vsel %vm3102, %v3095, 0
    %v3110 = vsel %vm3102, %v3096, 0
    %v3113 = vsel %vm3102, %v3097, 0
    %3115 = vmatprep.subr.bf16.mxu0 0
    %3116 = vmatpush1.bf16.msra.mxu0 0
    %3117 = vmatprep.subr.bf16.mxu0 0
    %3118 = vmatpush1.bf16.msra.mxu0 0
    %3119 = vmatprep.subr.bf16.mxu0 0
    %3120 = vmatpush1.bf16.msra.mxu0 0
    %3121 = vmatprep.subr.bf16.mxu0 0
    %3122 = vmatpush1.bf16.msra.mxu0 0
    %3123 = vmatprep.subr.bf16.mxu0 0
    %3124 = vmatpush1.bf16.msra.mxu0 0
    %3125 = vmatprep.subr.bf16.mxu0 0
    %3126 = vmatpush1.bf16.msra.mxu0 0
    %3127 = vmatprep.subr.bf16.mxu0 0
    %3128 = vmatpush1.bf16.msra.mxu0 0
    %3129 = vmatprep.subr.bf16.mxu0 %v3107
    %3130 = vmatpush1.bf16.msra.mxu0 %v3104
    %3131 = vmatprep.subr.bf16.mxu0 0
    %3132 = vmatpush2.bf16.msra.mxu0 0
    %3133 = vmatprep.subr.bf16.mxu0 0
    %3134 = vmatpush2.bf16.msra.mxu0 0
    %3135 = vmatprep.subr.bf16.mxu0 0
    %3136 = vmatpush2.bf16.msra.mxu0 0
    %3137 = vmatprep.subr.bf16.mxu0 0
    %3138 = vmatpush2.bf16.msra.mxu0 0
    %3139 = vmatprep.subr.bf16.mxu0 0
    %3140 = vmatpush2.bf16.msra.mxu0 0
    %3141 = vmatprep.subr.bf16.mxu0 0
    %3142 = vmatpush2.bf16.msra.mxu0 0
    %3143 = vmatprep.subr.bf16.mxu0 0
    %3144 = vmatpush2.bf16.msra.mxu0 0
    %3145 = vmatprep.subr.bf16.mxu0 0
    %3146 = vmatpush2.bf16.msra.mxu0 0
    %3147 = vmatprep.mubr.bf16.mxu0 0
    %3148 = vmatmul.mubr.bf16.gmra.mxu0 %v3100
    %v3149 = vpop.f32.mrf.mxu0
    %v3150 = vadd.f32 %v3071, %v3149
    %v3151 = vpop.f32.mrf.mxu0
    %v3152 = vadd.f32 %v3075, %v3151
    %v3153 = vpop.f32.mrf.mxu0
    %v3154 = vadd.f32 %v3071, %v3153
    %v3155 = vpop.f32.mrf.mxu0
    %v3156 = vadd.f32 %v3075, %v3155
    %3157 = vdwg.mxu0
    %3158 = vmatprep.subr.bf16.mxu0 0
    %3159 = vmatpush1.bf16.msra.mxu0 0
    %3160 = vmatprep.subr.bf16.mxu0 0
    %3161 = vmatpush1.bf16.msra.mxu0 0
    %3162 = vmatprep.subr.bf16.mxu0 0
    %3163 = vmatpush1.bf16.msra.mxu0 0
    %3164 = vmatprep.subr.bf16.mxu0 0
    %3165 = vmatpush1.bf16.msra.mxu0 0
    %3166 = vmatprep.subr.bf16.mxu0 0
    %3167 = vmatpush1.bf16.msra.mxu0 0
    %3168 = vmatprep.subr.bf16.mxu0 0
    %3169 = vmatpush1.bf16.msra.mxu0 0
    %3170 = vmatprep.subr.bf16.mxu0 0
    %3171 = vmatpush1.bf16.msra.mxu0 0
    %3172 = vmatprep.subr.bf16.mxu0 %v3113
    %3173 = vmatpush1.bf16.msra.mxu0 %v3110
    %3174 = vmatprep.subr.bf16.mxu0 0
    %3175 = vmatpush2.bf16.msra.mxu0 0
    %3176 = vmatprep.subr.bf16.mxu0 0
    %3177 = vmatpush2.bf16.msra.mxu0 0
    %3178 = vmatprep.subr.bf16.mxu0 0
    %3179 = vmatpush2.bf16.msra.mxu0 0
    %3180 = vmatprep.subr.bf16.mxu0 0
    %3181 = vmatpush2.bf16.msra.mxu0 0
    %3182 = vmatprep.subr.bf16.mxu0 0
    %3183 = vmatpush2.bf16.msra.mxu0 0
    %3184 = vmatprep.subr.bf16.mxu0 0
    %3185 = vmatpush2.bf16.msra.mxu0 0
    %3186 = vmatprep.subr.bf16.mxu0 0
    %3187 = vmatpush2.bf16.msra.mxu0 0
    %3188 = vmatprep.subr.bf16.mxu0 0
    %3189 = vmatpush2.bf16.msra.mxu0 0
    %3190 = vmatprep.mubr.bf16.mxu0 0
    %3191 = vmatmul.mubr.bf16.gmra.mxu0 %v3100
    %v3192 = vpop.f32.mrf.mxu0
    %v3193 = vadd.f32 %v3079, %v3192
    %v3194 = vpop.f32.mrf.mxu0
    %v3195 = vadd.f32 %v3083, %v3194
    %v3196 = vpop.f32.mrf.mxu0
    %v3197 = vadd.f32 %v3079, %v3196
    %v3198 = vpop.f32.mrf.mxu0
    %v3199 = vadd.f32 %v3083, %v3198
    %3200 = vdwg.mxu0
    %v3201 = vmax.f32 %v3150, 0.0
    %v3202 = vmax.f32 %v3152, 0.0
    %v3203 = vmax.f32 %v3193, 0.0
    %v3204 = vmax.f32 %v3195, 0.0
    %v3205 = vmax.f32 %v3154, 0.0
    %v3206 = vmax.f32 %v3156, 0.0
    %v3207 = vmax.f32 %v3197, 0.0
    %v3208 = vmax.f32 %v3199, 0.0
    %v3209 = vpack.c.bf16 %v3205, %v3201
    %v3210 = vpack.c.bf16 %v3206, %v3202
    %v3211 = vpack.c.bf16 %v3207, %v3203
    %v3212 = vpack.c.bf16 %v3208, %v3204
    %v3213 = vld [vmem:[#allocation7] sm:$0xff]
    %v3214 = vld [vmem:[#allocation7 + $0x8] sm:$0xff]
    %v3215 = vld [vmem:[#allocation7 + $0x10] sm:$0xff]
    %v3216 = vld [vmem:[#allocation7 + $0x18] sm:$0xff]
    %v3217 = vld [vmem:[#allocation7 + $0x20] sm:$0xff]
    %v3218 = vld [vmem:[#allocation7 + $0x28] sm:$0xff]
    %v3219 = vld [vmem:[#allocation7 + $0x30] sm:$0xff]
    %v3220 = vld [vmem:[#allocation7 + $0x38] sm:$0xff]
    %v3221 = vld [vmem:[#allocation7 + $0x40] sm:$0xff]
    %v3222 = vld [vmem:[#allocation7 + $0x48] sm:$0xff]
    %v3223 = vld [vmem:[#allocation7 + $0x50] sm:$0xff]
    %v3224 = vld [vmem:[#allocation7 + $0x58] sm:$0xff]
    %v3225 = vld [vmem:[#allocation7 + $0x60] sm:$0xff]
    %v3226 = vld [vmem:[#allocation7 + $0x68] sm:$0xff]
    %v3227 = vld [vmem:[#allocation7 + $0x70] sm:$0xff]
    %v3228 = vld [vmem:[#allocation7 + $0x78] sm:$0xff]
    %v3229 = vld [vmem:[#allocation7 + $0x80] sm:$0xff]
    %v3230 = vld [vmem:[#allocation7 + $0x88] sm:$0xff]
    %v3231 = vld [vmem:[#allocation7 + $0x90] sm:$0xff]
    %v3232 = vld [vmem:[#allocation7 + $0x98] sm:$0xff]
    %v3233 = vld [vmem:[#allocation7 + $0xa0] sm:$0xff]
    %v3234 = vld [vmem:[#allocation7 + $0xa8] sm:$0xff]
    %v3235 = vld [vmem:[#allocation7 + $0xb0] sm:$0xff]
    %v3236 = vld [vmem:[#allocation7 + $0xb8] sm:$0xff]
    %v3237 = vld [vmem:[#allocation7 + $0xc0] sm:$0xff]
    %v3238 = vld [vmem:[#allocation7 + $0xc8] sm:$0xff]
    %v3239 = vld [vmem:[#allocation7 + $0xd0] sm:$0xff]
    %v3240 = vld [vmem:[#allocation7 + $0xd8] sm:$0xff]
    %v3241 = vld [vmem:[#allocation7 + $0xe0] sm:$0xff]
    %v3242 = vld [vmem:[#allocation7 + $0xe8] sm:$0xff]
    %v3243 = vld [vmem:[#allocation7 + $0xf0] sm:$0xff]
    %v3244 = vld [vmem:[#allocation7 + $0xf8] sm:$0xff]
    %v3245 = vld [vmem:[#allocation7 + $0x100] sm:$0xff]
    %v3246 = vld [vmem:[#allocation7 + $0x108] sm:$0xff]
    %v3247 = vld [vmem:[#allocation7 + $0x110] sm:$0xff]
    %v3248 = vld [vmem:[#allocation7 + $0x118] sm:$0xff]
    %v3249 = vld [vmem:[#allocation7 + $0x120] sm:$0xff]
    %v3250 = vld [vmem:[#allocation7 + $0x128] sm:$0xff]
    %v3251 = vld [vmem:[#allocation7 + $0x130] sm:$0xff]
    %v3252 = vld [vmem:[#allocation7 + $0x138] sm:$0xff]
    %v3253 = vld [vmem:[#allocation7 + $0x140] sm:$0xff]
    %v3254 = vld [vmem:[#allocation7 + $0x148] sm:$0xff]
    %v3255 = vld [vmem:[#allocation7 + $0x150] sm:$0xff]
    %v3256 = vld [vmem:[#allocation7 + $0x158] sm:$0xff]
    %v3257 = vld [vmem:[#allocation7 + $0x160] sm:$0xff]
    %v3258 = vld [vmem:[#allocation7 + $0x168] sm:$0xff]
    %v3259 = vld [vmem:[#allocation7 + $0x170] sm:$0xff]
    %v3260 = vld [vmem:[#allocation7 + $0x178] sm:$0xff]
    %v3261 = vld [vmem:[#allocation7 + $0x180] sm:$0xff]
    %v3262 = vld [vmem:[#allocation7 + $0x188] sm:$0xff]
    %v3263 = vld [vmem:[#allocation7 + $0x190] sm:$0xff]
    %v3264 = vld [vmem:[#allocation7 + $0x198] sm:$0xff]
    %v3265 = vld [vmem:[#allocation7 + $0x1a0] sm:$0xff]
    %v3266 = vld [vmem:[#allocation7 + $0x1a8] sm:$0xff]
    %v3267 = vld [vmem:[#allocation7 + $0x1b0] sm:$0xff]
    %v3268 = vld [vmem:[#allocation7 + $0x1b8] sm:$0xff]
    %v3269 = vld [vmem:[#allocation7 + $0x1c0] sm:$0xff]
    %v3270 = vld [vmem:[#allocation7 + $0x1c8] sm:$0xff]
    %v3271 = vld [vmem:[#allocation7 + $0x1d0] sm:$0xff]
    %v3272 = vld [vmem:[#allocation7 + $0x1d8] sm:$0xff]
    %v3273 = vld [vmem:[#allocation7 + $0x1e0] sm:$0xff]
    %v3274 = vld [vmem:[#allocation7 + $0x1e8] sm:$0xff]
    %v3275 = vld [vmem:[#allocation7 + $0x1f0] sm:$0xff]
    %v3276 = vld [vmem:[#allocation7 + $0x1f8] sm:$0xff]
    %v3277 = vld [vmem:[#allocation7 + $0x200] sm:$0xff]
    %v3278 = vld [vmem:[#allocation7 + $0x208] sm:$0xff]
    %v3279 = vld [vmem:[#allocation7 + $0x210] sm:$0xff]
    %v3280 = vld [vmem:[#allocation7 + $0x218] sm:$0xff]
    %v3281 = vld [vmem:[#allocation7 + $0x220] sm:$0xff]
    %v3282 = vld [vmem:[#allocation7 + $0x228] sm:$0xff]
    %v3283 = vld [vmem:[#allocation7 + $0x230] sm:$0xff]
    %v3284 = vld [vmem:[#allocation7 + $0x238] sm:$0xff]
    %v3285 = vld [vmem:[#allocation7 + $0x240] sm:$0xff]
    %v3286 = vld [vmem:[#allocation7 + $0x248] sm:$0xff]
    %v3287 = vld [vmem:[#allocation7 + $0x250] sm:$0xff]
    %v3288 = vld [vmem:[#allocation7 + $0x258] sm:$0xff]
    %v3289 = vld [vmem:[#allocation7 + $0x260] sm:$0xff]
    %v3290 = vld [vmem:[#allocation7 + $0x268] sm:$0xff]
    %v3291 = vld [vmem:[#allocation7 + $0x270] sm:$0xff]
    %v3292 = vld [vmem:[#allocation7 + $0x278] sm:$0xff]
    %v3293 = vld [vmem:[#allocation7 + $0x280] sm:$0xff]
    %v3294 = vld [vmem:[#allocation7 + $0x288] sm:$0xff]
    %v3295 = vld [vmem:[#allocation7 + $0x290] sm:$0xff]
    %v3296 = vld [vmem:[#allocation7 + $0x298] sm:$0xff]
    %v3297 = vld [vmem:[#allocation7 + $0x2a0] sm:$0xff]
    %v3298 = vld [vmem:[#allocation7 + $0x2a8] sm:$0xff]
    %v3299 = vld [vmem:[#allocation7 + $0x2b0] sm:$0xff]
    %v3300 = vld [vmem:[#allocation7 + $0x2b8] sm:$0xff]
    %v3301 = vld [vmem:[#allocation7 + $0x2c0] sm:$0xff]
    %v3302 = vld [vmem:[#allocation7 + $0x2c8] sm:$0xff]
    %v3303 = vld [vmem:[#allocation7 + $0x2d0] sm:$0xff]
    %v3304 = vld [vmem:[#allocation7 + $0x2d8] sm:$0xff]
    %v3305 = vld [vmem:[#allocation7 + $0x2e0] sm:$0xff]
    %v3306 = vld [vmem:[#allocation7 + $0x2e8] sm:$0xff]
    %v3307 = vld [vmem:[#allocation7 + $0x2f0] sm:$0xff]
    %v3308 = vld [vmem:[#allocation7 + $0x2f8] sm:$0xff]
    %v3309 = vld [vmem:[#allocation7 + $0x300] sm:$0xff]
    %v3310 = vld [vmem:[#allocation7 + $0x308] sm:$0xff]
    %v3311 = vld [vmem:[#allocation7 + $0x310] sm:$0xff]
    %v3312 = vld [vmem:[#allocation7 + $0x318] sm:$0xff]
    %v3313 = vld [vmem:[#allocation7 + $0x320] sm:$0xff]
    %v3314 = vld [vmem:[#allocation7 + $0x328] sm:$0xff]
    %v3315 = vld [vmem:[#allocation7 + $0x330] sm:$0xff]
    %v3316 = vld [vmem:[#allocation7 + $0x338] sm:$0xff]
    %v3317 = vld [vmem:[#allocation7 + $0x340] sm:$0xff]
    %v3318 = vld [vmem:[#allocation7 + $0x348] sm:$0xff]
    %v3319 = vld [vmem:[#allocation7 + $0x350] sm:$0xff]
    %v3320 = vld [vmem:[#allocation7 + $0x358] sm:$0xff]
    %v3321 = vld [vmem:[#allocation7 + $0x360] sm:$0xff]
    %v3322 = vld [vmem:[#allocation7 + $0x368] sm:$0xff]
    %v3323 = vld [vmem:[#allocation7 + $0x370] sm:$0xff]
    %v3324 = vld [vmem:[#allocation7 + $0x378] sm:$0xff]
    %v3325 = vld [vmem:[#allocation7 + $0x380] sm:$0xff]
    %v3326 = vld [vmem:[#allocation7 + $0x388] sm:$0xff]
    %v3327 = vld [vmem:[#allocation7 + $0x390] sm:$0xff]
    %v3328 = vld [vmem:[#allocation7 + $0x398] sm:$0xff]
    %v3329 = vld [vmem:[#allocation7 + $0x3a0] sm:$0xff]
    %v3330 = vld [vmem:[#allocation7 + $0x3a8] sm:$0xff]
    %v3331 = vld [vmem:[#allocation7 + $0x3b0] sm:$0xff]
    %v3332 = vld [vmem:[#allocation7 + $0x3b8] sm:$0xff]
    %v3333 = vld [vmem:[#allocation7 + $0x3c0] sm:$0xff]
    %v3334 = vld [vmem:[#allocation7 + $0x3c8] sm:$0xff]
    %v3335 = vld [vmem:[#allocation7 + $0x3d0] sm:$0xff]
    %v3336 = vld [vmem:[#allocation7 + $0x3d8] sm:$0xff]
    %v3337 = vld [vmem:[#allocation7 + $0x3e0] sm:$0xff]
    %v3338 = vld [vmem:[#allocation7 + $0x3e8] sm:$0xff]
    %v3339 = vld [vmem:[#allocation7 + $0x3f0] sm:$0xff]
    %v3340 = vld [vmem:[#allocation7 + $0x3f8] sm:$0xff]
    %v3341 = vld [vmem:[#allocation7 + $0x400] sm:$0xff]
    %v3342 = vld [vmem:[#allocation7 + $0x408] sm:$0xff]
    %v3343 = vld [vmem:[#allocation7 + $0x410] sm:$0xff]
    %v3344 = vld [vmem:[#allocation7 + $0x418] sm:$0xff]
    %v3345 = vld [vmem:[#allocation7 + $0x420] sm:$0xff]
    %v3346 = vld [vmem:[#allocation7 + $0x428] sm:$0xff]
    %v3347 = vld [vmem:[#allocation7 + $0x430] sm:$0xff]
    %v3348 = vld [vmem:[#allocation7 + $0x438] sm:$0xff]
    %v3349 = vld [vmem:[#allocation7 + $0x440] sm:$0xff]
    %v3350 = vld [vmem:[#allocation7 + $0x448] sm:$0xff]
    %v3351 = vld [vmem:[#allocation7 + $0x450] sm:$0xff]
    %v3352 = vld [vmem:[#allocation7 + $0x458] sm:$0xff]
    %v3353 = vld [vmem:[#allocation7 + $0x460] sm:$0xff]
    %v3354 = vld [vmem:[#allocation7 + $0x468] sm:$0xff]
    %v3355 = vld [vmem:[#allocation7 + $0x470] sm:$0xff]
    %v3356 = vld [vmem:[#allocation7 + $0x478] sm:$0xff]
    %v3357 = vld [vmem:[#allocation7 + $0x480] sm:$0xff]
    %v3358 = vld [vmem:[#allocation7 + $0x488] sm:$0xff]
    %v3359 = vld [vmem:[#allocation7 + $0x490] sm:$0xff]
    %v3360 = vld [vmem:[#allocation7 + $0x498] sm:$0xff]
    %v3361 = vld [vmem:[#allocation7 + $0x4a0] sm:$0xff]
    %v3362 = vld [vmem:[#allocation7 + $0x4a8] sm:$0xff]
    %v3363 = vld [vmem:[#allocation7 + $0x4b0] sm:$0xff]
    %v3364 = vld [vmem:[#allocation7 + $0x4b8] sm:$0xff]
    %v3365 = vld [vmem:[#allocation7 + $0x4c0] sm:$0xff]
    %v3366 = vld [vmem:[#allocation7 + $0x4c8] sm:$0xff]
    %v3367 = vld [vmem:[#allocation7 + $0x4d0] sm:$0xff]
    %v3368 = vld [vmem:[#allocation7 + $0x4d8] sm:$0xff]
    %v3369 = vld [vmem:[#allocation7 + $0x4e0] sm:$0xff]
    %v3370 = vld [vmem:[#allocation7 + $0x4e8] sm:$0xff]
    %v3371 = vld [vmem:[#allocation7 + $0x4f0] sm:$0xff]
    %v3372 = vld [vmem:[#allocation7 + $0x4f8] sm:$0xff]
    %v3373 = vld [vmem:[#allocation7 + $0x500] sm:$0xff]
    %v3374 = vld [vmem:[#allocation7 + $0x508] sm:$0xff]
    %v3375 = vld [vmem:[#allocation7 + $0x510] sm:$0xff]
    %v3376 = vld [vmem:[#allocation7 + $0x518] sm:$0xff]
    %v3377 = vld [vmem:[#allocation7 + $0x520] sm:$0xff]
    %v3378 = vld [vmem:[#allocation7 + $0x528] sm:$0xff]
    %v3379 = vld [vmem:[#allocation7 + $0x530] sm:$0xff]
    %v3380 = vld [vmem:[#allocation7 + $0x538] sm:$0xff]
    %v3381 = vld [vmem:[#allocation7 + $0x540] sm:$0xff]
    %v3382 = vld [vmem:[#allocation7 + $0x548] sm:$0xff]
    %v3383 = vld [vmem:[#allocation7 + $0x550] sm:$0xff]
    %v3384 = vld [vmem:[#allocation7 + $0x558] sm:$0xff]
    %v3385 = vld [vmem:[#allocation7 + $0x560] sm:$0xff]
    %v3386 = vld [vmem:[#allocation7 + $0x568] sm:$0xff]
    %v3387 = vld [vmem:[#allocation7 + $0x570] sm:$0xff]
    %v3388 = vld [vmem:[#allocation7 + $0x578] sm:$0xff]
    %v3389 = vld [vmem:[#allocation7 + $0x580] sm:$0xff]
    %v3390 = vld [vmem:[#allocation7 + $0x588] sm:$0xff]
    %v3391 = vld [vmem:[#allocation7 + $0x590] sm:$0xff]
    %v3392 = vld [vmem:[#allocation7 + $0x598] sm:$0xff]
    %v3393 = vld [vmem:[#allocation7 + $0x5a0] sm:$0xff]
    %v3394 = vld [vmem:[#allocation7 + $0x5a8] sm:$0xff]
    %v3395 = vld [vmem:[#allocation7 + $0x5b0] sm:$0xff]
    %v3396 = vld [vmem:[#allocation7 + $0x5b8] sm:$0xff]
    %v3397 = vld [vmem:[#allocation7 + $0x5c0] sm:$0xff]
    %v3398 = vld [vmem:[#allocation7 + $0x5c8] sm:$0xff]
    %v3399 = vld [vmem:[#allocation7 + $0x5d0] sm:$0xff]
    %v3400 = vld [vmem:[#allocation7 + $0x5d8] sm:$0xff]
    %v3401 = vld [vmem:[#allocation7 + $0x5e0] sm:$0xff]
    %v3402 = vld [vmem:[#allocation7 + $0x5e8] sm:$0xff]
    %v3403 = vld [vmem:[#allocation7 + $0x5f0] sm:$0xff]
    %v3404 = vld [vmem:[#allocation7 + $0x5f8] sm:$0xff]
    %v3405 = vld [vmem:[#allocation7 + $0x600] sm:$0xff]
    %v3406 = vld [vmem:[#allocation7 + $0x608] sm:$0xff]
    %v3407 = vld [vmem:[#allocation7 + $0x610] sm:$0xff]
    %v3408 = vld [vmem:[#allocation7 + $0x618] sm:$0xff]
    %v3409 = vld [vmem:[#allocation7 + $0x620] sm:$0xff]
    %v3410 = vld [vmem:[#allocation7 + $0x628] sm:$0xff]
    %v3411 = vld [vmem:[#allocation7 + $0x630] sm:$0xff]
    %v3412 = vld [vmem:[#allocation7 + $0x638] sm:$0xff]
    %v3413 = vld [vmem:[#allocation7 + $0x640] sm:$0xff]
    %v3414 = vld [vmem:[#allocation7 + $0x648] sm:$0xff]
    %v3415 = vld [vmem:[#allocation7 + $0x650] sm:$0xff]
    %v3416 = vld [vmem:[#allocation7 + $0x658] sm:$0xff]
    %v3417 = vld [vmem:[#allocation7 + $0x660] sm:$0xff]
    %v3418 = vld [vmem:[#allocation7 + $0x668] sm:$0xff]
    %v3419 = vld [vmem:[#allocation7 + $0x670] sm:$0xff]
    %v3420 = vld [vmem:[#allocation7 + $0x678] sm:$0xff]
    %v3421 = vld [vmem:[#allocation7 + $0x680] sm:$0xff]
    %v3422 = vld [vmem:[#allocation7 + $0x688] sm:$0xff]
    %v3423 = vld [vmem:[#allocation7 + $0x690] sm:$0xff]
    %v3424 = vld [vmem:[#allocation7 + $0x698] sm:$0xff]
    %v3425 = vld [vmem:[#allocation7 + $0x6a0] sm:$0xff]
    %v3426 = vld [vmem:[#allocation7 + $0x6a8] sm:$0xff]
    %v3427 = vld [vmem:[#allocation7 + $0x6b0] sm:$0xff]
    %v3428 = vld [vmem:[#allocation7 + $0x6b8] sm:$0xff]
    %v3429 = vld [vmem:[#allocation7 + $0x6c0] sm:$0xff]
    %v3430 = vld [vmem:[#allocation7 + $0x6c8] sm:$0xff]
    %v3431 = vld [vmem:[#allocation7 + $0x6d0] sm:$0xff]
    %v3432 = vld [vmem:[#allocation7 + $0x6d8] sm:$0xff]
    %v3433 = vld [vmem:[#allocation7 + $0x6e0] sm:$0xff]
    %v3434 = vld [vmem:[#allocation7 + $0x6e8] sm:$0xff]
    %v3435 = vld [vmem:[#allocation7 + $0x6f0] sm:$0xff]
    %v3436 = vld [vmem:[#allocation7 + $0x6f8] sm:$0xff]
    %v3437 = vld [vmem:[#allocation7 + $0x700] sm:$0xff]
    %v3438 = vld [vmem:[#allocation7 + $0x708] sm:$0xff]
    %v3439 = vld [vmem:[#allocation7 + $0x710] sm:$0xff]
    %v3440 = vld [vmem:[#allocation7 + $0x718] sm:$0xff]
    %v3441 = vld [vmem:[#allocation7 + $0x720] sm:$0xff]
    %v3442 = vld [vmem:[#allocation7 + $0x728] sm:$0xff]
    %v3443 = vld [vmem:[#allocation7 + $0x730] sm:$0xff]
    %v3444 = vld [vmem:[#allocation7 + $0x738] sm:$0xff]
    %v3445 = vld [vmem:[#allocation7 + $0x740] sm:$0xff]
    %v3446 = vld [vmem:[#allocation7 + $0x748] sm:$0xff]
    %v3447 = vld [vmem:[#allocation7 + $0x750] sm:$0xff]
    %v3448 = vld [vmem:[#allocation7 + $0x758] sm:$0xff]
    %v3449 = vld [vmem:[#allocation7 + $0x760] sm:$0xff]
    %v3450 = vld [vmem:[#allocation7 + $0x768] sm:$0xff]
    %v3451 = vld [vmem:[#allocation7 + $0x770] sm:$0xff]
    %v3452 = vld [vmem:[#allocation7 + $0x778] sm:$0xff]
    %v3453 = vld [vmem:[#allocation7 + $0x780] sm:$0xff]
    %v3454 = vld [vmem:[#allocation7 + $0x788] sm:$0xff]
    %v3455 = vld [vmem:[#allocation7 + $0x790] sm:$0xff]
    %v3456 = vld [vmem:[#allocation7 + $0x798] sm:$0xff]
    %v3457 = vld [vmem:[#allocation7 + $0x7a0] sm:$0xff]
    %v3458 = vld [vmem:[#allocation7 + $0x7a8] sm:$0xff]
    %v3459 = vld [vmem:[#allocation7 + $0x7b0] sm:$0xff]
    %v3460 = vld [vmem:[#allocation7 + $0x7b8] sm:$0xff]
    %v3461 = vld [vmem:[#allocation7 + $0x7c0] sm:$0xff]
    %v3462 = vld [vmem:[#allocation7 + $0x7c8] sm:$0xff]
    %v3463 = vld [vmem:[#allocation7 + $0x7d0] sm:$0xff]
    %v3464 = vld [vmem:[#allocation7 + $0x7d8] sm:$0xff]
    %v3465 = vld [vmem:[#allocation7 + $0x7e0] sm:$0xff]
    %v3466 = vld [vmem:[#allocation7 + $0x7e8] sm:$0xff]
    %v3467 = vld [vmem:[#allocation7 + $0x7f0] sm:$0xff]
    %v3468 = vld [vmem:[#allocation7 + $0x7f8] sm:$0xff]
    %v3469 = vld [vmem:[%s13] sm:$0xff]
    %v3471 = vlaneseq
    %v3472 = vshrl.u32 %v3471, 7
    %v3473 = vsub.s32 0, %v3472
    %v3474 = vrot.slane %v3469, %v3473
    %v3475 = vlaneseq
    %v3476 = vshrl.u32 %v3475, 7
    %v3477 = vsub.s32 1, %v3476
    %v3478 = vrot.slane %v3469, %v3477
    %v3479 = vlaneseq
    %v3480 = vshrl.u32 %v3479, 7
    %v3481 = vsub.s32 2, %v3480
    %v3482 = vrot.slane %v3469, %v3481
    %v3483 = vlaneseq
    %v3484 = vshrl.u32 %v3483, 7
    %v3485 = vsub.s32 3, %v3484
    %v3486 = vrot.slane %v3469, %v3485
    %v3487 = vlaneseq
    %v3488 = vshrl.u32 %v3487, 7
    %v3489 = vsub.s32 4, %v3488
    %v3490 = vrot.slane %v3469, %v3489
    %v3491 = vlaneseq
    %v3492 = vshrl.u32 %v3491, 7
    %v3493 = vsub.s32 5, %v3492
    %v3494 = vrot.slane %v3469, %v3493
    %v3495 = vlaneseq
    %v3496 = vshrl.u32 %v3495, 7
    %v3497 = vsub.s32 6, %v3496
    %v3498 = vrot.slane %v3469, %v3497
    %v3499 = vlaneseq
    %v3500 = vshrl.u32 %v3499, 7
    %v3501 = vsub.s32 7, %v3500
    %v3502 = vrot.slane %v3469, %v3501
    %v3767 = vunpack.c.l.b16 %v3213
    %v3768 = vunpack.c.h.b16 %v3213
    %v3769 = vunpack.c.l.b16 %v3214
    %v3770 = vunpack.c.h.b16 %v3214
    %v3771 = vunpack.c.l.b16 %v3215
    %v3772 = vunpack.c.h.b16 %v3215
    %v3773 = vunpack.c.l.b16 %v3216
    %v3774 = vunpack.c.h.b16 %v3216
    %v3775 = vunpack.c.l.b16 %v3217
    %v3776 = vunpack.c.h.b16 %v3217
    %v3777 = vunpack.c.l.b16 %v3218
    %v3778 = vunpack.c.h.b16 %v3218
    %v3779 = vunpack.c.l.b16 %v3219
    %v3780 = vunpack.c.h.b16 %v3219
    %v3781 = vunpack.c.l.b16 %v3220
    %v3782 = vunpack.c.h.b16 %v3220
    %v3783 = vunpack.c.l.b16 %v3221
    %v3784 = vunpack.c.h.b16 %v3221
    %v3785 = vunpack.c.l.b16 %v3222
    %v3786 = vunpack.c.h.b16 %v3222
    %v3787 = vunpack.c.l.b16 %v3223
    %v3788 = vunpack.c.h.b16 %v3223
    %v3789 = vunpack.c.l.b16 %v3224
    %v3790 = vunpack.c.h.b16 %v3224
    %v3791 = vunpack.c.l.b16 %v3225
    %v3792 = vunpack.c.h.b16 %v3225
    %v3793 = vunpack.c.l.b16 %v3226
    %v3794 = vunpack.c.h.b16 %v3226
    %v3795 = vunpack.c.l.b16 %v3227
    %v3796 = vunpack.c.h.b16 %v3227
    %v3797 = vunpack.c.l.b16 %v3228
    %v3798 = vunpack.c.h.b16 %v3228
    %v3799 = vunpack.c.l.b16 %v3229
    %v3800 = vunpack.c.h.b16 %v3229
    %v3801 = vunpack.c.l.b16 %v3230
    %v3802 = vunpack.c.h.b16 %v3230
    %v3803 = vunpack.c.l.b16 %v3231
    %v3804 = vunpack.c.h.b16 %v3231
    %v3805 = vunpack.c.l.b16 %v3232
    %v3806 = vunpack.c.h.b16 %v3232
    %v3807 = vunpack.c.l.b16 %v3233
    %v3808 = vunpack.c.h.b16 %v3233
    %v3809 = vunpack.c.l.b16 %v3234
    %v3810 = vunpack.c.h.b16 %v3234
    %v3811 = vunpack.c.l.b16 %v3235
    %v3812 = vunpack.c.h.b16 %v3235
    %v3813 = vunpack.c.l.b16 %v3236
    %v3814 = vunpack.c.h.b16 %v3236
    %v3815 = vunpack.c.l.b16 %v3237
    %v3816 = vunpack.c.h.b16 %v3237
    %v3817 = vunpack.c.l.b16 %v3238
    %v3818 = vunpack.c.h.b16 %v3238
    %v3819 = vunpack.c.l.b16 %v3239
    %v3820 = vunpack.c.h.b16 %v3239
    %v3821 = vunpack.c.l.b16 %v3240
    %v3822 = vunpack.c.h.b16 %v3240
    %v3823 = vunpack.c.l.b16 %v3241
    %v3824 = vunpack.c.h.b16 %v3241
    %v3825 = vunpack.c.l.b16 %v3242
    %v3826 = vunpack.c.h.b16 %v3242
    %v3827 = vunpack.c.l.b16 %v3243
    %v3828 = vunpack.c.h.b16 %v3243
    %v3829 = vunpack.c.l.b16 %v3244
    %v3830 = vunpack.c.h.b16 %v3244
    %v3831 = vunpack.c.l.b16 %v3245
    %v3832 = vunpack.c.h.b16 %v3245
    %v3833 = vunpack.c.l.b16 %v3246
    %v3834 = vunpack.c.h.b16 %v3246
    %v3835 = vunpack.c.l.b16 %v3247
    %v3836 = vunpack.c.h.b16 %v3247
    %v3837 = vunpack.c.l.b16 %v3248
    %v3838 = vunpack.c.h.b16 %v3248
    %v3839 = vunpack.c.l.b16 %v3249
    %v3840 = vunpack.c.h.b16 %v3249
    %v3841 = vunpack.c.l.b16 %v3250
    %v3842 = vunpack.c.h.b16 %v3250
    %v3843 = vunpack.c.l.b16 %v3251
    %v3844 = vunpack.c.h.b16 %v3251
    %v3845 = vunpack.c.l.b16 %v3252
    %v3846 = vunpack.c.h.b16 %v3252
    %v3847 = vunpack.c.l.b16 %v3253
    %v3848 = vunpack.c.h.b16 %v3253
    %v3849 = vunpack.c.l.b16 %v3254
    %v3850 = vunpack.c.h.b16 %v3254
    %v3851 = vunpack.c.l.b16 %v3255
    %v3852 = vunpack.c.h.b16 %v3255
    %v3853 = vunpack.c.l.b16 %v3256
    %v3854 = vunpack.c.h.b16 %v3256
    %v3855 = vunpack.c.l.b16 %v3257
    %v3856 = vunpack.c.h.b16 %v3257
    %v3857 = vunpack.c.l.b16 %v3258
    %v3858 = vunpack.c.h.b16 %v3258
    %v3859 = vunpack.c.l.b16 %v3259
    %v3860 = vunpack.c.h.b16 %v3259
    %v3861 = vunpack.c.l.b16 %v3260
    %v3862 = vunpack.c.h.b16 %v3260
    %v3863 = vunpack.c.l.b16 %v3261
    %v3864 = vunpack.c.h.b16 %v3261
    %v3865 = vunpack.c.l.b16 %v3262
    %v3866 = vunpack.c.h.b16 %v3262
    %v3867 = vunpack.c.l.b16 %v3263
    %v3868 = vunpack.c.h.b16 %v3263
    %v3869 = vunpack.c.l.b16 %v3264
    %v3870 = vunpack.c.h.b16 %v3264
    %v3871 = vunpack.c.l.b16 %v3265
    %v3872 = vunpack.c.h.b16 %v3265
    %v3873 = vunpack.c.l.b16 %v3266
    %v3874 = vunpack.c.h.b16 %v3266
    %v3875 = vunpack.c.l.b16 %v3267
    %v3876 = vunpack.c.h.b16 %v3267
    %v3877 = vunpack.c.l.b16 %v3268
    %v3878 = vunpack.c.h.b16 %v3268
    %v3879 = vunpack.c.l.b16 %v3269
    %v3880 = vunpack.c.h.b16 %v3269
    %v3881 = vunpack.c.l.b16 %v3270
    %v3882 = vunpack.c.h.b16 %v3270
    %v3883 = vunpack.c.l.b16 %v3271
    %v3884 = vunpack.c.h.b16 %v3271
    %v3885 = vunpack.c.l.b16 %v3272
    %v3886 = vunpack.c.h.b16 %v3272
    %v3887 = vunpack.c.l.b16 %v3273
    %v3888 = vunpack.c.h.b16 %v3273
    %v3889 = vunpack.c.l.b16 %v3274
    %v3890 = vunpack.c.h.b16 %v3274
    %v3891 = vunpack.c.l.b16 %v3275
    %v3892 = vunpack.c.h.b16 %v3275
    %v3893 = vunpack.c.l.b16 %v3276
    %v3894 = vunpack.c.h.b16 %v3276
    %v3895 = vunpack.c.l.b16 %v3277
    %v3896 = vunpack.c.h.b16 %v3277
    %v3897 = vunpack.c.l.b16 %v3278
    %v3898 = vunpack.c.h.b16 %v3278
    %v3899 = vunpack.c.l.b16 %v3279
    %v3900 = vunpack.c.h.b16 %v3279
    %v3901 = vunpack.c.l.b16 %v3280
    %v3902 = vunpack.c.h.b16 %v3280
    %v3903 = vunpack.c.l.b16 %v3281
    %v3904 = vunpack.c.h.b16 %v3281
    %v3905 = vunpack.c.l.b16 %v3282
    %v3906 = vunpack.c.h.b16 %v3282
    %v3907 = vunpack.c.l.b16 %v3283
    %v3908 = vunpack.c.h.b16 %v3283
    %v3909 = vunpack.c.l.b16 %v3284
    %v3910 = vunpack.c.h.b16 %v3284
    %v3911 = vunpack.c.l.b16 %v3285
    %v3912 = vunpack.c.h.b16 %v3285
    %v3913 = vunpack.c.l.b16 %v3286
    %v3914 = vunpack.c.h.b16 %v3286
    %v3915 = vunpack.c.l.b16 %v3287
    %v3916 = vunpack.c.h.b16 %v3287
    %v3917 = vunpack.c.l.b16 %v3288
    %v3918 = vunpack.c.h.b16 %v3288
    %v3919 = vunpack.c.l.b16 %v3289
    %v3920 = vunpack.c.h.b16 %v3289
    %v3921 = vunpack.c.l.b16 %v3290
    %v3922 = vunpack.c.h.b16 %v3290
    %v3923 = vunpack.c.l.b16 %v3291
    %v3924 = vunpack.c.h.b16 %v3291
    %v3925 = vunpack.c.l.b16 %v3292
    %v3926 = vunpack.c.h.b16 %v3292
    %v3927 = vunpack.c.l.b16 %v3293
    %v3928 = vunpack.c.h.b16 %v3293
    %v3929 = vunpack.c.l.b16 %v3294
    %v3930 = vunpack.c.h.b16 %v3294
    %v3931 = vunpack.c.l.b16 %v3295
    %v3932 = vunpack.c.h.b16 %v3295
    %v3933 = vunpack.c.l.b16 %v3296
    %v3934 = vunpack.c.h.b16 %v3296
    %v3935 = vunpack.c.l.b16 %v3297
    %v3936 = vunpack.c.h.b16 %v3297
    %v3937 = vunpack.c.l.b16 %v3298
    %v3938 = vunpack.c.h.b16 %v3298
    %v3939 = vunpack.c.l.b16 %v3299
    %v3940 = vunpack.c.h.b16 %v3299
    %v3941 = vunpack.c.l.b16 %v3300
    %v3942 = vunpack.c.h.b16 %v3300
    %v3943 = vunpack.c.l.b16 %v3301
    %v3944 = vunpack.c.h.b16 %v3301
    %v3945 = vunpack.c.l.b16 %v3302
    %v3946 = vunpack.c.h.b16 %v3302
    %v3947 = vunpack.c.l.b16 %v3303
    %v3948 = vunpack.c.h.b16 %v3303
    %v3949 = vunpack.c.l.b16 %v3304
    %v3950 = vunpack.c.h.b16 %v3304
    %v3951 = vunpack.c.l.b16 %v3305
    %v3952 = vunpack.c.h.b16 %v3305
    %v3953 = vunpack.c.l.b16 %v3306
    %v3954 = vunpack.c.h.b16 %v3306
    %v3955 = vunpack.c.l.b16 %v3307
    %v3956 = vunpack.c.h.b16 %v3307
    %v3957 = vunpack.c.l.b16 %v3308
    %v3958 = vunpack.c.h.b16 %v3308
    %v3959 = vunpack.c.l.b16 %v3309
    %v3960 = vunpack.c.h.b16 %v3309
    %v3961 = vunpack.c.l.b16 %v3310
    %v3962 = vunpack.c.h.b16 %v3310
    %v3963 = vunpack.c.l.b16 %v3311
    %v3964 = vunpack.c.h.b16 %v3311
    %v3965 = vunpack.c.l.b16 %v3312
    %v3966 = vunpack.c.h.b16 %v3312
    %v3967 = vunpack.c.l.b16 %v3313
    %v3968 = vunpack.c.h.b16 %v3313
    %v3969 = vunpack.c.l.b16 %v3314
    %v3970 = vunpack.c.h.b16 %v3314
    %v3971 = vunpack.c.l.b16 %v3315
    %v3972 = vunpack.c.h.b16 %v3315
    %v3973 = vunpack.c.l.b16 %v3316
    %v3974 = vunpack.c.h.b16 %v3316
    %v3975 = vunpack.c.l.b16 %v3317
    %v3976 = vunpack.c.h.b16 %v3317
    %v3977 = vunpack.c.l.b16 %v3318
    %v3978 = vunpack.c.h.b16 %v3318
    %v3979 = vunpack.c.l.b16 %v3319
    %v3980 = vunpack.c.h.b16 %v3319
    %v3981 = vunpack.c.l.b16 %v3320
    %v3982 = vunpack.c.h.b16 %v3320
    %v3983 = vunpack.c.l.b16 %v3321
    %v3984 = vunpack.c.h.b16 %v3321
    %v3985 = vunpack.c.l.b16 %v3322
    %v3986 = vunpack.c.h.b16 %v3322
    %v3987 = vunpack.c.l.b16 %v3323
    %v3988 = vunpack.c.h.b16 %v3323
    %v3989 = vunpack.c.l.b16 %v3324
    %v3990 = vunpack.c.h.b16 %v3324
    %v3991 = vunpack.c.l.b16 %v3325
    %v3992 = vunpack.c.h.b16 %v3325
    %v3993 = vunpack.c.l.b16 %v3326
    %v3994 = vunpack.c.h.b16 %v3326
    %v3995 = vunpack.c.l.b16 %v3327
    %v3996 = vunpack.c.h.b16 %v3327
    %v3997 = vunpack.c.l.b16 %v3328
    %v3998 = vunpack.c.h.b16 %v3328
    %v3999 = vunpack.c.l.b16 %v3329
    %v4000 = vunpack.c.h.b16 %v3329
    %v4001 = vunpack.c.l.b16 %v3330
    %v4002 = vunpack.c.h.b16 %v3330
    %v4003 = vunpack.c.l.b16 %v3331
    %v4004 = vunpack.c.h.b16 %v3331
    %v4005 = vunpack.c.l.b16 %v3332
    %v4006 = vunpack.c.h.b16 %v3332
    %v4007 = vunpack.c.l.b16 %v3333
    %v4008 = vunpack.c.h.b16 %v3333
    %v4009 = vunpack.c.l.b16 %v3334
    %v4010 = vunpack.c.h.b16 %v3334
    %v4011 = vunpack.c.l.b16 %v3335
    %v4012 = vunpack.c.h.b16 %v3335
    %v4013 = vunpack.c.l.b16 %v3336
    %v4014 = vunpack.c.h.b16 %v3336
    %v4015 = vunpack.c.l.b16 %v3337
    %v4016 = vunpack.c.h.b16 %v3337
    %v4017 = vunpack.c.l.b16 %v3338
    %v4018 = vunpack.c.h.b16 %v3338
    %v4019 = vunpack.c.l.b16 %v3339
    %v4020 = vunpack.c.h.b16 %v3339
    %v4021 = vunpack.c.l.b16 %v3340
    %v4022 = vunpack.c.h.b16 %v3340
    %v4023 = vunpack.c.l.b16 %v3341
    %v4024 = vunpack.c.h.b16 %v3341
    %v4025 = vunpack.c.l.b16 %v3342
    %v4026 = vunpack.c.h.b16 %v3342
    %v4027 = vunpack.c.l.b16 %v3343
    %v4028 = vunpack.c.h.b16 %v3343
    %v4029 = vunpack.c.l.b16 %v3344
    %v4030 = vunpack.c.h.b16 %v3344
    %v4031 = vunpack.c.l.b16 %v3345
    %v4032 = vunpack.c.h.b16 %v3345
    %v4033 = vunpack.c.l.b16 %v3346
    %v4034 = vunpack.c.h.b16 %v3346
    %v4035 = vunpack.c.l.b16 %v3347
    %v4036 = vunpack.c.h.b16 %v3347
    %v4037 = vunpack.c.l.b16 %v3348
    %v4038 = vunpack.c.h.b16 %v3348
    %v4039 = vunpack.c.l.b16 %v3349
    %v4040 = vunpack.c.h.b16 %v3349
    %v4041 = vunpack.c.l.b16 %v3350
    %v4042 = vunpack.c.h.b16 %v3350
    %v4043 = vunpack.c.l.b16 %v3351
    %v4044 = vunpack.c.h.b16 %v3351
    %v4045 = vunpack.c.l.b16 %v3352
    %v4046 = vunpack.c.h.b16 %v3352
    %v4047 = vunpack.c.l.b16 %v3353
    %v4048 = vunpack.c.h.b16 %v3353
    %v4049 = vunpack.c.l.b16 %v3354
    %v4050 = vunpack.c.h.b16 %v3354
    %v4051 = vunpack.c.l.b16 %v3355
    %v4052 = vunpack.c.h.b16 %v3355
    %v4053 = vunpack.c.l.b16 %v3356
    %v4054 = vunpack.c.h.b16 %v3356
    %v4055 = vunpack.c.l.b16 %v3357
    %v4056 = vunpack.c.h.b16 %v3357
    %v4057 = vunpack.c.l.b16 %v3358
    %v4058 = vunpack.c.h.b16 %v3358
    %v4059 = vunpack.c.l.b16 %v3359
    %v4060 = vunpack.c.h.b16 %v3359
    %v4061 = vunpack.c.l.b16 %v3360
    %v4062 = vunpack.c.h.b16 %v3360
    %v4063 = vunpack.c.l.b16 %v3361
    %v4064 = vunpack.c.h.b16 %v3361
    %v4065 = vunpack.c.l.b16 %v3362
    %v4066 = vunpack.c.h.b16 %v3362
    %v4067 = vunpack.c.l.b16 %v3363
    %v4068 = vunpack.c.h.b16 %v3363
    %v4069 = vunpack.c.l.b16 %v3364
    %v4070 = vunpack.c.h.b16 %v3364
    %v4071 = vunpack.c.l.b16 %v3365
    %v4072 = vunpack.c.h.b16 %v3365
    %v4073 = vunpack.c.l.b16 %v3366
    %v4074 = vunpack.c.h.b16 %v3366
    %v4075 = vunpack.c.l.b16 %v3367
    %v4076 = vunpack.c.h.b16 %v3367
    %v4077 = vunpack.c.l.b16 %v3368
    %v4078 = vunpack.c.h.b16 %v3368
    %v4079 = vunpack.c.l.b16 %v3369
    %v4080 = vunpack.c.h.b16 %v3369
    %v4081 = vunpack.c.l.b16 %v3370
    %v4082 = vunpack.c.h.b16 %v3370
    %v4083 = vunpack.c.l.b16 %v3371
    %v4084 = vunpack.c.h.b16 %v3371
    %v4085 = vunpack.c.l.b16 %v3372
    %v4086 = vunpack.c.h.b16 %v3372
    %v4087 = vunpack.c.l.b16 %v3373
    %v4088 = vunpack.c.h.b16 %v3373
    %v4089 = vunpack.c.l.b16 %v3374
    %v4090 = vunpack.c.h.b16 %v3374
    %v4091 = vunpack.c.l.b16 %v3375
    %v4092 = vunpack.c.h.b16 %v3375
    %v4093 = vunpack.c.l.b16 %v3376
    %v4094 = vunpack.c.h.b16 %v3376
    %v4095 = vunpack.c.l.b16 %v3377
    %v4096 = vunpack.c.h.b16 %v3377
    %v4097 = vunpack.c.l.b16 %v3378
    %v4098 = vunpack.c.h.b16 %v3378
    %v4099 = vunpack.c.l.b16 %v3379
    %v4100 = vunpack.c.h.b16 %v3379
    %v4101 = vunpack.c.l.b16 %v3380
    %v4102 = vunpack.c.h.b16 %v3380
    %v4103 = vunpack.c.l.b16 %v3381
    %v4104 = vunpack.c.h.b16 %v3381
    %v4105 = vunpack.c.l.b16 %v3382
    %v4106 = vunpack.c.h.b16 %v3382
    %v4107 = vunpack.c.l.b16 %v3383
    %v4108 = vunpack.c.h.b16 %v3383
    %v4109 = vunpack.c.l.b16 %v3384
    %v4110 = vunpack.c.h.b16 %v3384
    %v4111 = vunpack.c.l.b16 %v3385
    %v4112 = vunpack.c.h.b16 %v3385
    %v4113 = vunpack.c.l.b16 %v3386
    %v4114 = vunpack.c.h.b16 %v3386
    %v4115 = vunpack.c.l.b16 %v3387
    %v4116 = vunpack.c.h.b16 %v3387
    %v4117 = vunpack.c.l.b16 %v3388
    %v4118 = vunpack.c.h.b16 %v3388
    %v4119 = vunpack.c.l.b16 %v3389
    %v4120 = vunpack.c.h.b16 %v3389
    %v4121 = vunpack.c.l.b16 %v3390
    %v4122 = vunpack.c.h.b16 %v3390
    %v4123 = vunpack.c.l.b16 %v3391
    %v4124 = vunpack.c.h.b16 %v3391
    %v4125 = vunpack.c.l.b16 %v3392
    %v4126 = vunpack.c.h.b16 %v3392
    %v4127 = vunpack.c.l.b16 %v3393
    %v4128 = vunpack.c.h.b16 %v3393
    %v4129 = vunpack.c.l.b16 %v3394
    %v4130 = vunpack.c.h.b16 %v3394
    %v4131 = vunpack.c.l.b16 %v3395
    %v4132 = vunpack.c.h.b16 %v3395
    %v4133 = vunpack.c.l.b16 %v3396
    %v4134 = vunpack.c.h.b16 %v3396
    %v4135 = vunpack.c.l.b16 %v3397
    %v4136 = vunpack.c.h.b16 %v3397
    %v4137 = vunpack.c.l.b16 %v3398
    %v4138 = vunpack.c.h.b16 %v3398
    %v4139 = vunpack.c.l.b16 %v3399
    %v4140 = vunpack.c.h.b16 %v3399
    %v4141 = vunpack.c.l.b16 %v3400
    %v4142 = vunpack.c.h.b16 %v3400
    %v4143 = vunpack.c.l.b16 %v3401
    %v4144 = vunpack.c.h.b16 %v3401
    %v4145 = vunpack.c.l.b16 %v3402
    %v4146 = vunpack.c.h.b16 %v3402
    %v4147 = vunpack.c.l.b16 %v3403
    %v4148 = vunpack.c.h.b16 %v3403
    %v4149 = vunpack.c.l.b16 %v3404
    %v4150 = vunpack.c.h.b16 %v3404
    %v4151 = vunpack.c.l.b16 %v3405
    %v4152 = vunpack.c.h.b16 %v3405
    %v4153 = vunpack.c.l.b16 %v3406
    %v4154 = vunpack.c.h.b16 %v3406
    %v4155 = vunpack.c.l.b16 %v3407
    %v4156 = vunpack.c.h.b16 %v3407
    %v4157 = vunpack.c.l.b16 %v3408
    %v4158 = vunpack.c.h.b16 %v3408
    %v4159 = vunpack.c.l.b16 %v3409
    %v4160 = vunpack.c.h.b16 %v3409
    %v4161 = vunpack.c.l.b16 %v3410
    %v4162 = vunpack.c.h.b16 %v3410
    %v4163 = vunpack.c.l.b16 %v3411
    %v4164 = vunpack.c.h.b16 %v3411
    %v4165 = vunpack.c.l.b16 %v3412
    %v4166 = vunpack.c.h.b16 %v3412
    %v4167 = vunpack.c.l.b16 %v3413
    %v4168 = vunpack.c.h.b16 %v3413
    %v4169 = vunpack.c.l.b16 %v3414
    %v4170 = vunpack.c.h.b16 %v3414
    %v4171 = vunpack.c.l.b16 %v3415
    %v4172 = vunpack.c.h.b16 %v3415
    %v4173 = vunpack.c.l.b16 %v3416
    %v4174 = vunpack.c.h.b16 %v3416
    %v4175 = vunpack.c.l.b16 %v3417
    %v4176 = vunpack.c.h.b16 %v3417
    %v4177 = vunpack.c.l.b16 %v3418
    %v4178 = vunpack.c.h.b16 %v3418
    %v4179 = vunpack.c.l.b16 %v3419
    %v4180 = vunpack.c.h.b16 %v3419
    %v4181 = vunpack.c.l.b16 %v3420
    %v4182 = vunpack.c.h.b16 %v3420
    %v4183 = vunpack.c.l.b16 %v3421
    %v4184 = vunpack.c.h.b16 %v3421
    %v4185 = vunpack.c.l.b16 %v3422
    %v4186 = vunpack.c.h.b16 %v3422
    %v4187 = vunpack.c.l.b16 %v3423
    %v4188 = vunpack.c.h.b16 %v3423
    %v4189 = vunpack.c.l.b16 %v3424
    %v4190 = vunpack.c.h.b16 %v3424
    %v4191 = vunpack.c.l.b16 %v3425
    %v4192 = vunpack.c.h.b16 %v3425
    %v4193 = vunpack.c.l.b16 %v3426
    %v4194 = vunpack.c.h.b16 %v3426
    %v4195 = vunpack.c.l.b16 %v3427
    %v4196 = vunpack.c.h.b16 %v3427
    %v4197 = vunpack.c.l.b16 %v3428
    %v4198 = vunpack.c.h.b16 %v3428
    %v4199 = vunpack.c.l.b16 %v3429
    %v4200 = vunpack.c.h.b16 %v3429
    %v4201 = vunpack.c.l.b16 %v3430
    %v4202 = vunpack.c.h.b16 %v3430
    %v4203 = vunpack.c.l.b16 %v3431
    %v4204 = vunpack.c.h.b16 %v3431
    %v4205 = vunpack.c.l.b16 %v3432
    %v4206 = vunpack.c.h.b16 %v3432
    %v4207 = vunpack.c.l.b16 %v3433
    %v4208 = vunpack.c.h.b16 %v3433
    %v4209 = vunpack.c.l.b16 %v3434
    %v4210 = vunpack.c.h.b16 %v3434
    %v4211 = vunpack.c.l.b16 %v3435
    %v4212 = vunpack.c.h.b16 %v3435
    %v4213 = vunpack.c.l.b16 %v3436
    %v4214 = vunpack.c.h.b16 %v3436
    %v4215 = vunpack.c.l.b16 %v3437
    %v4216 = vunpack.c.h.b16 %v3437
    %v4217 = vunpack.c.l.b16 %v3438
    %v4218 = vunpack.c.h.b16 %v3438
    %v4219 = vunpack.c.l.b16 %v3439
    %v4220 = vunpack.c.h.b16 %v3439
    %v4221 = vunpack.c.l.b16 %v3440
    %v4222 = vunpack.c.h.b16 %v3440
    %v4223 = vunpack.c.l.b16 %v3441
    %v4224 = vunpack.c.h.b16 %v3441
    %v4225 = vunpack.c.l.b16 %v3442
    %v4226 = vunpack.c.h.b16 %v3442
    %v4227 = vunpack.c.l.b16 %v3443
    %v4228 = vunpack.c.h.b16 %v3443
    %v4229 = vunpack.c.l.b16 %v3444
    %v4230 = vunpack.c.h.b16 %v3444
    %v4231 = vunpack.c.l.b16 %v3445
    %v4232 = vunpack.c.h.b16 %v3445
    %v4233 = vunpack.c.l.b16 %v3446
    %v4234 = vunpack.c.h.b16 %v3446
    %v4235 = vunpack.c.l.b16 %v3447
    %v4236 = vunpack.c.h.b16 %v3447
    %v4237 = vunpack.c.l.b16 %v3448
    %v4238 = vunpack.c.h.b16 %v3448
    %v4239 = vunpack.c.l.b16 %v3449
    %v4240 = vunpack.c.h.b16 %v3449
    %v4241 = vunpack.c.l.b16 %v3450
    %v4242 = vunpack.c.h.b16 %v3450
    %v4243 = vunpack.c.l.b16 %v3451
    %v4244 = vunpack.c.h.b16 %v3451
    %v4245 = vunpack.c.l.b16 %v3452
    %v4246 = vunpack.c.h.b16 %v3452
    %v4247 = vunpack.c.l.b16 %v3453
    %v4248 = vunpack.c.h.b16 %v3453
    %v4249 = vunpack.c.l.b16 %v3454
    %v4250 = vunpack.c.h.b16 %v3454
    %v4251 = vunpack.c.l.b16 %v3455
    %v4252 = vunpack.c.h.b16 %v3455
    %v4253 = vunpack.c.l.b16 %v3456
    %v4254 = vunpack.c.h.b16 %v3456
    %v4255 = vunpack.c.l.b16 %v3457
    %v4256 = vunpack.c.h.b16 %v3457
    %v4257 = vunpack.c.l.b16 %v3458
    %v4258 = vunpack.c.h.b16 %v3458
    %v4259 = vunpack.c.l.b16 %v3459
    %v4260 = vunpack.c.h.b16 %v3459
    %v4261 = vunpack.c.l.b16 %v3460
    %v4262 = vunpack.c.h.b16 %v3460
    %v4263 = vunpack.c.l.b16 %v3461
    %v4264 = vunpack.c.h.b16 %v3461
    %v4265 = vunpack.c.l.b16 %v3462
    %v4266 = vunpack.c.h.b16 %v3462
    %v4267 = vunpack.c.l.b16 %v3463
    %v4268 = vunpack.c.h.b16 %v3463
    %v4269 = vunpack.c.l.b16 %v3464
    %v4270 = vunpack.c.h.b16 %v3464
    %v4271 = vunpack.c.l.b16 %v3465
    %v4272 = vunpack.c.h.b16 %v3465
    %v4273 = vunpack.c.l.b16 %v3466
    %v4274 = vunpack.c.h.b16 %v3466
    %v4275 = vunpack.c.l.b16 %v3467
    %v4276 = vunpack.c.h.b16 %v3467
    %v4277 = vunpack.c.l.b16 %v3468
    %v4278 = vunpack.c.h.b16 %v3468
    %v4279 = vpack.c.b16 %v3775, %v3767
    %v4280 = vpack.c.b16 %v3776, %v3768
    %v4281 = vpack.c.b16 %v3777, %v3769
    %v4282 = vpack.c.b16 %v3778, %v3770
    %v4283 = vpack.c.b16 %v3779, %v3771
    %v4284 = vpack.c.b16 %v3780, %v3772
    %v4285 = vpack.c.b16 %v3781, %v3773
    %v4286 = vpack.c.b16 %v3782, %v3774
    %v4287 = vpack.c.b16 %v3791, %v3783
    %v4288 = vpack.c.b16 %v3792, %v3784
    %v4289 = vpack.c.b16 %v3793, %v3785
    %v4290 = vpack.c.b16 %v3794, %v3786
    %v4291 = vpack.c.b16 %v3795, %v3787
    %v4292 = vpack.c.b16 %v3796, %v3788
    %v4293 = vpack.c.b16 %v3797, %v3789
    %v4294 = vpack.c.b16 %v3798, %v3790
    %v4295 = vpack.c.b16 %v3807, %v3799
    %v4296 = vpack.c.b16 %v3808, %v3800
    %v4297 = vpack.c.b16 %v3809, %v3801
    %v4298 = vpack.c.b16 %v3810, %v3802
    %v4299 = vpack.c.b16 %v3811, %v3803
    %v4300 = vpack.c.b16 %v3812, %v3804
    %v4301 = vpack.c.b16 %v3813, %v3805
    %v4302 = vpack.c.b16 %v3814, %v3806
    %v4303 = vpack.c.b16 %v3823, %v3815
    %v4304 = vpack.c.b16 %v3824, %v3816
    %v4305 = vpack.c.b16 %v3825, %v3817
    %v4306 = vpack.c.b16 %v3826, %v3818
    %v4307 = vpack.c.b16 %v3827, %v3819
    %v4308 = vpack.c.b16 %v3828, %v3820
    %v4309 = vpack.c.b16 %v3829, %v3821
    %v4310 = vpack.c.b16 %v3830, %v3822
    %v4311 = vpack.c.b16 %v3839, %v3831
    %v4312 = vpack.c.b16 %v3840, %v3832
    %v4313 = vpack.c.b16 %v3841, %v3833
    %v4314 = vpack.c.b16 %v3842, %v3834
    %v4315 = vpack.c.b16 %v3843, %v3835
    %v4316 = vpack.c.b16 %v3844, %v3836
    %v4317 = vpack.c.b16 %v3845, %v3837
    %v4318 = vpack.c.b16 %v3846, %v3838
    %v4319 = vpack.c.b16 %v3855, %v3847
    %v4320 = vpack.c.b16 %v3856, %v3848
    %v4321 = vpack.c.b16 %v3857, %v3849
    %v4322 = vpack.c.b16 %v3858, %v3850
    %v4323 = vpack.c.b16 %v3859, %v3851
    %v4324 = vpack.c.b16 %v3860, %v3852
    %v4325 = vpack.c.b16 %v3861, %v3853
    %v4326 = vpack.c.b16 %v3862, %v3854
    %v4327 = vpack.c.b16 %v3871, %v3863
    %v4328 = vpack.c.b16 %v3872, %v3864
    %v4329 = vpack.c.b16 %v3873, %v3865
    %v4330 = vpack.c.b16 %v3874, %v3866
    %v4331 = vpack.c.b16 %v3875, %v3867
    %v4332 = vpack.c.b16 %v3876, %v3868
    %v4333 = vpack.c.b16 %v3877, %v3869
    %v4334 = vpack.c.b16 %v3878, %v3870
    %v4335 = vpack.c.b16 %v3887, %v3879
    %v4336 = vpack.c.b16 %v3888, %v3880
    %v4337 = vpack.c.b16 %v3889, %v3881
    %v4338 = vpack.c.b16 %v3890, %v3882
    %v4339 = vpack.c.b16 %v3891, %v3883
    %v4340 = vpack.c.b16 %v3892, %v3884
    %v4341 = vpack.c.b16 %v3893, %v3885
    %v4342 = vpack.c.b16 %v3894, %v3886
    %v4343 = vpack.c.b16 %v3903, %v3895
    %v4344 = vpack.c.b16 %v3904, %v3896
    %v4345 = vpack.c.b16 %v3905, %v3897
    %v4346 = vpack.c.b16 %v3906, %v3898
    %v4347 = vpack.c.b16 %v3907, %v3899
    %v4348 = vpack.c.b16 %v3908, %v3900
    %v4349 = vpack.c.b16 %v3909, %v3901
    %v4350 = vpack.c.b16 %v3910, %v3902
    %v4351 = vpack.c.b16 %v3919, %v3911
    %v4352 = vpack.c.b16 %v3920, %v3912
    %v4353 = vpack.c.b16 %v3921, %v3913
    %v4354 = vpack.c.b16 %v3922, %v3914
    %v4355 = vpack.c.b16 %v3923, %v3915
    %v4356 = vpack.c.b16 %v3924, %v3916
    %v4357 = vpack.c.b16 %v3925, %v3917
    %v4358 = vpack.c.b16 %v3926, %v3918
    %v4359 = vpack.c.b16 %v3935, %v3927
    %v4360 = vpack.c.b16 %v3936, %v3928
    %v4361 = vpack.c.b16 %v3937, %v3929
    %v4362 = vpack.c.b16 %v3938, %v3930
    %v4363 = vpack.c.b16 %v3939, %v3931
    %v4364 = vpack.c.b16 %v3940, %v3932
    %v4365 = vpack.c.b16 %v3941, %v3933
    %v4366 = vpack.c.b16 %v3942, %v3934
    %v4367 = vpack.c.b16 %v3951, %v3943
    %v4368 = vpack.c.b16 %v3952, %v3944
    %v4369 = vpack.c.b16 %v3953, %v3945
    %v4370 = vpack.c.b16 %v3954, %v3946
    %v4371 = vpack.c.b16 %v3955, %v3947
    %v4372 = vpack.c.b16 %v3956, %v3948
    %v4373 = vpack.c.b16 %v3957, %v3949
    %v4374 = vpack.c.b16 %v3958, %v3950
    %v4375 = vpack.c.b16 %v3967, %v3959
    %v4376 = vpack.c.b16 %v3968, %v3960
    %v4377 = vpack.c.b16 %v3969, %v3961
    %v4378 = vpack.c.b16 %v3970, %v3962
    %v4379 = vpack.c.b16 %v3971, %v3963
    %v4380 = vpack.c.b16 %v3972, %v3964
    %v4381 = vpack.c.b16 %v3973, %v3965
    %v4382 = vpack.c.b16 %v3974, %v3966
    %v4383 = vpack.c.b16 %v3983, %v3975
    %v4384 = vpack.c.b16 %v3984, %v3976
    %v4385 = vpack.c.b16 %v3985, %v3977
    %v4386 = vpack.c.b16 %v3986, %v3978
    %v4387 = vpack.c.b16 %v3987, %v3979
    %v4388 = vpack.c.b16 %v3988, %v3980
    %v4389 = vpack.c.b16 %v3989, %v3981
    %v4390 = vpack.c.b16 %v3990, %v3982
    %v4391 = vpack.c.b16 %v3999, %v3991
    %v4392 = vpack.c.b16 %v4000, %v3992
    %v4393 = vpack.c.b16 %v4001, %v3993
    %v4394 = vpack.c.b16 %v4002, %v3994
    %v4395 = vpack.c.b16 %v4003, %v3995
    %v4396 = vpack.c.b16 %v4004, %v3996
    %v4397 = vpack.c.b16 %v4005, %v3997
    %v4398 = vpack.c.b16 %v4006, %v3998
    %v4399 = vpack.c.b16 %v4015, %v4007
    %v4400 = vpack.c.b16 %v4016, %v4008
    %v4401 = vpack.c.b16 %v4017, %v4009
    %v4402 = vpack.c.b16 %v4018, %v4010
    %v4403 = vpack.c.b16 %v4019, %v4011
    %v4404 = vpack.c.b16 %v4020, %v4012
    %v4405 = vpack.c.b16 %v4021, %v4013
    %v4406 = vpack.c.b16 %v4022, %v4014
    %v4407 = vpack.c.b16 %v4031, %v4023
    %v4408 = vpack.c.b16 %v4032, %v4024
    %v4409 = vpack.c.b16 %v4033, %v4025
    %v4410 = vpack.c.b16 %v4034, %v4026
    %v4411 = vpack.c.b16 %v4035, %v4027
    %v4412 = vpack.c.b16 %v4036, %v4028
    %v4413 = vpack.c.b16 %v4037, %v4029
    %v4414 = vpack.c.b16 %v4038, %v4030
    %v4415 = vpack.c.b16 %v4047, %v4039
    %v4416 = vpack.c.b16 %v4048, %v4040
    %v4417 = vpack.c.b16 %v4049, %v4041
    %v4418 = vpack.c.b16 %v4050, %v4042
    %v4419 = vpack.c.b16 %v4051, %v4043
    %v4420 = vpack.c.b16 %v4052, %v4044
    %v4421 = vpack.c.b16 %v4053, %v4045
    %v4422 = vpack.c.b16 %v4054, %v4046
    %v4423 = vpack.c.b16 %v4063, %v4055
    %v4424 = vpack.c.b16 %v4064, %v4056
    %v4425 = vpack.c.b16 %v4065, %v4057
    %v4426 = vpack.c.b16 %v4066, %v4058
    %v4427 = vpack.c.b16 %v4067, %v4059
    %v4428 = vpack.c.b16 %v4068, %v4060
    %v4429 = vpack.c.b16 %v4069, %v4061
    %v4430 = vpack.c.b16 %v4070, %v4062
    %v4431 = vpack.c.b16 %v4079, %v4071
    %v4432 = vpack.c.b16 %v4080, %v4072
    %v4433 = vpack.c.b16 %v4081, %v4073
    %v4434 = vpack.c.b16 %v4082, %v4074
    %v4435 = vpack.c.b16 %v4083, %v4075
    %v4436 = vpack.c.b16 %v4084, %v4076
    %v4437 = vpack.c.b16 %v4085, %v4077
    %v4438 = vpack.c.b16 %v4086, %v4078
    %v4439 = vpack.c.b16 %v4095, %v4087
    %v4440 = vpack.c.b16 %v4096, %v4088
    %v4441 = vpack.c.b16 %v4097, %v4089
    %v4442 = vpack.c.b16 %v4098, %v4090
    %v4443 = vpack.c.b16 %v4099, %v4091
    %v4444 = vpack.c.b16 %v4100, %v4092
    %v4445 = vpack.c.b16 %v4101, %v4093
    %v4446 = vpack.c.b16 %v4102, %v4094
    %v4447 = vpack.c.b16 %v4111, %v4103
    %v4448 = vpack.c.b16 %v4112, %v4104
    %v4449 = vpack.c.b16 %v4113, %v4105
    %v4450 = vpack.c.b16 %v4114, %v4106
    %v4451 = vpack.c.b16 %v4115, %v4107
    %v4452 = vpack.c.b16 %v4116, %v4108
    %v4453 = vpack.c.b16 %v4117, %v4109
    %v4454 = vpack.c.b16 %v4118, %v4110
    %v4455 = vpack.c.b16 %v4127, %v4119
    %v4456 = vpack.c.b16 %v4128, %v4120
    %v4457 = vpack.c.b16 %v4129, %v4121
    %v4458 = vpack.c.b16 %v4130, %v4122
    %v4459 = vpack.c.b16 %v4131, %v4123
    %v4460 = vpack.c.b16 %v4132, %v4124
    %v4461 = vpack.c.b16 %v4133, %v4125
    %v4462 = vpack.c.b16 %v4134, %v4126
    %v4463 = vpack.c.b16 %v4143, %v4135
    %v4464 = vpack.c.b16 %v4144, %v4136
    %v4465 = vpack.c.b16 %v4145, %v4137
    %v4466 = vpack.c.b16 %v4146, %v4138
    %v4467 = vpack.c.b16 %v4147, %v4139
    %v4468 = vpack.c.b16 %v4148, %v4140
    %v4469 = vpack.c.b16 %v4149, %v4141
    %v4470 = vpack.c.b16 %v4150, %v4142
    %v4471 = vpack.c.b16 %v4159, %v4151
    %v4472 = vpack.c.b16 %v4160, %v4152
    %v4473 = vpack.c.b16 %v4161, %v4153
    %v4474 = vpack.c.b16 %v4162, %v4154
    %v4475 = vpack.c.b16 %v4163, %v4155
    %v4476 = vpack.c.b16 %v4164, %v4156
    %v4477 = vpack.c.b16 %v4165, %v4157
    %v4478 = vpack.c.b16 %v4166, %v4158
    %v4479 = vpack.c.b16 %v4175, %v4167
    %v4480 = vpack.c.b16 %v4176, %v4168
    %v4481 = vpack.c.b16 %v4177, %v4169
    %v4482 = vpack.c.b16 %v4178, %v4170
    %v4483 = vpack.c.b16 %v4179, %v4171
    %v4484 = vpack.c.b16 %v4180, %v4172
    %v4485 = vpack.c.b16 %v4181, %v4173
    %v4486 = vpack.c.b16 %v4182, %v4174
    %v4487 = vpack.c.b16 %v4191, %v4183
    %v4488 = vpack.c.b16 %v4192, %v4184
    %v4489 = vpack.c.b16 %v4193, %v4185
    %v4490 = vpack.c.b16 %v4194, %v4186
    %v4491 = vpack.c.b16 %v4195, %v4187
    %v4492 = vpack.c.b16 %v4196, %v4188
    %v4493 = vpack.c.b16 %v4197, %v4189
    %v4494 = vpack.c.b16 %v4198, %v4190
    %v4495 = vpack.c.b16 %v4207, %v4199
    %v4496 = vpack.c.b16 %v4208, %v4200
    %v4497 = vpack.c.b16 %v4209, %v4201
    %v4498 = vpack.c.b16 %v4210, %v4202
    %v4499 = vpack.c.b16 %v4211, %v4203
    %v4500 = vpack.c.b16 %v4212, %v4204
    %v4501 = vpack.c.b16 %v4213, %v4205
    %v4502 = vpack.c.b16 %v4214, %v4206
    %v4503 = vpack.c.b16 %v4223, %v4215
    %v4504 = vpack.c.b16 %v4224, %v4216
    %v4505 = vpack.c.b16 %v4225, %v4217
    %v4506 = vpack.c.b16 %v4226, %v4218
    %v4507 = vpack.c.b16 %v4227, %v4219
    %v4508 = vpack.c.b16 %v4228, %v4220
    %v4509 = vpack.c.b16 %v4229, %v4221
    %v4510 = vpack.c.b16 %v4230, %v4222
    %v4511 = vpack.c.b16 %v4239, %v4231
    %v4512 = vpack.c.b16 %v4240, %v4232
    %v4513 = vpack.c.b16 %v4241, %v4233
    %v4514 = vpack.c.b16 %v4242, %v4234
    %v4515 = vpack.c.b16 %v4243, %v4235
    %v4516 = vpack.c.b16 %v4244, %v4236
    %v4517 = vpack.c.b16 %v4245, %v4237
    %v4518 = vpack.c.b16 %v4246, %v4238
    %v4519 = vpack.c.b16 %v4255, %v4247
    %v4520 = vpack.c.b16 %v4256, %v4248
    %v4521 = vpack.c.b16 %v4257, %v4249
    %v4522 = vpack.c.b16 %v4258, %v4250
    %v4523 = vpack.c.b16 %v4259, %v4251
    %v4524 = vpack.c.b16 %v4260, %v4252
    %v4525 = vpack.c.b16 %v4261, %v4253
    %v4526 = vpack.c.b16 %v4262, %v4254
    %v4527 = vpack.c.b16 %v4271, %v4263
    %v4528 = vpack.c.b16 %v4272, %v4264
    %v4529 = vpack.c.b16 %v4273, %v4265
    %v4530 = vpack.c.b16 %v4274, %v4266
    %v4531 = vpack.c.b16 %v4275, %v4267
    %v4532 = vpack.c.b16 %v4276, %v4268
    %v4533 = vpack.c.b16 %v4277, %v4269
    %v4534 = vpack.c.b16 %v4278, %v4270
    %4791 = vmatprep.subr.bf16.mxu0 %v4336
    %4792 = vmatpush1.bf16.msra.mxu0 %v4335
    %4793 = vmatprep.subr.bf16.mxu0 %v4328
    %4794 = vmatpush1.bf16.msra.mxu0 %v4327
    %4795 = vmatprep.subr.bf16.mxu0 %v4320
    %4796 = vmatpush1.bf16.msra.mxu0 %v4319
    %4797 = vmatprep.subr.bf16.mxu0 %v4312
    %4798 = vmatpush1.bf16.msra.mxu0 %v4311
    %4799 = vmatprep.subr.bf16.mxu0 %v4304
    %4800 = vmatpush1.bf16.msra.mxu0 %v4303
    %4801 = vmatprep.subr.bf16.mxu0 %v4296
    %4802 = vmatpush1.bf16.msra.mxu0 %v4295
    %4803 = vmatprep.subr.bf16.mxu0 %v4288
    %4804 = vmatpush1.bf16.msra.mxu0 %v4287
    %4805 = vmatprep.subr.bf16.mxu0 %v4280
    %4806 = vmatpush1.bf16.msra.mxu0 %v4279
    %4807 = vmatprep.subr.bf16.mxu0 %v4400
    %4808 = vmatpush2.bf16.msra.mxu0 %v4399
    %4809 = vmatprep.subr.bf16.mxu0 %v4392
    %4810 = vmatpush2.bf16.msra.mxu0 %v4391
    %4811 = vmatprep.subr.bf16.mxu0 %v4384
    %4812 = vmatpush2.bf16.msra.mxu0 %v4383
    %4813 = vmatprep.subr.bf16.mxu0 %v4376
    %4814 = vmatpush2.bf16.msra.mxu0 %v4375
    %4815 = vmatprep.subr.bf16.mxu0 %v4368
    %4816 = vmatpush2.bf16.msra.mxu0 %v4367
    %4817 = vmatprep.subr.bf16.mxu0 %v4360
    %4818 = vmatpush2.bf16.msra.mxu0 %v4359
    %4819 = vmatprep.subr.bf16.mxu0 %v4352
    %4820 = vmatpush2.bf16.msra.mxu0 %v4351
    %4821 = vmatprep.subr.bf16.mxu0 %v4344
    %4822 = vmatpush2.bf16.msra.mxu0 %v4343
    %4823 = vmatprep.mubr.bf16.mxu0 %v3210
    %4824 = vmatmul.mubr.bf16.gmra.mxu0 %v3209
    %v4825 = vpop.f32.mrf.mxu0
    %v4826 = vadd.f32 %v3474, %v4825
    %v4827 = vpop.f32.mrf.mxu0
    %v4828 = vadd.f32 %v3478, %v4827
    %v4829 = vpop.f32.mrf.mxu0
    %v4830 = vadd.f32 %v3474, %v4829
    %v4831 = vpop.f32.mrf.mxu0
    %v4832 = vadd.f32 %v3478, %v4831
    %4833 = vdwg.mxu0
    %4834 = vmatprep.subr.bf16.mxu0 %v4464
    %4835 = vmatpush1.bf16.msra.mxu0 %v4463
    %4836 = vmatprep.subr.bf16.mxu0 %v4456
    %4837 = vmatpush1.bf16.msra.mxu0 %v4455
    %4838 = vmatprep.subr.bf16.mxu0 %v4448
    %4839 = vmatpush1.bf16.msra.mxu0 %v4447
    %4840 = vmatprep.subr.bf16.mxu0 %v4440
    %4841 = vmatpush1.bf16.msra.mxu0 %v4439
    %4842 = vmatprep.subr.bf16.mxu0 %v4432
    %4843 = vmatpush1.bf16.msra.mxu0 %v4431
    %4844 = vmatprep.subr.bf16.mxu0 %v4424
    %4845 = vmatpush1.bf16.msra.mxu0 %v4423
    %4846 = vmatprep.subr.bf16.mxu0 %v4416
    %4847 = vmatpush1.bf16.msra.mxu0 %v4415
    %4848 = vmatprep.subr.bf16.mxu0 %v4408
    %4849 = vmatpush1.bf16.msra.mxu0 %v4407
    %4850 = vmatprep.subr.bf16.mxu0 %v4528
    %4851 = vmatpush2.bf16.msra.mxu0 %v4527
    %4852 = vmatprep.subr.bf16.mxu0 %v4520
    %4853 = vmatpush2.bf16.msra.mxu0 %v4519
    %4854 = vmatprep.subr.bf16.mxu0 %v4512
    %4855 = vmatpush2.bf16.msra.mxu0 %v4511
    %4856 = vmatprep.subr.bf16.mxu0 %v4504
    %4857 = vmatpush2.bf16.msra.mxu0 %v4503
    %4858 = vmatprep.subr.bf16.mxu0 %v4496
    %4859 = vmatpush2.bf16.msra.mxu0 %v4495
    %4860 = vmatprep.subr.bf16.mxu0 %v4488
    %4861 = vmatpush2.bf16.msra.mxu0 %v4487
    %4862 = vmatprep.subr.bf16.mxu0 %v4480
    %4863 = vmatpush2.bf16.msra.mxu0 %v4479
    %4864 = vmatprep.subr.bf16.mxu0 %v4472
    %4865 = vmatpush2.bf16.msra.mxu0 %v4471
    %4866 = vmatprep.mubr.bf16.mxu0 %v3212
    %4867 = vmatmul.mubr.bf16.gmra.mxu0 %v3211
    %v4868 = vpop.f32.mrf.mxu0
    %v4869 = vadd.f32 %v4826, %v4868
    %v4870 = vpop.f32.mrf.mxu0
    %v4871 = vadd.f32 %v4828, %v4870
    %v4872 = vpop.f32.mrf.mxu0
    %v4873 = vadd.f32 %v4830, %v4872
    %v4874 = vpop.f32.mrf.mxu0
    %v4875 = vadd.f32 %v4832, %v4874
    %4876 = vdwg.mxu0
    %4877 = vmatprep.subr.bf16.mxu0 %v4338
    %4878 = vmatpush1.bf16.msra.mxu0 %v4337
    %4879 = vmatprep.subr.bf16.mxu0 %v4330
    %4880 = vmatpush1.bf16.msra.mxu0 %v4329
    %4881 = vmatprep.subr.bf16.mxu0 %v4322
    %4882 = vmatpush1.bf16.msra.mxu0 %v4321
    %4883 = vmatprep.subr.bf16.mxu0 %v4314
    %4884 = vmatpush1.bf16.msra.mxu0 %v4313
    %4885 = vmatprep.subr.bf16.mxu0 %v4306
    %4886 = vmatpush1.bf16.msra.mxu0 %v4305
    %4887 = vmatprep.subr.bf16.mxu0 %v4298
    %4888 = vmatpush1.bf16.msra.mxu0 %v4297
    %4889 = vmatprep.subr.bf16.mxu0 %v4290
    %4890 = vmatpush1.bf16.msra.mxu0 %v4289
    %4891 = vmatprep.subr.bf16.mxu0 %v4282
    %4892 = vmatpush1.bf16.msra.mxu0 %v4281
    %4893 = vmatprep.subr.bf16.mxu0 %v4402
    %4894 = vmatpush2.bf16.msra.mxu0 %v4401
    %4895 = vmatprep.subr.bf16.mxu0 %v4394
    %4896 = vmatpush2.bf16.msra.mxu0 %v4393
    %4897 = vmatprep.subr.bf16.mxu0 %v4386
    %4898 = vmatpush2.bf16.msra.mxu0 %v4385
    %4899 = vmatprep.subr.bf16.mxu0 %v4378
    %4900 = vmatpush2.bf16.msra.mxu0 %v4377
    %4901 = vmatprep.subr.bf16.mxu0 %v4370
    %4902 = vmatpush2.bf16.msra.mxu0 %v4369
    %4903 = vmatprep.subr.bf16.mxu0 %v4362
    %4904 = vmatpush2.bf16.msra.mxu0 %v4361
    %4905 = vmatprep.subr.bf16.mxu0 %v4354
    %4906 = vmatpush2.bf16.msra.mxu0 %v4353
    %4907 = vmatprep.subr.bf16.mxu0 %v4346
    %4908 = vmatpush2.bf16.msra.mxu0 %v4345
    %4909 = vmatprep.mubr.bf16.mxu0 %v3210
    %4910 = vmatmul.mubr.bf16.gmra.mxu0 %v3209
    %v4911 = vpop.f32.mrf.mxu0
    %v4912 = vadd.f32 %v3482, %v4911
    %v4913 = vpop.f32.mrf.mxu0
    %v4914 = vadd.f32 %v3486, %v4913
    %v4915 = vpop.f32.mrf.mxu0
    %v4916 = vadd.f32 %v3482, %v4915
    %v4917 = vpop.f32.mrf.mxu0
    %v4918 = vadd.f32 %v3486, %v4917
    %4919 = vdwg.mxu0
    %4920 = vmatprep.subr.bf16.mxu0 %v4466
    %4921 = vmatpush1.bf16.msra.mxu0 %v4465
    %4922 = vmatprep.subr.bf16.mxu0 %v4458
    %4923 = vmatpush1.bf16.msra.mxu0 %v4457
    %4924 = vmatprep.subr.bf16.mxu0 %v4450
    %4925 = vmatpush1.bf16.msra.mxu0 %v4449
    %4926 = vmatprep.subr.bf16.mxu0 %v4442
    %4927 = vmatpush1.bf16.msra.mxu0 %v4441
    %4928 = vmatprep.subr.bf16.mxu0 %v4434
    %4929 = vmatpush1.bf16.msra.mxu0 %v4433
    %4930 = vmatprep.subr.bf16.mxu0 %v4426
    %4931 = vmatpush1.bf16.msra.mxu0 %v4425
    %4932 = vmatprep.subr.bf16.mxu0 %v4418
    %4933 = vmatpush1.bf16.msra.mxu0 %v4417
    %4934 = vmatprep.subr.bf16.mxu0 %v4410
    %4935 = vmatpush1.bf16.msra.mxu0 %v4409
    %4936 = vmatprep.subr.bf16.mxu0 %v4530
    %4937 = vmatpush2.bf16.msra.mxu0 %v4529
    %4938 = vmatprep.subr.bf16.mxu0 %v4522
    %4939 = vmatpush2.bf16.msra.mxu0 %v4521
    %4940 = vmatprep.subr.bf16.mxu0 %v4514
    %4941 = vmatpush2.bf16.msra.mxu0 %v4513
    %4942 = vmatprep.subr.bf16.mxu0 %v4506
    %4943 = vmatpush2.bf16.msra.mxu0 %v4505
    %4944 = vmatprep.subr.bf16.mxu0 %v4498
    %4945 = vmatpush2.bf16.msra.mxu0 %v4497
    %4946 = vmatprep.subr.bf16.mxu0 %v4490
    %4947 = vmatpush2.bf16.msra.mxu0 %v4489
    %4948 = vmatprep.subr.bf16.mxu0 %v4482
    %4949 = vmatpush2.bf16.msra.mxu0 %v4481
    %4950 = vmatprep.subr.bf16.mxu0 %v4474
    %4951 = vmatpush2.bf16.msra.mxu0 %v4473
    %4952 = vmatprep.mubr.bf16.mxu0 %v3212
    %4953 = vmatmul.mubr.bf16.gmra.mxu0 %v3211
    %v4954 = vpop.f32.mrf.mxu0
    %v4955 = vadd.f32 %v4912, %v4954
    %v4956 = vpop.f32.mrf.mxu0
    %v4957 = vadd.f32 %v4914, %v4956
    %v4958 = vpop.f32.mrf.mxu0
    %v4959 = vadd.f32 %v4916, %v4958
    %v4960 = vpop.f32.mrf.mxu0
    %v4961 = vadd.f32 %v4918, %v4960
    %4962 = vdwg.mxu0
    %4963 = vmatprep.subr.bf16.mxu0 %v4340
    %4964 = vmatpush1.bf16.msra.mxu0 %v4339
    %4965 = vmatprep.subr.bf16.mxu0 %v4332
    %4966 = vmatpush1.bf16.msra.mxu0 %v4331
    %4967 = vmatprep.subr.bf16.mxu0 %v4324
    %4968 = vmatpush1.bf16.msra.mxu0 %v4323
    %4969 = vmatprep.subr.bf16.mxu0 %v4316
    %4970 = vmatpush1.bf16.msra.mxu0 %v4315
    %4971 = vmatprep.subr.bf16.mxu0 %v4308
    %4972 = vmatpush1.bf16.msra.mxu0 %v4307
    %4973 = vmatprep.subr.bf16.mxu0 %v4300
    %4974 = vmatpush1.bf16.msra.mxu0 %v4299
    %4975 = vmatprep.subr.bf16.mxu0 %v4292
    %4976 = vmatpush1.bf16.msra.mxu0 %v4291
    %4977 = vmatprep.subr.bf16.mxu0 %v4284
    %4978 = vmatpush1.bf16.msra.mxu0 %v4283
    %4979 = vmatprep.subr.bf16.mxu0 %v4404
    %4980 = vmatpush2.bf16.msra.mxu0 %v4403
    %4981 = vmatprep.subr.bf16.mxu0 %v4396
    %4982 = vmatpush2.bf16.msra.mxu0 %v4395
    %4983 = vmatprep.subr.bf16.mxu0 %v4388
    %4984 = vmatpush2.bf16.msra.mxu0 %v4387
    %4985 = vmatprep.subr.bf16.mxu0 %v4380
    %4986 = vmatpush2.bf16.msra.mxu0 %v4379
    %4987 = vmatprep.subr.bf16.mxu0 %v4372
    %4988 = vmatpush2.bf16.msra.mxu0 %v4371
    %4989 = vmatprep.subr.bf16.mxu0 %v4364
    %4990 = vmatpush2.bf16.msra.mxu0 %v4363
    %4991 = vmatprep.subr.bf16.mxu0 %v4356
    %4992 = vmatpush2.bf16.msra.mxu0 %v4355
    %4993 = vmatprep.subr.bf16.mxu0 %v4348
    %4994 = vmatpush2.bf16.msra.mxu0 %v4347
    %4995 = vmatprep.mubr.bf16.mxu0 %v3210
    %4996 = vmatmul.mubr.bf16.gmra.mxu0 %v3209
    %v4997 = vpop.f32.mrf.mxu0
    %v4998 = vadd.f32 %v3490, %v4997
    %v4999 = vpop.f32.mrf.mxu0
    %v5000 = vadd.f32 %v3494, %v4999
    %v5001 = vpop.f32.mrf.mxu0
    %v5002 = vadd.f32 %v3490, %v5001
    %v5003 = vpop.f32.mrf.mxu0
    %v5004 = vadd.f32 %v3494, %v5003
    %5005 = vdwg.mxu0
    %5006 = vmatprep.subr.bf16.mxu0 %v4468
    %5007 = vmatpush1.bf16.msra.mxu0 %v4467
    %5008 = vmatprep.subr.bf16.mxu0 %v4460
    %5009 = vmatpush1.bf16.msra.mxu0 %v4459
    %5010 = vmatprep.subr.bf16.mxu0 %v4452
    %5011 = vmatpush1.bf16.msra.mxu0 %v4451
    %5012 = vmatprep.subr.bf16.mxu0 %v4444
    %5013 = vmatpush1.bf16.msra.mxu0 %v4443
    %5014 = vmatprep.subr.bf16.mxu0 %v4436
    %5015 = vmatpush1.bf16.msra.mxu0 %v4435
    %5016 = vmatprep.subr.bf16.mxu0 %v4428
    %5017 = vmatpush1.bf16.msra.mxu0 %v4427
    %5018 = vmatprep.subr.bf16.mxu0 %v4420
    %5019 = vmatpush1.bf16.msra.mxu0 %v4419
    %5020 = vmatprep.subr.bf16.mxu0 %v4412
    %5021 = vmatpush1.bf16.msra.mxu0 %v4411
    %5022 = vmatprep.subr.bf16.mxu0 %v4532
    %5023 = vmatpush2.bf16.msra.mxu0 %v4531
    %5024 = vmatprep.subr.bf16.mxu0 %v4524
    %5025 = vmatpush2.bf16.msra.mxu0 %v4523
    %5026 = vmatprep.subr.bf16.mxu0 %v4516
    %5027 = vmatpush2.bf16.msra.mxu0 %v4515
    %5028 = vmatprep.subr.bf16.mxu0 %v4508
    %5029 = vmatpush2.bf16.msra.mxu0 %v4507
    %5030 = vmatprep.subr.bf16.mxu0 %v4500
    %5031 = vmatpush2.bf16.msra.mxu0 %v4499
    %5032 = vmatprep.subr.bf16.mxu0 %v4492
    %5033 = vmatpush2.bf16.msra.mxu0 %v4491
    %5034 = vmatprep.subr.bf16.mxu0 %v4484
    %5035 = vmatpush2.bf16.msra.mxu0 %v4483
    %5036 = vmatprep.subr.bf16.mxu0 %v4476
    %5037 = vmatpush2.bf16.msra.mxu0 %v4475
    %5038 = vmatprep.mubr.bf16.mxu0 %v3212
    %5039 = vmatmul.mubr.bf16.gmra.mxu0 %v3211
    %v5040 = vpop.f32.mrf.mxu0
    %v5041 = vadd.f32 %v4998, %v5040
    %v5042 = vpop.f32.mrf.mxu0
    %v5043 = vadd.f32 %v5000, %v5042
    %v5044 = vpop.f32.mrf.mxu0
    %v5045 = vadd.f32 %v5002, %v5044
    %v5046 = vpop.f32.mrf.mxu0
    %v5047 = vadd.f32 %v5004, %v5046
    %5048 = vdwg.mxu0
    %5049 = vmatprep.subr.bf16.mxu0 %v4342
    %5050 = vmatpush1.bf16.msra.mxu0 %v4341
    %5051 = vmatprep.subr.bf16.mxu0 %v4334
    %5052 = vmatpush1.bf16.msra.mxu0 %v4333
    %5053 = vmatprep.subr.bf16.mxu0 %v4326
    %5054 = vmatpush1.bf16.msra.mxu0 %v4325
    %5055 = vmatprep.subr.bf16.mxu0 %v4318
    %5056 = vmatpush1.bf16.msra.mxu0 %v4317
    %5057 = vmatprep.subr.bf16.mxu0 %v4310
    %5058 = vmatpush1.bf16.msra.mxu0 %v4309
    %5059 = vmatprep.subr.bf16.mxu0 %v4302
    %5060 = vmatpush1.bf16.msra.mxu0 %v4301
    %5061 = vmatprep.subr.bf16.mxu0 %v4294
    %5062 = vmatpush1.bf16.msra.mxu0 %v4293
    %5063 = vmatprep.subr.bf16.mxu0 %v4286
    %5064 = vmatpush1.bf16.msra.mxu0 %v4285
    %5065 = vmatprep.subr.bf16.mxu0 %v4406
    %5066 = vmatpush2.bf16.msra.mxu0 %v4405
    %5067 = vmatprep.subr.bf16.mxu0 %v4398
    %5068 = vmatpush2.bf16.msra.mxu0 %v4397
    %5069 = vmatprep.subr.bf16.mxu0 %v4390
    %5070 = vmatpush2.bf16.msra.mxu0 %v4389
    %5071 = vmatprep.subr.bf16.mxu0 %v4382
    %5072 = vmatpush2.bf16.msra.mxu0 %v4381
    %5073 = vmatprep.subr.bf16.mxu0 %v4374
    %5074 = vmatpush2.bf16.msra.mxu0 %v4373
    %5075 = vmatprep.subr.bf16.mxu0 %v4366
    %5076 = vmatpush2.bf16.msra.mxu0 %v4365
    %5077 = vmatprep.subr.bf16.mxu0 %v4358
    %5078 = vmatpush2.bf16.msra.mxu0 %v4357
    %5079 = vmatprep.subr.bf16.mxu0 %v4350
    %5080 = vmatpush2.bf16.msra.mxu0 %v4349
    %5081 = vmatprep.mubr.bf16.mxu0 %v3210
    %5082 = vmatmul.mubr.bf16.gmra.mxu0 %v3209
    %v5083 = vpop.f32.mrf.mxu0
    %v5084 = vadd.f32 %v3498, %v5083
    %v5085 = vpop.f32.mrf.mxu0
    %v5086 = vadd.f32 %v3502, %v5085
    %v5087 = vpop.f32.mrf.mxu0
    %v5088 = vadd.f32 %v3498, %v5087
    %v5089 = vpop.f32.mrf.mxu0
    %v5090 = vadd.f32 %v3502, %v5089
    %5091 = vdwg.mxu0
    %5092 = vmatprep.subr.bf16.mxu0 %v4470
    %5093 = vmatpush1.bf16.msra.mxu0 %v4469
    %5094 = vmatprep.subr.bf16.mxu0 %v4462
    %5095 = vmatpush1.bf16.msra.mxu0 %v4461
    %5096 = vmatprep.subr.bf16.mxu0 %v4454
    %5097 = vmatpush1.bf16.msra.mxu0 %v4453
    %5098 = vmatprep.subr.bf16.mxu0 %v4446
    %5099 = vmatpush1.bf16.msra.mxu0 %v4445
    %5100 = vmatprep.subr.bf16.mxu0 %v4438
    %5101 = vmatpush1.bf16.msra.mxu0 %v4437
    %5102 = vmatprep.subr.bf16.mxu0 %v4430
    %5103 = vmatpush1.bf16.msra.mxu0 %v4429
    %5104 = vmatprep.subr.bf16.mxu0 %v4422
    %5105 = vmatpush1.bf16.msra.mxu0 %v4421
    %5106 = vmatprep.subr.bf16.mxu0 %v4414
    %5107 = vmatpush1.bf16.msra.mxu0 %v4413
    %5108 = vmatprep.subr.bf16.mxu0 %v4534
    %5109 = vmatpush2.bf16.msra.mxu0 %v4533
    %5110 = vmatprep.subr.bf16.mxu0 %v4526
    %5111 = vmatpush2.bf16.msra.mxu0 %v4525
    %5112 = vmatprep.subr.bf16.mxu0 %v4518
    %5113 = vmatpush2.bf16.msra.mxu0 %v4517
    %5114 = vmatprep.subr.bf16.mxu0 %v4510
    %5115 = vmatpush2.bf16.msra.mxu0 %v4509
    %5116 = vmatprep.subr.bf16.mxu0 %v4502
    %5117 = vmatpush2.bf16.msra.mxu0 %v4501
    %5118 = vmatprep.subr.bf16.mxu0 %v4494
    %5119 = vmatpush2.bf16.msra.mxu0 %v4493
    %5120 = vmatprep.subr.bf16.mxu0 %v4486
    %5121 = vmatpush2.bf16.msra.mxu0 %v4485
    %5122 = vmatprep.subr.bf16.mxu0 %v4478
    %5123 = vmatpush2.bf16.msra.mxu0 %v4477
    %5124 = vmatprep.mubr.bf16.mxu0 %v3212
    %5125 = vmatmul.mubr.bf16.gmra.mxu0 %v3211
    %v5126 = vpop.f32.mrf.mxu0
    %v5127 = vadd.f32 %v5084, %v5126
    %v5128 = vpop.f32.mrf.mxu0
    %v5129 = vadd.f32 %v5086, %v5128
    %v5130 = vpop.f32.mrf.mxu0
    %v5131 = vadd.f32 %v5088, %v5130
    %v5132 = vpop.f32.mrf.mxu0
    %v5133 = vadd.f32 %v5090, %v5132
    %5134 = vdwg.mxu0
    %v5135 = vmax.f32 %v4869, 0.0
    %v5136 = vmax.f32 %v4871, 0.0
    %v5137 = vmax.f32 %v4955, 0.0
    %v5138 = vmax.f32 %v4957, 0.0
    %v5139 = vmax.f32 %v5041, 0.0
    %v5140 = vmax.f32 %v5043, 0.0
    %v5141 = vmax.f32 %v5127, 0.0
    %v5142 = vmax.f32 %v5129, 0.0
    %v5143 = vmax.f32 %v4873, 0.0
    %v5144 = vmax.f32 %v4875, 0.0
    %v5145 = vmax.f32 %v4959, 0.0
    %v5146 = vmax.f32 %v4961, 0.0
    %v5147 = vmax.f32 %v5045, 0.0
    %v5148 = vmax.f32 %v5047, 0.0
    %v5149 = vmax.f32 %v5131, 0.0
    %v5150 = vmax.f32 %v5133, 0.0
    %v5151 = vpack.c.bf16 %v5143, %v5135
    %v5152 = vpack.c.bf16 %v5144, %v5136
    %v5153 = vpack.c.bf16 %v5145, %v5137
    %v5154 = vpack.c.bf16 %v5146, %v5138
    %v5155 = vpack.c.bf16 %v5147, %v5139
    %v5156 = vpack.c.bf16 %v5148, %v5140
    %v5157 = vpack.c.bf16 %v5149, %v5141
    %v5158 = vpack.c.bf16 %v5150, %v5142
    %v5159 = vld [vmem:[#allocation9] sm:$0xf]
    %v5160 = vld [vmem:[#allocation9 + $0x4] sm:$0xf]
    %v5161 = vld [vmem:[#allocation9 + $0x8] sm:$0xf]
    %v5162 = vld [vmem:[#allocation9 + $0xc] sm:$0xf]
    %v5163 = vld [vmem:[#allocation9 + $0x10] sm:$0xf]
    %v5164 = vld [vmem:[#allocation9 + $0x14] sm:$0xf]
    %v5165 = vld [vmem:[#allocation9 + $0x18] sm:$0xf]
    %v5166 = vld [vmem:[#allocation9 + $0x1c] sm:$0xf]
    %v5167 = vld [vmem:[#allocation9 + $0x20] sm:$0xf]
    %v5168 = vld [vmem:[#allocation9 + $0x24] sm:$0xf]
    %v5169 = vld [vmem:[#allocation9 + $0x28] sm:$0xf]
    %v5170 = vld [vmem:[#allocation9 + $0x2c] sm:$0xf]
    %v5171 = vld [vmem:[#allocation9 + $0x30] sm:$0xf]
    %v5172 = vld [vmem:[#allocation9 + $0x34] sm:$0xf]
    %v5173 = vld [vmem:[#allocation9 + $0x38] sm:$0xf]
    %v5174 = vld [vmem:[#allocation9 + $0x3c] sm:$0xf]
    %v5175 = vld [vmem:[#allocation9 + $0x40] sm:$0xf]
    %v5176 = vld [vmem:[#allocation9 + $0x44] sm:$0xf]
    %v5177 = vld [vmem:[#allocation9 + $0x48] sm:$0xf]
    %v5178 = vld [vmem:[#allocation9 + $0x4c] sm:$0xf]
    %v5179 = vld [vmem:[#allocation9 + $0x50] sm:$0xf]
    %v5180 = vld [vmem:[#allocation9 + $0x54] sm:$0xf]
    %v5181 = vld [vmem:[#allocation9 + $0x58] sm:$0xf]
    %v5182 = vld [vmem:[#allocation9 + $0x5c] sm:$0xf]
    %v5183 = vld [vmem:[#allocation9 + $0x60] sm:$0xf]
    %v5184 = vld [vmem:[#allocation9 + $0x64] sm:$0xf]
    %v5185 = vld [vmem:[#allocation9 + $0x68] sm:$0xf]
    %v5186 = vld [vmem:[#allocation9 + $0x6c] sm:$0xf]
    %v5187 = vld [vmem:[#allocation9 + $0x70] sm:$0xf]
    %v5188 = vld [vmem:[#allocation9 + $0x74] sm:$0xf]
    %v5189 = vld [vmem:[#allocation9 + $0x78] sm:$0xf]
    %v5190 = vld [vmem:[#allocation9 + $0x7c] sm:$0xf]
    %v5191 = vld [vmem:[#allocation9 + $0x80] sm:$0xf]
    %v5192 = vld [vmem:[#allocation9 + $0x84] sm:$0xf]
    %v5193 = vld [vmem:[#allocation9 + $0x88] sm:$0xf]
    %v5194 = vld [vmem:[#allocation9 + $0x8c] sm:$0xf]
    %v5195 = vld [vmem:[#allocation9 + $0x90] sm:$0xf]
    %v5196 = vld [vmem:[#allocation9 + $0x94] sm:$0xf]
    %v5197 = vld [vmem:[#allocation9 + $0x98] sm:$0xf]
    %v5198 = vld [vmem:[#allocation9 + $0x9c] sm:$0xf]
    %v5199 = vld [vmem:[#allocation9 + $0xa0] sm:$0xf]
    %v5200 = vld [vmem:[#allocation9 + $0xa4] sm:$0xf]
    %v5201 = vld [vmem:[#allocation9 + $0xa8] sm:$0xf]
    %v5202 = vld [vmem:[#allocation9 + $0xac] sm:$0xf]
    %v5203 = vld [vmem:[#allocation9 + $0xb0] sm:$0xf]
    %v5204 = vld [vmem:[#allocation9 + $0xb4] sm:$0xf]
    %v5205 = vld [vmem:[#allocation9 + $0xb8] sm:$0xf]
    %v5206 = vld [vmem:[#allocation9 + $0xbc] sm:$0xf]
    %v5207 = vld [vmem:[#allocation9 + $0xc0] sm:$0xf]
    %v5208 = vld [vmem:[#allocation9 + $0xc4] sm:$0xf]
    %v5209 = vld [vmem:[#allocation9 + $0xc8] sm:$0xf]
    %v5210 = vld [vmem:[#allocation9 + $0xcc] sm:$0xf]
    %v5211 = vld [vmem:[#allocation9 + $0xd0] sm:$0xf]
    %v5212 = vld [vmem:[#allocation9 + $0xd4] sm:$0xf]
    %v5213 = vld [vmem:[#allocation9 + $0xd8] sm:$0xf]
    %v5214 = vld [vmem:[#allocation9 + $0xdc] sm:$0xf]
    %v5215 = vld [vmem:[#allocation9 + $0xe0] sm:$0xf]
    %v5216 = vld [vmem:[#allocation9 + $0xe4] sm:$0xf]
    %v5217 = vld [vmem:[#allocation9 + $0xe8] sm:$0xf]
    %v5218 = vld [vmem:[#allocation9 + $0xec] sm:$0xf]
    %v5219 = vld [vmem:[#allocation9 + $0xf0] sm:$0xf]
    %v5220 = vld [vmem:[#allocation9 + $0xf4] sm:$0xf]
    %v5221 = vld [vmem:[#allocation9 + $0xf8] sm:$0xf]
    %v5222 = vld [vmem:[#allocation9 + $0xfc] sm:$0xf]
    %v5223 = vld [vmem:[#allocation9 + $0x100] sm:$0xf]
    %v5224 = vld [vmem:[#allocation9 + $0x104] sm:$0xf]
    %v5225 = vld [vmem:[#allocation9 + $0x108] sm:$0xf]
    %v5226 = vld [vmem:[#allocation9 + $0x10c] sm:$0xf]
    %v5227 = vld [vmem:[#allocation9 + $0x110] sm:$0xf]
    %v5228 = vld [vmem:[#allocation9 + $0x114] sm:$0xf]
    %v5229 = vld [vmem:[#allocation9 + $0x118] sm:$0xf]
    %v5230 = vld [vmem:[#allocation9 + $0x11c] sm:$0xf]
    %v5231 = vld [vmem:[#allocation9 + $0x120] sm:$0xf]
    %v5232 = vld [vmem:[#allocation9 + $0x124] sm:$0xf]
    %v5233 = vld [vmem:[#allocation9 + $0x128] sm:$0xf]
    %v5234 = vld [vmem:[#allocation9 + $0x12c] sm:$0xf]
    %v5235 = vld [vmem:[#allocation9 + $0x130] sm:$0xf]
    %v5236 = vld [vmem:[#allocation9 + $0x134] sm:$0xf]
    %v5237 = vld [vmem:[#allocation9 + $0x138] sm:$0xf]
    %v5238 = vld [vmem:[#allocation9 + $0x13c] sm:$0xf]
    %v5239 = vld [vmem:[#allocation9 + $0x140] sm:$0xf]
    %v5240 = vld [vmem:[#allocation9 + $0x144] sm:$0xf]
    %v5241 = vld [vmem:[#allocation9 + $0x148] sm:$0xf]
    %v5242 = vld [vmem:[#allocation9 + $0x14c] sm:$0xf]
    %v5243 = vld [vmem:[#allocation9 + $0x150] sm:$0xf]
    %v5244 = vld [vmem:[#allocation9 + $0x154] sm:$0xf]
    %v5245 = vld [vmem:[#allocation9 + $0x158] sm:$0xf]
    %v5246 = vld [vmem:[#allocation9 + $0x15c] sm:$0xf]
    %v5247 = vld [vmem:[#allocation9 + $0x160] sm:$0xf]
    %v5248 = vld [vmem:[#allocation9 + $0x164] sm:$0xf]
    %v5249 = vld [vmem:[#allocation9 + $0x168] sm:$0xf]
    %v5250 = vld [vmem:[#allocation9 + $0x16c] sm:$0xf]
    %v5251 = vld [vmem:[#allocation9 + $0x170] sm:$0xf]
    %v5252 = vld [vmem:[#allocation9 + $0x174] sm:$0xf]
    %v5253 = vld [vmem:[#allocation9 + $0x178] sm:$0xf]
    %v5254 = vld [vmem:[#allocation9 + $0x17c] sm:$0xf]
    %v5255 = vld [vmem:[#allocation9 + $0x180] sm:$0xf]
    %v5256 = vld [vmem:[#allocation9 + $0x184] sm:$0xf]
    %v5257 = vld [vmem:[#allocation9 + $0x188] sm:$0xf]
    %v5258 = vld [vmem:[#allocation9 + $0x18c] sm:$0xf]
    %v5259 = vld [vmem:[#allocation9 + $0x190] sm:$0xf]
    %v5260 = vld [vmem:[#allocation9 + $0x194] sm:$0xf]
    %v5261 = vld [vmem:[#allocation9 + $0x198] sm:$0xf]
    %v5262 = vld [vmem:[#allocation9 + $0x19c] sm:$0xf]
    %v5263 = vld [vmem:[#allocation9 + $0x1a0] sm:$0xf]
    %v5264 = vld [vmem:[#allocation9 + $0x1a4] sm:$0xf]
    %v5265 = vld [vmem:[#allocation9 + $0x1a8] sm:$0xf]
    %v5266 = vld [vmem:[#allocation9 + $0x1ac] sm:$0xf]
    %v5267 = vld [vmem:[#allocation9 + $0x1b0] sm:$0xf]
    %v5268 = vld [vmem:[#allocation9 + $0x1b4] sm:$0xf]
    %v5269 = vld [vmem:[#allocation9 + $0x1b8] sm:$0xf]
    %v5270 = vld [vmem:[#allocation9 + $0x1bc] sm:$0xf]
    %v5271 = vld [vmem:[#allocation9 + $0x1c0] sm:$0xf]
    %v5272 = vld [vmem:[#allocation9 + $0x1c4] sm:$0xf]
    %v5273 = vld [vmem:[#allocation9 + $0x1c8] sm:$0xf]
    %v5274 = vld [vmem:[#allocation9 + $0x1cc] sm:$0xf]
    %v5275 = vld [vmem:[#allocation9 + $0x1d0] sm:$0xf]
    %v5276 = vld [vmem:[#allocation9 + $0x1d4] sm:$0xf]
    %v5277 = vld [vmem:[#allocation9 + $0x1d8] sm:$0xf]
    %v5278 = vld [vmem:[#allocation9 + $0x1dc] sm:$0xf]
    %v5279 = vld [vmem:[#allocation9 + $0x1e0] sm:$0xf]
    %v5280 = vld [vmem:[#allocation9 + $0x1e4] sm:$0xf]
    %v5281 = vld [vmem:[#allocation9 + $0x1e8] sm:$0xf]
    %v5282 = vld [vmem:[#allocation9 + $0x1ec] sm:$0xf]
    %v5283 = vld [vmem:[#allocation9 + $0x1f0] sm:$0xf]
    %v5284 = vld [vmem:[#allocation9 + $0x1f4] sm:$0xf]
    %v5285 = vld [vmem:[#allocation9 + $0x1f8] sm:$0xf]
    %v5286 = vld [vmem:[#allocation9 + $0x1fc] sm:$0xf]
    %v5287 = vld [vmem:[%s15] sm:$0x1]
    %v5289 = vlaneseq
    %v5290 = vshrl.u32 %v5289, 7
    %v5291 = vsub.s32 0, %v5290
    %v5292 = vrot.slane %v5287, %v5291
    %v5422 = vunpack.c.l.b16 %v5159
    %v5423 = vunpack.c.l.b16 %v5160
    %v5424 = vunpack.c.l.b16 %v5161
    %v5425 = vunpack.c.l.b16 %v5162
    %v5426 = vunpack.c.l.b16 %v5163
    %v5427 = vunpack.c.l.b16 %v5164
    %v5428 = vunpack.c.l.b16 %v5165
    %v5429 = vunpack.c.l.b16 %v5166
    %v5430 = vunpack.c.l.b16 %v5167
    %v5431 = vunpack.c.l.b16 %v5168
    %v5432 = vunpack.c.l.b16 %v5169
    %v5433 = vunpack.c.l.b16 %v5170
    %v5434 = vunpack.c.l.b16 %v5171
    %v5435 = vunpack.c.l.b16 %v5172
    %v5436 = vunpack.c.l.b16 %v5173
    %v5437 = vunpack.c.l.b16 %v5174
    %v5438 = vunpack.c.l.b16 %v5175
    %v5439 = vunpack.c.l.b16 %v5176
    %v5440 = vunpack.c.l.b16 %v5177
    %v5441 = vunpack.c.l.b16 %v5178
    %v5442 = vunpack.c.l.b16 %v5179
    %v5443 = vunpack.c.l.b16 %v5180
    %v5444 = vunpack.c.l.b16 %v5181
    %v5445 = vunpack.c.l.b16 %v5182
    %v5446 = vunpack.c.l.b16 %v5183
    %v5447 = vunpack.c.l.b16 %v5184
    %v5448 = vunpack.c.l.b16 %v5185
    %v5449 = vunpack.c.l.b16 %v5186
    %v5450 = vunpack.c.l.b16 %v5187
    %v5451 = vunpack.c.l.b16 %v5188
    %v5452 = vunpack.c.l.b16 %v5189
    %v5453 = vunpack.c.l.b16 %v5190
    %v5454 = vunpack.c.l.b16 %v5191
    %v5455 = vunpack.c.l.b16 %v5192
    %v5456 = vunpack.c.l.b16 %v5193
    %v5457 = vunpack.c.l.b16 %v5194
    %v5458 = vunpack.c.l.b16 %v5195
    %v5459 = vunpack.c.l.b16 %v5196
    %v5460 = vunpack.c.l.b16 %v5197
    %v5461 = vunpack.c.l.b16 %v5198
    %v5462 = vunpack.c.l.b16 %v5199
    %v5463 = vunpack.c.l.b16 %v5200
    %v5464 = vunpack.c.l.b16 %v5201
    %v5465 = vunpack.c.l.b16 %v5202
    %v5466 = vunpack.c.l.b16 %v5203
    %v5467 = vunpack.c.l.b16 %v5204
    %v5468 = vunpack.c.l.b16 %v5205
    %v5469 = vunpack.c.l.b16 %v5206
    %v5470 = vunpack.c.l.b16 %v5207
    %v5471 = vunpack.c.l.b16 %v5208
    %v5472 = vunpack.c.l.b16 %v5209
    %v5473 = vunpack.c.l.b16 %v5210
    %v5474 = vunpack.c.l.b16 %v5211
    %v5475 = vunpack.c.l.b16 %v5212
    %v5476 = vunpack.c.l.b16 %v5213
    %v5477 = vunpack.c.l.b16 %v5214
    %v5478 = vunpack.c.l.b16 %v5215
    %v5479 = vunpack.c.l.b16 %v5216
    %v5480 = vunpack.c.l.b16 %v5217
    %v5481 = vunpack.c.l.b16 %v5218
    %v5482 = vunpack.c.l.b16 %v5219
    %v5483 = vunpack.c.l.b16 %v5220
    %v5484 = vunpack.c.l.b16 %v5221
    %v5485 = vunpack.c.l.b16 %v5222
    %v5486 = vunpack.c.l.b16 %v5223
    %v5487 = vunpack.c.l.b16 %v5224
    %v5488 = vunpack.c.l.b16 %v5225
    %v5489 = vunpack.c.l.b16 %v5226
    %v5490 = vunpack.c.l.b16 %v5227
    %v5491 = vunpack.c.l.b16 %v5228
    %v5492 = vunpack.c.l.b16 %v5229
    %v5493 = vunpack.c.l.b16 %v5230
    %v5494 = vunpack.c.l.b16 %v5231
    %v5495 = vunpack.c.l.b16 %v5232
    %v5496 = vunpack.c.l.b16 %v5233
    %v5497 = vunpack.c.l.b16 %v5234
    %v5498 = vunpack.c.l.b16 %v5235
    %v5499 = vunpack.c.l.b16 %v5236
    %v5500 = vunpack.c.l.b16 %v5237
    %v5501 = vunpack.c.l.b16 %v5238
    %v5502 = vunpack.c.l.b16 %v5239
    %v5503 = vunpack.c.l.b16 %v5240
    %v5504 = vunpack.c.l.b16 %v5241
    %v5505 = vunpack.c.l.b16 %v5242
    %v5506 = vunpack.c.l.b16 %v5243
    %v5507 = vunpack.c.l.b16 %v5244
    %v5508 = vunpack.c.l.b16 %v5245
    %v5509 = vunpack.c.l.b16 %v5246
    %v5510 = vunpack.c.l.b16 %v5247
    %v5511 = vunpack.c.l.b16 %v5248
    %v5512 = vunpack.c.l.b16 %v5249
    %v5513 = vunpack.c.l.b16 %v5250
    %v5514 = vunpack.c.l.b16 %v5251
    %v5515 = vunpack.c.l.b16 %v5252
    %v5516 = vunpack.c.l.b16 %v5253
    %v5517 = vunpack.c.l.b16 %v5254
    %v5518 = vunpack.c.l.b16 %v5255
    %v5519 = vunpack.c.l.b16 %v5256
    %v5520 = vunpack.c.l.b16 %v5257
    %v5521 = vunpack.c.l.b16 %v5258
    %v5522 = vunpack.c.l.b16 %v5259
    %v5523 = vunpack.c.l.b16 %v5260
    %v5524 = vunpack.c.l.b16 %v5261
    %v5525 = vunpack.c.l.b16 %v5262
    %v5526 = vunpack.c.l.b16 %v5263
    %v5527 = vunpack.c.l.b16 %v5264
    %v5528 = vunpack.c.l.b16 %v5265
    %v5529 = vunpack.c.l.b16 %v5266
    %v5530 = vunpack.c.l.b16 %v5267
    %v5531 = vunpack.c.l.b16 %v5268
    %v5532 = vunpack.c.l.b16 %v5269
    %v5533 = vunpack.c.l.b16 %v5270
    %v5534 = vunpack.c.l.b16 %v5271
    %v5535 = vunpack.c.l.b16 %v5272
    %v5536 = vunpack.c.l.b16 %v5273
    %v5537 = vunpack.c.l.b16 %v5274
    %v5538 = vunpack.c.l.b16 %v5275
    %v5539 = vunpack.c.l.b16 %v5276
    %v5540 = vunpack.c.l.b16 %v5277
    %v5541 = vunpack.c.l.b16 %v5278
    %v5542 = vunpack.c.l.b16 %v5279
    %v5543 = vunpack.c.l.b16 %v5280
    %v5544 = vunpack.c.l.b16 %v5281
    %v5545 = vunpack.c.l.b16 %v5282
    %v5546 = vunpack.c.l.b16 %v5283
    %v5547 = vunpack.c.l.b16 %v5284
    %v5548 = vunpack.c.l.b16 %v5285
    %v5549 = vunpack.c.l.b16 %v5286
    %v5550 = vpack.c.b16 %v5423, %v5422
    %v5551 = vpack.c.b16 %v5425, %v5424
    %v5552 = vpack.c.b16 %v5427, %v5426
    %v5553 = vpack.c.b16 %v5429, %v5428
    %v5554 = vpack.c.b16 %v5431, %v5430
    %v5555 = vpack.c.b16 %v5433, %v5432
    %v5556 = vpack.c.b16 %v5435, %v5434
    %v5557 = vpack.c.b16 %v5437, %v5436
    %v5558 = vpack.c.b16 %v5439, %v5438
    %v5559 = vpack.c.b16 %v5441, %v5440
    %v5560 = vpack.c.b16 %v5443, %v5442
    %v5561 = vpack.c.b16 %v5445, %v5444
    %v5562 = vpack.c.b16 %v5447, %v5446
    %v5563 = vpack.c.b16 %v5449, %v5448
    %v5564 = vpack.c.b16 %v5451, %v5450
    %v5565 = vpack.c.b16 %v5453, %v5452
    %v5566 = vpack.c.b16 %v5455, %v5454
    %v5567 = vpack.c.b16 %v5457, %v5456
    %v5568 = vpack.c.b16 %v5459, %v5458
    %v5569 = vpack.c.b16 %v5461, %v5460
    %v5570 = vpack.c.b16 %v5463, %v5462
    %v5571 = vpack.c.b16 %v5465, %v5464
    %v5572 = vpack.c.b16 %v5467, %v5466
    %v5573 = vpack.c.b16 %v5469, %v5468
    %v5574 = vpack.c.b16 %v5471, %v5470
    %v5575 = vpack.c.b16 %v5473, %v5472
    %v5576 = vpack.c.b16 %v5475, %v5474
    %v5577 = vpack.c.b16 %v5477, %v5476
    %v5578 = vpack.c.b16 %v5479, %v5478
    %v5579 = vpack.c.b16 %v5481, %v5480
    %v5580 = vpack.c.b16 %v5483, %v5482
    %v5581 = vpack.c.b16 %v5485, %v5484
    %v5582 = vpack.c.b16 %v5487, %v5486
    %v5583 = vpack.c.b16 %v5489, %v5488
    %v5584 = vpack.c.b16 %v5491, %v5490
    %v5585 = vpack.c.b16 %v5493, %v5492
    %v5586 = vpack.c.b16 %v5495, %v5494
    %v5587 = vpack.c.b16 %v5497, %v5496
    %v5588 = vpack.c.b16 %v5499, %v5498
    %v5589 = vpack.c.b16 %v5501, %v5500
    %v5590 = vpack.c.b16 %v5503, %v5502
    %v5591 = vpack.c.b16 %v5505, %v5504
    %v5592 = vpack.c.b16 %v5507, %v5506
    %v5593 = vpack.c.b16 %v5509, %v5508
    %v5594 = vpack.c.b16 %v5511, %v5510
    %v5595 = vpack.c.b16 %v5513, %v5512
    %v5596 = vpack.c.b16 %v5515, %v5514
    %v5597 = vpack.c.b16 %v5517, %v5516
    %v5598 = vpack.c.b16 %v5519, %v5518
    %v5599 = vpack.c.b16 %v5521, %v5520
    %v5600 = vpack.c.b16 %v5523, %v5522
    %v5601 = vpack.c.b16 %v5525, %v5524
    %v5602 = vpack.c.b16 %v5527, %v5526
    %v5603 = vpack.c.b16 %v5529, %v5528
    %v5604 = vpack.c.b16 %v5531, %v5530
    %v5605 = vpack.c.b16 %v5533, %v5532
    %v5606 = vpack.c.b16 %v5535, %v5534
    %v5607 = vpack.c.b16 %v5537, %v5536
    %v5608 = vpack.c.b16 %v5539, %v5538
    %v5609 = vpack.c.b16 %v5541, %v5540
    %v5610 = vpack.c.b16 %v5543, %v5542
    %v5611 = vpack.c.b16 %v5545, %v5544
    %v5612 = vpack.c.b16 %v5547, %v5546
    %v5613 = vpack.c.b16 %v5549, %v5548
    %5678 = vmatprep.subr.bf16.mxu0 0
    %5679 = vmatpush1.bf16.msra.mxu0 %v5557
    %5680 = vmatprep.subr.bf16.mxu0 0
    %5681 = vmatpush1.bf16.msra.mxu0 %v5556
    %5682 = vmatprep.subr.bf16.mxu0 0
    %5683 = vmatpush1.bf16.msra.mxu0 %v5555
    %5684 = vmatprep.subr.bf16.mxu0 0
    %5685 = vmatpush1.bf16.msra.mxu0 %v5554
    %5686 = vmatprep.subr.bf16.mxu0 0
    %5687 = vmatpush1.bf16.msra.mxu0 %v5553
    %5688 = vmatprep.subr.bf16.mxu0 0
    %5689 = vmatpush1.bf16.msra.mxu0 %v5552
    %5690 = vmatprep.subr.bf16.mxu0 0
    %5691 = vmatpush1.bf16.msra.mxu0 %v5551
    %5692 = vmatprep.subr.bf16.mxu0 0
    %5693 = vmatpush1.bf16.msra.mxu0 %v5550
    %5694 = vmatprep.subr.bf16.mxu0 0
    %5695 = vmatpush2.bf16.msra.mxu0 %v5565
    %5696 = vmatprep.subr.bf16.mxu0 0
    %5697 = vmatpush2.bf16.msra.mxu0 %v5564
    %5698 = vmatprep.subr.bf16.mxu0 0
    %5699 = vmatpush2.bf16.msra.mxu0 %v5563
    %5700 = vmatprep.subr.bf16.mxu0 0
    %5701 = vmatpush2.bf16.msra.mxu0 %v5562
    %5702 = vmatprep.subr.bf16.mxu0 0
    %5703 = vmatpush2.bf16.msra.mxu0 %v5561
    %5704 = vmatprep.subr.bf16.mxu0 0
    %5705 = vmatpush2.bf16.msra.mxu0 %v5560
    %5706 = vmatprep.subr.bf16.mxu0 0
    %5707 = vmatpush2.bf16.msra.mxu0 %v5559
    %5708 = vmatprep.subr.bf16.mxu0 0
    %5709 = vmatpush2.bf16.msra.mxu0 %v5558
    %5710 = vmatprep.mubr.bf16.mxu0 %v5152
    %5711 = vmatmul.mubr.bf16.gmra.mxu0 %v5151
    %v5712 = vpop.f32.mrf.mxu0
    %v5713 = vadd.f32 %v5292, %v5712
    %v5714 = vpop.f32.mrf.mxu0
    %v5715 = vpop.f32.mrf.mxu0
    %v5716 = vadd.f32 %v5292, %v5715
    %v5717 = vpop.f32.mrf.mxu0
    %5718 = vdwg.mxu0
    %5719 = vmatprep.subr.bf16.mxu0 0
    %5720 = vmatpush1.bf16.msra.mxu0 %v5573
    %5721 = vmatprep.subr.bf16.mxu0 0
    %5722 = vmatpush1.bf16.msra.mxu0 %v5572
    %5723 = vmatprep.subr.bf16.mxu0 0
    %5724 = vmatpush1.bf16.msra.mxu0 %v5571
    %5725 = vmatprep.subr.bf16.mxu0 0
    %5726 = vmatpush1.bf16.msra.mxu0 %v5570
    %5727 = vmatprep.subr.bf16.mxu0 0
    %5728 = vmatpush1.bf16.msra.mxu0 %v5569
    %5729 = vmatprep.subr.bf16.mxu0 0
    %5730 = vmatpush1.bf16.msra.mxu0 %v5568
    %5731 = vmatprep.subr.bf16.mxu0 0
    %5732 = vmatpush1.bf16.msra.mxu0 %v5567
    %5733 = vmatprep.subr.bf16.mxu0 0
    %5734 = vmatpush1.bf16.msra.mxu0 %v5566
    %5735 = vmatprep.subr.bf16.mxu0 0
    %5736 = vmatpush2.bf16.msra.mxu0 %v5581
    %5737 = vmatprep.subr.bf16.mxu0 0
    %5738 = vmatpush2.bf16.msra.mxu0 %v5580
    %5739 = vmatprep.subr.bf16.mxu0 0
    %5740 = vmatpush2.bf16.msra.mxu0 %v5579
    %5741 = vmatprep.subr.bf16.mxu0 0
    %5742 = vmatpush2.bf16.msra.mxu0 %v5578
    %5743 = vmatprep.subr.bf16.mxu0 0
    %5744 = vmatpush2.bf16.msra.mxu0 %v5577
    %5745 = vmatprep.subr.bf16.mxu0 0
    %5746 = vmatpush2.bf16.msra.mxu0 %v5576
    %5747 = vmatprep.subr.bf16.mxu0 0
    %5748 = vmatpush2.bf16.msra.mxu0 %v5575
    %5749 = vmatprep.subr.bf16.mxu0 0
    %5750 = vmatpush2.bf16.msra.mxu0 %v5574
    %5751 = vmatprep.mubr.bf16.mxu0 %v5154
    %5752 = vmatmul.mubr.bf16.gmra.mxu0 %v5153
    %v5753 = vpop.f32.mrf.mxu0
    %v5754 = vadd.f32 %v5713, %v5753
    %v5755 = vpop.f32.mrf.mxu0
    %v5756 = vpop.f32.mrf.mxu0
    %v5757 = vadd.f32 %v5716, %v5756
    %v5758 = vpop.f32.mrf.mxu0
    %5759 = vdwg.mxu0
    %5760 = vmatprep.subr.bf16.mxu0 0
    %5761 = vmatpush1.bf16.msra.mxu0 %v5589
    %5762 = vmatprep.subr.bf16.mxu0 0
    %5763 = vmatpush1.bf16.msra.mxu0 %v5588
    %5764 = vmatprep.subr.bf16.mxu0 0
    %5765 = vmatpush1.bf16.msra.mxu0 %v5587
    %5766 = vmatprep.subr.bf16.mxu0 0
    %5767 = vmatpush1.bf16.msra.mxu0 %v5586
    %5768 = vmatprep.subr.bf16.mxu0 0
    %5769 = vmatpush1.bf16.msra.mxu0 %v5585
    %5770 = vmatprep.subr.bf16.mxu0 0
    %5771 = vmatpush1.bf16.msra.mxu0 %v5584
    %5772 = vmatprep.subr.bf16.mxu0 0
    %5773 = vmatpush1.bf16.msra.mxu0 %v5583
    %5774 = vmatprep.subr.bf16.mxu0 0
    %5775 = vmatpush1.bf16.msra.mxu0 %v5582
    %5776 = vmatprep.subr.bf16.mxu0 0
    %5777 = vmatpush2.bf16.msra.mxu0 %v5597
    %5778 = vmatprep.subr.bf16.mxu0 0
    %5779 = vmatpush2.bf16.msra.mxu0 %v5596
    %5780 = vmatprep.subr.bf16.mxu0 0
    %5781 = vmatpush2.bf16.msra.mxu0 %v5595
    %5782 = vmatprep.subr.bf16.mxu0 0
    %5783 = vmatpush2.bf16.msra.mxu0 %v5594
    %5784 = vmatprep.subr.bf16.mxu0 0
    %5785 = vmatpush2.bf16.msra.mxu0 %v5593
    %5786 = vmatprep.subr.bf16.mxu0 0
    %5787 = vmatpush2.bf16.msra.mxu0 %v5592
    %5788 = vmatprep.subr.bf16.mxu0 0
    %5789 = vmatpush2.bf16.msra.mxu0 %v5591
    %5790 = vmatprep.subr.bf16.mxu0 0
    %5791 = vmatpush2.bf16.msra.mxu0 %v5590
    %5792 = vmatprep.mubr.bf16.mxu0 %v5156
    %5793 = vmatmul.mubr.bf16.gmra.mxu0 %v5155
    %v5794 = vpop.f32.mrf.mxu0
    %v5795 = vadd.f32 %v5754, %v5794
    %v5796 = vpop.f32.mrf.mxu0
    %v5797 = vpop.f32.mrf.mxu0
    %v5798 = vadd.f32 %v5757, %v5797
    %v5799 = vpop.f32.mrf.mxu0
    %5800 = vdwg.mxu0
    %5801 = vmatprep.subr.bf16.mxu0 0
    %5802 = vmatpush1.bf16.msra.mxu0 %v5605
    %5803 = vmatprep.subr.bf16.mxu0 0
    %5804 = vmatpush1.bf16.msra.mxu0 %v5604
    %5805 = vmatprep.subr.bf16.mxu0 0
    %5806 = vmatpush1.bf16.msra.mxu0 %v5603
    %5807 = vmatprep.subr.bf16.mxu0 0
    %5808 = vmatpush1.bf16.msra.mxu0 %v5602
    %5809 = vmatprep.subr.bf16.mxu0 0
    %5810 = vmatpush1.bf16.msra.mxu0 %v5601
    %5811 = vmatprep.subr.bf16.mxu0 0
    %5812 = vmatpush1.bf16.msra.mxu0 %v5600
    %5813 = vmatprep.subr.bf16.mxu0 0
    %5814 = vmatpush1.bf16.msra.mxu0 %v5599
    %5815 = vmatprep.subr.bf16.mxu0 0
    %5816 = vmatpush1.bf16.msra.mxu0 %v5598
    %5817 = vmatprep.subr.bf16.mxu0 0
    %5818 = vmatpush2.bf16.msra.mxu0 %v5613
    %5819 = vmatprep.subr.bf16.mxu0 0
    %5820 = vmatpush2.bf16.msra.mxu0 %v5612
    %5821 = vmatprep.subr.bf16.mxu0 0
    %5822 = vmatpush2.bf16.msra.mxu0 %v5611
    %5823 = vmatprep.subr.bf16.mxu0 0
    %5824 = vmatpush2.bf16.msra.mxu0 %v5610
    %5825 = vmatprep.subr.bf16.mxu0 0
    %5826 = vmatpush2.bf16.msra.mxu0 %v5609
    %5827 = vmatprep.subr.bf16.mxu0 0
    %5828 = vmatpush2.bf16.msra.mxu0 %v5608
    %5829 = vmatprep.subr.bf16.mxu0 0
    %5830 = vmatpush2.bf16.msra.mxu0 %v5607
    %5831 = vmatprep.subr.bf16.mxu0 0
    %5832 = vmatpush2.bf16.msra.mxu0 %v5606
    %5833 = vmatprep.mubr.bf16.mxu0 %v5158
    %5834 = vmatmul.mubr.bf16.gmra.mxu0 %v5157
    %v5835 = vpop.f32.mrf.mxu0
    %v5836 = vadd.f32 %v5795, %v5835
    %v5837 = vpop.f32.mrf.mxu0
    %v5838 = vpop.f32.mrf.mxu0
    %v5839 = vadd.f32 %v5798, %v5838
    %v5840 = vpop.f32.mrf.mxu0
    %5841 = vdwg.mxu0
    %v5842 = vxor.u32 %v5836, 2147483648
    %v5843 = vxor.u32 %v5839, 2147483648
    %v5844 = vmul.f32 %v5842, 1.442695
    %v5845 = vpow.pop %v5844
    %v5846 = vmul.f32 %v5843, 1.442695
    %v5847 = vpow.pop %v5846
    %v5848 = vadd.f32 %v5845, 1.0
    %v5849 = vadd.f32 %v5847, 1.0
    %v5850 = vrcp.pop %v5848
    %v5851 = vmul.f32 1.0, %v5850
    %v5852 = vrcp.pop %v5849
    %v5853 = vmul.f32 1.0, %v5852
    %v5854 = vsub.f32 %v5851, %v154
    %v5855 = vsub.f32 %v5853, %v155
    %v5856 = vpack.c.bf16 %v5855, %v5854
    %v5857 = vld [vmem:[#allocation12] sm:$0xff]
    %v5858 = vld [vmem:[#allocation12 + $0x8] sm:$0xff]
    %v5859 = vld [vmem:[#allocation12 + $0x10] sm:$0xff]
    %v5860 = vld [vmem:[#allocation12 + $0x18] sm:$0xff]
    %v5861 = vld [vmem:[#allocation12 + $0x20] sm:$0xff]
    %v5862 = vld [vmem:[#allocation12 + $0x28] sm:$0xff]
    %v5863 = vld [vmem:[#allocation12 + $0x30] sm:$0xff]
    %v5864 = vld [vmem:[#allocation12 + $0x38] sm:$0xff]
    %v5865 = vld [vmem:[#allocation12 + $0x40] sm:$0xff]
    %v5866 = vld [vmem:[#allocation12 + $0x48] sm:$0xff]
    %v5867 = vld [vmem:[#allocation12 + $0x50] sm:$0xff]
    %v5868 = vld [vmem:[#allocation12 + $0x58] sm:$0xff]
    %v5869 = vld [vmem:[#allocation12 + $0x60] sm:$0xff]
    %v5870 = vld [vmem:[#allocation12 + $0x68] sm:$0xff]
    %v5871 = vld [vmem:[#allocation12 + $0x70] sm:$0xff]
    %v5872 = vld [vmem:[#allocation12 + $0x78] sm:$0xff]
    %v5873 = vld [vmem:[#allocation12 + $0x80] sm:$0xff]
    %v5874 = vld [vmem:[#allocation12 + $0x88] sm:$0xff]
    %v5875 = vld [vmem:[#allocation12 + $0x90] sm:$0xff]
    %v5876 = vld [vmem:[#allocation12 + $0x98] sm:$0xff]
    %v5877 = vld [vmem:[#allocation12 + $0xa0] sm:$0xff]
    %v5878 = vld [vmem:[#allocation12 + $0xa8] sm:$0xff]
    %v5879 = vld [vmem:[#allocation12 + $0xb0] sm:$0xff]
    %v5880 = vld [vmem:[#allocation12 + $0xb8] sm:$0xff]
    %v5881 = vld [vmem:[#allocation12 + $0xc0] sm:$0xff]
    %v5882 = vld [vmem:[#allocation12 + $0xc8] sm:$0xff]
    %v5883 = vld [vmem:[#allocation12 + $0xd0] sm:$0xff]
    %v5884 = vld [vmem:[#allocation12 + $0xd8] sm:$0xff]
    %v5885 = vld [vmem:[#allocation12 + $0xe0] sm:$0xff]
    %v5886 = vld [vmem:[#allocation12 + $0xe8] sm:$0xff]
    %v5887 = vld [vmem:[#allocation12 + $0xf0] sm:$0xff]
    %v5888 = vld [vmem:[#allocation12 + $0xf8] sm:$0xff]
    %v5889 = vld [vmem:[#allocation12 + $0x100] sm:$0xff]
    %v5890 = vld [vmem:[#allocation12 + $0x108] sm:$0xff]
    %v5891 = vld [vmem:[#allocation12 + $0x110] sm:$0xff]
    %v5892 = vld [vmem:[#allocation12 + $0x118] sm:$0xff]
    %v5893 = vld [vmem:[#allocation12 + $0x120] sm:$0xff]
    %v5894 = vld [vmem:[#allocation12 + $0x128] sm:$0xff]
    %v5895 = vld [vmem:[#allocation12 + $0x130] sm:$0xff]
    %v5896 = vld [vmem:[#allocation12 + $0x138] sm:$0xff]
    %v5897 = vld [vmem:[#allocation12 + $0x140] sm:$0xff]
    %v5898 = vld [vmem:[#allocation12 + $0x148] sm:$0xff]
    %v5899 = vld [vmem:[#allocation12 + $0x150] sm:$0xff]
    %v5900 = vld [vmem:[#allocation12 + $0x158] sm:$0xff]
    %v5901 = vld [vmem:[#allocation12 + $0x160] sm:$0xff]
    %v5902 = vld [vmem:[#allocation12 + $0x168] sm:$0xff]
    %v5903 = vld [vmem:[#allocation12 + $0x170] sm:$0xff]
    %v5904 = vld [vmem:[#allocation12 + $0x178] sm:$0xff]
    %v5905 = vld [vmem:[#allocation12 + $0x180] sm:$0xff]
    %v5906 = vld [vmem:[#allocation12 + $0x188] sm:$0xff]
    %v5907 = vld [vmem:[#allocation12 + $0x190] sm:$0xff]
    %v5908 = vld [vmem:[#allocation12 + $0x198] sm:$0xff]
    %v5909 = vld [vmem:[#allocation12 + $0x1a0] sm:$0xff]
    %v5910 = vld [vmem:[#allocation12 + $0x1a8] sm:$0xff]
    %v5911 = vld [vmem:[#allocation12 + $0x1b0] sm:$0xff]
    %v5912 = vld [vmem:[#allocation12 + $0x1b8] sm:$0xff]
    %v5913 = vld [vmem:[#allocation12 + $0x1c0] sm:$0xff]
    %v5914 = vld [vmem:[#allocation12 + $0x1c8] sm:$0xff]
    %v5915 = vld [vmem:[#allocation12 + $0x1d0] sm:$0xff]
    %v5916 = vld [vmem:[#allocation12 + $0x1d8] sm:$0xff]
    %v5917 = vld [vmem:[#allocation12 + $0x1e0] sm:$0xff]
    %v5918 = vld [vmem:[#allocation12 + $0x1e8] sm:$0xff]
    %v5919 = vld [vmem:[#allocation12 + $0x1f0] sm:$0xff]
    %v5920 = vld [vmem:[#allocation12 + $0x1f8] sm:$0xff]
    %v5985 = vunpack.c.l.b16 %v5857
    %v5986 = vunpack.c.h.b16 %v5857
    %v5987 = vunpack.c.l.b16 %v5858
    %v5988 = vunpack.c.h.b16 %v5858
    %v5989 = vunpack.c.l.b16 %v5859
    %v5990 = vunpack.c.h.b16 %v5859
    %v5991 = vunpack.c.l.b16 %v5860
    %v5992 = vunpack.c.h.b16 %v5860
    %v5993 = vunpack.c.l.b16 %v5861
    %v5994 = vunpack.c.h.b16 %v5861
    %v5995 = vunpack.c.l.b16 %v5862
    %v5996 = vunpack.c.h.b16 %v5862
    %v5997 = vunpack.c.l.b16 %v5863
    %v5998 = vunpack.c.h.b16 %v5863
    %v5999 = vunpack.c.l.b16 %v5864
    %v6000 = vunpack.c.h.b16 %v5864
    %v6001 = vunpack.c.l.b16 %v5865
    %v6002 = vunpack.c.h.b16 %v5865
    %v6003 = vunpack.c.l.b16 %v5866
    %v6004 = vunpack.c.h.b16 %v5866
    %v6005 = vunpack.c.l.b16 %v5867
    %v6006 = vunpack.c.h.b16 %v5867
    %v6007 = vunpack.c.l.b16 %v5868
    %v6008 = vunpack.c.h.b16 %v5868
    %v6009 = vunpack.c.l.b16 %v5869
    %v6010 = vunpack.c.h.b16 %v5869
    %v6011 = vunpack.c.l.b16 %v5870
    %v6012 = vunpack.c.h.b16 %v5870
    %v6013 = vunpack.c.l.b16 %v5871
    %v6014 = vunpack.c.h.b16 %v5871
    %v6015 = vunpack.c.l.b16 %v5872
    %v6016 = vunpack.c.h.b16 %v5872
    %v6017 = vunpack.c.l.b16 %v5873
    %v6018 = vunpack.c.h.b16 %v5873
    %v6019 = vunpack.c.l.b16 %v5874
    %v6020 = vunpack.c.h.b16 %v5874
    %v6021 = vunpack.c.l.b16 %v5875
    %v6022 = vunpack.c.h.b16 %v5875
    %v6023 = vunpack.c.l.b16 %v5876
    %v6024 = vunpack.c.h.b16 %v5876
    %v6025 = vunpack.c.l.b16 %v5877
    %v6026 = vunpack.c.h.b16 %v5877
    %v6027 = vunpack.c.l.b16 %v5878
    %v6028 = vunpack.c.h.b16 %v5878
    %v6029 = vunpack.c.l.b16 %v5879
    %v6030 = vunpack.c.h.b16 %v5879
    %v6031 = vunpack.c.l.b16 %v5880
    %v6032 = vunpack.c.h.b16 %v5880
    %v6033 = vunpack.c.l.b16 %v5881
    %v6034 = vunpack.c.h.b16 %v5881
    %v6035 = vunpack.c.l.b16 %v5882
    %v6036 = vunpack.c.h.b16 %v5882
    %v6037 = vunpack.c.l.b16 %v5883
    %v6038 = vunpack.c.h.b16 %v5883
    %v6039 = vunpack.c.l.b16 %v5884
    %v6040 = vunpack.c.h.b16 %v5884
    %v6041 = vunpack.c.l.b16 %v5885
    %v6042 = vunpack.c.h.b16 %v5885
    %v6043 = vunpack.c.l.b16 %v5886
    %v6044 = vunpack.c.h.b16 %v5886
    %v6045 = vunpack.c.l.b16 %v5887
    %v6046 = vunpack.c.h.b16 %v5887
    %v6047 = vunpack.c.l.b16 %v5888
    %v6048 = vunpack.c.h.b16 %v5888
    %v6049 = vunpack.c.l.b16 %v5889
    %v6050 = vunpack.c.h.b16 %v5889
    %v6051 = vunpack.c.l.b16 %v5890
    %v6052 = vunpack.c.h.b16 %v5890
    %v6053 = vunpack.c.l.b16 %v5891
    %v6054 = vunpack.c.h.b16 %v5891
    %v6055 = vunpack.c.l.b16 %v5892
    %v6056 = vunpack.c.h.b16 %v5892
    %v6057 = vunpack.c.l.b16 %v5893
    %v6058 = vunpack.c.h.b16 %v5893
    %v6059 = vunpack.c.l.b16 %v5894
    %v6060 = vunpack.c.h.b16 %v5894
    %v6061 = vunpack.c.l.b16 %v5895
    %v6062 = vunpack.c.h.b16 %v5895
    %v6063 = vunpack.c.l.b16 %v5896
    %v6064 = vunpack.c.h.b16 %v5896
    %v6065 = vunpack.c.l.b16 %v5897
    %v6066 = vunpack.c.h.b16 %v5897
    %v6067 = vunpack.c.l.b16 %v5898
    %v6068 = vunpack.c.h.b16 %v5898
    %v6069 = vunpack.c.l.b16 %v5899
    %v6070 = vunpack.c.h.b16 %v5899
    %v6071 = vunpack.c.l.b16 %v5900
    %v6072 = vunpack.c.h.b16 %v5900
    %v6073 = vunpack.c.l.b16 %v5901
    %v6074 = vunpack.c.h.b16 %v5901
    %v6075 = vunpack.c.l.b16 %v5902
    %v6076 = vunpack.c.h.b16 %v5902
    %v6077 = vunpack.c.l.b16 %v5903
    %v6078 = vunpack.c.h.b16 %v5903
    %v6079 = vunpack.c.l.b16 %v5904
    %v6080 = vunpack.c.h.b16 %v5904
    %v6081 = vunpack.c.l.b16 %v5905
    %v6082 = vunpack.c.h.b16 %v5905
    %v6083 = vunpack.c.l.b16 %v5906
    %v6084 = vunpack.c.h.b16 %v5906
    %v6085 = vunpack.c.l.b16 %v5907
    %v6086 = vunpack.c.h.b16 %v5907
    %v6087 = vunpack.c.l.b16 %v5908
    %v6088 = vunpack.c.h.b16 %v5908
    %v6089 = vunpack.c.l.b16 %v5909
    %v6090 = vunpack.c.h.b16 %v5909
    %v6091 = vunpack.c.l.b16 %v5910
    %v6092 = vunpack.c.h.b16 %v5910
    %v6093 = vunpack.c.l.b16 %v5911
    %v6094 = vunpack.c.h.b16 %v5911
    %v6095 = vunpack.c.l.b16 %v5912
    %v6096 = vunpack.c.h.b16 %v5912
    %v6097 = vunpack.c.l.b16 %v5913
    %v6098 = vunpack.c.h.b16 %v5913
    %v6099 = vunpack.c.l.b16 %v5914
    %v6100 = vunpack.c.h.b16 %v5914
    %v6101 = vunpack.c.l.b16 %v5915
    %v6102 = vunpack.c.h.b16 %v5915
    %v6103 = vunpack.c.l.b16 %v5916
    %v6104 = vunpack.c.h.b16 %v5916
    %v6105 = vunpack.c.l.b16 %v5917
    %v6106 = vunpack.c.h.b16 %v5917
    %v6107 = vunpack.c.l.b16 %v5918
    %v6108 = vunpack.c.h.b16 %v5918
    %v6109 = vunpack.c.l.b16 %v5919
    %v6110 = vunpack.c.h.b16 %v5919
    %v6111 = vunpack.c.l.b16 %v5920
    %v6112 = vunpack.c.h.b16 %v5920
    %v6113 = vpack.c.b16 %v5993, %v5985
    %v6114 = vpack.c.b16 %v5994, %v5986
    %v6115 = vpack.c.b16 %v5995, %v5987
    %v6116 = vpack.c.b16 %v5996, %v5988
    %v6117 = vpack.c.b16 %v5997, %v5989
    %v6118 = vpack.c.b16 %v5998, %v5990
    %v6119 = vpack.c.b16 %v5999, %v5991
    %v6120 = vpack.c.b16 %v6000, %v5992
    %v6121 = vpack.c.b16 %v6009, %v6001
    %v6122 = vpack.c.b16 %v6010, %v6002
    %v6123 = vpack.c.b16 %v6011, %v6003
    %v6124 = vpack.c.b16 %v6012, %v6004
    %v6125 = vpack.c.b16 %v6013, %v6005
    %v6126 = vpack.c.b16 %v6014, %v6006
    %v6127 = vpack.c.b16 %v6015, %v6007
    %v6128 = vpack.c.b16 %v6016, %v6008
    %v6129 = vpack.c.b16 %v6025, %v6017
    %v6130 = vpack.c.b16 %v6026, %v6018
    %v6131 = vpack.c.b16 %v6027, %v6019
    %v6132 = vpack.c.b16 %v6028, %v6020
    %v6133 = vpack.c.b16 %v6029, %v6021
    %v6134 = vpack.c.b16 %v6030, %v6022
    %v6135 = vpack.c.b16 %v6031, %v6023
    %v6136 = vpack.c.b16 %v6032, %v6024
    %v6137 = vpack.c.b16 %v6041, %v6033
    %v6138 = vpack.c.b16 %v6042, %v6034
    %v6139 = vpack.c.b16 %v6043, %v6035
    %v6140 = vpack.c.b16 %v6044, %v6036
    %v6141 = vpack.c.b16 %v6045, %v6037
    %v6142 = vpack.c.b16 %v6046, %v6038
    %v6143 = vpack.c.b16 %v6047, %v6039
    %v6144 = vpack.c.b16 %v6048, %v6040
    %v6145 = vpack.c.b16 %v6057, %v6049
    %v6146 = vpack.c.b16 %v6058, %v6050
    %v6147 = vpack.c.b16 %v6059, %v6051
    %v6148 = vpack.c.b16 %v6060, %v6052
    %v6149 = vpack.c.b16 %v6061, %v6053
    %v6150 = vpack.c.b16 %v6062, %v6054
    %v6151 = vpack.c.b16 %v6063, %v6055
    %v6152 = vpack.c.b16 %v6064, %v6056
    %v6153 = vpack.c.b16 %v6073, %v6065
    %v6154 = vpack.c.b16 %v6074, %v6066
    %v6155 = vpack.c.b16 %v6075, %v6067
    %v6156 = vpack.c.b16 %v6076, %v6068
    %v6157 = vpack.c.b16 %v6077, %v6069
    %v6158 = vpack.c.b16 %v6078, %v6070
    %v6159 = vpack.c.b16 %v6079, %v6071
    %v6160 = vpack.c.b16 %v6080, %v6072
    %v6161 = vpack.c.b16 %v6089, %v6081
    %v6162 = vpack.c.b16 %v6090, %v6082
    %v6163 = vpack.c.b16 %v6091, %v6083
    %v6164 = vpack.c.b16 %v6092, %v6084
    %v6165 = vpack.c.b16 %v6093, %v6085
    %v6166 = vpack.c.b16 %v6094, %v6086
    %v6167 = vpack.c.b16 %v6095, %v6087
    %v6168 = vpack.c.b16 %v6096, %v6088
    %v6169 = vpack.c.b16 %v6105, %v6097
    %v6170 = vpack.c.b16 %v6106, %v6098
    %v6171 = vpack.c.b16 %v6107, %v6099
    %v6172 = vpack.c.b16 %v6108, %v6100
    %v6173 = vpack.c.b16 %v6109, %v6101
    %v6174 = vpack.c.b16 %v6110, %v6102
    %v6175 = vpack.c.b16 %v6111, %v6103
    %v6176 = vpack.c.b16 %v6112, %v6104
    %6241 = vmatprep.subr.bf16.mxu0 %v6170
    %6242 = vmatpush1.bf16.msra.mxu0 %v6169
    %6243 = vmatprep.subr.bf16.mxu0 %v6162
    %6244 = vmatpush1.bf16.msra.mxu0 %v6161
    %6245 = vmatprep.subr.bf16.mxu0 %v6154
    %6246 = vmatpush1.bf16.msra.mxu0 %v6153
    %6247 = vmatprep.subr.bf16.mxu0 %v6146
    %6248 = vmatpush1.bf16.msra.mxu0 %v6145
    %6249 = vmatprep.subr.bf16.mxu0 %v6138
    %6250 = vmatpush1.bf16.msra.mxu0 %v6137
    %6251 = vmatprep.subr.bf16.mxu0 %v6130
    %6252 = vmatpush1.bf16.msra.mxu0 %v6129
    %6253 = vmatprep.subr.bf16.mxu0 %v6122
    %6254 = vmatpush1.bf16.msra.mxu0 %v6121
    %6255 = vmatprep.subr.bf16.mxu0 %v6114
    %6256 = vmatpush1.bf16.msra.mxu0 %v6113
    %6257 = vmatprep.subr.bf16.mxu0 0
    %6258 = vmatpush2.bf16.msra.mxu0 0
    %6259 = vmatprep.subr.bf16.mxu0 0
    %6260 = vmatpush2.bf16.msra.mxu0 0
    %6261 = vmatprep.subr.bf16.mxu0 0
    %6262 = vmatpush2.bf16.msra.mxu0 0
    %6263 = vmatprep.subr.bf16.mxu0 0
    %6264 = vmatpush2.bf16.msra.mxu0 0
    %6265 = vmatprep.subr.bf16.mxu0 0
    %6266 = vmatpush2.bf16.msra.mxu0 0
    %6267 = vmatprep.subr.bf16.mxu0 0
    %6268 = vmatpush2.bf16.msra.mxu0 0
    %6269 = vmatprep.subr.bf16.mxu0 0
    %6270 = vmatpush2.bf16.msra.mxu0 0
    %6271 = vmatprep.subr.bf16.mxu0 0
    %6272 = vmatpush2.bf16.msra.mxu0 0
    %6273 = vmatprep.mubr.bf16.mxu0 0
    %6274 = vmatmul.mubr.bf16.gmra.mxu0 %v5856
    %v6275 = vpop.f32.mrf.mxu0
    %v6276 = vadd.f32 0.0, %v6275
    %v6277 = vpop.f32.mrf.mxu0
    %v6278 = vadd.f32 0.0, %v6277
    %v6279 = vpop.f32.mrf.mxu0
    %v6280 = vadd.f32 0.0, %v6279
    %v6281 = vpop.f32.mrf.mxu0
    %v6282 = vadd.f32 0.0, %v6281
    %6283 = vdwg.mxu0
    %6284 = vmatprep.subr.bf16.mxu0 %v6172
    %6285 = vmatpush1.bf16.msra.mxu0 %v6171
    %6286 = vmatprep.subr.bf16.mxu0 %v6164
    %6287 = vmatpush1.bf16.msra.mxu0 %v6163
    %6288 = vmatprep.subr.bf16.mxu0 %v6156
    %6289 = vmatpush1.bf16.msra.mxu0 %v6155
    %6290 = vmatprep.subr.bf16.mxu0 %v6148
    %6291 = vmatpush1.bf16.msra.mxu0 %v6147
    %6292 = vmatprep.subr.bf16.mxu0 %v6140
    %6293 = vmatpush1.bf16.msra.mxu0 %v6139
    %6294 = vmatprep.subr.bf16.mxu0 %v6132
    %6295 = vmatpush1.bf16.msra.mxu0 %v6131
    %6296 = vmatprep.subr.bf16.mxu0 %v6124
    %6297 = vmatpush1.bf16.msra.mxu0 %v6123
    %6298 = vmatprep.subr.bf16.mxu0 %v6116
    %6299 = vmatpush1.bf16.msra.mxu0 %v6115
    %6300 = vmatprep.subr.bf16.mxu0 0
    %6301 = vmatpush2.bf16.msra.mxu0 0
    %6302 = vmatprep.subr.bf16.mxu0 0
    %6303 = vmatpush2.bf16.msra.mxu0 0
    %6304 = vmatprep.subr.bf16.mxu0 0
    %6305 = vmatpush2.bf16.msra.mxu0 0
    %6306 = vmatprep.subr.bf16.mxu0 0
    %6307 = vmatpush2.bf16.msra.mxu0 0
    %6308 = vmatprep.subr.bf16.mxu0 0
    %6309 = vmatpush2.bf16.msra.mxu0 0
    %6310 = vmatprep.subr.bf16.mxu0 0
    %6311 = vmatpush2.bf16.msra.mxu0 0
    %6312 = vmatprep.subr.bf16.mxu0 0
    %6313 = vmatpush2.bf16.msra.mxu0 0
    %6314 = vmatprep.subr.bf16.mxu0 0
    %6315 = vmatpush2.bf16.msra.mxu0 0
    %6316 = vmatprep.mubr.bf16.mxu0 0
    %6317 = vmatmul.mubr.bf16.gmra.mxu0 %v5856
    %v6318 = vpop.f32.mrf.mxu0
    %v6319 = vadd.f32 0.0, %v6318
    %v6320 = vpop.f32.mrf.mxu0
    %v6321 = vadd.f32 0.0, %v6320
    %v6322 = vpop.f32.mrf.mxu0
    %v6323 = vadd.f32 0.0, %v6322
    %v6324 = vpop.f32.mrf.mxu0
    %v6325 = vadd.f32 0.0, %v6324
    %6326 = vdwg.mxu0
    %6327 = vmatprep.subr.bf16.mxu0 %v6174
    %6328 = vmatpush1.bf16.msra.mxu0 %v6173
    %6329 = vmatprep.subr.bf16.mxu0 %v6166
    %6330 = vmatpush1.bf16.msra.mxu0 %v6165
    %6331 = vmatprep.subr.bf16.mxu0 %v6158
    %6332 = vmatpush1.bf16.msra.mxu0 %v6157
    %6333 = vmatprep.subr.bf16.mxu0 %v6150
    %6334 = vmatpush1.bf16.msra.mxu0 %v6149
    %6335 = vmatprep.subr.bf16.mxu0 %v6142
    %6336 = vmatpush1.bf16.msra.mxu0 %v6141
    %6337 = vmatprep.subr.bf16.mxu0 %v6134
    %6338 = vmatpush1.bf16.msra.mxu0 %v6133
    %6339 = vmatprep.subr.bf16.mxu0 %v6126
    %6340 = vmatpush1.bf16.msra.mxu0 %v6125
    %6341 = vmatprep.subr.bf16.mxu0 %v6118
    %6342 = vmatpush1.bf16.msra.mxu0 %v6117
    %6343 = vmatprep.subr.bf16.mxu0 0
    %6344 = vmatpush2.bf16.msra.mxu0 0
    %6345 = vmatprep.subr.bf16.mxu0 0
    %6346 = vmatpush2.bf16.msra.mxu0 0
    %6347 = vmatprep.subr.bf16.mxu0 0
    %6348 = vmatpush2.bf16.msra.mxu0 0
    %6349 = vmatprep.subr.bf16.mxu0 0
    %6350 = vmatpush2.bf16.msra.mxu0 0
    %6351 = vmatprep.subr.bf16.mxu0 0
    %6352 = vmatpush2.bf16.msra.mxu0 0
    %6353 = vmatprep.subr.bf16.mxu0 0
    %6354 = vmatpush2.bf16.msra.mxu0 0
    %6355 = vmatprep.subr.bf16.mxu0 0
    %6356 = vmatpush2.bf16.msra.mxu0 0
    %6357 = vmatprep.subr.bf16.mxu0 0
    %6358 = vmatpush2.bf16.msra.mxu0 0
    %6359 = vmatprep.mubr.bf16.mxu0 0
    %6360 = vmatmul.mubr.bf16.gmra.mxu0 %v5856
    %v6361 = vpop.f32.mrf.mxu0
    %v6362 = vadd.f32 0.0, %v6361
    %v6363 = vpop.f32.mrf.mxu0
    %v6364 = vadd.f32 0.0, %v6363
    %v6365 = vpop.f32.mrf.mxu0
    %v6366 = vadd.f32 0.0, %v6365
    %v6367 = vpop.f32.mrf.mxu0
    %v6368 = vadd.f32 0.0, %v6367
    %6369 = vdwg.mxu0
    %6370 = vmatprep.subr.bf16.mxu0 %v6176
    %6371 = vmatpush1.bf16.msra.mxu0 %v6175
    %6372 = vmatprep.subr.bf16.mxu0 %v6168
    %6373 = vmatpush1.bf16.msra.mxu0 %v6167
    %6374 = vmatprep.subr.bf16.mxu0 %v6160
    %6375 = vmatpush1.bf16.msra.mxu0 %v6159
    %6376 = vmatprep.subr.bf16.mxu0 %v6152
    %6377 = vmatpush1.bf16.msra.mxu0 %v6151
    %6378 = vmatprep.subr.bf16.mxu0 %v6144
    %6379 = vmatpush1.bf16.msra.mxu0 %v6143
    %6380 = vmatprep.subr.bf16.mxu0 %v6136
    %6381 = vmatpush1.bf16.msra.mxu0 %v6135
    %6382 = vmatprep.subr.bf16.mxu0 %v6128
    %6383 = vmatpush1.bf16.msra.mxu0 %v6127
    %6384 = vmatprep.subr.bf16.mxu0 %v6120
    %6385 = vmatpush1.bf16.msra.mxu0 %v6119
    %6386 = vmatprep.subr.bf16.mxu0 0
    %6387 = vmatpush2.bf16.msra.mxu0 0
    %6388 = vmatprep.subr.bf16.mxu0 0
    %6389 = vmatpush2.bf16.msra.mxu0 0
    %6390 = vmatprep.subr.bf16.mxu0 0
    %6391 = vmatpush2.bf16.msra.mxu0 0
    %6392 = vmatprep.subr.bf16.mxu0 0
    %6393 = vmatpush2.bf16.msra.mxu0 0
    %6394 = vmatprep.subr.bf16.mxu0 0
    %6395 = vmatpush2.bf16.msra.mxu0 0
    %6396 = vmatprep.subr.bf16.mxu0 0
    %6397 = vmatpush2.bf16.msra.mxu0 0
    %6398 = vmatprep.subr.bf16.mxu0 0
    %6399 = vmatpush2.bf16.msra.mxu0 0
    %6400 = vmatprep.subr.bf16.mxu0 0
    %6401 = vmatpush2.bf16.msra.mxu0 0
    %6402 = vmatprep.mubr.bf16.mxu0 0
    %6403 = vmatmul.mubr.bf16.gmra.mxu0 %v5856
    %v6404 = vpop.f32.mrf.mxu0
    %v6405 = vadd.f32 0.0, %v6404
    %v6406 = vpop.f32.mrf.mxu0
    %v6407 = vadd.f32 0.0, %v6406
    %v6408 = vpop.f32.mrf.mxu0
    %v6409 = vadd.f32 0.0, %v6408
    %v6410 = vpop.f32.mrf.mxu0
    %v6411 = vadd.f32 0.0, %v6410
    %6412 = vdwg.mxu0
    %vm6413 = vcmp.gt.f32.partialorder %v5135, 0.0
    %vm6414 = vcmp.gt.f32.partialorder %v5136, 0.0
    %vm6415 = vcmp.gt.f32.partialorder %v5137, 0.0
    %vm6416 = vcmp.gt.f32.partialorder %v5138, 0.0
    %vm6417 = vcmp.gt.f32.partialorder %v5139, 0.0
    %vm6418 = vcmp.gt.f32.partialorder %v5140, 0.0
    %vm6419 = vcmp.gt.f32.partialorder %v5141, 0.0
    %vm6420 = vcmp.gt.f32.partialorder %v5142, 0.0
    %vm6421 = vcmp.gt.f32.partialorder %v5143, 0.0
    %vm6422 = vcmp.gt.f32.partialorder %v5144, 0.0
    %vm6423 = vcmp.gt.f32.partialorder %v5145, 0.0
    %vm6424 = vcmp.gt.f32.partialorder %v5146, 0.0
    %vm6425 = vcmp.gt.f32.partialorder %v5147, 0.0
    %vm6426 = vcmp.gt.f32.partialorder %v5148, 0.0
    %vm6427 = vcmp.gt.f32.partialorder %v5149, 0.0
    %vm6428 = vcmp.gt.f32.partialorder %v5150, 0.0
    %v6429 = vsel %vm6413, 1, 0
    %v6430 = vsel %vm6414, 1, 0
    %v6431 = vsel %vm6415, 1, 0
    %v6432 = vsel %vm6416, 1, 0
    %v6433 = vsel %vm6417, 1, 0
    %v6434 = vsel %vm6418, 1, 0
    %v6435 = vsel %vm6419, 1, 0
    %v6436 = vsel %vm6420, 1, 0
    %v6437 = vsel %vm6421, 1, 0
    %v6438 = vsel %vm6422, 1, 0
    %v6439 = vsel %vm6423, 1, 0
    %v6440 = vsel %vm6424, 1, 0
    %v6441 = vsel %vm6425, 1, 0
    %v6442 = vsel %vm6426, 1, 0
    %v6443 = vsel %vm6427, 1, 0
    %v6444 = vsel %vm6428, 1, 0
    %v6445 = vcvt.s32.f32 %v6429
    %v6446 = vcvt.s32.f32 %v6430
    %v6447 = vcvt.s32.f32 %v6431
    %v6448 = vcvt.s32.f32 %v6432
    %v6449 = vcvt.s32.f32 %v6433
    %v6450 = vcvt.s32.f32 %v6434
    %v6451 = vcvt.s32.f32 %v6435
    %v6452 = vcvt.s32.f32 %v6436
    %v6453 = vcvt.s32.f32 %v6437
    %v6454 = vcvt.s32.f32 %v6438
    %v6455 = vcvt.s32.f32 %v6439
    %v6456 = vcvt.s32.f32 %v6440
    %v6457 = vcvt.s32.f32 %v6441
    %v6458 = vcvt.s32.f32 %v6442
    %v6459 = vcvt.s32.f32 %v6443
    %v6460 = vcvt.s32.f32 %v6444
    %v6461 = vmul.f32 %v6276, %v6445
    %v6462 = vmul.f32 %v6278, %v6446
    %v6463 = vmul.f32 %v6319, %v6447
    %v6464 = vmul.f32 %v6321, %v6448
    %v6465 = vmul.f32 %v6362, %v6449
    %v6466 = vmul.f32 %v6364, %v6450
    %v6467 = vmul.f32 %v6405, %v6451
    %v6468 = vmul.f32 %v6407, %v6452
    %v6469 = vmul.f32 %v6280, %v6453
    %v6470 = vmul.f32 %v6282, %v6454
    %v6471 = vmul.f32 %v6323, %v6455
    %v6472 = vmul.f32 %v6325, %v6456
    %v6473 = vmul.f32 %v6366, %v6457
    %v6474 = vmul.f32 %v6368, %v6458
    %v6475 = vmul.f32 %v6409, %v6459
    %v6476 = vmul.f32 %v6411, %v6460
    %v6477 = vpack.c.bf16 %v6469, %v6461
    %v6478 = vpack.c.bf16 %v6470, %v6462
    %v6479 = vpack.c.bf16 %v6471, %v6463
    %v6480 = vpack.c.bf16 %v6472, %v6464
    %v6481 = vpack.c.bf16 %v6473, %v6465
    %v6482 = vpack.c.bf16 %v6474, %v6466
    %v6483 = vpack.c.bf16 %v6475, %v6467
    %v6484 = vpack.c.bf16 %v6476, %v6468
    %v6485 = vld [vmem:[#allocation10] sm:$0xff]
    %v6486 = vld [vmem:[#allocation10 + $0x8] sm:$0xff]
    %v6487 = vld [vmem:[#allocation10 + $0x10] sm:$0xff]
    %v6488 = vld [vmem:[#allocation10 + $0x18] sm:$0xff]
    %v6489 = vld [vmem:[#allocation10 + $0x20] sm:$0xff]
    %v6490 = vld [vmem:[#allocation10 + $0x28] sm:$0xff]
    %v6491 = vld [vmem:[#allocation10 + $0x30] sm:$0xff]
    %v6492 = vld [vmem:[#allocation10 + $0x38] sm:$0xff]
    %v6493 = vld [vmem:[#allocation10 + $0x40] sm:$0xff]
    %v6494 = vld [vmem:[#allocation10 + $0x48] sm:$0xff]
    %v6495 = vld [vmem:[#allocation10 + $0x50] sm:$0xff]
    %v6496 = vld [vmem:[#allocation10 + $0x58] sm:$0xff]
    %v6497 = vld [vmem:[#allocation10 + $0x60] sm:$0xff]
    %v6498 = vld [vmem:[#allocation10 + $0x68] sm:$0xff]
    %v6499 = vld [vmem:[#allocation10 + $0x70] sm:$0xff]
    %v6500 = vld [vmem:[#allocation10 + $0x78] sm:$0xff]
    %v6501 = vld [vmem:[#allocation10 + $0x80] sm:$0xff]
    %v6502 = vld [vmem:[#allocation10 + $0x88] sm:$0xff]
    %v6503 = vld [vmem:[#allocation10 + $0x90] sm:$0xff]
    %v6504 = vld [vmem:[#allocation10 + $0x98] sm:$0xff]
    %v6505 = vld [vmem:[#allocation10 + $0xa0] sm:$0xff]
    %v6506 = vld [vmem:[#allocation10 + $0xa8] sm:$0xff]
    %v6507 = vld [vmem:[#allocation10 + $0xb0] sm:$0xff]
    %v6508 = vld [vmem:[#allocation10 + $0xb8] sm:$0xff]
    %v6509 = vld [vmem:[#allocation10 + $0xc0] sm:$0xff]
    %v6510 = vld [vmem:[#allocation10 + $0xc8] sm:$0xff]
    %v6511 = vld [vmem:[#allocation10 + $0xd0] sm:$0xff]
    %v6512 = vld [vmem:[#allocation10 + $0xd8] sm:$0xff]
    %v6513 = vld [vmem:[#allocation10 + $0xe0] sm:$0xff]
    %v6514 = vld [vmem:[#allocation10 + $0xe8] sm:$0xff]
    %v6515 = vld [vmem:[#allocation10 + $0xf0] sm:$0xff]
    %v6516 = vld [vmem:[#allocation10 + $0xf8] sm:$0xff]
    %v6517 = vld [vmem:[#allocation10 + $0x100] sm:$0xff]
    %v6518 = vld [vmem:[#allocation10 + $0x108] sm:$0xff]
    %v6519 = vld [vmem:[#allocation10 + $0x110] sm:$0xff]
    %v6520 = vld [vmem:[#allocation10 + $0x118] sm:$0xff]
    %v6521 = vld [vmem:[#allocation10 + $0x120] sm:$0xff]
    %v6522 = vld [vmem:[#allocation10 + $0x128] sm:$0xff]
    %v6523 = vld [vmem:[#allocation10 + $0x130] sm:$0xff]
    %v6524 = vld [vmem:[#allocation10 + $0x138] sm:$0xff]
    %v6525 = vld [vmem:[#allocation10 + $0x140] sm:$0xff]
    %v6526 = vld [vmem:[#allocation10 + $0x148] sm:$0xff]
    %v6527 = vld [vmem:[#allocation10 + $0x150] sm:$0xff]
    %v6528 = vld [vmem:[#allocation10 + $0x158] sm:$0xff]
    %v6529 = vld [vmem:[#allocation10 + $0x160] sm:$0xff]
    %v6530 = vld [vmem:[#allocation10 + $0x168] sm:$0xff]
    %v6531 = vld [vmem:[#allocation10 + $0x170] sm:$0xff]
    %v6532 = vld [vmem:[#allocation10 + $0x178] sm:$0xff]
    %v6533 = vld [vmem:[#allocation10 + $0x180] sm:$0xff]
    %v6534 = vld [vmem:[#allocation10 + $0x188] sm:$0xff]
    %v6535 = vld [vmem:[#allocation10 + $0x190] sm:$0xff]
    %v6536 = vld [vmem:[#allocation10 + $0x198] sm:$0xff]
    %v6537 = vld [vmem:[#allocation10 + $0x1a0] sm:$0xff]
    %v6538 = vld [vmem:[#allocation10 + $0x1a8] sm:$0xff]
    %v6539 = vld [vmem:[#allocation10 + $0x1b0] sm:$0xff]
    %v6540 = vld [vmem:[#allocation10 + $0x1b8] sm:$0xff]
    %v6541 = vld [vmem:[#allocation10 + $0x1c0] sm:$0xff]
    %v6542 = vld [vmem:[#allocation10 + $0x1c8] sm:$0xff]
    %v6543 = vld [vmem:[#allocation10 + $0x1d0] sm:$0xff]
    %v6544 = vld [vmem:[#allocation10 + $0x1d8] sm:$0xff]
    %v6545 = vld [vmem:[#allocation10 + $0x1e0] sm:$0xff]
    %v6546 = vld [vmem:[#allocation10 + $0x1e8] sm:$0xff]
    %v6547 = vld [vmem:[#allocation10 + $0x1f0] sm:$0xff]
    %v6548 = vld [vmem:[#allocation10 + $0x1f8] sm:$0xff]
    %v6549 = vld [vmem:[#allocation10 + $0x200] sm:$0xff]
    %v6550 = vld [vmem:[#allocation10 + $0x208] sm:$0xff]
    %v6551 = vld [vmem:[#allocation10 + $0x210] sm:$0xff]
    %v6552 = vld [vmem:[#allocation10 + $0x218] sm:$0xff]
    %v6553 = vld [vmem:[#allocation10 + $0x220] sm:$0xff]
    %v6554 = vld [vmem:[#allocation10 + $0x228] sm:$0xff]
    %v6555 = vld [vmem:[#allocation10 + $0x230] sm:$0xff]
    %v6556 = vld [vmem:[#allocation10 + $0x238] sm:$0xff]
    %v6557 = vld [vmem:[#allocation10 + $0x240] sm:$0xff]
    %v6558 = vld [vmem:[#allocation10 + $0x248] sm:$0xff]
    %v6559 = vld [vmem:[#allocation10 + $0x250] sm:$0xff]
    %v6560 = vld [vmem:[#allocation10 + $0x258] sm:$0xff]
    %v6561 = vld [vmem:[#allocation10 + $0x260] sm:$0xff]
    %v6562 = vld [vmem:[#allocation10 + $0x268] sm:$0xff]
    %v6563 = vld [vmem:[#allocation10 + $0x270] sm:$0xff]
    %v6564 = vld [vmem:[#allocation10 + $0x278] sm:$0xff]
    %v6565 = vld [vmem:[#allocation10 + $0x280] sm:$0xff]
    %v6566 = vld [vmem:[#allocation10 + $0x288] sm:$0xff]
    %v6567 = vld [vmem:[#allocation10 + $0x290] sm:$0xff]
    %v6568 = vld [vmem:[#allocation10 + $0x298] sm:$0xff]
    %v6569 = vld [vmem:[#allocation10 + $0x2a0] sm:$0xff]
    %v6570 = vld [vmem:[#allocation10 + $0x2a8] sm:$0xff]
    %v6571 = vld [vmem:[#allocation10 + $0x2b0] sm:$0xff]
    %v6572 = vld [vmem:[#allocation10 + $0x2b8] sm:$0xff]
    %v6573 = vld [vmem:[#allocation10 + $0x2c0] sm:$0xff]
    %v6574 = vld [vmem:[#allocation10 + $0x2c8] sm:$0xff]
    %v6575 = vld [vmem:[#allocation10 + $0x2d0] sm:$0xff]
    %v6576 = vld [vmem:[#allocation10 + $0x2d8] sm:$0xff]
    %v6577 = vld [vmem:[#allocation10 + $0x2e0] sm:$0xff]
    %v6578 = vld [vmem:[#allocation10 + $0x2e8] sm:$0xff]
    %v6579 = vld [vmem:[#allocation10 + $0x2f0] sm:$0xff]
    %v6580 = vld [vmem:[#allocation10 + $0x2f8] sm:$0xff]
    %v6581 = vld [vmem:[#allocation10 + $0x300] sm:$0xff]
    %v6582 = vld [vmem:[#allocation10 + $0x308] sm:$0xff]
    %v6583 = vld [vmem:[#allocation10 + $0x310] sm:$0xff]
    %v6584 = vld [vmem:[#allocation10 + $0x318] sm:$0xff]
    %v6585 = vld [vmem:[#allocation10 + $0x320] sm:$0xff]
    %v6586 = vld [vmem:[#allocation10 + $0x328] sm:$0xff]
    %v6587 = vld [vmem:[#allocation10 + $0x330] sm:$0xff]
    %v6588 = vld [vmem:[#allocation10 + $0x338] sm:$0xff]
    %v6589 = vld [vmem:[#allocation10 + $0x340] sm:$0xff]
    %v6590 = vld [vmem:[#allocation10 + $0x348] sm:$0xff]
    %v6591 = vld [vmem:[#allocation10 + $0x350] sm:$0xff]
    %v6592 = vld [vmem:[#allocation10 + $0x358] sm:$0xff]
    %v6593 = vld [vmem:[#allocation10 + $0x360] sm:$0xff]
    %v6594 = vld [vmem:[#allocation10 + $0x368] sm:$0xff]
    %v6595 = vld [vmem:[#allocation10 + $0x370] sm:$0xff]
    %v6596 = vld [vmem:[#allocation10 + $0x378] sm:$0xff]
    %v6597 = vld [vmem:[#allocation10 + $0x380] sm:$0xff]
    %v6598 = vld [vmem:[#allocation10 + $0x388] sm:$0xff]
    %v6599 = vld [vmem:[#allocation10 + $0x390] sm:$0xff]
    %v6600 = vld [vmem:[#allocation10 + $0x398] sm:$0xff]
    %v6601 = vld [vmem:[#allocation10 + $0x3a0] sm:$0xff]
    %v6602 = vld [vmem:[#allocation10 + $0x3a8] sm:$0xff]
    %v6603 = vld [vmem:[#allocation10 + $0x3b0] sm:$0xff]
    %v6604 = vld [vmem:[#allocation10 + $0x3b8] sm:$0xff]
    %v6605 = vld [vmem:[#allocation10 + $0x3c0] sm:$0xff]
    %v6606 = vld [vmem:[#allocation10 + $0x3c8] sm:$0xff]
    %v6607 = vld [vmem:[#allocation10 + $0x3d0] sm:$0xff]
    %v6608 = vld [vmem:[#allocation10 + $0x3d8] sm:$0xff]
    %v6609 = vld [vmem:[#allocation10 + $0x3e0] sm:$0xff]
    %v6610 = vld [vmem:[#allocation10 + $0x3e8] sm:$0xff]
    %v6611 = vld [vmem:[#allocation10 + $0x3f0] sm:$0xff]
    %v6612 = vld [vmem:[#allocation10 + $0x3f8] sm:$0xff]
    %v6613 = vld [vmem:[#allocation10 + $0x400] sm:$0xff]
    %v6614 = vld [vmem:[#allocation10 + $0x408] sm:$0xff]
    %v6615 = vld [vmem:[#allocation10 + $0x410] sm:$0xff]
    %v6616 = vld [vmem:[#allocation10 + $0x418] sm:$0xff]
    %v6617 = vld [vmem:[#allocation10 + $0x420] sm:$0xff]
    %v6618 = vld [vmem:[#allocation10 + $0x428] sm:$0xff]
    %v6619 = vld [vmem:[#allocation10 + $0x430] sm:$0xff]
    %v6620 = vld [vmem:[#allocation10 + $0x438] sm:$0xff]
    %v6621 = vld [vmem:[#allocation10 + $0x440] sm:$0xff]
    %v6622 = vld [vmem:[#allocation10 + $0x448] sm:$0xff]
    %v6623 = vld [vmem:[#allocation10 + $0x450] sm:$0xff]
    %v6624 = vld [vmem:[#allocation10 + $0x458] sm:$0xff]
    %v6625 = vld [vmem:[#allocation10 + $0x460] sm:$0xff]
    %v6626 = vld [vmem:[#allocation10 + $0x468] sm:$0xff]
    %v6627 = vld [vmem:[#allocation10 + $0x470] sm:$0xff]
    %v6628 = vld [vmem:[#allocation10 + $0x478] sm:$0xff]
    %v6629 = vld [vmem:[#allocation10 + $0x480] sm:$0xff]
    %v6630 = vld [vmem:[#allocation10 + $0x488] sm:$0xff]
    %v6631 = vld [vmem:[#allocation10 + $0x490] sm:$0xff]
    %v6632 = vld [vmem:[#allocation10 + $0x498] sm:$0xff]
    %v6633 = vld [vmem:[#allocation10 + $0x4a0] sm:$0xff]
    %v6634 = vld [vmem:[#allocation10 + $0x4a8] sm:$0xff]
    %v6635 = vld [vmem:[#allocation10 + $0x4b0] sm:$0xff]
    %v6636 = vld [vmem:[#allocation10 + $0x4b8] sm:$0xff]
    %v6637 = vld [vmem:[#allocation10 + $0x4c0] sm:$0xff]
    %v6638 = vld [vmem:[#allocation10 + $0x4c8] sm:$0xff]
    %v6639 = vld [vmem:[#allocation10 + $0x4d0] sm:$0xff]
    %v6640 = vld [vmem:[#allocation10 + $0x4d8] sm:$0xff]
    %v6641 = vld [vmem:[#allocation10 + $0x4e0] sm:$0xff]
    %v6642 = vld [vmem:[#allocation10 + $0x4e8] sm:$0xff]
    %v6643 = vld [vmem:[#allocation10 + $0x4f0] sm:$0xff]
    %v6644 = vld [vmem:[#allocation10 + $0x4f8] sm:$0xff]
    %v6645 = vld [vmem:[#allocation10 + $0x500] sm:$0xff]
    %v6646 = vld [vmem:[#allocation10 + $0x508] sm:$0xff]
    %v6647 = vld [vmem:[#allocation10 + $0x510] sm:$0xff]
    %v6648 = vld [vmem:[#allocation10 + $0x518] sm:$0xff]
    %v6649 = vld [vmem:[#allocation10 + $0x520] sm:$0xff]
    %v6650 = vld [vmem:[#allocation10 + $0x528] sm:$0xff]
    %v6651 = vld [vmem:[#allocation10 + $0x530] sm:$0xff]
    %v6652 = vld [vmem:[#allocation10 + $0x538] sm:$0xff]
    %v6653 = vld [vmem:[#allocation10 + $0x540] sm:$0xff]
    %v6654 = vld [vmem:[#allocation10 + $0x548] sm:$0xff]
    %v6655 = vld [vmem:[#allocation10 + $0x550] sm:$0xff]
    %v6656 = vld [vmem:[#allocation10 + $0x558] sm:$0xff]
    %v6657 = vld [vmem:[#allocation10 + $0x560] sm:$0xff]
    %v6658 = vld [vmem:[#allocation10 + $0x568] sm:$0xff]
    %v6659 = vld [vmem:[#allocation10 + $0x570] sm:$0xff]
    %v6660 = vld [vmem:[#allocation10 + $0x578] sm:$0xff]
    %v6661 = vld [vmem:[#allocation10 + $0x580] sm:$0xff]
    %v6662 = vld [vmem:[#allocation10 + $0x588] sm:$0xff]
    %v6663 = vld [vmem:[#allocation10 + $0x590] sm:$0xff]
    %v6664 = vld [vmem:[#allocation10 + $0x598] sm:$0xff]
    %v6665 = vld [vmem:[#allocation10 + $0x5a0] sm:$0xff]
    %v6666 = vld [vmem:[#allocation10 + $0x5a8] sm:$0xff]
    %v6667 = vld [vmem:[#allocation10 + $0x5b0] sm:$0xff]
    %v6668 = vld [vmem:[#allocation10 + $0x5b8] sm:$0xff]
    %v6669 = vld [vmem:[#allocation10 + $0x5c0] sm:$0xff]
    %v6670 = vld [vmem:[#allocation10 + $0x5c8] sm:$0xff]
    %v6671 = vld [vmem:[#allocation10 + $0x5d0] sm:$0xff]
    %v6672 = vld [vmem:[#allocation10 + $0x5d8] sm:$0xff]
    %v6673 = vld [vmem:[#allocation10 + $0x5e0] sm:$0xff]
    %v6674 = vld [vmem:[#allocation10 + $0x5e8] sm:$0xff]
    %v6675 = vld [vmem:[#allocation10 + $0x5f0] sm:$0xff]
    %v6676 = vld [vmem:[#allocation10 + $0x5f8] sm:$0xff]
    %v6677 = vld [vmem:[#allocation10 + $0x600] sm:$0xff]
    %v6678 = vld [vmem:[#allocation10 + $0x608] sm:$0xff]
    %v6679 = vld [vmem:[#allocation10 + $0x610] sm:$0xff]
    %v6680 = vld [vmem:[#allocation10 + $0x618] sm:$0xff]
    %v6681 = vld [vmem:[#allocation10 + $0x620] sm:$0xff]
    %v6682 = vld [vmem:[#allocation10 + $0x628] sm:$0xff]
    %v6683 = vld [vmem:[#allocation10 + $0x630] sm:$0xff]
    %v6684 = vld [vmem:[#allocation10 + $0x638] sm:$0xff]
    %v6685 = vld [vmem:[#allocation10 + $0x640] sm:$0xff]
    %v6686 = vld [vmem:[#allocation10 + $0x648] sm:$0xff]
    %v6687 = vld [vmem:[#allocation10 + $0x650] sm:$0xff]
    %v6688 = vld [vmem:[#allocation10 + $0x658] sm:$0xff]
    %v6689 = vld [vmem:[#allocation10 + $0x660] sm:$0xff]
    %v6690 = vld [vmem:[#allocation10 + $0x668] sm:$0xff]
    %v6691 = vld [vmem:[#allocation10 + $0x670] sm:$0xff]
    %v6692 = vld [vmem:[#allocation10 + $0x678] sm:$0xff]
    %v6693 = vld [vmem:[#allocation10 + $0x680] sm:$0xff]
    %v6694 = vld [vmem:[#allocation10 + $0x688] sm:$0xff]
    %v6695 = vld [vmem:[#allocation10 + $0x690] sm:$0xff]
    %v6696 = vld [vmem:[#allocation10 + $0x698] sm:$0xff]
    %v6697 = vld [vmem:[#allocation10 + $0x6a0] sm:$0xff]
    %v6698 = vld [vmem:[#allocation10 + $0x6a8] sm:$0xff]
    %v6699 = vld [vmem:[#allocation10 + $0x6b0] sm:$0xff]
    %v6700 = vld [vmem:[#allocation10 + $0x6b8] sm:$0xff]
    %v6701 = vld [vmem:[#allocation10 + $0x6c0] sm:$0xff]
    %v6702 = vld [vmem:[#allocation10 + $0x6c8] sm:$0xff]
    %v6703 = vld [vmem:[#allocation10 + $0x6d0] sm:$0xff]
    %v6704 = vld [vmem:[#allocation10 + $0x6d8] sm:$0xff]
    %v6705 = vld [vmem:[#allocation10 + $0x6e0] sm:$0xff]
    %v6706 = vld [vmem:[#allocation10 + $0x6e8] sm:$0xff]
    %v6707 = vld [vmem:[#allocation10 + $0x6f0] sm:$0xff]
    %v6708 = vld [vmem:[#allocation10 + $0x6f8] sm:$0xff]
    %v6709 = vld [vmem:[#allocation10 + $0x700] sm:$0xff]
    %v6710 = vld [vmem:[#allocation10 + $0x708] sm:$0xff]
    %v6711 = vld [vmem:[#allocation10 + $0x710] sm:$0xff]
    %v6712 = vld [vmem:[#allocation10 + $0x718] sm:$0xff]
    %v6713 = vld [vmem:[#allocation10 + $0x720] sm:$0xff]
    %v6714 = vld [vmem:[#allocation10 + $0x728] sm:$0xff]
    %v6715 = vld [vmem:[#allocation10 + $0x730] sm:$0xff]
    %v6716 = vld [vmem:[#allocation10 + $0x738] sm:$0xff]
    %v6717 = vld [vmem:[#allocation10 + $0x740] sm:$0xff]
    %v6718 = vld [vmem:[#allocation10 + $0x748] sm:$0xff]
    %v6719 = vld [vmem:[#allocation10 + $0x750] sm:$0xff]
    %v6720 = vld [vmem:[#allocation10 + $0x758] sm:$0xff]
    %v6721 = vld [vmem:[#allocation10 + $0x760] sm:$0xff]
    %v6722 = vld [vmem:[#allocation10 + $0x768] sm:$0xff]
    %v6723 = vld [vmem:[#allocation10 + $0x770] sm:$0xff]
    %v6724 = vld [vmem:[#allocation10 + $0x778] sm:$0xff]
    %v6725 = vld [vmem:[#allocation10 + $0x780] sm:$0xff]
    %v6726 = vld [vmem:[#allocation10 + $0x788] sm:$0xff]
    %v6727 = vld [vmem:[#allocation10 + $0x790] sm:$0xff]
    %v6728 = vld [vmem:[#allocation10 + $0x798] sm:$0xff]
    %v6729 = vld [vmem:[#allocation10 + $0x7a0] sm:$0xff]
    %v6730 = vld [vmem:[#allocation10 + $0x7a8] sm:$0xff]
    %v6731 = vld [vmem:[#allocation10 + $0x7b0] sm:$0xff]
    %v6732 = vld [vmem:[#allocation10 + $0x7b8] sm:$0xff]
    %v6733 = vld [vmem:[#allocation10 + $0x7c0] sm:$0xff]
    %v6734 = vld [vmem:[#allocation10 + $0x7c8] sm:$0xff]
    %v6735 = vld [vmem:[#allocation10 + $0x7d0] sm:$0xff]
    %v6736 = vld [vmem:[#allocation10 + $0x7d8] sm:$0xff]
    %v6737 = vld [vmem:[#allocation10 + $0x7e0] sm:$0xff]
    %v6738 = vld [vmem:[#allocation10 + $0x7e8] sm:$0xff]
    %v6739 = vld [vmem:[#allocation10 + $0x7f0] sm:$0xff]
    %v6740 = vld [vmem:[#allocation10 + $0x7f8] sm:$0xff]
    %v6997 = vunpack.c.l.b16 %v6485
    %v6998 = vunpack.c.h.b16 %v6485
    %v6999 = vunpack.c.l.b16 %v6486
    %v7000 = vunpack.c.h.b16 %v6486
    %v7001 = vunpack.c.l.b16 %v6487
    %v7002 = vunpack.c.h.b16 %v6487
    %v7003 = vunpack.c.l.b16 %v6488
    %v7004 = vunpack.c.h.b16 %v6488
    %v7005 = vunpack.c.l.b16 %v6489
    %v7006 = vunpack.c.h.b16 %v6489
    %v7007 = vunpack.c.l.b16 %v6490
    %v7008 = vunpack.c.h.b16 %v6490
    %v7009 = vunpack.c.l.b16 %v6491
    %v7010 = vunpack.c.h.b16 %v6491
    %v7011 = vunpack.c.l.b16 %v6492
    %v7012 = vunpack.c.h.b16 %v6492
    %v7013 = vunpack.c.l.b16 %v6493
    %v7014 = vunpack.c.h.b16 %v6493
    %v7015 = vunpack.c.l.b16 %v6494
    %v7016 = vunpack.c.h.b16 %v6494
    %v7017 = vunpack.c.l.b16 %v6495
    %v7018 = vunpack.c.h.b16 %v6495
    %v7019 = vunpack.c.l.b16 %v6496
    %v7020 = vunpack.c.h.b16 %v6496
    %v7021 = vunpack.c.l.b16 %v6497
    %v7022 = vunpack.c.h.b16 %v6497
    %v7023 = vunpack.c.l.b16 %v6498
    %v7024 = vunpack.c.h.b16 %v6498
    %v7025 = vunpack.c.l.b16 %v6499
    %v7026 = vunpack.c.h.b16 %v6499
    %v7027 = vunpack.c.l.b16 %v6500
    %v7028 = vunpack.c.h.b16 %v6500
    %v7029 = vunpack.c.l.b16 %v6501
    %v7030 = vunpack.c.h.b16 %v6501
    %v7031 = vunpack.c.l.b16 %v6502
    %v7032 = vunpack.c.h.b16 %v6502
    %v7033 = vunpack.c.l.b16 %v6503
    %v7034 = vunpack.c.h.b16 %v6503
    %v7035 = vunpack.c.l.b16 %v6504
    %v7036 = vunpack.c.h.b16 %v6504
    %v7037 = vunpack.c.l.b16 %v6505
    %v7038 = vunpack.c.h.b16 %v6505
    %v7039 = vunpack.c.l.b16 %v6506
    %v7040 = vunpack.c.h.b16 %v6506
    %v7041 = vunpack.c.l.b16 %v6507
    %v7042 = vunpack.c.h.b16 %v6507
    %v7043 = vunpack.c.l.b16 %v6508
    %v7044 = vunpack.c.h.b16 %v6508
    %v7045 = vunpack.c.l.b16 %v6509
    %v7046 = vunpack.c.h.b16 %v6509
    %v7047 = vunpack.c.l.b16 %v6510
    %v7048 = vunpack.c.h.b16 %v6510
    %v7049 = vunpack.c.l.b16 %v6511
    %v7050 = vunpack.c.h.b16 %v6511
    %v7051 = vunpack.c.l.b16 %v6512
    %v7052 = vunpack.c.h.b16 %v6512
    %v7053 = vunpack.c.l.b16 %v6513
    %v7054 = vunpack.c.h.b16 %v6513
    %v7055 = vunpack.c.l.b16 %v6514
    %v7056 = vunpack.c.h.b16 %v6514
    %v7057 = vunpack.c.l.b16 %v6515
    %v7058 = vunpack.c.h.b16 %v6515
    %v7059 = vunpack.c.l.b16 %v6516
    %v7060 = vunpack.c.h.b16 %v6516
    %v7061 = vunpack.c.l.b16 %v6517
    %v7062 = vunpack.c.h.b16 %v6517
    %v7063 = vunpack.c.l.b16 %v6518
    %v7064 = vunpack.c.h.b16 %v6518
    %v7065 = vunpack.c.l.b16 %v6519
    %v7066 = vunpack.c.h.b16 %v6519
    %v7067 = vunpack.c.l.b16 %v6520
    %v7068 = vunpack.c.h.b16 %v6520
    %v7069 = vunpack.c.l.b16 %v6521
    %v7070 = vunpack.c.h.b16 %v6521
    %v7071 = vunpack.c.l.b16 %v6522
    %v7072 = vunpack.c.h.b16 %v6522
    %v7073 = vunpack.c.l.b16 %v6523
    %v7074 = vunpack.c.h.b16 %v6523
    %v7075 = vunpack.c.l.b16 %v6524
    %v7076 = vunpack.c.h.b16 %v6524
    %v7077 = vunpack.c.l.b16 %v6525
    %v7078 = vunpack.c.h.b16 %v6525
    %v7079 = vunpack.c.l.b16 %v6526
    %v7080 = vunpack.c.h.b16 %v6526
    %v7081 = vunpack.c.l.b16 %v6527
    %v7082 = vunpack.c.h.b16 %v6527
    %v7083 = vunpack.c.l.b16 %v6528
    %v7084 = vunpack.c.h.b16 %v6528
    %v7085 = vunpack.c.l.b16 %v6529
    %v7086 = vunpack.c.h.b16 %v6529
    %v7087 = vunpack.c.l.b16 %v6530
    %v7088 = vunpack.c.h.b16 %v6530
    %v7089 = vunpack.c.l.b16 %v6531
    %v7090 = vunpack.c.h.b16 %v6531
    %v7091 = vunpack.c.l.b16 %v6532
    %v7092 = vunpack.c.h.b16 %v6532
    %v7093 = vunpack.c.l.b16 %v6533
    %v7094 = vunpack.c.h.b16 %v6533
    %v7095 = vunpack.c.l.b16 %v6534
    %v7096 = vunpack.c.h.b16 %v6534
    %v7097 = vunpack.c.l.b16 %v6535
    %v7098 = vunpack.c.h.b16 %v6535
    %v7099 = vunpack.c.l.b16 %v6536
    %v7100 = vunpack.c.h.b16 %v6536
    %v7101 = vunpack.c.l.b16 %v6537
    %v7102 = vunpack.c.h.b16 %v6537
    %v7103 = vunpack.c.l.b16 %v6538
    %v7104 = vunpack.c.h.b16 %v6538
    %v7105 = vunpack.c.l.b16 %v6539
    %v7106 = vunpack.c.h.b16 %v6539
    %v7107 = vunpack.c.l.b16 %v6540
    %v7108 = vunpack.c.h.b16 %v6540
    %v7109 = vunpack.c.l.b16 %v6541
    %v7110 = vunpack.c.h.b16 %v6541
    %v7111 = vunpack.c.l.b16 %v6542
    %v7112 = vunpack.c.h.b16 %v6542
    %v7113 = vunpack.c.l.b16 %v6543
    %v7114 = vunpack.c.h.b16 %v6543
    %v7115 = vunpack.c.l.b16 %v6544
    %v7116 = vunpack.c.h.b16 %v6544
    %v7117 = vunpack.c.l.b16 %v6545
    %v7118 = vunpack.c.h.b16 %v6545
    %v7119 = vunpack.c.l.b16 %v6546
    %v7120 = vunpack.c.h.b16 %v6546
    %v7121 = vunpack.c.l.b16 %v6547
    %v7122 = vunpack.c.h.b16 %v6547
    %v7123 = vunpack.c.l.b16 %v6548
    %v7124 = vunpack.c.h.b16 %v6548
    %v7125 = vunpack.c.l.b16 %v6549
    %v7126 = vunpack.c.h.b16 %v6549
    %v7127 = vunpack.c.l.b16 %v6550
    %v7128 = vunpack.c.h.b16 %v6550
    %v7129 = vunpack.c.l.b16 %v6551
    %v7130 = vunpack.c.h.b16 %v6551
    %v7131 = vunpack.c.l.b16 %v6552
    %v7132 = vunpack.c.h.b16 %v6552
    %v7133 = vunpack.c.l.b16 %v6553
    %v7134 = vunpack.c.h.b16 %v6553
    %v7135 = vunpack.c.l.b16 %v6554
    %v7136 = vunpack.c.h.b16 %v6554
    %v7137 = vunpack.c.l.b16 %v6555
    %v7138 = vunpack.c.h.b16 %v6555
    %v7139 = vunpack.c.l.b16 %v6556
    %v7140 = vunpack.c.h.b16 %v6556
    %v7141 = vunpack.c.l.b16 %v6557
    %v7142 = vunpack.c.h.b16 %v6557
    %v7143 = vunpack.c.l.b16 %v6558
    %v7144 = vunpack.c.h.b16 %v6558
    %v7145 = vunpack.c.l.b16 %v6559
    %v7146 = vunpack.c.h.b16 %v6559
    %v7147 = vunpack.c.l.b16 %v6560
    %v7148 = vunpack.c.h.b16 %v6560
    %v7149 = vunpack.c.l.b16 %v6561
    %v7150 = vunpack.c.h.b16 %v6561
    %v7151 = vunpack.c.l.b16 %v6562
    %v7152 = vunpack.c.h.b16 %v6562
    %v7153 = vunpack.c.l.b16 %v6563
    %v7154 = vunpack.c.h.b16 %v6563
    %v7155 = vunpack.c.l.b16 %v6564
    %v7156 = vunpack.c.h.b16 %v6564
    %v7157 = vunpack.c.l.b16 %v6565
    %v7158 = vunpack.c.h.b16 %v6565
    %v7159 = vunpack.c.l.b16 %v6566
    %v7160 = vunpack.c.h.b16 %v6566
    %v7161 = vunpack.c.l.b16 %v6567
    %v7162 = vunpack.c.h.b16 %v6567
    %v7163 = vunpack.c.l.b16 %v6568
    %v7164 = vunpack.c.h.b16 %v6568
    %v7165 = vunpack.c.l.b16 %v6569
    %v7166 = vunpack.c.h.b16 %v6569
    %v7167 = vunpack.c.l.b16 %v6570
    %v7168 = vunpack.c.h.b16 %v6570
    %v7169 = vunpack.c.l.b16 %v6571
    %v7170 = vunpack.c.h.b16 %v6571
    %v7171 = vunpack.c.l.b16 %v6572
    %v7172 = vunpack.c.h.b16 %v6572
    %v7173 = vunpack.c.l.b16 %v6573
    %v7174 = vunpack.c.h.b16 %v6573
    %v7175 = vunpack.c.l.b16 %v6574
    %v7176 = vunpack.c.h.b16 %v6574
    %v7177 = vunpack.c.l.b16 %v6575
    %v7178 = vunpack.c.h.b16 %v6575
    %v7179 = vunpack.c.l.b16 %v6576
    %v7180 = vunpack.c.h.b16 %v6576
    %v7181 = vunpack.c.l.b16 %v6577
    %v7182 = vunpack.c.h.b16 %v6577
    %v7183 = vunpack.c.l.b16 %v6578
    %v7184 = vunpack.c.h.b16 %v6578
    %v7185 = vunpack.c.l.b16 %v6579
    %v7186 = vunpack.c.h.b16 %v6579
    %v7187 = vunpack.c.l.b16 %v6580
    %v7188 = vunpack.c.h.b16 %v6580
    %v7189 = vunpack.c.l.b16 %v6581
    %v7190 = vunpack.c.h.b16 %v6581
    %v7191 = vunpack.c.l.b16 %v6582
    %v7192 = vunpack.c.h.b16 %v6582
    %v7193 = vunpack.c.l.b16 %v6583
    %v7194 = vunpack.c.h.b16 %v6583
    %v7195 = vunpack.c.l.b16 %v6584
    %v7196 = vunpack.c.h.b16 %v6584
    %v7197 = vunpack.c.l.b16 %v6585
    %v7198 = vunpack.c.h.b16 %v6585
    %v7199 = vunpack.c.l.b16 %v6586
    %v7200 = vunpack.c.h.b16 %v6586
    %v7201 = vunpack.c.l.b16 %v6587
    %v7202 = vunpack.c.h.b16 %v6587
    %v7203 = vunpack.c.l.b16 %v6588
    %v7204 = vunpack.c.h.b16 %v6588
    %v7205 = vunpack.c.l.b16 %v6589
    %v7206 = vunpack.c.h.b16 %v6589
    %v7207 = vunpack.c.l.b16 %v6590
    %v7208 = vunpack.c.h.b16 %v6590
    %v7209 = vunpack.c.l.b16 %v6591
    %v7210 = vunpack.c.h.b16 %v6591
    %v7211 = vunpack.c.l.b16 %v6592
    %v7212 = vunpack.c.h.b16 %v6592
    %v7213 = vunpack.c.l.b16 %v6593
    %v7214 = vunpack.c.h.b16 %v6593
    %v7215 = vunpack.c.l.b16 %v6594
    %v7216 = vunpack.c.h.b16 %v6594
    %v7217 = vunpack.c.l.b16 %v6595
    %v7218 = vunpack.c.h.b16 %v6595
    %v7219 = vunpack.c.l.b16 %v6596
    %v7220 = vunpack.c.h.b16 %v6596
    %v7221 = vunpack.c.l.b16 %v6597
    %v7222 = vunpack.c.h.b16 %v6597
    %v7223 = vunpack.c.l.b16 %v6598
    %v7224 = vunpack.c.h.b16 %v6598
    %v7225 = vunpack.c.l.b16 %v6599
    %v7226 = vunpack.c.h.b16 %v6599
    %v7227 = vunpack.c.l.b16 %v6600
    %v7228 = vunpack.c.h.b16 %v6600
    %v7229 = vunpack.c.l.b16 %v6601
    %v7230 = vunpack.c.h.b16 %v6601
    %v7231 = vunpack.c.l.b16 %v6602
    %v7232 = vunpack.c.h.b16 %v6602
    %v7233 = vunpack.c.l.b16 %v6603
    %v7234 = vunpack.c.h.b16 %v6603
    %v7235 = vunpack.c.l.b16 %v6604
    %v7236 = vunpack.c.h.b16 %v6604
    %v7237 = vunpack.c.l.b16 %v6605
    %v7238 = vunpack.c.h.b16 %v6605
    %v7239 = vunpack.c.l.b16 %v6606
    %v7240 = vunpack.c.h.b16 %v6606
    %v7241 = vunpack.c.l.b16 %v6607
    %v7242 = vunpack.c.h.b16 %v6607
    %v7243 = vunpack.c.l.b16 %v6608
    %v7244 = vunpack.c.h.b16 %v6608
    %v7245 = vunpack.c.l.b16 %v6609
    %v7246 = vunpack.c.h.b16 %v6609
    %v7247 = vunpack.c.l.b16 %v6610
    %v7248 = vunpack.c.h.b16 %v6610
    %v7249 = vunpack.c.l.b16 %v6611
    %v7250 = vunpack.c.h.b16 %v6611
    %v7251 = vunpack.c.l.b16 %v6612
    %v7252 = vunpack.c.h.b16 %v6612
    %v7253 = vunpack.c.l.b16 %v6613
    %v7254 = vunpack.c.h.b16 %v6613
    %v7255 = vunpack.c.l.b16 %v6614
    %v7256 = vunpack.c.h.b16 %v6614
    %v7257 = vunpack.c.l.b16 %v6615
    %v7258 = vunpack.c.h.b16 %v6615
    %v7259 = vunpack.c.l.b16 %v6616
    %v7260 = vunpack.c.h.b16 %v6616
    %v7261 = vunpack.c.l.b16 %v6617
    %v7262 = vunpack.c.h.b16 %v6617
    %v7263 = vunpack.c.l.b16 %v6618
    %v7264 = vunpack.c.h.b16 %v6618
    %v7265 = vunpack.c.l.b16 %v6619
    %v7266 = vunpack.c.h.b16 %v6619
    %v7267 = vunpack.c.l.b16 %v6620
    %v7268 = vunpack.c.h.b16 %v6620
    %v7269 = vunpack.c.l.b16 %v6621
    %v7270 = vunpack.c.h.b16 %v6621
    %v7271 = vunpack.c.l.b16 %v6622
    %v7272 = vunpack.c.h.b16 %v6622
    %v7273 = vunpack.c.l.b16 %v6623
    %v7274 = vunpack.c.h.b16 %v6623
    %v7275 = vunpack.c.l.b16 %v6624
    %v7276 = vunpack.c.h.b16 %v6624
    %v7277 = vunpack.c.l.b16 %v6625
    %v7278 = vunpack.c.h.b16 %v6625
    %v7279 = vunpack.c.l.b16 %v6626
    %v7280 = vunpack.c.h.b16 %v6626
    %v7281 = vunpack.c.l.b16 %v6627
    %v7282 = vunpack.c.h.b16 %v6627
    %v7283 = vunpack.c.l.b16 %v6628
    %v7284 = vunpack.c.h.b16 %v6628
    %v7285 = vunpack.c.l.b16 %v6629
    %v7286 = vunpack.c.h.b16 %v6629
    %v7287 = vunpack.c.l.b16 %v6630
    %v7288 = vunpack.c.h.b16 %v6630
    %v7289 = vunpack.c.l.b16 %v6631
    %v7290 = vunpack.c.h.b16 %v6631
    %v7291 = vunpack.c.l.b16 %v6632
    %v7292 = vunpack.c.h.b16 %v6632
    %v7293 = vunpack.c.l.b16 %v6633
    %v7294 = vunpack.c.h.b16 %v6633
    %v7295 = vunpack.c.l.b16 %v6634
    %v7296 = vunpack.c.h.b16 %v6634
    %v7297 = vunpack.c.l.b16 %v6635
    %v7298 = vunpack.c.h.b16 %v6635
    %v7299 = vunpack.c.l.b16 %v6636
    %v7300 = vunpack.c.h.b16 %v6636
    %v7301 = vunpack.c.l.b16 %v6637
    %v7302 = vunpack.c.h.b16 %v6637
    %v7303 = vunpack.c.l.b16 %v6638
    %v7304 = vunpack.c.h.b16 %v6638
    %v7305 = vunpack.c.l.b16 %v6639
    %v7306 = vunpack.c.h.b16 %v6639
    %v7307 = vunpack.c.l.b16 %v6640
    %v7308 = vunpack.c.h.b16 %v6640
    %v7309 = vunpack.c.l.b16 %v6641
    %v7310 = vunpack.c.h.b16 %v6641
    %v7311 = vunpack.c.l.b16 %v6642
    %v7312 = vunpack.c.h.b16 %v6642
    %v7313 = vunpack.c.l.b16 %v6643
    %v7314 = vunpack.c.h.b16 %v6643
    %v7315 = vunpack.c.l.b16 %v6644
    %v7316 = vunpack.c.h.b16 %v6644
    %v7317 = vunpack.c.l.b16 %v6645
    %v7318 = vunpack.c.h.b16 %v6645
    %v7319 = vunpack.c.l.b16 %v6646
    %v7320 = vunpack.c.h.b16 %v6646
    %v7321 = vunpack.c.l.b16 %v6647
    %v7322 = vunpack.c.h.b16 %v6647
    %v7323 = vunpack.c.l.b16 %v6648
    %v7324 = vunpack.c.h.b16 %v6648
    %v7325 = vunpack.c.l.b16 %v6649
    %v7326 = vunpack.c.h.b16 %v6649
    %v7327 = vunpack.c.l.b16 %v6650
    %v7328 = vunpack.c.h.b16 %v6650
    %v7329 = vunpack.c.l.b16 %v6651
    %v7330 = vunpack.c.h.b16 %v6651
    %v7331 = vunpack.c.l.b16 %v6652
    %v7332 = vunpack.c.h.b16 %v6652
    %v7333 = vunpack.c.l.b16 %v6653
    %v7334 = vunpack.c.h.b16 %v6653
    %v7335 = vunpack.c.l.b16 %v6654
    %v7336 = vunpack.c.h.b16 %v6654
    %v7337 = vunpack.c.l.b16 %v6655
    %v7338 = vunpack.c.h.b16 %v6655
    %v7339 = vunpack.c.l.b16 %v6656
    %v7340 = vunpack.c.h.b16 %v6656
    %v7341 = vunpack.c.l.b16 %v6657
    %v7342 = vunpack.c.h.b16 %v6657
    %v7343 = vunpack.c.l.b16 %v6658
    %v7344 = vunpack.c.h.b16 %v6658
    %v7345 = vunpack.c.l.b16 %v6659
    %v7346 = vunpack.c.h.b16 %v6659
    %v7347 = vunpack.c.l.b16 %v6660
    %v7348 = vunpack.c.h.b16 %v6660
    %v7349 = vunpack.c.l.b16 %v6661
    %v7350 = vunpack.c.h.b16 %v6661
    %v7351 = vunpack.c.l.b16 %v6662
    %v7352 = vunpack.c.h.b16 %v6662
    %v7353 = vunpack.c.l.b16 %v6663
    %v7354 = vunpack.c.h.b16 %v6663
    %v7355 = vunpack.c.l.b16 %v6664
    %v7356 = vunpack.c.h.b16 %v6664
    %v7357 = vunpack.c.l.b16 %v6665
    %v7358 = vunpack.c.h.b16 %v6665
    %v7359 = vunpack.c.l.b16 %v6666
    %v7360 = vunpack.c.h.b16 %v6666
    %v7361 = vunpack.c.l.b16 %v6667
    %v7362 = vunpack.c.h.b16 %v6667
    %v7363 = vunpack.c.l.b16 %v6668
    %v7364 = vunpack.c.h.b16 %v6668
    %v7365 = vunpack.c.l.b16 %v6669
    %v7366 = vunpack.c.h.b16 %v6669
    %v7367 = vunpack.c.l.b16 %v6670
    %v7368 = vunpack.c.h.b16 %v6670
    %v7369 = vunpack.c.l.b16 %v6671
    %v7370 = vunpack.c.h.b16 %v6671
    %v7371 = vunpack.c.l.b16 %v6672
    %v7372 = vunpack.c.h.b16 %v6672
    %v7373 = vunpack.c.l.b16 %v6673
    %v7374 = vunpack.c.h.b16 %v6673
    %v7375 = vunpack.c.l.b16 %v6674
    %v7376 = vunpack.c.h.b16 %v6674
    %v7377 = vunpack.c.l.b16 %v6675
    %v7378 = vunpack.c.h.b16 %v6675
    %v7379 = vunpack.c.l.b16 %v6676
    %v7380 = vunpack.c.h.b16 %v6676
    %v7381 = vunpack.c.l.b16 %v6677
    %v7382 = vunpack.c.h.b16 %v6677
    %v7383 = vunpack.c.l.b16 %v6678
    %v7384 = vunpack.c.h.b16 %v6678
    %v7385 = vunpack.c.l.b16 %v6679
    %v7386 = vunpack.c.h.b16 %v6679
    %v7387 = vunpack.c.l.b16 %v6680
    %v7388 = vunpack.c.h.b16 %v6680
    %v7389 = vunpack.c.l.b16 %v6681
    %v7390 = vunpack.c.h.b16 %v6681
    %v7391 = vunpack.c.l.b16 %v6682
    %v7392 = vunpack.c.h.b16 %v6682
    %v7393 = vunpack.c.l.b16 %v6683
    %v7394 = vunpack.c.h.b16 %v6683
    %v7395 = vunpack.c.l.b16 %v6684
    %v7396 = vunpack.c.h.b16 %v6684
    %v7397 = vunpack.c.l.b16 %v6685
    %v7398 = vunpack.c.h.b16 %v6685
    %v7399 = vunpack.c.l.b16 %v6686
    %v7400 = vunpack.c.h.b16 %v6686
    %v7401 = vunpack.c.l.b16 %v6687
    %v7402 = vunpack.c.h.b16 %v6687
    %v7403 = vunpack.c.l.b16 %v6688
    %v7404 = vunpack.c.h.b16 %v6688
    %v7405 = vunpack.c.l.b16 %v6689
    %v7406 = vunpack.c.h.b16 %v6689
    %v7407 = vunpack.c.l.b16 %v6690
    %v7408 = vunpack.c.h.b16 %v6690
    %v7409 = vunpack.c.l.b16 %v6691
    %v7410 = vunpack.c.h.b16 %v6691
    %v7411 = vunpack.c.l.b16 %v6692
    %v7412 = vunpack.c.h.b16 %v6692
    %v7413 = vunpack.c.l.b16 %v6693
    %v7414 = vunpack.c.h.b16 %v6693
    %v7415 = vunpack.c.l.b16 %v6694
    %v7416 = vunpack.c.h.b16 %v6694
    %v7417 = vunpack.c.l.b16 %v6695
    %v7418 = vunpack.c.h.b16 %v6695
    %v7419 = vunpack.c.l.b16 %v6696
    %v7420 = vunpack.c.h.b16 %v6696
    %v7421 = vunpack.c.l.b16 %v6697
    %v7422 = vunpack.c.h.b16 %v6697
    %v7423 = vunpack.c.l.b16 %v6698
    %v7424 = vunpack.c.h.b16 %v6698
    %v7425 = vunpack.c.l.b16 %v6699
    %v7426 = vunpack.c.h.b16 %v6699
    %v7427 = vunpack.c.l.b16 %v6700
    %v7428 = vunpack.c.h.b16 %v6700
    %v7429 = vunpack.c.l.b16 %v6701
    %v7430 = vunpack.c.h.b16 %v6701
    %v7431 = vunpack.c.l.b16 %v6702
    %v7432 = vunpack.c.h.b16 %v6702
    %v7433 = vunpack.c.l.b16 %v6703
    %v7434 = vunpack.c.h.b16 %v6703
    %v7435 = vunpack.c.l.b16 %v6704
    %v7436 = vunpack.c.h.b16 %v6704
    %v7437 = vunpack.c.l.b16 %v6705
    %v7438 = vunpack.c.h.b16 %v6705
    %v7439 = vunpack.c.l.b16 %v6706
    %v7440 = vunpack.c.h.b16 %v6706
    %v7441 = vunpack.c.l.b16 %v6707
    %v7442 = vunpack.c.h.b16 %v6707
    %v7443 = vunpack.c.l.b16 %v6708
    %v7444 = vunpack.c.h.b16 %v6708
    %v7445 = vunpack.c.l.b16 %v6709
    %v7446 = vunpack.c.h.b16 %v6709
    %v7447 = vunpack.c.l.b16 %v6710
    %v7448 = vunpack.c.h.b16 %v6710
    %v7449 = vunpack.c.l.b16 %v6711
    %v7450 = vunpack.c.h.b16 %v6711
    %v7451 = vunpack.c.l.b16 %v6712
    %v7452 = vunpack.c.h.b16 %v6712
    %v7453 = vunpack.c.l.b16 %v6713
    %v7454 = vunpack.c.h.b16 %v6713
    %v7455 = vunpack.c.l.b16 %v6714
    %v7456 = vunpack.c.h.b16 %v6714
    %v7457 = vunpack.c.l.b16 %v6715
    %v7458 = vunpack.c.h.b16 %v6715
    %v7459 = vunpack.c.l.b16 %v6716
    %v7460 = vunpack.c.h.b16 %v6716
    %v7461 = vunpack.c.l.b16 %v6717
    %v7462 = vunpack.c.h.b16 %v6717
    %v7463 = vunpack.c.l.b16 %v6718
    %v7464 = vunpack.c.h.b16 %v6718
    %v7465 = vunpack.c.l.b16 %v6719
    %v7466 = vunpack.c.h.b16 %v6719
    %v7467 = vunpack.c.l.b16 %v6720
    %v7468 = vunpack.c.h.b16 %v6720
    %v7469 = vunpack.c.l.b16 %v6721
    %v7470 = vunpack.c.h.b16 %v6721
    %v7471 = vunpack.c.l.b16 %v6722
    %v7472 = vunpack.c.h.b16 %v6722
    %v7473 = vunpack.c.l.b16 %v6723
    %v7474 = vunpack.c.h.b16 %v6723
    %v7475 = vunpack.c.l.b16 %v6724
    %v7476 = vunpack.c.h.b16 %v6724
    %v7477 = vunpack.c.l.b16 %v6725
    %v7478 = vunpack.c.h.b16 %v6725
    %v7479 = vunpack.c.l.b16 %v6726
    %v7480 = vunpack.c.h.b16 %v6726
    %v7481 = vunpack.c.l.b16 %v6727
    %v7482 = vunpack.c.h.b16 %v6727
    %v7483 = vunpack.c.l.b16 %v6728
    %v7484 = vunpack.c.h.b16 %v6728
    %v7485 = vunpack.c.l.b16 %v6729
    %v7486 = vunpack.c.h.b16 %v6729
    %v7487 = vunpack.c.l.b16 %v6730
    %v7488 = vunpack.c.h.b16 %v6730
    %v7489 = vunpack.c.l.b16 %v6731
    %v7490 = vunpack.c.h.b16 %v6731
    %v7491 = vunpack.c.l.b16 %v6732
    %v7492 = vunpack.c.h.b16 %v6732
    %v7493 = vunpack.c.l.b16 %v6733
    %v7494 = vunpack.c.h.b16 %v6733
    %v7495 = vunpack.c.l.b16 %v6734
    %v7496 = vunpack.c.h.b16 %v6734
    %v7497 = vunpack.c.l.b16 %v6735
    %v7498 = vunpack.c.h.b16 %v6735
    %v7499 = vunpack.c.l.b16 %v6736
    %v7500 = vunpack.c.h.b16 %v6736
    %v7501 = vunpack.c.l.b16 %v6737
    %v7502 = vunpack.c.h.b16 %v6737
    %v7503 = vunpack.c.l.b16 %v6738
    %v7504 = vunpack.c.h.b16 %v6738
    %v7505 = vunpack.c.l.b16 %v6739
    %v7506 = vunpack.c.h.b16 %v6739
    %v7507 = vunpack.c.l.b16 %v6740
    %v7508 = vunpack.c.h.b16 %v6740
    %v7509 = vpack.c.b16 %v7001, %v6997
    %v7510 = vpack.c.b16 %v7002, %v6998
    %v7511 = vpack.c.b16 %v7003, %v6999
    %v7512 = vpack.c.b16 %v7004, %v7000
    %v7513 = vpack.c.b16 %v7009, %v7005
    %v7514 = vpack.c.b16 %v7010, %v7006
    %v7515 = vpack.c.b16 %v7011, %v7007
    %v7516 = vpack.c.b16 %v7012, %v7008
    %v7517 = vpack.c.b16 %v7017, %v7013
    %v7518 = vpack.c.b16 %v7018, %v7014
    %v7519 = vpack.c.b16 %v7019, %v7015
    %v7520 = vpack.c.b16 %v7020, %v7016
    %v7521 = vpack.c.b16 %v7025, %v7021
    %v7522 = vpack.c.b16 %v7026, %v7022
    %v7523 = vpack.c.b16 %v7027, %v7023
    %v7524 = vpack.c.b16 %v7028, %v7024
    %v7525 = vpack.c.b16 %v7033, %v7029
    %v7526 = vpack.c.b16 %v7034, %v7030
    %v7527 = vpack.c.b16 %v7035, %v7031
    %v7528 = vpack.c.b16 %v7036, %v7032
    %v7529 = vpack.c.b16 %v7041, %v7037
    %v7530 = vpack.c.b16 %v7042, %v7038
    %v7531 = vpack.c.b16 %v7043, %v7039
    %v7532 = vpack.c.b16 %v7044, %v7040
    %v7533 = vpack.c.b16 %v7049, %v7045
    %v7534 = vpack.c.b16 %v7050, %v7046
    %v7535 = vpack.c.b16 %v7051, %v7047
    %v7536 = vpack.c.b16 %v7052, %v7048
    %v7537 = vpack.c.b16 %v7057, %v7053
    %v7538 = vpack.c.b16 %v7058, %v7054
    %v7539 = vpack.c.b16 %v7059, %v7055
    %v7540 = vpack.c.b16 %v7060, %v7056
    %v7541 = vpack.c.b16 %v7065, %v7061
    %v7542 = vpack.c.b16 %v7066, %v7062
    %v7543 = vpack.c.b16 %v7067, %v7063
    %v7544 = vpack.c.b16 %v7068, %v7064
    %v7545 = vpack.c.b16 %v7073, %v7069
    %v7546 = vpack.c.b16 %v7074, %v7070
    %v7547 = vpack.c.b16 %v7075, %v7071
    %v7548 = vpack.c.b16 %v7076, %v7072
    %v7549 = vpack.c.b16 %v7081, %v7077
    %v7550 = vpack.c.b16 %v7082, %v7078
    %v7551 = vpack.c.b16 %v7083, %v7079
    %v7552 = vpack.c.b16 %v7084, %v7080
    %v7553 = vpack.c.b16 %v7089, %v7085
    %v7554 = vpack.c.b16 %v7090, %v7086
    %v7555 = vpack.c.b16 %v7091, %v7087
    %v7556 = vpack.c.b16 %v7092, %v7088
    %v7557 = vpack.c.b16 %v7097, %v7093
    %v7558 = vpack.c.b16 %v7098, %v7094
    %v7559 = vpack.c.b16 %v7099, %v7095
    %v7560 = vpack.c.b16 %v7100, %v7096
    %v7561 = vpack.c.b16 %v7105, %v7101
    %v7562 = vpack.c.b16 %v7106, %v7102
    %v7563 = vpack.c.b16 %v7107, %v7103
    %v7564 = vpack.c.b16 %v7108, %v7104
    %v7565 = vpack.c.b16 %v7113, %v7109
    %v7566 = vpack.c.b16 %v7114, %v7110
    %v7567 = vpack.c.b16 %v7115, %v7111
    %v7568 = vpack.c.b16 %v7116, %v7112
    %v7569 = vpack.c.b16 %v7121, %v7117
    %v7570 = vpack.c.b16 %v7122, %v7118
    %v7571 = vpack.c.b16 %v7123, %v7119
    %v7572 = vpack.c.b16 %v7124, %v7120
    %v7573 = vpack.c.b16 %v7129, %v7125
    %v7574 = vpack.c.b16 %v7130, %v7126
    %v7575 = vpack.c.b16 %v7131, %v7127
    %v7576 = vpack.c.b16 %v7132, %v7128
    %v7577 = vpack.c.b16 %v7137, %v7133
    %v7578 = vpack.c.b16 %v7138, %v7134
    %v7579 = vpack.c.b16 %v7139, %v7135
    %v7580 = vpack.c.b16 %v7140, %v7136
    %v7581 = vpack.c.b16 %v7145, %v7141
    %v7582 = vpack.c.b16 %v7146, %v7142
    %v7583 = vpack.c.b16 %v7147, %v7143
    %v7584 = vpack.c.b16 %v7148, %v7144
    %v7585 = vpack.c.b16 %v7153, %v7149
    %v7586 = vpack.c.b16 %v7154, %v7150
    %v7587 = vpack.c.b16 %v7155, %v7151
    %v7588 = vpack.c.b16 %v7156, %v7152
    %v7589 = vpack.c.b16 %v7161, %v7157
    %v7590 = vpack.c.b16 %v7162, %v7158
    %v7591 = vpack.c.b16 %v7163, %v7159
    %v7592 = vpack.c.b16 %v7164, %v7160
    %v7593 = vpack.c.b16 %v7169, %v7165
    %v7594 = vpack.c.b16 %v7170, %v7166
    %v7595 = vpack.c.b16 %v7171, %v7167
    %v7596 = vpack.c.b16 %v7172, %v7168
    %v7597 = vpack.c.b16 %v7177, %v7173
    %v7598 = vpack.c.b16 %v7178, %v7174
    %v7599 = vpack.c.b16 %v7179, %v7175
    %v7600 = vpack.c.b16 %v7180, %v7176
    %v7601 = vpack.c.b16 %v7185, %v7181
    %v7602 = vpack.c.b16 %v7186, %v7182
    %v7603 = vpack.c.b16 %v7187, %v7183
    %v7604 = vpack.c.b16 %v7188, %v7184
    %v7605 = vpack.c.b16 %v7193, %v7189
    %v7606 = vpack.c.b16 %v7194, %v7190
    %v7607 = vpack.c.b16 %v7195, %v7191
    %v7608 = vpack.c.b16 %v7196, %v7192
    %v7609 = vpack.c.b16 %v7201, %v7197
    %v7610 = vpack.c.b16 %v7202, %v7198
    %v7611 = vpack.c.b16 %v7203, %v7199
    %v7612 = vpack.c.b16 %v7204, %v7200
    %v7613 = vpack.c.b16 %v7209, %v7205
    %v7614 = vpack.c.b16 %v7210, %v7206
    %v7615 = vpack.c.b16 %v7211, %v7207
    %v7616 = vpack.c.b16 %v7212, %v7208
    %v7617 = vpack.c.b16 %v7217, %v7213
    %v7618 = vpack.c.b16 %v7218, %v7214
    %v7619 = vpack.c.b16 %v7219, %v7215
    %v7620 = vpack.c.b16 %v7220, %v7216
    %v7621 = vpack.c.b16 %v7225, %v7221
    %v7622 = vpack.c.b16 %v7226, %v7222
    %v7623 = vpack.c.b16 %v7227, %v7223
    %v7624 = vpack.c.b16 %v7228, %v7224
    %v7625 = vpack.c.b16 %v7233, %v7229
    %v7626 = vpack.c.b16 %v7234, %v7230
    %v7627 = vpack.c.b16 %v7235, %v7231
    %v7628 = vpack.c.b16 %v7236, %v7232
    %v7629 = vpack.c.b16 %v7241, %v7237
    %v7630 = vpack.c.b16 %v7242, %v7238
    %v7631 = vpack.c.b16 %v7243, %v7239
    %v7632 = vpack.c.b16 %v7244, %v7240
    %v7633 = vpack.c.b16 %v7249, %v7245
    %v7634 = vpack.c.b16 %v7250, %v7246
    %v7635 = vpack.c.b16 %v7251, %v7247
    %v7636 = vpack.c.b16 %v7252, %v7248
    %v7637 = vpack.c.b16 %v7257, %v7253
    %v7638 = vpack.c.b16 %v7258, %v7254
    %v7639 = vpack.c.b16 %v7259, %v7255
    %v7640 = vpack.c.b16 %v7260, %v7256
    %v7641 = vpack.c.b16 %v7265, %v7261
    %v7642 = vpack.c.b16 %v7266, %v7262
    %v7643 = vpack.c.b16 %v7267, %v7263
    %v7644 = vpack.c.b16 %v7268, %v7264
    %v7645 = vpack.c.b16 %v7273, %v7269
    %v7646 = vpack.c.b16 %v7274, %v7270
    %v7647 = vpack.c.b16 %v7275, %v7271
    %v7648 = vpack.c.b16 %v7276, %v7272
    %v7649 = vpack.c.b16 %v7281, %v7277
    %v7650 = vpack.c.b16 %v7282, %v7278
    %v7651 = vpack.c.b16 %v7283, %v7279
    %v7652 = vpack.c.b16 %v7284, %v7280
    %v7653 = vpack.c.b16 %v7289, %v7285
    %v7654 = vpack.c.b16 %v7290, %v7286
    %v7655 = vpack.c.b16 %v7291, %v7287
    %v7656 = vpack.c.b16 %v7292, %v7288
    %v7657 = vpack.c.b16 %v7297, %v7293
    %v7658 = vpack.c.b16 %v7298, %v7294
    %v7659 = vpack.c.b16 %v7299, %v7295
    %v7660 = vpack.c.b16 %v7300, %v7296
    %v7661 = vpack.c.b16 %v7305, %v7301
    %v7662 = vpack.c.b16 %v7306, %v7302
    %v7663 = vpack.c.b16 %v7307, %v7303
    %v7664 = vpack.c.b16 %v7308, %v7304
    %v7665 = vpack.c.b16 %v7313, %v7309
    %v7666 = vpack.c.b16 %v7314, %v7310
    %v7667 = vpack.c.b16 %v7315, %v7311
    %v7668 = vpack.c.b16 %v7316, %v7312
    %v7669 = vpack.c.b16 %v7321, %v7317
    %v7670 = vpack.c.b16 %v7322, %v7318
    %v7671 = vpack.c.b16 %v7323, %v7319
    %v7672 = vpack.c.b16 %v7324, %v7320
    %v7673 = vpack.c.b16 %v7329, %v7325
    %v7674 = vpack.c.b16 %v7330, %v7326
    %v7675 = vpack.c.b16 %v7331, %v7327
    %v7676 = vpack.c.b16 %v7332, %v7328
    %v7677 = vpack.c.b16 %v7337, %v7333
    %v7678 = vpack.c.b16 %v7338, %v7334
    %v7679 = vpack.c.b16 %v7339, %v7335
    %v7680 = vpack.c.b16 %v7340, %v7336
    %v7681 = vpack.c.b16 %v7345, %v7341
    %v7682 = vpack.c.b16 %v7346, %v7342
    %v7683 = vpack.c.b16 %v7347, %v7343
    %v7684 = vpack.c.b16 %v7348, %v7344
    %v7685 = vpack.c.b16 %v7353, %v7349
    %v7686 = vpack.c.b16 %v7354, %v7350
    %v7687 = vpack.c.b16 %v7355, %v7351
    %v7688 = vpack.c.b16 %v7356, %v7352
    %v7689 = vpack.c.b16 %v7361, %v7357
    %v7690 = vpack.c.b16 %v7362, %v7358
    %v7691 = vpack.c.b16 %v7363, %v7359
    %v7692 = vpack.c.b16 %v7364, %v7360
    %v7693 = vpack.c.b16 %v7369, %v7365
    %v7694 = vpack.c.b16 %v7370, %v7366
    %v7695 = vpack.c.b16 %v7371, %v7367
    %v7696 = vpack.c.b16 %v7372, %v7368
    %v7697 = vpack.c.b16 %v7377, %v7373
    %v7698 = vpack.c.b16 %v7378, %v7374
    %v7699 = vpack.c.b16 %v7379, %v7375
    %v7700 = vpack.c.b16 %v7380, %v7376
    %v7701 = vpack.c.b16 %v7385, %v7381
    %v7702 = vpack.c.b16 %v7386, %v7382
    %v7703 = vpack.c.b16 %v7387, %v7383
    %v7704 = vpack.c.b16 %v7388, %v7384
    %v7705 = vpack.c.b16 %v7393, %v7389
    %v7706 = vpack.c.b16 %v7394, %v7390
    %v7707 = vpack.c.b16 %v7395, %v7391
    %v7708 = vpack.c.b16 %v7396, %v7392
    %v7709 = vpack.c.b16 %v7401, %v7397
    %v7710 = vpack.c.b16 %v7402, %v7398
    %v7711 = vpack.c.b16 %v7403, %v7399
    %v7712 = vpack.c.b16 %v7404, %v7400
    %v7713 = vpack.c.b16 %v7409, %v7405
    %v7714 = vpack.c.b16 %v7410, %v7406
    %v7715 = vpack.c.b16 %v7411, %v7407
    %v7716 = vpack.c.b16 %v7412, %v7408
    %v7717 = vpack.c.b16 %v7417, %v7413
    %v7718 = vpack.c.b16 %v7418, %v7414
    %v7719 = vpack.c.b16 %v7419, %v7415
    %v7720 = vpack.c.b16 %v7420, %v7416
    %v7721 = vpack.c.b16 %v7425, %v7421
    %v7722 = vpack.c.b16 %v7426, %v7422
    %v7723 = vpack.c.b16 %v7427, %v7423
    %v7724 = vpack.c.b16 %v7428, %v7424
    %v7725 = vpack.c.b16 %v7433, %v7429
    %v7726 = vpack.c.b16 %v7434, %v7430
    %v7727 = vpack.c.b16 %v7435, %v7431
    %v7728 = vpack.c.b16 %v7436, %v7432
    %v7729 = vpack.c.b16 %v7441, %v7437
    %v7730 = vpack.c.b16 %v7442, %v7438
    %v7731 = vpack.c.b16 %v7443, %v7439
    %v7732 = vpack.c.b16 %v7444, %v7440
    %v7733 = vpack.c.b16 %v7449, %v7445
    %v7734 = vpack.c.b16 %v7450, %v7446
    %v7735 = vpack.c.b16 %v7451, %v7447
    %v7736 = vpack.c.b16 %v7452, %v7448
    %v7737 = vpack.c.b16 %v7457, %v7453
    %v7738 = vpack.c.b16 %v7458, %v7454
    %v7739 = vpack.c.b16 %v7459, %v7455
    %v7740 = vpack.c.b16 %v7460, %v7456
    %v7741 = vpack.c.b16 %v7465, %v7461
    %v7742 = vpack.c.b16 %v7466, %v7462
    %v7743 = vpack.c.b16 %v7467, %v7463
    %v7744 = vpack.c.b16 %v7468, %v7464
    %v7745 = vpack.c.b16 %v7473, %v7469
    %v7746 = vpack.c.b16 %v7474, %v7470
    %v7747 = vpack.c.b16 %v7475, %v7471
    %v7748 = vpack.c.b16 %v7476, %v7472
    %v7749 = vpack.c.b16 %v7481, %v7477
    %v7750 = vpack.c.b16 %v7482, %v7478
    %v7751 = vpack.c.b16 %v7483, %v7479
    %v7752 = vpack.c.b16 %v7484, %v7480
    %v7753 = vpack.c.b16 %v7489, %v7485
    %v7754 = vpack.c.b16 %v7490, %v7486
    %v7755 = vpack.c.b16 %v7491, %v7487
    %v7756 = vpack.c.b16 %v7492, %v7488
    %v7757 = vpack.c.b16 %v7497, %v7493
    %v7758 = vpack.c.b16 %v7498, %v7494
    %v7759 = vpack.c.b16 %v7499, %v7495
    %v7760 = vpack.c.b16 %v7500, %v7496
    %v7761 = vpack.c.b16 %v7505, %v7501
    %v7762 = vpack.c.b16 %v7506, %v7502
    %v7763 = vpack.c.b16 %v7507, %v7503
    %v7764 = vpack.c.b16 %v7508, %v7504
    %8021 = vmatprep.subr.bf16.mxu0 %v7538
    %8022 = vmatpush1.bf16.msra.mxu0 %v7537
    %8023 = vmatprep.subr.bf16.mxu0 %v7534
    %8024 = vmatpush1.bf16.msra.mxu0 %v7533
    %8025 = vmatprep.subr.bf16.mxu0 %v7530
    %8026 = vmatpush1.bf16.msra.mxu0 %v7529
    %8027 = vmatprep.subr.bf16.mxu0 %v7526
    %8028 = vmatpush1.bf16.msra.mxu0 %v7525
    %8029 = vmatprep.subr.bf16.mxu0 %v7522
    %8030 = vmatpush1.bf16.msra.mxu0 %v7521
    %8031 = vmatprep.subr.bf16.mxu0 %v7518
    %8032 = vmatpush1.bf16.msra.mxu0 %v7517
    %8033 = vmatprep.subr.bf16.mxu0 %v7514
    %8034 = vmatpush1.bf16.msra.mxu0 %v7513
    %8035 = vmatprep.subr.bf16.mxu0 %v7510
    %8036 = vmatpush1.bf16.msra.mxu0 %v7509
    %8037 = vmatprep.subr.bf16.mxu0 %v7570
    %8038 = vmatpush2.bf16.msra.mxu0 %v7569
    %8039 = vmatprep.subr.bf16.mxu0 %v7566
    %8040 = vmatpush2.bf16.msra.mxu0 %v7565
    %8041 = vmatprep.subr.bf16.mxu0 %v7562
    %8042 = vmatpush2.bf16.msra.mxu0 %v7561
    %8043 = vmatprep.subr.bf16.mxu0 %v7558
    %8044 = vmatpush2.bf16.msra.mxu0 %v7557
    %8045 = vmatprep.subr.bf16.mxu0 %v7554
    %8046 = vmatpush2.bf16.msra.mxu0 %v7553
    %8047 = vmatprep.subr.bf16.mxu0 %v7550
    %8048 = vmatpush2.bf16.msra.mxu0 %v7549
    %8049 = vmatprep.subr.bf16.mxu0 %v7546
    %8050 = vmatpush2.bf16.msra.mxu0 %v7545
    %8051 = vmatprep.subr.bf16.mxu0 %v7542
    %8052 = vmatpush2.bf16.msra.mxu0 %v7541
    %8053 = vmatprep.mubr.bf16.mxu0 %v6478
    %8054 = vmatmul.mubr.bf16.gmra.mxu0 %v6477
    %v8055 = vpop.f32.mrf.mxu0
    %v8056 = vadd.f32 0.0, %v8055
    %v8057 = vpop.f32.mrf.mxu0
    %v8058 = vadd.f32 0.0, %v8057
    %v8059 = vpop.f32.mrf.mxu0
    %v8060 = vadd.f32 0.0, %v8059
    %v8061 = vpop.f32.mrf.mxu0
    %v8062 = vadd.f32 0.0, %v8061
    %8063 = vdwg.mxu0
    %8064 = vmatprep.subr.bf16.mxu0 %v7602
    %8065 = vmatpush1.bf16.msra.mxu0 %v7601
    %8066 = vmatprep.subr.bf16.mxu0 %v7598
    %8067 = vmatpush1.bf16.msra.mxu0 %v7597
    %8068 = vmatprep.subr.bf16.mxu0 %v7594
    %8069 = vmatpush1.bf16.msra.mxu0 %v7593
    %8070 = vmatprep.subr.bf16.mxu0 %v7590
    %8071 = vmatpush1.bf16.msra.mxu0 %v7589
    %8072 = vmatprep.subr.bf16.mxu0 %v7586
    %8073 = vmatpush1.bf16.msra.mxu0 %v7585
    %8074 = vmatprep.subr.bf16.mxu0 %v7582
    %8075 = vmatpush1.bf16.msra.mxu0 %v7581
    %8076 = vmatprep.subr.bf16.mxu0 %v7578
    %8077 = vmatpush1.bf16.msra.mxu0 %v7577
    %8078 = vmatprep.subr.bf16.mxu0 %v7574
    %8079 = vmatpush1.bf16.msra.mxu0 %v7573
    %8080 = vmatprep.subr.bf16.mxu0 %v7634
    %8081 = vmatpush2.bf16.msra.mxu0 %v7633
    %8082 = vmatprep.subr.bf16.mxu0 %v7630
    %8083 = vmatpush2.bf16.msra.mxu0 %v7629
    %8084 = vmatprep.subr.bf16.mxu0 %v7626
    %8085 = vmatpush2.bf16.msra.mxu0 %v7625
    %8086 = vmatprep.subr.bf16.mxu0 %v7622
    %8087 = vmatpush2.bf16.msra.mxu0 %v7621
    %8088 = vmatprep.subr.bf16.mxu0 %v7618
    %8089 = vmatpush2.bf16.msra.mxu0 %v7617
    %8090 = vmatprep.subr.bf16.mxu0 %v7614
    %8091 = vmatpush2.bf16.msra.mxu0 %v7613
    %8092 = vmatprep.subr.bf16.mxu0 %v7610
    %8093 = vmatpush2.bf16.msra.mxu0 %v7609
    %8094 = vmatprep.subr.bf16.mxu0 %v7606
    %8095 = vmatpush2.bf16.msra.mxu0 %v7605
    %8096 = vmatprep.mubr.bf16.mxu0 %v6480
    %8097 = vmatmul.mubr.bf16.gmra.mxu0 %v6479
    %v8098 = vpop.f32.mrf.mxu0
    %v8099 = vadd.f32 %v8056, %v8098
    %v8100 = vpop.f32.mrf.mxu0
    %v8101 = vadd.f32 %v8058, %v8100
    %v8102 = vpop.f32.mrf.mxu0
    %v8103 = vadd.f32 %v8060, %v8102
    %v8104 = vpop.f32.mrf.mxu0
    %v8105 = vadd.f32 %v8062, %v8104
    %8106 = vdwg.mxu0
    %8107 = vmatprep.subr.bf16.mxu0 %v7666
    %8108 = vmatpush1.bf16.msra.mxu0 %v7665
    %8109 = vmatprep.subr.bf16.mxu0 %v7662
    %8110 = vmatpush1.bf16.msra.mxu0 %v7661
    %8111 = vmatprep.subr.bf16.mxu0 %v7658
    %8112 = vmatpush1.bf16.msra.mxu0 %v7657
    %8113 = vmatprep.subr.bf16.mxu0 %v7654
    %8114 = vmatpush1.bf16.msra.mxu0 %v7653
    %8115 = vmatprep.subr.bf16.mxu0 %v7650
    %8116 = vmatpush1.bf16.msra.mxu0 %v7649
    %8117 = vmatprep.subr.bf16.mxu0 %v7646
    %8118 = vmatpush1.bf16.msra.mxu0 %v7645
    %8119 = vmatprep.subr.bf16.mxu0 %v7642
    %8120 = vmatpush1.bf16.msra.mxu0 %v7641
    %8121 = vmatprep.subr.bf16.mxu0 %v7638
    %8122 = vmatpush1.bf16.msra.mxu0 %v7637
    %8123 = vmatprep.subr.bf16.mxu0 %v7698
    %8124 = vmatpush2.bf16.msra.mxu0 %v7697
    %8125 = vmatprep.subr.bf16.mxu0 %v7694
    %8126 = vmatpush2.bf16.msra.mxu0 %v7693
    %8127 = vmatprep.subr.bf16.mxu0 %v7690
    %8128 = vmatpush2.bf16.msra.mxu0 %v7689
    %8129 = vmatprep.subr.bf16.mxu0 %v7686
    %8130 = vmatpush2.bf16.msra.mxu0 %v7685
    %8131 = vmatprep.subr.bf16.mxu0 %v7682
    %8132 = vmatpush2.bf16.msra.mxu0 %v7681
    %8133 = vmatprep.subr.bf16.mxu0 %v7678
    %8134 = vmatpush2.bf16.msra.mxu0 %v7677
    %8135 = vmatprep.subr.bf16.mxu0 %v7674
    %8136 = vmatpush2.bf16.msra.mxu0 %v7673
    %8137 = vmatprep.subr.bf16.mxu0 %v7670
    %8138 = vmatpush2.bf16.msra.mxu0 %v7669
    %8139 = vmatprep.mubr.bf16.mxu0 %v6482
    %8140 = vmatmul.mubr.bf16.gmra.mxu0 %v6481
    %v8141 = vpop.f32.mrf.mxu0
    %v8142 = vadd.f32 %v8099, %v8141
    %v8143 = vpop.f32.mrf.mxu0
    %v8144 = vadd.f32 %v8101, %v8143
    %v8145 = vpop.f32.mrf.mxu0
    %v8146 = vadd.f32 %v8103, %v8145
    %v8147 = vpop.f32.mrf.mxu0
    %v8148 = vadd.f32 %v8105, %v8147
    %8149 = vdwg.mxu0
    %8150 = vmatprep.subr.bf16.mxu0 %v7730
    %8151 = vmatpush1.bf16.msra.mxu0 %v7729
    %8152 = vmatprep.subr.bf16.mxu0 %v7726
    %8153 = vmatpush1.bf16.msra.mxu0 %v7725
    %8154 = vmatprep.subr.bf16.mxu0 %v7722
    %8155 = vmatpush1.bf16.msra.mxu0 %v7721
    %8156 = vmatprep.subr.bf16.mxu0 %v7718
    %8157 = vmatpush1.bf16.msra.mxu0 %v7717
    %8158 = vmatprep.subr.bf16.mxu0 %v7714
    %8159 = vmatpush1.bf16.msra.mxu0 %v7713
    %8160 = vmatprep.subr.bf16.mxu0 %v7710
    %8161 = vmatpush1.bf16.msra.mxu0 %v7709
    %8162 = vmatprep.subr.bf16.mxu0 %v7706
    %8163 = vmatpush1.bf16.msra.mxu0 %v7705
    %8164 = vmatprep.subr.bf16.mxu0 %v7702
    %8165 = vmatpush1.bf16.msra.mxu0 %v7701
    %8166 = vmatprep.subr.bf16.mxu0 %v7762
    %8167 = vmatpush2.bf16.msra.mxu0 %v7761
    %8168 = vmatprep.subr.bf16.mxu0 %v7758
    %8169 = vmatpush2.bf16.msra.mxu0 %v7757
    %8170 = vmatprep.subr.bf16.mxu0 %v7754
    %8171 = vmatpush2.bf16.msra.mxu0 %v7753
    %8172 = vmatprep.subr.bf16.mxu0 %v7750
    %8173 = vmatpush2.bf16.msra.mxu0 %v7749
    %8174 = vmatprep.subr.bf16.mxu0 %v7746
    %8175 = vmatpush2.bf16.msra.mxu0 %v7745
    %8176 = vmatprep.subr.bf16.mxu0 %v7742
    %8177 = vmatpush2.bf16.msra.mxu0 %v7741
    %8178 = vmatprep.subr.bf16.mxu0 %v7738
    %8179 = vmatpush2.bf16.msra.mxu0 %v7737
    %8180 = vmatprep.subr.bf16.mxu0 %v7734
    %8181 = vmatpush2.bf16.msra.mxu0 %v7733
    %8182 = vmatprep.mubr.bf16.mxu0 %v6484
    %8183 = vmatmul.mubr.bf16.gmra.mxu0 %v6483
    %v8184 = vpop.f32.mrf.mxu0
    %v8185 = vadd.f32 %v8142, %v8184
    %v8186 = vpop.f32.mrf.mxu0
    %v8187 = vadd.f32 %v8144, %v8186
    %v8188 = vpop.f32.mrf.mxu0
    %v8189 = vadd.f32 %v8146, %v8188
    %v8190 = vpop.f32.mrf.mxu0
    %v8191 = vadd.f32 %v8148, %v8190
    %8192 = vdwg.mxu0
    %8193 = vmatprep.subr.bf16.mxu0 %v7540
    %8194 = vmatpush1.bf16.msra.mxu0 %v7539
    %8195 = vmatprep.subr.bf16.mxu0 %v7536
    %8196 = vmatpush1.bf16.msra.mxu0 %v7535
    %8197 = vmatprep.subr.bf16.mxu0 %v7532
    %8198 = vmatpush1.bf16.msra.mxu0 %v7531
    %8199 = vmatprep.subr.bf16.mxu0 %v7528
    %8200 = vmatpush1.bf16.msra.mxu0 %v7527
    %8201 = vmatprep.subr.bf16.mxu0 %v7524
    %8202 = vmatpush1.bf16.msra.mxu0 %v7523
    %8203 = vmatprep.subr.bf16.mxu0 %v7520
    %8204 = vmatpush1.bf16.msra.mxu0 %v7519
    %8205 = vmatprep.subr.bf16.mxu0 %v7516
    %8206 = vmatpush1.bf16.msra.mxu0 %v7515
    %8207 = vmatprep.subr.bf16.mxu0 %v7512
    %8208 = vmatpush1.bf16.msra.mxu0 %v7511
    %8209 = vmatprep.subr.bf16.mxu0 %v7572
    %8210 = vmatpush2.bf16.msra.mxu0 %v7571
    %8211 = vmatprep.subr.bf16.mxu0 %v7568
    %8212 = vmatpush2.bf16.msra.mxu0 %v7567
    %8213 = vmatprep.subr.bf16.mxu0 %v7564
    %8214 = vmatpush2.bf16.msra.mxu0 %v7563
    %8215 = vmatprep.subr.bf16.mxu0 %v7560
    %8216 = vmatpush2.bf16.msra.mxu0 %v7559
    %8217 = vmatprep.subr.bf16.mxu0 %v7556
    %8218 = vmatpush2.bf16.msra.mxu0 %v7555
    %8219 = vmatprep.subr.bf16.mxu0 %v7552
    %8220 = vmatpush2.bf16.msra.mxu0 %v7551
    %8221 = vmatprep.subr.bf16.mxu0 %v7548
    %8222 = vmatpush2.bf16.msra.mxu0 %v7547
    %8223 = vmatprep.subr.bf16.mxu0 %v7544
    %8224 = vmatpush2.bf16.msra.mxu0 %v7543
    %8225 = vmatprep.mubr.bf16.mxu0 %v6478
    %8226 = vmatmul.mubr.bf16.gmra.mxu0 %v6477
    %v8227 = vpop.f32.mrf.mxu0
    %v8228 = vadd.f32 0.0, %v8227
    %v8229 = vpop.f32.mrf.mxu0
    %v8230 = vadd.f32 0.0, %v8229
    %v8231 = vpop.f32.mrf.mxu0
    %v8232 = vadd.f32 0.0, %v8231
    %v8233 = vpop.f32.mrf.mxu0
    %v8234 = vadd.f32 0.0, %v8233
    %8235 = vdwg.mxu0
    %8236 = vmatprep.subr.bf16.mxu0 %v7604
    %8237 = vmatpush1.bf16.msra.mxu0 %v7603
    %8238 = vmatprep.subr.bf16.mxu0 %v7600
    %8239 = vmatpush1.bf16.msra.mxu0 %v7599
    %8240 = vmatprep.subr.bf16.mxu0 %v7596
    %8241 = vmatpush1.bf16.msra.mxu0 %v7595
    %8242 = vmatprep.subr.bf16.mxu0 %v7592
    %8243 = vmatpush1.bf16.msra.mxu0 %v7591
    %8244 = vmatprep.subr.bf16.mxu0 %v7588
    %8245 = vmatpush1.bf16.msra.mxu0 %v7587
    %8246 = vmatprep.subr.bf16.mxu0 %v7584
    %8247 = vmatpush1.bf16.msra.mxu0 %v7583
    %8248 = vmatprep.subr.bf16.mxu0 %v7580
    %8249 = vmatpush1.bf16.msra.mxu0 %v7579
    %8250 = vmatprep.subr.bf16.mxu0 %v7576
    %8251 = vmatpush1.bf16.msra.mxu0 %v7575
    %8252 = vmatprep.subr.bf16.mxu0 %v7636
    %8253 = vmatpush2.bf16.msra.mxu0 %v7635
    %8254 = vmatprep.subr.bf16.mxu0 %v7632
    %8255 = vmatpush2.bf16.msra.mxu0 %v7631
    %8256 = vmatprep.subr.bf16.mxu0 %v7628
    %8257 = vmatpush2.bf16.msra.mxu0 %v7627
    %8258 = vmatprep.subr.bf16.mxu0 %v7624
    %8259 = vmatpush2.bf16.msra.mxu0 %v7623
    %8260 = vmatprep.subr.bf16.mxu0 %v7620
    %8261 = vmatpush2.bf16.msra.mxu0 %v7619
    %8262 = vmatprep.subr.bf16.mxu0 %v7616
    %8263 = vmatpush2.bf16.msra.mxu0 %v7615
    %8264 = vmatprep.subr.bf16.mxu0 %v7612
    %8265 = vmatpush2.bf16.msra.mxu0 %v7611
    %8266 = vmatprep.subr.bf16.mxu0 %v7608
    %8267 = vmatpush2.bf16.msra.mxu0 %v7607
    %8268 = vmatprep.mubr.bf16.mxu0 %v6480
    %8269 = vmatmul.mubr.bf16.gmra.mxu0 %v6479
    %v8270 = vpop.f32.mrf.mxu0
    %v8271 = vadd.f32 %v8228, %v8270
    %v8272 = vpop.f32.mrf.mxu0
    %v8273 = vadd.f32 %v8230, %v8272
    %v8274 = vpop.f32.mrf.mxu0
    %v8275 = vadd.f32 %v8232, %v8274
    %v8276 = vpop.f32.mrf.mxu0
    %v8277 = vadd.f32 %v8234, %v8276
    %8278 = vdwg.mxu0
    %8279 = vmatprep.subr.bf16.mxu0 %v7668
    %8280 = vmatpush1.bf16.msra.mxu0 %v7667
    %8281 = vmatprep.subr.bf16.mxu0 %v7664
    %8282 = vmatpush1.bf16.msra.mxu0 %v7663
    %8283 = vmatprep.subr.bf16.mxu0 %v7660
    %8284 = vmatpush1.bf16.msra.mxu0 %v7659
    %8285 = vmatprep.subr.bf16.mxu0 %v7656
    %8286 = vmatpush1.bf16.msra.mxu0 %v7655
    %8287 = vmatprep.subr.bf16.mxu0 %v7652
    %8288 = vmatpush1.bf16.msra.mxu0 %v7651
    %8289 = vmatprep.subr.bf16.mxu0 %v7648
    %8290 = vmatpush1.bf16.msra.mxu0 %v7647
    %8291 = vmatprep.subr.bf16.mxu0 %v7644
    %8292 = vmatpush1.bf16.msra.mxu0 %v7643
    %8293 = vmatprep.subr.bf16.mxu0 %v7640
    %8294 = vmatpush1.bf16.msra.mxu0 %v7639
    %8295 = vmatprep.subr.bf16.mxu0 %v7700
    %8296 = vmatpush2.bf16.msra.mxu0 %v7699
    %8297 = vmatprep.subr.bf16.mxu0 %v7696
    %8298 = vmatpush2.bf16.msra.mxu0 %v7695
    %8299 = vmatprep.subr.bf16.mxu0 %v7692
    %8300 = vmatpush2.bf16.msra.mxu0 %v7691
    %8301 = vmatprep.subr.bf16.mxu0 %v7688
    %8302 = vmatpush2.bf16.msra.mxu0 %v7687
    %8303 = vmatprep.subr.bf16.mxu0 %v7684
    %8304 = vmatpush2.bf16.msra.mxu0 %v7683
    %8305 = vmatprep.subr.bf16.mxu0 %v7680
    %8306 = vmatpush2.bf16.msra.mxu0 %v7679
    %8307 = vmatprep.subr.bf16.mxu0 %v7676
    %8308 = vmatpush2.bf16.msra.mxu0 %v7675
    %8309 = vmatprep.subr.bf16.mxu0 %v7672
    %8310 = vmatpush2.bf16.msra.mxu0 %v7671
    %8311 = vmatprep.mubr.bf16.mxu0 %v6482
    %8312 = vmatmul.mubr.bf16.gmra.mxu0 %v6481
    %v8313 = vpop.f32.mrf.mxu0
    %v8314 = vadd.f32 %v8271, %v8313
    %v8315 = vpop.f32.mrf.mxu0
    %v8316 = vadd.f32 %v8273, %v8315
    %v8317 = vpop.f32.mrf.mxu0
    %v8318 = vadd.f32 %v8275, %v8317
    %v8319 = vpop.f32.mrf.mxu0
    %v8320 = vadd.f32 %v8277, %v8319
    %8321 = vdwg.mxu0
    %8322 = vmatprep.subr.bf16.mxu0 %v7732
    %8323 = vmatpush1.bf16.msra.mxu0 %v7731
    %8324 = vmatprep.subr.bf16.mxu0 %v7728
    %8325 = vmatpush1.bf16.msra.mxu0 %v7727
    %8326 = vmatprep.subr.bf16.mxu0 %v7724
    %8327 = vmatpush1.bf16.msra.mxu0 %v7723
    %8328 = vmatprep.subr.bf16.mxu0 %v7720
    %8329 = vmatpush1.bf16.msra.mxu0 %v7719
    %8330 = vmatprep.subr.bf16.mxu0 %v7716
    %8331 = vmatpush1.bf16.msra.mxu0 %v7715
    %8332 = vmatprep.subr.bf16.mxu0 %v7712
    %8333 = vmatpush1.bf16.msra.mxu0 %v7711
    %8334 = vmatprep.subr.bf16.mxu0 %v7708
    %8335 = vmatpush1.bf16.msra.mxu0 %v7707
    %8336 = vmatprep.subr.bf16.mxu0 %v7704
    %8337 = vmatpush1.bf16.msra.mxu0 %v7703
    %8338 = vmatprep.subr.bf16.mxu0 %v7764
    %8339 = vmatpush2.bf16.msra.mxu0 %v7763
    %8340 = vmatprep.subr.bf16.mxu0 %v7760
    %8341 = vmatpush2.bf16.msra.mxu0 %v7759
    %8342 = vmatprep.subr.bf16.mxu0 %v7756
    %8343 = vmatpush2.bf16.msra.mxu0 %v7755
    %8344 = vmatprep.subr.bf16.mxu0 %v7752
    %8345 = vmatpush2.bf16.msra.mxu0 %v7751
    %8346 = vmatprep.subr.bf16.mxu0 %v7748
    %8347 = vmatpush2.bf16.msra.mxu0 %v7747
    %8348 = vmatprep.subr.bf16.mxu0 %v7744
    %8349 = vmatpush2.bf16.msra.mxu0 %v7743
    %8350 = vmatprep.subr.bf16.mxu0 %v7740
    %8351 = vmatpush2.bf16.msra.mxu0 %v7739
    %8352 = vmatprep.subr.bf16.mxu0 %v7736
    %8353 = vmatpush2.bf16.msra.mxu0 %v7735
    %8354 = vmatprep.mubr.bf16.mxu0 %v6484
    %8355 = vmatmul.mubr.bf16.gmra.mxu0 %v6483
    %v8356 = vpop.f32.mrf.mxu0
    %v8357 = vadd.f32 %v8314, %v8356
    %v8358 = vpop.f32.mrf.mxu0
    %v8359 = vadd.f32 %v8316, %v8358
    %v8360 = vpop.f32.mrf.mxu0
    %v8361 = vadd.f32 %v8318, %v8360
    %v8362 = vpop.f32.mrf.mxu0
    %v8363 = vadd.f32 %v8320, %v8362
    %8364 = vdwg.mxu0
    %vm8365 = vcmp.gt.f32.partialorder %v3201, 0.0
    %vm8366 = vcmp.gt.f32.partialorder %v3202, 0.0
    %vm8367 = vcmp.gt.f32.partialorder %v3203, 0.0
    %vm8368 = vcmp.gt.f32.partialorder %v3204, 0.0
    %vm8369 = vcmp.gt.f32.partialorder %v3205, 0.0
    %vm8370 = vcmp.gt.f32.partialorder %v3206, 0.0
    %vm8371 = vcmp.gt.f32.partialorder %v3207, 0.0
    %vm8372 = vcmp.gt.f32.partialorder %v3208, 0.0
    %v8373 = vsel %vm8365, 1, 0
    %v8374 = vsel %vm8366, 1, 0
    %v8375 = vsel %vm8367, 1, 0
    %v8376 = vsel %vm8368, 1, 0
    %v8377 = vsel %vm8369, 1, 0
    %v8378 = vsel %vm8370, 1, 0
    %v8379 = vsel %vm8371, 1, 0
    %v8380 = vsel %vm8372, 1, 0
    %v8381 = vcvt.s32.f32 %v8373
    %v8382 = vcvt.s32.f32 %v8374
    %v8383 = vcvt.s32.f32 %v8375
    %v8384 = vcvt.s32.f32 %v8376
    %v8385 = vcvt.s32.f32 %v8377
    %v8386 = vcvt.s32.f32 %v8378
    %v8387 = vcvt.s32.f32 %v8379
    %v8388 = vcvt.s32.f32 %v8380
    %v8389 = vmul.f32 %v8185, %v8381
    %v8390 = vmul.f32 %v8187, %v8382
    %v8391 = vmul.f32 %v8357, %v8383
    %v8392 = vmul.f32 %v8359, %v8384
    %v8393 = vmul.f32 %v8189, %v8385
    %v8394 = vmul.f32 %v8191, %v8386
    %v8395 = vmul.f32 %v8361, %v8387
    %v8396 = vmul.f32 %v8363, %v8388
    %v8397 = vpack.c.bf16 %v8393, %v8389
    %v8398 = vpack.c.bf16 %v8394, %v8390
    %v8399 = vpack.c.bf16 %v8395, %v8391
    %v8400 = vpack.c.bf16 %v8396, %v8392
    %v8401 = vld [vmem:[%s16] sm:$0xf]
    %v8402 = vld [vmem:[%s16 + $0x4] sm:$0xf]
    %v8403 = vld [vmem:[%s16 + $0x8] sm:$0xf]
    %v8404 = vld [vmem:[%s16 + $0xc] sm:$0xf]
    %v8405 = vld [vmem:[%s16 + $0x10] sm:$0xf]
    %v8406 = vld [vmem:[%s16 + $0x14] sm:$0xf]
    %v8407 = vld [vmem:[%s16 + $0x18] sm:$0xf]
    %v8408 = vld [vmem:[%s16 + $0x1c] sm:$0xf]
    %v8409 = vld [vmem:[%s16 + $0x20] sm:$0xf]
    %v8410 = vld [vmem:[%s16 + $0x24] sm:$0xf]
    %v8411 = vld [vmem:[%s16 + $0x28] sm:$0xf]
    %v8412 = vld [vmem:[%s16 + $0x2c] sm:$0xf]
    %v8413 = vld [vmem:[%s16 + $0x30] sm:$0xf]
    %v8414 = vld [vmem:[%s16 + $0x34] sm:$0xf]
    %v8415 = vld [vmem:[%s16 + $0x38] sm:$0xf]
    %v8416 = vld [vmem:[%s16 + $0x3c] sm:$0xf]
    %v8417 = vld [vmem:[%s16 + $0x40] sm:$0xf]
    %v8418 = vld [vmem:[%s16 + $0x44] sm:$0xf]
    %v8419 = vld [vmem:[%s16 + $0x48] sm:$0xf]
    %v8420 = vld [vmem:[%s16 + $0x4c] sm:$0xf]
    %v8421 = vld [vmem:[%s16 + $0x50] sm:$0xf]
    %v8422 = vld [vmem:[%s16 + $0x54] sm:$0xf]
    %v8423 = vld [vmem:[%s16 + $0x58] sm:$0xf]
    %v8424 = vld [vmem:[%s16 + $0x5c] sm:$0xf]
    %v8425 = vld [vmem:[%s16 + $0x60] sm:$0xf]
    %v8426 = vld [vmem:[%s16 + $0x64] sm:$0xf]
    %v8427 = vld [vmem:[%s16 + $0x68] sm:$0xf]
    %v8428 = vld [vmem:[%s16 + $0x6c] sm:$0xf]
    %v8429 = vld [vmem:[%s16 + $0x70] sm:$0xf]
    %v8430 = vld [vmem:[%s16 + $0x74] sm:$0xf]
    %v8431 = vld [vmem:[%s16 + $0x78] sm:$0xf]
    %v8432 = vld [vmem:[%s16 + $0x7c] sm:$0xf]
    %v8433 = vld [vmem:[%s16 + $0x80] sm:$0xf]
    %v8434 = vld [vmem:[%s16 + $0x84] sm:$0xf]
    %v8435 = vld [vmem:[%s16 + $0x88] sm:$0xf]
    %v8436 = vld [vmem:[%s16 + $0x8c] sm:$0xf]
    %v8437 = vld [vmem:[%s16 + $0x90] sm:$0xf]
    %v8438 = vld [vmem:[%s16 + $0x94] sm:$0xf]
    %v8439 = vld [vmem:[%s16 + $0x98] sm:$0xf]
    %v8440 = vld [vmem:[%s16 + $0x9c] sm:$0xf]
    %v8441 = vld [vmem:[%s16 + $0xa0] sm:$0xf]
    %v8442 = vld [vmem:[%s16 + $0xa4] sm:$0xf]
    %v8443 = vld [vmem:[%s16 + $0xa8] sm:$0xf]
    %v8444 = vld [vmem:[%s16 + $0xac] sm:$0xf]
    %v8445 = vld [vmem:[%s16 + $0xb0] sm:$0xf]
    %v8446 = vld [vmem:[%s16 + $0xb4] sm:$0xf]
    %v8447 = vld [vmem:[%s16 + $0xb8] sm:$0xf]
    %v8448 = vld [vmem:[%s16 + $0xbc] sm:$0xf]
    %v8449 = vld [vmem:[%s16 + $0xc0] sm:$0xf]
    %v8450 = vld [vmem:[%s16 + $0xc4] sm:$0xf]
    %v8451 = vld [vmem:[%s16 + $0xc8] sm:$0xf]
    %v8452 = vld [vmem:[%s16 + $0xcc] sm:$0xf]
    %v8453 = vld [vmem:[%s16 + $0xd0] sm:$0xf]
    %v8454 = vld [vmem:[%s16 + $0xd4] sm:$0xf]
    %v8455 = vld [vmem:[%s16 + $0xd8] sm:$0xf]
    %v8456 = vld [vmem:[%s16 + $0xdc] sm:$0xf]
    %v8457 = vld [vmem:[%s16 + $0xe0] sm:$0xf]
    %v8458 = vld [vmem:[%s16 + $0xe4] sm:$0xf]
    %v8459 = vld [vmem:[%s16 + $0xe8] sm:$0xf]
    %v8460 = vld [vmem:[%s16 + $0xec] sm:$0xf]
    %v8461 = vld [vmem:[%s16 + $0xf0] sm:$0xf]
    %v8462 = vld [vmem:[%s16 + $0xf4] sm:$0xf]
    %v8463 = vld [vmem:[%s16 + $0xf8] sm:$0xf]
    %v8464 = vld [vmem:[%s16 + $0xfc] sm:$0xf]
    %v8529 = vunpack.c.l.b16 %v8401
    %v8530 = vunpack.c.l.b16 %v8402
    %v8531 = vunpack.c.l.b16 %v8403
    %v8532 = vunpack.c.l.b16 %v8404
    %v8533 = vunpack.c.l.b16 %v8405
    %v8534 = vunpack.c.l.b16 %v8406
    %v8535 = vunpack.c.l.b16 %v8407
    %v8536 = vunpack.c.l.b16 %v8408
    %v8537 = vunpack.c.l.b16 %v8409
    %v8538 = vunpack.c.l.b16 %v8410
    %v8539 = vunpack.c.l.b16 %v8411
    %v8540 = vunpack.c.l.b16 %v8412
    %v8541 = vunpack.c.l.b16 %v8413
    %v8542 = vunpack.c.l.b16 %v8414
    %v8543 = vunpack.c.l.b16 %v8415
    %v8544 = vunpack.c.l.b16 %v8416
    %v8545 = vunpack.c.l.b16 %v8417
    %v8546 = vunpack.c.l.b16 %v8418
    %v8547 = vunpack.c.l.b16 %v8419
    %v8548 = vunpack.c.l.b16 %v8420
    %v8549 = vunpack.c.l.b16 %v8421
    %v8550 = vunpack.c.l.b16 %v8422
    %v8551 = vunpack.c.l.b16 %v8423
    %v8552 = vunpack.c.l.b16 %v8424
    %v8553 = vunpack.c.l.b16 %v8425
    %v8554 = vunpack.c.l.b16 %v8426
    %v8555 = vunpack.c.l.b16 %v8427
    %v8556 = vunpack.c.l.b16 %v8428
    %v8557 = vunpack.c.l.b16 %v8429
    %v8558 = vunpack.c.l.b16 %v8430
    %v8559 = vunpack.c.l.b16 %v8431
    %v8560 = vunpack.c.l.b16 %v8432
    %v8561 = vunpack.c.l.b16 %v8433
    %v8562 = vunpack.c.l.b16 %v8434
    %v8563 = vunpack.c.l.b16 %v8435
    %v8564 = vunpack.c.l.b16 %v8436
    %v8565 = vunpack.c.l.b16 %v8437
    %v8566 = vunpack.c.l.b16 %v8438
    %v8567 = vunpack.c.l.b16 %v8439
    %v8568 = vunpack.c.l.b16 %v8440
    %v8569 = vunpack.c.l.b16 %v8441
    %v8570 = vunpack.c.l.b16 %v8442
    %v8571 = vunpack.c.l.b16 %v8443
    %v8572 = vunpack.c.l.b16 %v8444
    %v8573 = vunpack.c.l.b16 %v8445
    %v8574 = vunpack.c.l.b16 %v8446
    %v8575 = vunpack.c.l.b16 %v8447
    %v8576 = vunpack.c.l.b16 %v8448
    %v8577 = vunpack.c.l.b16 %v8449
    %v8578 = vunpack.c.l.b16 %v8450
    %v8579 = vunpack.c.l.b16 %v8451
    %v8580 = vunpack.c.l.b16 %v8452
    %v8581 = vunpack.c.l.b16 %v8453
    %v8582 = vunpack.c.l.b16 %v8454
    %v8583 = vunpack.c.l.b16 %v8455
    %v8584 = vunpack.c.l.b16 %v8456
    %v8585 = vunpack.c.l.b16 %v8457
    %v8586 = vunpack.c.l.b16 %v8458
    %v8587 = vunpack.c.l.b16 %v8459
    %v8588 = vunpack.c.l.b16 %v8460
    %v8589 = vunpack.c.l.b16 %v8461
    %v8590 = vunpack.c.l.b16 %v8462
    %v8591 = vunpack.c.l.b16 %v8463
    %v8592 = vunpack.c.l.b16 %v8464
    %v8593 = vpack.c.b16 %v8530, %v8529
    %v8594 = vpack.c.b16 %v8532, %v8531
    %v8595 = vpack.c.b16 %v8534, %v8533
    %v8596 = vpack.c.b16 %v8536, %v8535
    %v8597 = vpack.c.b16 %v8538, %v8537
    %v8598 = vpack.c.b16 %v8540, %v8539
    %v8599 = vpack.c.b16 %v8542, %v8541
    %v8600 = vpack.c.b16 %v8544, %v8543
    %v8601 = vpack.c.b16 %v8546, %v8545
    %v8602 = vpack.c.b16 %v8548, %v8547
    %v8603 = vpack.c.b16 %v8550, %v8549
    %v8604 = vpack.c.b16 %v8552, %v8551
    %v8605 = vpack.c.b16 %v8554, %v8553
    %v8606 = vpack.c.b16 %v8556, %v8555
    %v8607 = vpack.c.b16 %v8558, %v8557
    %v8608 = vpack.c.b16 %v8560, %v8559
    %v8609 = vpack.c.b16 %v8562, %v8561
    %v8610 = vpack.c.b16 %v8564, %v8563
    %v8611 = vpack.c.b16 %v8566, %v8565
    %v8612 = vpack.c.b16 %v8568, %v8567
    %v8613 = vpack.c.b16 %v8570, %v8569
    %v8614 = vpack.c.b16 %v8572, %v8571
    %v8615 = vpack.c.b16 %v8574, %v8573
    %v8616 = vpack.c.b16 %v8576, %v8575
    %v8617 = vpack.c.b16 %v8578, %v8577
    %v8618 = vpack.c.b16 %v8580, %v8579
    %v8619 = vpack.c.b16 %v8582, %v8581
    %v8620 = vpack.c.b16 %v8584, %v8583
    %v8621 = vpack.c.b16 %v8586, %v8585
    %v8622 = vpack.c.b16 %v8588, %v8587
    %v8623 = vpack.c.b16 %v8590, %v8589
    %v8624 = vpack.c.b16 %v8592, %v8591
    %8657 = vmatprep.subr.bf16.mxu0 0
    %8658 = vmatpush1.bf16.msra.mxu0 %v8600
    %8659 = vmatprep.subr.bf16.mxu0 0
    %8660 = vmatpush1.bf16.msra.mxu0 %v8599
    %8661 = vmatprep.subr.bf16.mxu0 0
    %8662 = vmatpush1.bf16.msra.mxu0 %v8598
    %8663 = vmatprep.subr.bf16.mxu0 0
    %8664 = vmatpush1.bf16.msra.mxu0 %v8597
    %8665 = vmatprep.subr.bf16.mxu0 0
    %8666 = vmatpush1.bf16.msra.mxu0 %v8596
    %8667 = vmatprep.subr.bf16.mxu0 0
    %8668 = vmatpush1.bf16.msra.mxu0 %v8595
    %8669 = vmatprep.subr.bf16.mxu0 0
    %8670 = vmatpush1.bf16.msra.mxu0 %v8594
    %8671 = vmatprep.subr.bf16.mxu0 0
    %8672 = vmatpush1.bf16.msra.mxu0 %v8593
    %8673 = vmatprep.subr.bf16.mxu0 0
    %8674 = vmatpush2.bf16.msra.mxu0 %v8608
    %8675 = vmatprep.subr.bf16.mxu0 0
    %8676 = vmatpush2.bf16.msra.mxu0 %v8607
    %8677 = vmatprep.subr.bf16.mxu0 0
    %8678 = vmatpush2.bf16.msra.mxu0 %v8606
    %8679 = vmatprep.subr.bf16.mxu0 0
    %8680 = vmatpush2.bf16.msra.mxu0 %v8605
    %8681 = vmatprep.subr.bf16.mxu0 0
    %8682 = vmatpush2.bf16.msra.mxu0 %v8604
    %8683 = vmatprep.subr.bf16.mxu0 0
    %8684 = vmatpush2.bf16.msra.mxu0 %v8603
    %8685 = vmatprep.subr.bf16.mxu0 0
    %8686 = vmatpush2.bf16.msra.mxu0 %v8602
    %8687 = vmatprep.subr.bf16.mxu0 0
    %8688 = vmatpush2.bf16.msra.mxu0 %v8601
    %8689 = vmatprep.mubr.bf16.mxu0 %v8398
    %8690 = vmatmul.mubr.bf16.gmra.mxu0 %v8397
    %v8691 = vpop.f32.mrf.mxu0
    %v8692 = vadd.f32 %v3056, %v8691
    %v8693 = vpop.f32.mrf.mxu0
    %v8694 = vpop.f32.mrf.mxu0
    %v8695 = vadd.f32 %v3057, %v8694
    %v8696 = vpop.f32.mrf.mxu0
    %8697 = vdwg.mxu0
    %8698 = vmatprep.subr.bf16.mxu0 0
    %8699 = vmatpush1.bf16.msra.mxu0 %v8616
    %8700 = vmatprep.subr.bf16.mxu0 0
    %8701 = vmatpush1.bf16.msra.mxu0 %v8615
    %8702 = vmatprep.subr.bf16.mxu0 0
    %8703 = vmatpush1.bf16.msra.mxu0 %v8614
    %8704 = vmatprep.subr.bf16.mxu0 0
    %8705 = vmatpush1.bf16.msra.mxu0 %v8613
    %8706 = vmatprep.subr.bf16.mxu0 0
    %8707 = vmatpush1.bf16.msra.mxu0 %v8612
    %8708 = vmatprep.subr.bf16.mxu0 0
    %8709 = vmatpush1.bf16.msra.mxu0 %v8611
    %8710 = vmatprep.subr.bf16.mxu0 0
    %8711 = vmatpush1.bf16.msra.mxu0 %v8610
    %8712 = vmatprep.subr.bf16.mxu0 0
    %8713 = vmatpush1.bf16.msra.mxu0 %v8609
    %8714 = vmatprep.subr.bf16.mxu0 0
    %8715 = vmatpush2.bf16.msra.mxu0 %v8624
    %8716 = vmatprep.subr.bf16.mxu0 0
    %8717 = vmatpush2.bf16.msra.mxu0 %v8623
    %8718 = vmatprep.subr.bf16.mxu0 0
    %8719 = vmatpush2.bf16.msra.mxu0 %v8622
    %8720 = vmatprep.subr.bf16.mxu0 0
    %8721 = vmatpush2.bf16.msra.mxu0 %v8621
    %8722 = vmatprep.subr.bf16.mxu0 0
    %8723 = vmatpush2.bf16.msra.mxu0 %v8620
    %8724 = vmatprep.subr.bf16.mxu0 0
    %8725 = vmatpush2.bf16.msra.mxu0 %v8619
    %8726 = vmatprep.subr.bf16.mxu0 0
    %8727 = vmatpush2.bf16.msra.mxu0 %v8618
    %8728 = vmatprep.subr.bf16.mxu0 0
    %8729 = vmatpush2.bf16.msra.mxu0 %v8617
    %8730 = vmatprep.mubr.bf16.mxu0 %v8400
    %8731 = vmatmul.mubr.bf16.gmra.mxu0 %v8399
    %v8732 = vpop.f32.mrf.mxu0
    %v8733 = vadd.f32 %v8692, %v8732
    %v8734 = vpop.f32.mrf.mxu0
    %v8735 = vpop.f32.mrf.mxu0
    %v8736 = vadd.f32 %v8695, %v8735
    %v8737 = vpop.f32.mrf.mxu0
    %8738 = vdwg.mxu0
    %v8739 = vstv %s150
    %v8740 = vmul.f32 %v8739, %v8733
    %v8741 = vmul.f32 %v8739, %v8736
    %v8742 = vsub.f32 %v3061, %v8740
    %v8743 = vsub.f32 %v3062, %v8741
    %v8744 = vstv %s148
    %v8745 = vmul.f32 %v8744, %v8742
    %v8746 = vmul.f32 %v8744, %v8743
    %v8747 = vadd.f32 %v3056, %v8745
    %v8748 = vadd.f32 %v3057, %v8746
    %v8749 = vpack.c.bf16 %v8748, %v8747
    %v8751 = vsel %vm3098, %v8749, 0
    %8753 = vmatprep.subr.bf16.mxu0 0
    %8754 = vmatpush1.bf16.msra.mxu0 0
    %8755 = vmatprep.subr.bf16.mxu0 0
    %8756 = vmatpush1.bf16.msra.mxu0 0
    %8757 = vmatprep.subr.bf16.mxu0 0
    %8758 = vmatpush1.bf16.msra.mxu0 0
    %8759 = vmatprep.subr.bf16.mxu0 0
    %8760 = vmatpush1.bf16.msra.mxu0 0
    %8761 = vmatprep.subr.bf16.mxu0 0
    %8762 = vmatpush1.bf16.msra.mxu0 0
    %8763 = vmatprep.subr.bf16.mxu0 0
    %8764 = vmatpush1.bf16.msra.mxu0 0
    %8765 = vmatprep.subr.bf16.mxu0 0
    %8766 = vmatpush1.bf16.msra.mxu0 0
    %8767 = vmatprep.subr.bf16.mxu0 %v3107
    %8768 = vmatpush1.bf16.msra.mxu0 %v3104
    %8769 = vmatprep.subr.bf16.mxu0 0
    %8770 = vmatpush2.bf16.msra.mxu0 0
    %8771 = vmatprep.subr.bf16.mxu0 0
    %8772 = vmatpush2.bf16.msra.mxu0 0
    %8773 = vmatprep.subr.bf16.mxu0 0
    %8774 = vmatpush2.bf16.msra.mxu0 0
    %8775 = vmatprep.subr.bf16.mxu0 0
    %8776 = vmatpush2.bf16.msra.mxu0 0
    %8777 = vmatprep.subr.bf16.mxu0 0
    %8778 = vmatpush2.bf16.msra.mxu0 0
    %8779 = vmatprep.subr.bf16.mxu0 0
    %8780 = vmatpush2.bf16.msra.mxu0 0
    %8781 = vmatprep.subr.bf16.mxu0 0
    %8782 = vmatpush2.bf16.msra.mxu0 0
    %8783 = vmatprep.subr.bf16.mxu0 0
    %8784 = vmatpush2.bf16.msra.mxu0 0
    %8785 = vmatprep.mubr.bf16.mxu0 0
    %8786 = vmatmul.mubr.bf16.gmra.mxu0 %v8751
    %v8787 = vpop.f32.mrf.mxu0
    %v8788 = vadd.f32 %v3071, %v8787
    %v8789 = vpop.f32.mrf.mxu0
    %v8790 = vadd.f32 %v3075, %v8789
    %v8791 = vpop.f32.mrf.mxu0
    %v8792 = vadd.f32 %v3071, %v8791
    %v8793 = vpop.f32.mrf.mxu0
    %v8794 = vadd.f32 %v3075, %v8793
    %8795 = vdwg.mxu0
    %8796 = vmatprep.subr.bf16.mxu0 0
    %8797 = vmatpush1.bf16.msra.mxu0 0
    %8798 = vmatprep.subr.bf16.mxu0 0
    %8799 = vmatpush1.bf16.msra.mxu0 0
    %8800 = vmatprep.subr.bf16.mxu0 0
    %8801 = vmatpush1.bf16.msra.mxu0 0
    %8802 = vmatprep.subr.bf16.mxu0 0
    %8803 = vmatpush1.bf16.msra.mxu0 0
    %8804 = vmatprep.subr.bf16.mxu0 0
    %8805 = vmatpush1.bf16.msra.mxu0 0
    %8806 = vmatprep.subr.bf16.mxu0 0
    %8807 = vmatpush1.bf16.msra.mxu0 0
    %8808 = vmatprep.subr.bf16.mxu0 0
    %8809 = vmatpush1.bf16.msra.mxu0 0
    %8810 = vmatprep.subr.bf16.mxu0 %v3113
    %8811 = vmatpush1.bf16.msra.mxu0 %v3110
    %8812 = vmatprep.subr.bf16.mxu0 0
    %8813 = vmatpush2.bf16.msra.mxu0 0
    %8814 = vmatprep.subr.bf16.mxu0 0
    %8815 = vmatpush2.bf16.msra.mxu0 0
    %8816 = vmatprep.subr.bf16.mxu0 0
    %8817 = vmatpush2.bf16.msra.mxu0 0
    %8818 = vmatprep.subr.bf16.mxu0 0
    %8819 = vmatpush2.bf16.msra.mxu0 0
    %8820 = vmatprep.subr.bf16.mxu0 0
    %8821 = vmatpush2.bf16.msra.mxu0 0
    %8822 = vmatprep.subr.bf16.mxu0 0
    %8823 = vmatpush2.bf16.msra.mxu0 0
    %8824 = vmatprep.subr.bf16.mxu0 0
    %8825 = vmatpush2.bf16.msra.mxu0 0
    %8826 = vmatprep.subr.bf16.mxu0 0
    %8827 = vmatpush2.bf16.msra.mxu0 0
    %8828 = vmatprep.mubr.bf16.mxu0 0
    %8829 = vmatmul.mubr.bf16.gmra.mxu0 %v8751
    %v8830 = vpop.f32.mrf.mxu0
    %v8831 = vadd.f32 %v3079, %v8830
    %v8832 = vpop.f32.mrf.mxu0
    %v8833 = vadd.f32 %v3083, %v8832
    %v8834 = vpop.f32.mrf.mxu0
    %v8835 = vadd.f32 %v3079, %v8834
    %v8836 = vpop.f32.mrf.mxu0
    %v8837 = vadd.f32 %v3083, %v8836
    %8838 = vdwg.mxu0
    %v8839 = vmax.f32 %v8788, 0.0
    %v8840 = vmax.f32 %v8790, 0.0
    %v8841 = vmax.f32 %v8831, 0.0
    %v8842 = vmax.f32 %v8833, 0.0
    %v8843 = vmax.f32 %v8792, 0.0
    %v8844 = vmax.f32 %v8794, 0.0
    %v8845 = vmax.f32 %v8835, 0.0
    %v8846 = vmax.f32 %v8837, 0.0
    %v8847 = vpack.c.bf16 %v8843, %v8839
    %v8848 = vpack.c.bf16 %v8844, %v8840
    %v8849 = vpack.c.bf16 %v8845, %v8841
    %v8850 = vpack.c.bf16 %v8846, %v8842
    %8851 = vmatprep.subr.bf16.mxu0 %v4336
    %8852 = vmatpush1.bf16.msra.mxu0 %v4335
    %8853 = vmatprep.subr.bf16.mxu0 %v4328
    %8854 = vmatpush1.bf16.msra.mxu0 %v4327
    %8855 = vmatprep.subr.bf16.mxu0 %v4320
    %8856 = vmatpush1.bf16.msra.mxu0 %v4319
    %8857 = vmatprep.subr.bf16.mxu0 %v4312
    %8858 = vmatpush1.bf16.msra.mxu0 %v4311
    %8859 = vmatprep.subr.bf16.mxu0 %v4304
    %8860 = vmatpush1.bf16.msra.mxu0 %v4303
    %8861 = vmatprep.subr.bf16.mxu0 %v4296
    %8862 = vmatpush1.bf16.msra.mxu0 %v4295
    %8863 = vmatprep.subr.bf16.mxu0 %v4288
    %8864 = vmatpush1.bf16.msra.mxu0 %v4287
    %8865 = vmatprep.subr.bf16.mxu0 %v4280
    %8866 = vmatpush1.bf16.msra.mxu0 %v4279
    %8867 = vmatprep.subr.bf16.mxu0 %v4400
    %8868 = vmatpush2.bf16.msra.mxu0 %v4399
    %8869 = vmatprep.subr.bf16.mxu0 %v4392
    %8870 = vmatpush2.bf16.msra.mxu0 %v4391
    %8871 = vmatprep.subr.bf16.mxu0 %v4384
    %8872 = vmatpush2.bf16.msra.mxu0 %v4383
    %8873 = vmatprep.subr.bf16.mxu0 %v4376
    %8874 = vmatpush2.bf16.msra.mxu0 %v4375
    %8875 = vmatprep.subr.bf16.mxu0 %v4368
    %8876 = vmatpush2.bf16.msra.mxu0 %v4367
    %8877 = vmatprep.subr.bf16.mxu0 %v4360
    %8878 = vmatpush2.bf16.msra.mxu0 %v4359
    %8879 = vmatprep.subr.bf16.mxu0 %v4352
    %8880 = vmatpush2.bf16.msra.mxu0 %v4351
    %8881 = vmatprep.subr.bf16.mxu0 %v4344
    %8882 = vmatpush2.bf16.msra.mxu0 %v4343
    %8883 = vmatprep.mubr.bf16.mxu0 %v8848
    %8884 = vmatmul.mubr.bf16.gmra.mxu0 %v8847
    %v8885 = vpop.f32.mrf.mxu0
    %v8886 = vadd.f32 %v3474, %v8885
    %v8887 = vpop.f32.mrf.mxu0
    %v8888 = vadd.f32 %v3478, %v8887
    %v8889 = vpop.f32.mrf.mxu0
    %v8890 = vadd.f32 %v3474, %v8889
    %v8891 = vpop.f32.mrf.mxu0
    %v8892 = vadd.f32 %v3478, %v8891
    %8893 = vdwg.mxu0
    %8894 = vmatprep.subr.bf16.mxu0 %v4464
    %8895 = vmatpush1.bf16.msra.mxu0 %v4463
    %8896 = vmatprep.subr.bf16.mxu0 %v4456
    %8897 = vmatpush1.bf16.msra.mxu0 %v4455
    %8898 = vmatprep.subr.bf16.mxu0 %v4448
    %8899 = vmatpush1.bf16.msra.mxu0 %v4447
    %8900 = vmatprep.subr.bf16.mxu0 %v4440
    %8901 = vmatpush1.bf16.msra.mxu0 %v4439
    %8902 = vmatprep.subr.bf16.mxu0 %v4432
    %8903 = vmatpush1.bf16.msra.mxu0 %v4431
    %8904 = vmatprep.subr.bf16.mxu0 %v4424
    %8905 = vmatpush1.bf16.msra.mxu0 %v4423
    %8906 = vmatprep.subr.bf16.mxu0 %v4416
    %8907 = vmatpush1.bf16.msra.mxu0 %v4415
    %8908 = vmatprep.subr.bf16.mxu0 %v4408
    %8909 = vmatpush1.bf16.msra.mxu0 %v4407
    %8910 = vmatprep.subr.bf16.mxu0 %v4528
    %8911 = vmatpush2.bf16.msra.mxu0 %v4527
    %8912 = vmatprep.subr.bf16.mxu0 %v4520
    %8913 = vmatpush2.bf16.msra.mxu0 %v4519
    %8914 = vmatprep.subr.bf16.mxu0 %v4512
    %8915 = vmatpush2.bf16.msra.mxu0 %v4511
    %8916 = vmatprep.subr.bf16.mxu0 %v4504
    %8917 = vmatpush2.bf16.msra.mxu0 %v4503
    %8918 = vmatprep.subr.bf16.mxu0 %v4496
    %8919 = vmatpush2.bf16.msra.mxu0 %v4495
    %8920 = vmatprep.subr.bf16.mxu0 %v4488
    %8921 = vmatpush2.bf16.msra.mxu0 %v4487
    %8922 = vmatprep.subr.bf16.mxu0 %v4480
    %8923 = vmatpush2.bf16.msra.mxu0 %v4479
    %8924 = vmatprep.subr.bf16.mxu0 %v4472
    %8925 = vmatpush2.bf16.msra.mxu0 %v4471
    %8926 = vmatprep.mubr.bf16.mxu0 %v8850
    %8927 = vmatmul.mubr.bf16.gmra.mxu0 %v8849
    %v8928 = vpop.f32.mrf.mxu0
    %v8929 = vadd.f32 %v8886, %v8928
    %v8930 = vpop.f32.mrf.mxu0
    %v8931 = vadd.f32 %v8888, %v8930
    %v8932 = vpop.f32.mrf.mxu0
    %v8933 = vadd.f32 %v8890, %v8932
    %v8934 = vpop.f32.mrf.mxu0
    %v8935 = vadd.f32 %v8892, %v8934
    %8936 = vdwg.mxu0
    %8937 = vmatprep.subr.bf16.mxu0 %v4338
    %8938 = vmatpush1.bf16.msra.mxu0 %v4337
    %8939 = vmatprep.subr.bf16.mxu0 %v4330
    %8940 = vmatpush1.bf16.msra.mxu0 %v4329
    %8941 = vmatprep.subr.bf16.mxu0 %v4322
    %8942 = vmatpush1.bf16.msra.mxu0 %v4321
    %8943 = vmatprep.subr.bf16.mxu0 %v4314
    %8944 = vmatpush1.bf16.msra.mxu0 %v4313
    %8945 = vmatprep.subr.bf16.mxu0 %v4306
    %8946 = vmatpush1.bf16.msra.mxu0 %v4305
    %8947 = vmatprep.subr.bf16.mxu0 %v4298
    %8948 = vmatpush1.bf16.msra.mxu0 %v4297
    %8949 = vmatprep.subr.bf16.mxu0 %v4290
    %8950 = vmatpush1.bf16.msra.mxu0 %v4289
    %8951 = vmatprep.subr.bf16.mxu0 %v4282
    %8952 = vmatpush1.bf16.msra.mxu0 %v4281
    %8953 = vmatprep.subr.bf16.mxu0 %v4402
    %8954 = vmatpush2.bf16.msra.mxu0 %v4401
    %8955 = vmatprep.subr.bf16.mxu0 %v4394
    %8956 = vmatpush2.bf16.msra.mxu0 %v4393
    %8957 = vmatprep.subr.bf16.mxu0 %v4386
    %8958 = vmatpush2.bf16.msra.mxu0 %v4385
    %8959 = vmatprep.subr.bf16.mxu0 %v4378
    %8960 = vmatpush2.bf16.msra.mxu0 %v4377
    %8961 = vmatprep.subr.bf16.mxu0 %v4370
    %8962 = vmatpush2.bf16.msra.mxu0 %v4369
    %8963 = vmatprep.subr.bf16.mxu0 %v4362
    %8964 = vmatpush2.bf16.msra.mxu0 %v4361
    %8965 = vmatprep.subr.bf16.mxu0 %v4354
    %8966 = vmatpush2.bf16.msra.mxu0 %v4353
    %8967 = vmatprep.subr.bf16.mxu0 %v4346
    %8968 = vmatpush2.bf16.msra.mxu0 %v4345
    %8969 = vmatprep.mubr.bf16.mxu0 %v8848
    %8970 = vmatmul.mubr.bf16.gmra.mxu0 %v8847
    %v8971 = vpop.f32.mrf.mxu0
    %v8972 = vadd.f32 %v3482, %v8971
    %v8973 = vpop.f32.mrf.mxu0
    %v8974 = vadd.f32 %v3486, %v8973
    %v8975 = vpop.f32.mrf.mxu0
    %v8976 = vadd.f32 %v3482, %v8975
    %v8977 = vpop.f32.mrf.mxu0
    %v8978 = vadd.f32 %v3486, %v8977
    %8979 = vdwg.mxu0
    %8980 = vmatprep.subr.bf16.mxu0 %v4466
    %8981 = vmatpush1.bf16.msra.mxu0 %v4465
    %8982 = vmatprep.subr.bf16.mxu0 %v4458
    %8983 = vmatpush1.bf16.msra.mxu0 %v4457
    %8984 = vmatprep.subr.bf16.mxu0 %v4450
    %8985 = vmatpush1.bf16.msra.mxu0 %v4449
    %8986 = vmatprep.subr.bf16.mxu0 %v4442
    %8987 = vmatpush1.bf16.msra.mxu0 %v4441
    %8988 = vmatprep.subr.bf16.mxu0 %v4434
    %8989 = vmatpush1.bf16.msra.mxu0 %v4433
    %8990 = vmatprep.subr.bf16.mxu0 %v4426
    %8991 = vmatpush1.bf16.msra.mxu0 %v4425
    %8992 = vmatprep.subr.bf16.mxu0 %v4418
    %8993 = vmatpush1.bf16.msra.mxu0 %v4417
    %8994 = vmatprep.subr.bf16.mxu0 %v4410
    %8995 = vmatpush1.bf16.msra.mxu0 %v4409
    %8996 = vmatprep.subr.bf16.mxu0 %v4530
    %8997 = vmatpush2.bf16.msra.mxu0 %v4529
    %8998 = vmatprep.subr.bf16.mxu0 %v4522
    %8999 = vmatpush2.bf16.msra.mxu0 %v4521
    %9000 = vmatprep.subr.bf16.mxu0 %v4514
    %9001 = vmatpush2.bf16.msra.mxu0 %v4513
    %9002 = vmatprep.subr.bf16.mxu0 %v4506
    %9003 = vmatpush2.bf16.msra.mxu0 %v4505
    %9004 = vmatprep.subr.bf16.mxu0 %v4498
    %9005 = vmatpush2.bf16.msra.mxu0 %v4497
    %9006 = vmatprep.subr.bf16.mxu0 %v4490
    %9007 = vmatpush2.bf16.msra.mxu0 %v4489
    %9008 = vmatprep.subr.bf16.mxu0 %v4482
    %9009 = vmatpush2.bf16.msra.mxu0 %v4481
    %9010 = vmatprep.subr.bf16.mxu0 %v4474
    %9011 = vmatpush2.bf16.msra.mxu0 %v4473
    %9012 = vmatprep.mubr.bf16.mxu0 %v8850
    %9013 = vmatmul.mubr.bf16.gmra.mxu0 %v8849
    %v9014 = vpop.f32.mrf.mxu0
    %v9015 = vadd.f32 %v8972, %v9014
    %v9016 = vpop.f32.mrf.mxu0
    %v9017 = vadd.f32 %v8974, %v9016
    %v9018 = vpop.f32.mrf.mxu0
    %v9019 = vadd.f32 %v8976, %v9018
    %v9020 = vpop.f32.mrf.mxu0
    %v9021 = vadd.f32 %v8978, %v9020
    %9022 = vdwg.mxu0
    %9023 = vmatprep.subr.bf16.mxu0 %v4340
    %9024 = vmatpush1.bf16.msra.mxu0 %v4339
    %9025 = vmatprep.subr.bf16.mxu0 %v4332
    %9026 = vmatpush1.bf16.msra.mxu0 %v4331
    %9027 = vmatprep.subr.bf16.mxu0 %v4324
    %9028 = vmatpush1.bf16.msra.mxu0 %v4323
    %9029 = vmatprep.subr.bf16.mxu0 %v4316
    %9030 = vmatpush1.bf16.msra.mxu0 %v4315
    %9031 = vmatprep.subr.bf16.mxu0 %v4308
    %9032 = vmatpush1.bf16.msra.mxu0 %v4307
    %9033 = vmatprep.subr.bf16.mxu0 %v4300
    %9034 = vmatpush1.bf16.msra.mxu0 %v4299
    %9035 = vmatprep.subr.bf16.mxu0 %v4292
    %9036 = vmatpush1.bf16.msra.mxu0 %v4291
    %9037 = vmatprep.subr.bf16.mxu0 %v4284
    %9038 = vmatpush1.bf16.msra.mxu0 %v4283
    %9039 = vmatprep.subr.bf16.mxu0 %v4404
    %9040 = vmatpush2.bf16.msra.mxu0 %v4403
    %9041 = vmatprep.subr.bf16.mxu0 %v4396
    %9042 = vmatpush2.bf16.msra.mxu0 %v4395
    %9043 = vmatprep.subr.bf16.mxu0 %v4388
    %9044 = vmatpush2.bf16.msra.mxu0 %v4387
    %9045 = vmatprep.subr.bf16.mxu0 %v4380
    %9046 = vmatpush2.bf16.msra.mxu0 %v4379
    %9047 = vmatprep.subr.bf16.mxu0 %v4372
    %9048 = vmatpush2.bf16.msra.mxu0 %v4371
    %9049 = vmatprep.subr.bf16.mxu0 %v4364
    %9050 = vmatpush2.bf16.msra.mxu0 %v4363
    %9051 = vmatprep.subr.bf16.mxu0 %v4356
    %9052 = vmatpush2.bf16.msra.mxu0 %v4355
    %9053 = vmatprep.subr.bf16.mxu0 %v4348
    %9054 = vmatpush2.bf16.msra.mxu0 %v4347
    %9055 = vmatprep.mubr.bf16.mxu0 %v8848
    %9056 = vmatmul.mubr.bf16.gmra.mxu0 %v8847
    %v9057 = vpop.f32.mrf.mxu0
    %v9058 = vadd.f32 %v3490, %v9057
    %v9059 = vpop.f32.mrf.mxu0
    %v9060 = vadd.f32 %v3494, %v9059
    %v9061 = vpop.f32.mrf.mxu0
    %v9062 = vadd.f32 %v3490, %v9061
    %v9063 = vpop.f32.mrf.mxu0
    %v9064 = vadd.f32 %v3494, %v9063
    %9065 = vdwg.mxu0
    %9066 = vmatprep.subr.bf16.mxu0 %v4468
    %9067 = vmatpush1.bf16.msra.mxu0 %v4467
    %9068 = vmatprep.subr.bf16.mxu0 %v4460
    %9069 = vmatpush1.bf16.msra.mxu0 %v4459
    %9070 = vmatprep.subr.bf16.mxu0 %v4452
    %9071 = vmatpush1.bf16.msra.mxu0 %v4451
    %9072 = vmatprep.subr.bf16.mxu0 %v4444
    %9073 = vmatpush1.bf16.msra.mxu0 %v4443
    %9074 = vmatprep.subr.bf16.mxu0 %v4436
    %9075 = vmatpush1.bf16.msra.mxu0 %v4435
    %9076 = vmatprep.subr.bf16.mxu0 %v4428
    %9077 = vmatpush1.bf16.msra.mxu0 %v4427
    %9078 = vmatprep.subr.bf16.mxu0 %v4420
    %9079 = vmatpush1.bf16.msra.mxu0 %v4419
    %9080 = vmatprep.subr.bf16.mxu0 %v4412
    %9081 = vmatpush1.bf16.msra.mxu0 %v4411
    %9082 = vmatprep.subr.bf16.mxu0 %v4532
    %9083 = vmatpush2.bf16.msra.mxu0 %v4531
    %9084 = vmatprep.subr.bf16.mxu0 %v4524
    %9085 = vmatpush2.bf16.msra.mxu0 %v4523
    %9086 = vmatprep.subr.bf16.mxu0 %v4516
    %9087 = vmatpush2.bf16.msra.mxu0 %v4515
    %9088 = vmatprep.subr.bf16.mxu0 %v4508
    %9089 = vmatpush2.bf16.msra.mxu0 %v4507
    %9090 = vmatprep.subr.bf16.mxu0 %v4500
    %9091 = vmatpush2.bf16.msra.mxu0 %v4499
    %9092 = vmatprep.subr.bf16.mxu0 %v4492
    %9093 = vmatpush2.bf16.msra.mxu0 %v4491
    %9094 = vmatprep.subr.bf16.mxu0 %v4484
    %9095 = vmatpush2.bf16.msra.mxu0 %v4483
    %9096 = vmatprep.subr.bf16.mxu0 %v4476
    %9097 = vmatpush2.bf16.msra.mxu0 %v4475
    %9098 = vmatprep.mubr.bf16.mxu0 %v8850
    %9099 = vmatmul.mubr.bf16.gmra.mxu0 %v8849
    %v9100 = vpop.f32.mrf.mxu0
    %v9101 = vadd.f32 %v9058, %v9100
    %v9102 = vpop.f32.mrf.mxu0
    %v9103 = vadd.f32 %v9060, %v9102
    %v9104 = vpop.f32.mrf.mxu0
    %v9105 = vadd.f32 %v9062, %v9104
    %v9106 = vpop.f32.mrf.mxu0
    %v9107 = vadd.f32 %v9064, %v9106
    %9108 = vdwg.mxu0
    %9109 = vmatprep.subr.bf16.mxu0 %v4342
    %9110 = vmatpush1.bf16.msra.mxu0 %v4341
    %9111 = vmatprep.subr.bf16.mxu0 %v4334
    %9112 = vmatpush1.bf16.msra.mxu0 %v4333
    %9113 = vmatprep.subr.bf16.mxu0 %v4326
    %9114 = vmatpush1.bf16.msra.mxu0 %v4325
    %9115 = vmatprep.subr.bf16.mxu0 %v4318
    %9116 = vmatpush1.bf16.msra.mxu0 %v4317
    %9117 = vmatprep.subr.bf16.mxu0 %v4310
    %9118 = vmatpush1.bf16.msra.mxu0 %v4309
    %9119 = vmatprep.subr.bf16.mxu0 %v4302
    %9120 = vmatpush1.bf16.msra.mxu0 %v4301
    %9121 = vmatprep.subr.bf16.mxu0 %v4294
    %9122 = vmatpush1.bf16.msra.mxu0 %v4293
    %9123 = vmatprep.subr.bf16.mxu0 %v4286
    %9124 = vmatpush1.bf16.msra.mxu0 %v4285
    %9125 = vmatprep.subr.bf16.mxu0 %v4406
    %9126 = vmatpush2.bf16.msra.mxu0 %v4405
    %9127 = vmatprep.subr.bf16.mxu0 %v4398
    %9128 = vmatpush2.bf16.msra.mxu0 %v4397
    %9129 = vmatprep.subr.bf16.mxu0 %v4390
    %9130 = vmatpush2.bf16.msra.mxu0 %v4389
    %9131 = vmatprep.subr.bf16.mxu0 %v4382
    %9132 = vmatpush2.bf16.msra.mxu0 %v4381
    %9133 = vmatprep.subr.bf16.mxu0 %v4374
    %9134 = vmatpush2.bf16.msra.mxu0 %v4373
    %9135 = vmatprep.subr.bf16.mxu0 %v4366
    %9136 = vmatpush2.bf16.msra.mxu0 %v4365
    %9137 = vmatprep.subr.bf16.mxu0 %v4358
    %9138 = vmatpush2.bf16.msra.mxu0 %v4357
    %9139 = vmatprep.subr.bf16.mxu0 %v4350
    %9140 = vmatpush2.bf16.msra.mxu0 %v4349
    %9141 = vmatprep.mubr.bf16.mxu0 %v8848
    %9142 = vmatmul.mubr.bf16.gmra.mxu0 %v8847
    %v9143 = vpop.f32.mrf.mxu0
    %v9144 = vadd.f32 %v3498, %v9143
    %v9145 = vpop.f32.mrf.mxu0
    %v9146 = vadd.f32 %v3502, %v9145
    %v9147 = vpop.f32.mrf.mxu0
    %v9148 = vadd.f32 %v3498, %v9147
    %v9149 = vpop.f32.mrf.mxu0
    %v9150 = vadd.f32 %v3502, %v9149
    %9151 = vdwg.mxu0
    %9152 = vmatprep.subr.bf16.mxu0 %v4470
    %9153 = vmatpush1.bf16.msra.mxu0 %v4469
    %9154 = vmatprep.subr.bf16.mxu0 %v4462
    %9155 = vmatpush1.bf16.msra.mxu0 %v4461
    %9156 = vmatprep.subr.bf16.mxu0 %v4454
    %9157 = vmatpush1.bf16.msra.mxu0 %v4453
    %9158 = vmatprep.subr.bf16.mxu0 %v4446
    %9159 = vmatpush1.bf16.msra.mxu0 %v4445
    %9160 = vmatprep.subr.bf16.mxu0 %v4438
    %9161 = vmatpush1.bf16.msra.mxu0 %v4437
    %9162 = vmatprep.subr.bf16.mxu0 %v4430
    %9163 = vmatpush1.bf16.msra.mxu0 %v4429
    %9164 = vmatprep.subr.bf16.mxu0 %v4422
    %9165 = vmatpush1.bf16.msra.mxu0 %v4421
    %9166 = vmatprep.subr.bf16.mxu0 %v4414
    %9167 = vmatpush1.bf16.msra.mxu0 %v4413
    %9168 = vmatprep.subr.bf16.mxu0 %v4534
    %9169 = vmatpush2.bf16.msra.mxu0 %v4533
    %9170 = vmatprep.subr.bf16.mxu0 %v4526
    %9171 = vmatpush2.bf16.msra.mxu0 %v4525
    %9172 = vmatprep.subr.bf16.mxu0 %v4518
    %9173 = vmatpush2.bf16.msra.mxu0 %v4517
    %9174 = vmatprep.subr.bf16.mxu0 %v4510
    %9175 = vmatpush2.bf16.msra.mxu0 %v4509
    %9176 = vmatprep.subr.bf16.mxu0 %v4502
    %9177 = vmatpush2.bf16.msra.mxu0 %v4501
    %9178 = vmatprep.subr.bf16.mxu0 %v4494
    %9179 = vmatpush2.bf16.msra.mxu0 %v4493
    %9180 = vmatprep.subr.bf16.mxu0 %v4486
    %9181 = vmatpush2.bf16.msra.mxu0 %v4485
    %9182 = vmatprep.subr.bf16.mxu0 %v4478
    %9183 = vmatpush2.bf16.msra.mxu0 %v4477
    %9184 = vmatprep.mubr.bf16.mxu0 %v8850
    %9185 = vmatmul.mubr.bf16.gmra.mxu0 %v8849
    %v9186 = vpop.f32.mrf.mxu0
    %v9187 = vadd.f32 %v9144, %v9186
    %v9188 = vpop.f32.mrf.mxu0
    %v9189 = vadd.f32 %v9146, %v9188
    %v9190 = vpop.f32.mrf.mxu0
    %v9191 = vadd.f32 %v9148, %v9190
    %v9192 = vpop.f32.mrf.mxu0
    %v9193 = vadd.f32 %v9150, %v9192
    %9194 = vdwg.mxu0
    %v9195 = vmax.f32 %v8929, 0.0
    %v9196 = vmax.f32 %v8931, 0.0
    %v9197 = vmax.f32 %v9015, 0.0
    %v9198 = vmax.f32 %v9017, 0.0
    %v9199 = vmax.f32 %v9101, 0.0
    %v9200 = vmax.f32 %v9103, 0.0
    %v9201 = vmax.f32 %v9187, 0.0
    %v9202 = vmax.f32 %v9189, 0.0
    %v9203 = vmax.f32 %v8933, 0.0
    %v9204 = vmax.f32 %v8935, 0.0
    %v9205 = vmax.f32 %v9019, 0.0
    %v9206 = vmax.f32 %v9021, 0.0
    %v9207 = vmax.f32 %v9105, 0.0
    %v9208 = vmax.f32 %v9107, 0.0
    %v9209 = vmax.f32 %v9191, 0.0
    %v9210 = vmax.f32 %v9193, 0.0
    %v9211 = vpack.c.bf16 %v9203, %v9195
    %v9212 = vpack.c.bf16 %v9204, %v9196
    %v9213 = vpack.c.bf16 %v9205, %v9197
    %v9214 = vpack.c.bf16 %v9206, %v9198
    %v9215 = vpack.c.bf16 %v9207, %v9199
    %v9216 = vpack.c.bf16 %v9208, %v9200
    %v9217 = vpack.c.bf16 %v9209, %v9201
    %v9218 = vpack.c.bf16 %v9210, %v9202
    %9219 = vmatprep.subr.bf16.mxu0 0
    %9220 = vmatpush1.bf16.msra.mxu0 %v5557
    %9221 = vmatprep.subr.bf16.mxu0 0
    %9222 = vmatpush1.bf16.msra.mxu0 %v5556
    %9223 = vmatprep.subr.bf16.mxu0 0
    %9224 = vmatpush1.bf16.msra.mxu0 %v5555
    %9225 = vmatprep.subr.bf16.mxu0 0
    %9226 = vmatpush1.bf16.msra.mxu0 %v5554
    %9227 = vmatprep.subr.bf16.mxu0 0
    %9228 = vmatpush1.bf16.msra.mxu0 %v5553
    %9229 = vmatprep.subr.bf16.mxu0 0
    %9230 = vmatpush1.bf16.msra.mxu0 %v5552
    %9231 = vmatprep.subr.bf16.mxu0 0
    %9232 = vmatpush1.bf16.msra.mxu0 %v5551
    %9233 = vmatprep.subr.bf16.mxu0 0
    %9234 = vmatpush1.bf16.msra.mxu0 %v5550
    %9235 = vmatprep.subr.bf16.mxu0 0
    %9236 = vmatpush2.bf16.msra.mxu0 %v5565
    %9237 = vmatprep.subr.bf16.mxu0 0
    %9238 = vmatpush2.bf16.msra.mxu0 %v5564
    %9239 = vmatprep.subr.bf16.mxu0 0
    %9240 = vmatpush2.bf16.msra.mxu0 %v5563
    %9241 = vmatprep.subr.bf16.mxu0 0
    %9242 = vmatpush2.bf16.msra.mxu0 %v5562
    %9243 = vmatprep.subr.bf16.mxu0 0
    %9244 = vmatpush2.bf16.msra.mxu0 %v5561
    %9245 = vmatprep.subr.bf16.mxu0 0
    %9246 = vmatpush2.bf16.msra.mxu0 %v5560
    %9247 = vmatprep.subr.bf16.mxu0 0
    %9248 = vmatpush2.bf16.msra.mxu0 %v5559
    %9249 = vmatprep.subr.bf16.mxu0 0
    %9250 = vmatpush2.bf16.msra.mxu0 %v5558
    %9251 = vmatprep.mubr.bf16.mxu0 %v9212
    %9252 = vmatmul.mubr.bf16.gmra.mxu0 %v9211
    %v9253 = vpop.f32.mrf.mxu0
    %v9254 = vadd.f32 %v5292, %v9253
    %v9255 = vpop.f32.mrf.mxu0
    %v9256 = vpop.f32.mrf.mxu0
    %v9257 = vadd.f32 %v5292, %v9256
    %v9258 = vpop.f32.mrf.mxu0
    %9259 = vdwg.mxu0
    %9260 = vmatprep.subr.bf16.mxu0 0
    %9261 = vmatpush1.bf16.msra.mxu0 %v5573
    %9262 = vmatprep.subr.bf16.mxu0 0
    %9263 = vmatpush1.bf16.msra.mxu0 %v5572
    %9264 = vmatprep.subr.bf16.mxu0 0
    %9265 = vmatpush1.bf16.msra.mxu0 %v5571
    %9266 = vmatprep.subr.bf16.mxu0 0
    %9267 = vmatpush1.bf16.msra.mxu0 %v5570
    %9268 = vmatprep.subr.bf16.mxu0 0
    %9269 = vmatpush1.bf16.msra.mxu0 %v5569
    %9270 = vmatprep.subr.bf16.mxu0 0
    %9271 = vmatpush1.bf16.msra.mxu0 %v5568
    %9272 = vmatprep.subr.bf16.mxu0 0
    %9273 = vmatpush1.bf16.msra.mxu0 %v5567
    %9274 = vmatprep.subr.bf16.mxu0 0
    %9275 = vmatpush1.bf16.msra.mxu0 %v5566
    %9276 = vmatprep.subr.bf16.mxu0 0
    %9277 = vmatpush2.bf16.msra.mxu0 %v5581
    %9278 = vmatprep.subr.bf16.mxu0 0
    %9279 = vmatpush2.bf16.msra.mxu0 %v5580
    %9280 = vmatprep.subr.bf16.mxu0 0
    %9281 = vmatpush2.bf16.msra.mxu0 %v5579
    %9282 = vmatprep.subr.bf16.mxu0 0
    %9283 = vmatpush2.bf16.msra.mxu0 %v5578
    %9284 = vmatprep.subr.bf16.mxu0 0
    %9285 = vmatpush2.bf16.msra.mxu0 %v5577
    %9286 = vmatprep.subr.bf16.mxu0 0
    %9287 = vmatpush2.bf16.msra.mxu0 %v5576
    %9288 = vmatprep.subr.bf16.mxu0 0
    %9289 = vmatpush2.bf16.msra.mxu0 %v5575
    %9290 = vmatprep.subr.bf16.mxu0 0
    %9291 = vmatpush2.bf16.msra.mxu0 %v5574
    %9292 = vmatprep.mubr.bf16.mxu0 %v9214
    %9293 = vmatmul.mubr.bf16.gmra.mxu0 %v9213
    %v9294 = vpop.f32.mrf.mxu0
    %v9295 = vadd.f32 %v9254, %v9294
    %v9296 = vpop.f32.mrf.mxu0
    %v9297 = vpop.f32.mrf.mxu0
    %v9298 = vadd.f32 %v9257, %v9297
    %v9299 = vpop.f32.mrf.mxu0
    %9300 = vdwg.mxu0
    %9301 = vmatprep.subr.bf16.mxu0 0
    %9302 = vmatpush1.bf16.msra.mxu0 %v5589
    %9303 = vmatprep.subr.bf16.mxu0 0
    %9304 = vmatpush1.bf16.msra.mxu0 %v5588
    %9305 = vmatprep.subr.bf16.mxu0 0
    %9306 = vmatpush1.bf16.msra.mxu0 %v5587
    %9307 = vmatprep.subr.bf16.mxu0 0
    %9308 = vmatpush1.bf16.msra.mxu0 %v5586
    %9309 = vmatprep.subr.bf16.mxu0 0
    %9310 = vmatpush1.bf16.msra.mxu0 %v5585
    %9311 = vmatprep.subr.bf16.mxu0 0
    %9312 = vmatpush1.bf16.msra.mxu0 %v5584
    %9313 = vmatprep.subr.bf16.mxu0 0
    %9314 = vmatpush1.bf16.msra.mxu0 %v5583
    %9315 = vmatprep.subr.bf16.mxu0 0
    %9316 = vmatpush1.bf16.msra.mxu0 %v5582
    %9317 = vmatprep.subr.bf16.mxu0 0
    %9318 = vmatpush2.bf16.msra.mxu0 %v5597
    %9319 = vmatprep.subr.bf16.mxu0 0
    %9320 = vmatpush2.bf16.msra.mxu0 %v5596
    %9321 = vmatprep.subr.bf16.mxu0 0
    %9322 = vmatpush2.bf16.msra.mxu0 %v5595
    %9323 = vmatprep.subr.bf16.mxu0 0
    %9324 = vmatpush2.bf16.msra.mxu0 %v5594
    %9325 = vmatprep.subr.bf16.mxu0 0
    %9326 = vmatpush2.bf16.msra.mxu0 %v5593
    %9327 = vmatprep.subr.bf16.mxu0 0
    %9328 = vmatpush2.bf16.msra.mxu0 %v5592
    %9329 = vmatprep.subr.bf16.mxu0 0
    %9330 = vmatpush2.bf16.msra.mxu0 %v5591
    %9331 = vmatprep.subr.bf16.mxu0 0
    %9332 = vmatpush2.bf16.msra.mxu0 %v5590
    %9333 = vmatprep.mubr.bf16.mxu0 %v9216
    %9334 = vmatmul.mubr.bf16.gmra.mxu0 %v9215
    %v9335 = vpop.f32.mrf.mxu0
    %v9336 = vadd.f32 %v9295, %v9335
    %v9337 = vpop.f32.mrf.mxu0
    %v9338 = vpop.f32.mrf.mxu0
    %v9339 = vadd.f32 %v9298, %v9338
    %v9340 = vpop.f32.mrf.mxu0
    %9341 = vdwg.mxu0
    %9342 = vmatprep.subr.bf16.mxu0 0
    %9343 = vmatpush1.bf16.msra.mxu0 %v5605
    %9344 = vmatprep.subr.bf16.mxu0 0
    %9345 = vmatpush1.bf16.msra.mxu0 %v5604
    %9346 = vmatprep.subr.bf16.mxu0 0
    %9347 = vmatpush1.bf16.msra.mxu0 %v5603
    %9348 = vmatprep.subr.bf16.mxu0 0
    %9349 = vmatpush1.bf16.msra.mxu0 %v5602
    %9350 = vmatprep.subr.bf16.mxu0 0
    %9351 = vmatpush1.bf16.msra.mxu0 %v5601
    %9352 = vmatprep.subr.bf16.mxu0 0
    %9353 = vmatpush1.bf16.msra.mxu0 %v5600
    %9354 = vmatprep.subr.bf16.mxu0 0
    %9355 = vmatpush1.bf16.msra.mxu0 %v5599
    %9356 = vmatprep.subr.bf16.mxu0 0
    %9357 = vmatpush1.bf16.msra.mxu0 %v5598
    %9358 = vmatprep.subr.bf16.mxu0 0
    %9359 = vmatpush2.bf16.msra.mxu0 %v5613
    %9360 = vmatprep.subr.bf16.mxu0 0
    %9361 = vmatpush2.bf16.msra.mxu0 %v5612
    %9362 = vmatprep.subr.bf16.mxu0 0
    %9363 = vmatpush2.bf16.msra.mxu0 %v5611
    %9364 = vmatprep.subr.bf16.mxu0 0
    %9365 = vmatpush2.bf16.msra.mxu0 %v5610
    %9366 = vmatprep.subr.bf16.mxu0 0
    %9367 = vmatpush2.bf16.msra.mxu0 %v5609
    %9368 = vmatprep.subr.bf16.mxu0 0
    %9369 = vmatpush2.bf16.msra.mxu0 %v5608
    %9370 = vmatprep.subr.bf16.mxu0 0
    %9371 = vmatpush2.bf16.msra.mxu0 %v5607
    %9372 = vmatprep.subr.bf16.mxu0 0
    %9373 = vmatpush2.bf16.msra.mxu0 %v5606
    %9374 = vmatprep.mubr.bf16.mxu0 %v9218
    %9375 = vmatmul.mubr.bf16.gmra.mxu0 %v9217
    %v9376 = vpop.f32.mrf.mxu0
    %v9377 = vadd.f32 %v9336, %v9376
    %v9378 = vpop.f32.mrf.mxu0
    %v9379 = vpop.f32.mrf.mxu0
    %v9380 = vadd.f32 %v9339, %v9379
    %v9381 = vpop.f32.mrf.mxu0
    %9382 = vdwg.mxu0
    %v9383 = vxor.u32 %v9377, 2147483648
    %v9384 = vxor.u32 %v9380, 2147483648
    %v9385 = vmul.f32 %v9383, 1.442695
    %v9386 = vpow.pop %v9385
    %v9387 = vmul.f32 %v9384, 1.442695
    %v9388 = vpow.pop %v9387
    %v9389 = vadd.f32 %v9386, 1.0
    %v9390 = vadd.f32 %v9388, 1.0
    %v9391 = vrcp.pop %v9389
    %v9392 = vmul.f32 1.0, %v9391
    %v9393 = vrcp.pop %v9390
    %v9394 = vmul.f32 1.0, %v9393
    %v9395 = vsub.f32 %v9392, %v154
    %v9396 = vsub.f32 %v9394, %v155
    %v9397 = vpack.c.bf16 %v9396, %v9395
    %9398 = vmatprep.subr.bf16.mxu0 %v6170
    %9399 = vmatpush1.bf16.msra.mxu0 %v6169
    %9400 = vmatprep.subr.bf16.mxu0 %v6162
    %9401 = vmatpush1.bf16.msra.mxu0 %v6161
    %9402 = vmatprep.subr.bf16.mxu0 %v6154
    %9403 = vmatpush1.bf16.msra.mxu0 %v6153
    %9404 = vmatprep.subr.bf16.mxu0 %v6146
    %9405 = vmatpush1.bf16.msra.mxu0 %v6145
    %9406 = vmatprep.subr.bf16.mxu0 %v6138
    %9407 = vmatpush1.bf16.msra.mxu0 %v6137
    %9408 = vmatprep.subr.bf16.mxu0 %v6130
    %9409 = vmatpush1.bf16.msra.mxu0 %v6129
    %9410 = vmatprep.subr.bf16.mxu0 %v6122
    %9411 = vmatpush1.bf16.msra.mxu0 %v6121
    %9412 = vmatprep.subr.bf16.mxu0 %v6114
    %9413 = vmatpush1.bf16.msra.mxu0 %v6113
    %9414 = vmatprep.subr.bf16.mxu0 0
    %9415 = vmatpush2.bf16.msra.mxu0 0
    %9416 = vmatprep.subr.bf16.mxu0 0
    %9417 = vmatpush2.bf16.msra.mxu0 0
    %9418 = vmatprep.subr.bf16.mxu0 0
    %9419 = vmatpush2.bf16.msra.mxu0 0
    %9420 = vmatprep.subr.bf16.mxu0 0
    %9421 = vmatpush2.bf16.msra.mxu0 0
    %9422 = vmatprep.subr.bf16.mxu0 0
    %9423 = vmatpush2.bf16.msra.mxu0 0
    %9424 = vmatprep.subr.bf16.mxu0 0
    %9425 = vmatpush2.bf16.msra.mxu0 0
    %9426 = vmatprep.subr.bf16.mxu0 0
    %9427 = vmatpush2.bf16.msra.mxu0 0
    %9428 = vmatprep.subr.bf16.mxu0 0
    %9429 = vmatpush2.bf16.msra.mxu0 0
    %9430 = vmatprep.mubr.bf16.mxu0 0
    %9431 = vmatmul.mubr.bf16.gmra.mxu0 %v9397
    %v9432 = vpop.f32.mrf.mxu0
    %v9433 = vadd.f32 0.0, %v9432
    %v9434 = vpop.f32.mrf.mxu0
    %v9435 = vadd.f32 0.0, %v9434
    %v9436 = vpop.f32.mrf.mxu0
    %v9437 = vadd.f32 0.0, %v9436
    %v9438 = vpop.f32.mrf.mxu0
    %v9439 = vadd.f32 0.0, %v9438
    %9440 = vdwg.mxu0
    %9441 = vmatprep.subr.bf16.mxu0 %v6172
    %9442 = vmatpush1.bf16.msra.mxu0 %v6171
    %9443 = vmatprep.subr.bf16.mxu0 %v6164
    %9444 = vmatpush1.bf16.msra.mxu0 %v6163
    %9445 = vmatprep.subr.bf16.mxu0 %v6156
    %9446 = vmatpush1.bf16.msra.mxu0 %v6155
    %9447 = vmatprep.subr.bf16.mxu0 %v6148
    %9448 = vmatpush1.bf16.msra.mxu0 %v6147
    %9449 = vmatprep.subr.bf16.mxu0 %v6140
    %9450 = vmatpush1.bf16.msra.mxu0 %v6139
    %9451 = vmatprep.subr.bf16.mxu0 %v6132
    %9452 = vmatpush1.bf16.msra.mxu0 %v6131
    %9453 = vmatprep.subr.bf16.mxu0 %v6124
    %9454 = vmatpush1.bf16.msra.mxu0 %v6123
    %9455 = vmatprep.subr.bf16.mxu0 %v6116
    %9456 = vmatpush1.bf16.msra.mxu0 %v6115
    %9457 = vmatprep.subr.bf16.mxu0 0
    %9458 = vmatpush2.bf16.msra.mxu0 0
    %9459 = vmatprep.subr.bf16.mxu0 0
    %9460 = vmatpush2.bf16.msra.mxu0 0
    %9461 = vmatprep.subr.bf16.mxu0 0
    %9462 = vmatpush2.bf16.msra.mxu0 0
    %9463 = vmatprep.subr.bf16.mxu0 0
    %9464 = vmatpush2.bf16.msra.mxu0 0
    %9465 = vmatprep.subr.bf16.mxu0 0
    %9466 = vmatpush2.bf16.msra.mxu0 0
    %9467 = vmatprep.subr.bf16.mxu0 0
    %9468 = vmatpush2.bf16.msra.mxu0 0
    %9469 = vmatprep.subr.bf16.mxu0 0
    %9470 = vmatpush2.bf16.msra.mxu0 0
    %9471 = vmatprep.subr.bf16.mxu0 0
    %9472 = vmatpush2.bf16.msra.mxu0 0
    %9473 = vmatprep.mubr.bf16.mxu0 0
    %9474 = vmatmul.mubr.bf16.gmra.mxu0 %v9397
    %v9475 = vpop.f32.mrf.mxu0
    %v9476 = vadd.f32 0.0, %v9475
    %v9477 = vpop.f32.mrf.mxu0
    %v9478 = vadd.f32 0.0, %v9477
    %v9479 = vpop.f32.mrf.mxu0
    %v9480 = vadd.f32 0.0, %v9479
    %v9481 = vpop.f32.mrf.mxu0
    %v9482 = vadd.f32 0.0, %v9481
    %9483 = vdwg.mxu0
    %9484 = vmatprep.subr.bf16.mxu0 %v6174
    %9485 = vmatpush1.bf16.msra.mxu0 %v6173
    %9486 = vmatprep.subr.bf16.mxu0 %v6166
    %9487 = vmatpush1.bf16.msra.mxu0 %v6165
    %9488 = vmatprep.subr.bf16.mxu0 %v6158
    %9489 = vmatpush1.bf16.msra.mxu0 %v6157
    %9490 = vmatprep.subr.bf16.mxu0 %v6150
    %9491 = vmatpush1.bf16.msra.mxu0 %v6149
    %9492 = vmatprep.subr.bf16.mxu0 %v6142
    %9493 = vmatpush1.bf16.msra.mxu0 %v6141
    %9494 = vmatprep.subr.bf16.mxu0 %v6134
    %9495 = vmatpush1.bf16.msra.mxu0 %v6133
    %9496 = vmatprep.subr.bf16.mxu0 %v6126
    %9497 = vmatpush1.bf16.msra.mxu0 %v6125
    %9498 = vmatprep.subr.bf16.mxu0 %v6118
    %9499 = vmatpush1.bf16.msra.mxu0 %v6117
    %9500 = vmatprep.subr.bf16.mxu0 0
    %9501 = vmatpush2.bf16.msra.mxu0 0
    %9502 = vmatprep.subr.bf16.mxu0 0
    %9503 = vmatpush2.bf16.msra.mxu0 0
    %9504 = vmatprep.subr.bf16.mxu0 0
    %9505 = vmatpush2.bf16.msra.mxu0 0
    %9506 = vmatprep.subr.bf16.mxu0 0
    %9507 = vmatpush2.bf16.msra.mxu0 0
    %9508 = vmatprep.subr.bf16.mxu0 0
    %9509 = vmatpush2.bf16.msra.mxu0 0
    %9510 = vmatprep.subr.bf16.mxu0 0
    %9511 = vmatpush2.bf16.msra.mxu0 0
    %9512 = vmatprep.subr.bf16.mxu0 0
    %9513 = vmatpush2.bf16.msra.mxu0 0
    %9514 = vmatprep.subr.bf16.mxu0 0
    %9515 = vmatpush2.bf16.msra.mxu0 0
    %9516 = vmatprep.mubr.bf16.mxu0 0
    %9517 = vmatmul.mubr.bf16.gmra.mxu0 %v9397
    %v9518 = vpop.f32.mrf.mxu0
    %v9519 = vadd.f32 0.0, %v9518
    %v9520 = vpop.f32.mrf.mxu0
    %v9521 = vadd.f32 0.0, %v9520
    %v9522 = vpop.f32.mrf.mxu0
    %v9523 = vadd.f32 0.0, %v9522
    %v9524 = vpop.f32.mrf.mxu0
    %v9525 = vadd.f32 0.0, %v9524
    %9526 = vdwg.mxu0
    %9527 = vmatprep.subr.bf16.mxu0 %v6176
    %9528 = vmatpush1.bf16.msra.mxu0 %v6175
    %9529 = vmatprep.subr.bf16.mxu0 %v6168
    %9530 = vmatpush1.bf16.msra.mxu0 %v6167
    %9531 = vmatprep.subr.bf16.mxu0 %v6160
    %9532 = vmatpush1.bf16.msra.mxu0 %v6159
    %9533 = vmatprep.subr.bf16.mxu0 %v6152
    %9534 = vmatpush1.bf16.msra.mxu0 %v6151
    %9535 = vmatprep.subr.bf16.mxu0 %v6144
    %9536 = vmatpush1.bf16.msra.mxu0 %v6143
    %9537 = vmatprep.subr.bf16.mxu0 %v6136
    %9538 = vmatpush1.bf16.msra.mxu0 %v6135
    %9539 = vmatprep.subr.bf16.mxu0 %v6128
    %9540 = vmatpush1.bf16.msra.mxu0 %v6127
    %9541 = vmatprep.subr.bf16.mxu0 %v6120
    %9542 = vmatpush1.bf16.msra.mxu0 %v6119
    %9543 = vmatprep.subr.bf16.mxu0 0
    %9544 = vmatpush2.bf16.msra.mxu0 0
    %9545 = vmatprep.subr.bf16.mxu0 0
    %9546 = vmatpush2.bf16.msra.mxu0 0
    %9547 = vmatprep.subr.bf16.mxu0 0
    %9548 = vmatpush2.bf16.msra.mxu0 0
    %9549 = vmatprep.subr.bf16.mxu0 0
    %9550 = vmatpush2.bf16.msra.mxu0 0
    %9551 = vmatprep.subr.bf16.mxu0 0
    %9552 = vmatpush2.bf16.msra.mxu0 0
    %9553 = vmatprep.subr.bf16.mxu0 0
    %9554 = vmatpush2.bf16.msra.mxu0 0
    %9555 = vmatprep.subr.bf16.mxu0 0
    %9556 = vmatpush2.bf16.msra.mxu0 0
    %9557 = vmatprep.subr.bf16.mxu0 0
    %9558 = vmatpush2.bf16.msra.mxu0 0
    %9559 = vmatprep.mubr.bf16.mxu0 0
    %9560 = vmatmul.mubr.bf16.gmra.mxu0 %v9397
    %v9561 = vpop.f32.mrf.mxu0
    %v9562 = vadd.f32 0.0, %v9561
    %v9563 = vpop.f32.mrf.mxu0
    %v9564 = vadd.f32 0.0, %v9563
    %v9565 = vpop.f32.mrf.mxu0
    %v9566 = vadd.f32 0.0, %v9565
    %v9567 = vpop.f32.mrf.mxu0
    %v9568 = vadd.f32 0.0, %v9567
    %9569 = vdwg.mxu0
    %vm9570 = vcmp.gt.f32.partialorder %v9195, 0.0
    %vm9571 = vcmp.gt.f32.partialorder %v9196, 0.0
    %vm9572 = vcmp.gt.f32.partialorder %v9197, 0.0
    %vm9573 = vcmp.gt.f32.partialorder %v9198, 0.0
    %vm9574 = vcmp.gt.f32.partialorder %v9199, 0.0
    %vm9575 = vcmp.gt.f32.partialorder %v9200, 0.0
    %vm9576 = vcmp.gt.f32.partialorder %v9201, 0.0
    %vm9577 = vcmp.gt.f32.partialorder %v9202, 0.0
    %vm9578 = vcmp.gt.f32.partialorder %v9203, 0.0
    %vm9579 = vcmp.gt.f32.partialorder %v9204, 0.0
    %vm9580 = vcmp.gt.f32.partialorder %v9205, 0.0
    %vm9581 = vcmp.gt.f32.partialorder %v9206, 0.0
    %vm9582 = vcmp.gt.f32.partialorder %v9207, 0.0
    %vm9583 = vcmp.gt.f32.partialorder %v9208, 0.0
    %vm9584 = vcmp.gt.f32.partialorder %v9209, 0.0
    %vm9585 = vcmp.gt.f32.partialorder %v9210, 0.0
    %v9586 = vsel %vm9570, 1, 0
    %v9587 = vsel %vm9571, 1, 0
    %v9588 = vsel %vm9572, 1, 0
    %v9589 = vsel %vm9573, 1, 0
    %v9590 = vsel %vm9574, 1, 0
    %v9591 = vsel %vm9575, 1, 0
    %v9592 = vsel %vm9576, 1, 0
    %v9593 = vsel %vm9577, 1, 0
    %v9594 = vsel %vm9578, 1, 0
    %v9595 = vsel %vm9579, 1, 0
    %v9596 = vsel %vm9580, 1, 0
    %v9597 = vsel %vm9581, 1, 0
    %v9598 = vsel %vm9582, 1, 0
    %v9599 = vsel %vm9583, 1, 0
    %v9600 = vsel %vm9584, 1, 0
    %v9601 = vsel %vm9585, 1, 0
    %v9602 = vcvt.s32.f32 %v9586
    %v9603 = vcvt.s32.f32 %v9587
    %v9604 = vcvt.s32.f32 %v9588
    %v9605 = vcvt.s32.f32 %v9589
    %v9606 = vcvt.s32.f32 %v9590
    %v9607 = vcvt.s32.f32 %v9591
    %v9608 = vcvt.s32.f32 %v9592
    %v9609 = vcvt.s32.f32 %v9593
    %v9610 = vcvt.s32.f32 %v9594
    %v9611 = vcvt.s32.f32 %v9595
    %v9612 = vcvt.s32.f32 %v9596
    %v9613 = vcvt.s32.f32 %v9597
    %v9614 = vcvt.s32.f32 %v9598
    %v9615 = vcvt.s32.f32 %v9599
    %v9616 = vcvt.s32.f32 %v9600
    %v9617 = vcvt.s32.f32 %v9601
    %v9618 = vmul.f32 %v9433, %v9602
    %v9619 = vmul.f32 %v9435, %v9603
    %v9620 = vmul.f32 %v9476, %v9604
    %v9621 = vmul.f32 %v9478, %v9605
    %v9622 = vmul.f32 %v9519, %v9606
    %v9623 = vmul.f32 %v9521, %v9607
    %v9624 = vmul.f32 %v9562, %v9608
    %v9625 = vmul.f32 %v9564, %v9609
    %v9626 = vmul.f32 %v9437, %v9610
    %v9627 = vmul.f32 %v9439, %v9611
    %v9628 = vmul.f32 %v9480, %v9612
    %v9629 = vmul.f32 %v9482, %v9613
    %v9630 = vmul.f32 %v9523, %v9614
    %v9631 = vmul.f32 %v9525, %v9615
    %v9632 = vmul.f32 %v9566, %v9616
    %v9633 = vmul.f32 %v9568, %v9617
    %v9634 = vpack.c.bf16 %v9626, %v9618
    %v9635 = vpack.c.bf16 %v9627, %v9619
    %v9636 = vpack.c.bf16 %v9628, %v9620
    %v9637 = vpack.c.bf16 %v9629, %v9621
    %v9638 = vpack.c.bf16 %v9630, %v9622
    %v9639 = vpack.c.bf16 %v9631, %v9623
    %v9640 = vpack.c.bf16 %v9632, %v9624
    %v9641 = vpack.c.bf16 %v9633, %v9625
    %9642 = vmatprep.subr.bf16.mxu0 %v7538
    %9643 = vmatpush1.bf16.msra.mxu0 %v7537
    %9644 = vmatprep.subr.bf16.mxu0 %v7534
    %9645 = vmatpush1.bf16.msra.mxu0 %v7533
    %9646 = vmatprep.subr.bf16.mxu0 %v7530
    %9647 = vmatpush1.bf16.msra.mxu0 %v7529
    %9648 = vmatprep.subr.bf16.mxu0 %v7526
    %9649 = vmatpush1.bf16.msra.mxu0 %v7525
    %9650 = vmatprep.subr.bf16.mxu0 %v7522
    %9651 = vmatpush1.bf16.msra.mxu0 %v7521
    %9652 = vmatprep.subr.bf16.mxu0 %v7518
    %9653 = vmatpush1.bf16.msra.mxu0 %v7517
    %9654 = vmatprep.subr.bf16.mxu0 %v7514
    %9655 = vmatpush1.bf16.msra.mxu0 %v7513
    %9656 = vmatprep.subr.bf16.mxu0 %v7510
    %9657 = vmatpush1.bf16.msra.mxu0 %v7509
    %9658 = vmatprep.subr.bf16.mxu0 %v7570
    %9659 = vmatpush2.bf16.msra.mxu0 %v7569
    %9660 = vmatprep.subr.bf16.mxu0 %v7566
    %9661 = vmatpush2.bf16.msra.mxu0 %v7565
    %9662 = vmatprep.subr.bf16.mxu0 %v7562
    %9663 = vmatpush2.bf16.msra.mxu0 %v7561
    %9664 = vmatprep.subr.bf16.mxu0 %v7558
    %9665 = vmatpush2.bf16.msra.mxu0 %v7557
    %9666 = vmatprep.subr.bf16.mxu0 %v7554
    %9667 = vmatpush2.bf16.msra.mxu0 %v7553
    %9668 = vmatprep.subr.bf16.mxu0 %v7550
    %9669 = vmatpush2.bf16.msra.mxu0 %v7549
    %9670 = vmatprep.subr.bf16.mxu0 %v7546
    %9671 = vmatpush2.bf16.msra.mxu0 %v7545
    %9672 = vmatprep.subr.bf16.mxu0 %v7542
    %9673 = vmatpush2.bf16.msra.mxu0 %v7541
    %9674 = vmatprep.mubr.bf16.mxu0 %v9635
    %9675 = vmatmul.mubr.bf16.gmra.mxu0 %v9634
    %v9676 = vpop.f32.mrf.mxu0
    %v9677 = vadd.f32 0.0, %v9676
    %v9678 = vpop.f32.mrf.mxu0
    %v9679 = vadd.f32 0.0, %v9678
    %v9680 = vpop.f32.mrf.mxu0
    %v9681 = vadd.f32 0.0, %v9680
    %v9682 = vpop.f32.mrf.mxu0
    %v9683 = vadd.f32 0.0, %v9682
    %9684 = vdwg.mxu0
    %9685 = vmatprep.subr.bf16.mxu0 %v7602
    %9686 = vmatpush1.bf16.msra.mxu0 %v7601
    %9687 = vmatprep.subr.bf16.mxu0 %v7598
    %9688 = vmatpush1.bf16.msra.mxu0 %v7597
    %9689 = vmatprep.subr.bf16.mxu0 %v7594
    %9690 = vmatpush1.bf16.msra.mxu0 %v7593
    %9691 = vmatprep.subr.bf16.mxu0 %v7590
    %9692 = vmatpush1.bf16.msra.mxu0 %v7589
    %9693 = vmatprep.subr.bf16.mxu0 %v7586
    %9694 = vmatpush1.bf16.msra.mxu0 %v7585
    %9695 = vmatprep.subr.bf16.mxu0 %v7582
    %9696 = vmatpush1.bf16.msra.mxu0 %v7581
    %9697 = vmatprep.subr.bf16.mxu0 %v7578
    %9698 = vmatpush1.bf16.msra.mxu0 %v7577
    %9699 = vmatprep.subr.bf16.mxu0 %v7574
    %9700 = vmatpush1.bf16.msra.mxu0 %v7573
    %9701 = vmatprep.subr.bf16.mxu0 %v7634
    %9702 = vmatpush2.bf16.msra.mxu0 %v7633
    %9703 = vmatprep.subr.bf16.mxu0 %v7630
    %9704 = vmatpush2.bf16.msra.mxu0 %v7629
    %9705 = vmatprep.subr.bf16.mxu0 %v7626
    %9706 = vmatpush2.bf16.msra.mxu0 %v7625
    %9707 = vmatprep.subr.bf16.mxu0 %v7622
    %9708 = vmatpush2.bf16.msra.mxu0 %v7621
    %9709 = vmatprep.subr.bf16.mxu0 %v7618
    %9710 = vmatpush2.bf16.msra.mxu0 %v7617
    %9711 = vmatprep.subr.bf16.mxu0 %v7614
    %9712 = vmatpush2.bf16.msra.mxu0 %v7613
    %9713 = vmatprep.subr.bf16.mxu0 %v7610
    %9714 = vmatpush2.bf16.msra.mxu0 %v7609
    %9715 = vmatprep.subr.bf16.mxu0 %v7606
    %9716 = vmatpush2.bf16.msra.mxu0 %v7605
    %9717 = vmatprep.mubr.bf16.mxu0 %v9637
    %9718 = vmatmul.mubr.bf16.gmra.mxu0 %v9636
    %v9719 = vpop.f32.mrf.mxu0
    %v9720 = vadd.f32 %v9677, %v9719
    %v9721 = vpop.f32.mrf.mxu0
    %v9722 = vadd.f32 %v9679, %v9721
    %v9723 = vpop.f32.mrf.mxu0
    %v9724 = vadd.f32 %v9681, %v9723
    %v9725 = vpop.f32.mrf.mxu0
    %v9726 = vadd.f32 %v9683, %v9725
    %9727 = vdwg.mxu0
    %9728 = vmatprep.subr.bf16.mxu0 %v7666
    %9729 = vmatpush1.bf16.msra.mxu0 %v7665
    %9730 = vmatprep.subr.bf16.mxu0 %v7662
    %9731 = vmatpush1.bf16.msra.mxu0 %v7661
    %9732 = vmatprep.subr.bf16.mxu0 %v7658
    %9733 = vmatpush1.bf16.msra.mxu0 %v7657
    %9734 = vmatprep.subr.bf16.mxu0 %v7654
    %9735 = vmatpush1.bf16.msra.mxu0 %v7653
    %9736 = vmatprep.subr.bf16.mxu0 %v7650
    %9737 = vmatpush1.bf16.msra.mxu0 %v7649
    %9738 = vmatprep.subr.bf16.mxu0 %v7646
    %9739 = vmatpush1.bf16.msra.mxu0 %v7645
    %9740 = vmatprep.subr.bf16.mxu0 %v7642
    %9741 = vmatpush1.bf16.msra.mxu0 %v7641
    %9742 = vmatprep.subr.bf16.mxu0 %v7638
    %9743 = vmatpush1.bf16.msra.mxu0 %v7637
    %9744 = vmatprep.subr.bf16.mxu0 %v7698
    %9745 = vmatpush2.bf16.msra.mxu0 %v7697
    %9746 = vmatprep.subr.bf16.mxu0 %v7694
    %9747 = vmatpush2.bf16.msra.mxu0 %v7693
    %9748 = vmatprep.subr.bf16.mxu0 %v7690
    %9749 = vmatpush2.bf16.msra.mxu0 %v7689
    %9750 = vmatprep.subr.bf16.mxu0 %v7686
    %9751 = vmatpush2.bf16.msra.mxu0 %v7685
    %9752 = vmatprep.subr.bf16.mxu0 %v7682
    %9753 = vmatpush2.bf16.msra.mxu0 %v7681
    %9754 = vmatprep.subr.bf16.mxu0 %v7678
    %9755 = vmatpush2.bf16.msra.mxu0 %v7677
    %9756 = vmatprep.subr.bf16.mxu0 %v7674
    %9757 = vmatpush2.bf16.msra.mxu0 %v7673
    %9758 = vmatprep.subr.bf16.mxu0 %v7670
    %9759 = vmatpush2.bf16.msra.mxu0 %v7669
    %9760 = vmatprep.mubr.bf16.mxu0 %v9639
    %9761 = vmatmul.mubr.bf16.gmra.mxu0 %v9638
    %v9762 = vpop.f32.mrf.mxu0
    %v9763 = vadd.f32 %v9720, %v9762
    %v9764 = vpop.f32.mrf.mxu0
    %v9765 = vadd.f32 %v9722, %v9764
    %v9766 = vpop.f32.mrf.mxu0
    %v9767 = vadd.f32 %v9724, %v9766
    %v9768 = vpop.f32.mrf.mxu0
    %v9769 = vadd.f32 %v9726, %v9768
    %9770 = vdwg.mxu0
    %9771 = vmatprep.subr.bf16.mxu0 %v7730
    %9772 = vmatpush1.bf16.msra.mxu0 %v7729
    %9773 = vmatprep.subr.bf16.mxu0 %v7726
    %9774 = vmatpush1.bf16.msra.mxu0 %v7725
    %9775 = vmatprep.subr.bf16.mxu0 %v7722
    %9776 = vmatpush1.bf16.msra.mxu0 %v7721
    %9777 = vmatprep.subr.bf16.mxu0 %v7718
    %9778 = vmatpush1.bf16.msra.mxu0 %v7717
    %9779 = vmatprep.subr.bf16.mxu0 %v7714
    %9780 = vmatpush1.bf16.msra.mxu0 %v7713
    %9781 = vmatprep.subr.bf16.mxu0 %v7710
    %9782 = vmatpush1.bf16.msra.mxu0 %v7709
    %9783 = vmatprep.subr.bf16.mxu0 %v7706
    %9784 = vmatpush1.bf16.msra.mxu0 %v7705
    %9785 = vmatprep.subr.bf16.mxu0 %v7702
    %9786 = vmatpush1.bf16.msra.mxu0 %v7701
    %9787 = vmatprep.subr.bf16.mxu0 %v7762
    %9788 = vmatpush2.bf16.msra.mxu0 %v7761
    %9789 = vmatprep.subr.bf16.mxu0 %v7758
    %9790 = vmatpush2.bf16.msra.mxu0 %v7757
    %9791 = vmatprep.subr.bf16.mxu0 %v7754
    %9792 = vmatpush2.bf16.msra.mxu0 %v7753
    %9793 = vmatprep.subr.bf16.mxu0 %v7750
    %9794 = vmatpush2.bf16.msra.mxu0 %v7749
    %9795 = vmatprep.subr.bf16.mxu0 %v7746
    %9796 = vmatpush2.bf16.msra.mxu0 %v7745
    %9797 = vmatprep.subr.bf16.mxu0 %v7742
    %9798 = vmatpush2.bf16.msra.mxu0 %v7741
    %9799 = vmatprep.subr.bf16.mxu0 %v7738
    %9800 = vmatpush2.bf16.msra.mxu0 %v7737
    %9801 = vmatprep.subr.bf16.mxu0 %v7734
    %9802 = vmatpush2.bf16.msra.mxu0 %v7733
    %9803 = vmatprep.mubr.bf16.mxu0 %v9641
    %9804 = vmatmul.mubr.bf16.gmra.mxu0 %v9640
    %v9805 = vpop.f32.mrf.mxu0
    %v9806 = vadd.f32 %v9763, %v9805
    %v9807 = vpop.f32.mrf.mxu0
    %v9808 = vadd.f32 %v9765, %v9807
    %v9809 = vpop.f32.mrf.mxu0
    %v9810 = vadd.f32 %v9767, %v9809
    %v9811 = vpop.f32.mrf.mxu0
    %v9812 = vadd.f32 %v9769, %v9811
    %9813 = vdwg.mxu0
    %9814 = vmatprep.subr.bf16.mxu0 %v7540
    %9815 = vmatpush1.bf16.msra.mxu0 %v7539
    %9816 = vmatprep.subr.bf16.mxu0 %v7536
    %9817 = vmatpush1.bf16.msra.mxu0 %v7535
    %9818 = vmatprep.subr.bf16.mxu0 %v7532
    %9819 = vmatpush1.bf16.msra.mxu0 %v7531
    %9820 = vmatprep.subr.bf16.mxu0 %v7528
    %9821 = vmatpush1.bf16.msra.mxu0 %v7527
    %9822 = vmatprep.subr.bf16.mxu0 %v7524
    %9823 = vmatpush1.bf16.msra.mxu0 %v7523
    %9824 = vmatprep.subr.bf16.mxu0 %v7520
    %9825 = vmatpush1.bf16.msra.mxu0 %v7519
    %9826 = vmatprep.subr.bf16.mxu0 %v7516
    %9827 = vmatpush1.bf16.msra.mxu0 %v7515
    %9828 = vmatprep.subr.bf16.mxu0 %v7512
    %9829 = vmatpush1.bf16.msra.mxu0 %v7511
    %9830 = vmatprep.subr.bf16.mxu0 %v7572
    %9831 = vmatpush2.bf16.msra.mxu0 %v7571
    %9832 = vmatprep.subr.bf16.mxu0 %v7568
    %9833 = vmatpush2.bf16.msra.mxu0 %v7567
    %9834 = vmatprep.subr.bf16.mxu0 %v7564
    %9835 = vmatpush2.bf16.msra.mxu0 %v7563
    %9836 = vmatprep.subr.bf16.mxu0 %v7560
    %9837 = vmatpush2.bf16.msra.mxu0 %v7559
    %9838 = vmatprep.subr.bf16.mxu0 %v7556
    %9839 = vmatpush2.bf16.msra.mxu0 %v7555
    %9840 = vmatprep.subr.bf16.mxu0 %v7552
    %9841 = vmatpush2.bf16.msra.mxu0 %v7551
    %9842 = vmatprep.subr.bf16.mxu0 %v7548
    %9843 = vmatpush2.bf16.msra.mxu0 %v7547
    %9844 = vmatprep.subr.bf16.mxu0 %v7544
    %9845 = vmatpush2.bf16.msra.mxu0 %v7543
    %9846 = vmatprep.mubr.bf16.mxu0 %v9635
    %9847 = vmatmul.mubr.bf16.gmra.mxu0 %v9634
    %v9848 = vpop.f32.mrf.mxu0
    %v9849 = vadd.f32 0.0, %v9848
    %v9850 = vpop.f32.mrf.mxu0
    %v9851 = vadd.f32 0.0, %v9850
    %v9852 = vpop.f32.mrf.mxu0
    %v9853 = vadd.f32 0.0, %v9852
    %v9854 = vpop.f32.mrf.mxu0
    %v9855 = vadd.f32 0.0, %v9854
    %9856 = vdwg.mxu0
    %9857 = vmatprep.subr.bf16.mxu0 %v7604
    %9858 = vmatpush1.bf16.msra.mxu0 %v7603
    %9859 = vmatprep.subr.bf16.mxu0 %v7600
    %9860 = vmatpush1.bf16.msra.mxu0 %v7599
    %9861 = vmatprep.subr.bf16.mxu0 %v7596
    %9862 = vmatpush1.bf16.msra.mxu0 %v7595
    %9863 = vmatprep.subr.bf16.mxu0 %v7592
    %9864 = vmatpush1.bf16.msra.mxu0 %v7591
    %9865 = vmatprep.subr.bf16.mxu0 %v7588
    %9866 = vmatpush1.bf16.msra.mxu0 %v7587
    %9867 = vmatprep.subr.bf16.mxu0 %v7584
    %9868 = vmatpush1.bf16.msra.mxu0 %v7583
    %9869 = vmatprep.subr.bf16.mxu0 %v7580
    %9870 = vmatpush1.bf16.msra.mxu0 %v7579
    %9871 = vmatprep.subr.bf16.mxu0 %v7576
    %9872 = vmatpush1.bf16.msra.mxu0 %v7575
    %9873 = vmatprep.subr.bf16.mxu0 %v7636
    %9874 = vmatpush2.bf16.msra.mxu0 %v7635
    %9875 = vmatprep.subr.bf16.mxu0 %v7632
    %9876 = vmatpush2.bf16.msra.mxu0 %v7631
    %9877 = vmatprep.subr.bf16.mxu0 %v7628
    %9878 = vmatpush2.bf16.msra.mxu0 %v7627
    %9879 = vmatprep.subr.bf16.mxu0 %v7624
    %9880 = vmatpush2.bf16.msra.mxu0 %v7623
    %9881 = vmatprep.subr.bf16.mxu0 %v7620
    %9882 = vmatpush2.bf16.msra.mxu0 %v7619
    %9883 = vmatprep.subr.bf16.mxu0 %v7616
    %9884 = vmatpush2.bf16.msra.mxu0 %v7615
    %9885 = vmatprep.subr.bf16.mxu0 %v7612
    %9886 = vmatpush2.bf16.msra.mxu0 %v7611
    %9887 = vmatprep.subr.bf16.mxu0 %v7608
    %9888 = vmatpush2.bf16.msra.mxu0 %v7607
    %9889 = vmatprep.mubr.bf16.mxu0 %v9637
    %9890 = vmatmul.mubr.bf16.gmra.mxu0 %v9636
    %v9891 = vpop.f32.mrf.mxu0
    %v9892 = vadd.f32 %v9849, %v9891
    %v9893 = vpop.f32.mrf.mxu0
    %v9894 = vadd.f32 %v9851, %v9893
    %v9895 = vpop.f32.mrf.mxu0
    %v9896 = vadd.f32 %v9853, %v9895
    %v9897 = vpop.f32.mrf.mxu0
    %v9898 = vadd.f32 %v9855, %v9897
    %9899 = vdwg.mxu0
    %9900 = vmatprep.subr.bf16.mxu0 %v7668
    %9901 = vmatpush1.bf16.msra.mxu0 %v7667
    %9902 = vmatprep.subr.bf16.mxu0 %v7664
    %9903 = vmatpush1.bf16.msra.mxu0 %v7663
    %9904 = vmatprep.subr.bf16.mxu0 %v7660
    %9905 = vmatpush1.bf16.msra.mxu0 %v7659
    %9906 = vmatprep.subr.bf16.mxu0 %v7656
    %9907 = vmatpush1.bf16.msra.mxu0 %v7655
    %9908 = vmatprep.subr.bf16.mxu0 %v7652
    %9909 = vmatpush1.bf16.msra.mxu0 %v7651
    %9910 = vmatprep.subr.bf16.mxu0 %v7648
    %9911 = vmatpush1.bf16.msra.mxu0 %v7647
    %9912 = vmatprep.subr.bf16.mxu0 %v7644
    %9913 = vmatpush1.bf16.msra.mxu0 %v7643
    %9914 = vmatprep.subr.bf16.mxu0 %v7640
    %9915 = vmatpush1.bf16.msra.mxu0 %v7639
    %9916 = vmatprep.subr.bf16.mxu0 %v7700
    %9917 = vmatpush2.bf16.msra.mxu0 %v7699
    %9918 = vmatprep.subr.bf16.mxu0 %v7696
    %9919 = vmatpush2.bf16.msra.mxu0 %v7695
    %9920 = vmatprep.subr.bf16.mxu0 %v7692
    %9921 = vmatpush2.bf16.msra.mxu0 %v7691
    %9922 = vmatprep.subr.bf16.mxu0 %v7688
    %9923 = vmatpush2.bf16.msra.mxu0 %v7687
    %9924 = vmatprep.subr.bf16.mxu0 %v7684
    %9925 = vmatpush2.bf16.msra.mxu0 %v7683
    %9926 = vmatprep.subr.bf16.mxu0 %v7680
    %9927 = vmatpush2.bf16.msra.mxu0 %v7679
    %9928 = vmatprep.subr.bf16.mxu0 %v7676
    %9929 = vmatpush2.bf16.msra.mxu0 %v7675
    %9930 = vmatprep.subr.bf16.mxu0 %v7672
    %9931 = vmatpush2.bf16.msra.mxu0 %v7671
    %9932 = vmatprep.mubr.bf16.mxu0 %v9639
    %9933 = vmatmul.mubr.bf16.gmra.mxu0 %v9638
    %v9934 = vpop.f32.mrf.mxu0
    %v9935 = vadd.f32 %v9892, %v9934
    %v9936 = vpop.f32.mrf.mxu0
    %v9937 = vadd.f32 %v9894, %v9936
    %v9938 = vpop.f32.mrf.mxu0
    %v9939 = vadd.f32 %v9896, %v9938
    %v9940 = vpop.f32.mrf.mxu0
    %v9941 = vadd.f32 %v9898, %v9940
    %9942 = vdwg.mxu0
    %9943 = vmatprep.subr.bf16.mxu0 %v7732
    %9944 = vmatpush1.bf16.msra.mxu0 %v7731
    %9945 = vmatprep.subr.bf16.mxu0 %v7728
    %9946 = vmatpush1.bf16.msra.mxu0 %v7727
    %9947 = vmatprep.subr.bf16.mxu0 %v7724
    %9948 = vmatpush1.bf16.msra.mxu0 %v7723
    %9949 = vmatprep.subr.bf16.mxu0 %v7720
    %9950 = vmatpush1.bf16.msra.mxu0 %v7719
    %9951 = vmatprep.subr.bf16.mxu0 %v7716
    %9952 = vmatpush1.bf16.msra.mxu0 %v7715
    %9953 = vmatprep.subr.bf16.mxu0 %v7712
    %9954 = vmatpush1.bf16.msra.mxu0 %v7711
    %9955 = vmatprep.subr.bf16.mxu0 %v7708
    %9956 = vmatpush1.bf16.msra.mxu0 %v7707
    %9957 = vmatprep.subr.bf16.mxu0 %v7704
    %9958 = vmatpush1.bf16.msra.mxu0 %v7703
    %9959 = vmatprep.subr.bf16.mxu0 %v7764
    %9960 = vmatpush2.bf16.msra.mxu0 %v7763
    %9961 = vmatprep.subr.bf16.mxu0 %v7760
    %9962 = vmatpush2.bf16.msra.mxu0 %v7759
    %9963 = vmatprep.subr.bf16.mxu0 %v7756
    %9964 = vmatpush2.bf16.msra.mxu0 %v7755
    %9965 = vmatprep.subr.bf16.mxu0 %v7752
    %9966 = vmatpush2.bf16.msra.mxu0 %v7751
    %9967 = vmatprep.subr.bf16.mxu0 %v7748
    %9968 = vmatpush2.bf16.msra.mxu0 %v7747
    %9969 = vmatprep.subr.bf16.mxu0 %v7744
    %9970 = vmatpush2.bf16.msra.mxu0 %v7743
    %9971 = vmatprep.subr.bf16.mxu0 %v7740
    %9972 = vmatpush2.bf16.msra.mxu0 %v7739
    %9973 = vmatprep.subr.bf16.mxu0 %v7736
    %9974 = vmatpush2.bf16.msra.mxu0 %v7735
    %9975 = vmatprep.mubr.bf16.mxu0 %v9641
    %9976 = vmatmul.mubr.bf16.gmra.mxu0 %v9640
    %v9977 = vpop.f32.mrf.mxu0
    %v9978 = vadd.f32 %v9935, %v9977
    %v9979 = vpop.f32.mrf.mxu0
    %v9980 = vadd.f32 %v9937, %v9979
    %v9981 = vpop.f32.mrf.mxu0
    %v9982 = vadd.f32 %v9939, %v9981
    %v9983 = vpop.f32.mrf.mxu0
    %v9984 = vadd.f32 %v9941, %v9983
    %9985 = vdwg.mxu0
    %vm9986 = vcmp.gt.f32.partialorder %v8839, 0.0
    %vm9987 = vcmp.gt.f32.partialorder %v8840, 0.0
    %vm9988 = vcmp.gt.f32.partialorder %v8841, 0.0
    %vm9989 = vcmp.gt.f32.partialorder %v8842, 0.0
    %vm9990 = vcmp.gt.f32.partialorder %v8843, 0.0
    %vm9991 = vcmp.gt.f32.partialorder %v8844, 0.0
    %vm9992 = vcmp.gt.f32.partialorder %v8845, 0.0
    %vm9993 = vcmp.gt.f32.partialorder %v8846, 0.0
    %v9994 = vsel %vm9986, 1, 0
    %v9995 = vsel %vm9987, 1, 0
    %v9996 = vsel %vm9988, 1, 0
    %v9997 = vsel %vm9989, 1, 0
    %v9998 = vsel %vm9990, 1, 0
    %v9999 = vsel %vm9991, 1, 0
    %v10000 = vsel %vm9992, 1, 0
    %v10001 = vsel %vm9993, 1, 0
    %v10002 = vcvt.s32.f32 %v9994
    %v10003 = vcvt.s32.f32 %v9995
    %v10004 = vcvt.s32.f32 %v9996
    %v10005 = vcvt.s32.f32 %v9997
    %v10006 = vcvt.s32.f32 %v9998
    %v10007 = vcvt.s32.f32 %v9999
    %v10008 = vcvt.s32.f32 %v10000
    %v10009 = vcvt.s32.f32 %v10001
    %v10010 = vmul.f32 %v9806, %v10002
    %v10011 = vmul.f32 %v9808, %v10003
    %v10012 = vmul.f32 %v9978, %v10004
    %v10013 = vmul.f32 %v9980, %v10005
    %v10014 = vmul.f32 %v9810, %v10006
    %v10015 = vmul.f32 %v9812, %v10007
    %v10016 = vmul.f32 %v9982, %v10008
    %v10017 = vmul.f32 %v9984, %v10009
    %v10018 = vpack.c.bf16 %v10014, %v10010
    %v10019 = vpack.c.bf16 %v10015, %v10011
    %v10020 = vpack.c.bf16 %v10016, %v10012
    %v10021 = vpack.c.bf16 %v10017, %v10013
    %10022 = vmatprep.subr.bf16.mxu0 0
    %10023 = vmatpush1.bf16.msra.mxu0 %v8600
    %10024 = vmatprep.subr.bf16.mxu0 0
    %10025 = vmatpush1.bf16.msra.mxu0 %v8599
    %10026 = vmatprep.subr.bf16.mxu0 0
    %10027 = vmatpush1.bf16.msra.mxu0 %v8598
    %10028 = vmatprep.subr.bf16.mxu0 0
    %10029 = vmatpush1.bf16.msra.mxu0 %v8597
    %10030 = vmatprep.subr.bf16.mxu0 0
    %10031 = vmatpush1.bf16.msra.mxu0 %v8596
    %10032 = vmatprep.subr.bf16.mxu0 0
    %10033 = vmatpush1.bf16.msra.mxu0 %v8595
    %10034 = vmatprep.subr.bf16.mxu0 0
    %10035 = vmatpush1.bf16.msra.mxu0 %v8594
    %10036 = vmatprep.subr.bf16.mxu0 0
    %10037 = vmatpush1.bf16.msra.mxu0 %v8593
    %10038 = vmatprep.subr.bf16.mxu0 0
    %10039 = vmatpush2.bf16.msra.mxu0 %v8608
    %10040 = vmatprep.subr.bf16.mxu0 0
    %10041 = vmatpush2.bf16.msra.mxu0 %v8607
    %10042 = vmatprep.subr.bf16.mxu0 0
    %10043 = vmatpush2.bf16.msra.mxu0 %v8606
    %10044 = vmatprep.subr.bf16.mxu0 0
    %10045 = vmatpush2.bf16.msra.mxu0 %v8605
    %10046 = vmatprep.subr.bf16.mxu0 0
    %10047 = vmatpush2.bf16.msra.mxu0 %v8604
    %10048 = vmatprep.subr.bf16.mxu0 0
    %10049 = vmatpush2.bf16.msra.mxu0 %v8603
    %10050 = vmatprep.subr.bf16.mxu0 0
    %10051 = vmatpush2.bf16.msra.mxu0 %v8602
    %10052 = vmatprep.subr.bf16.mxu0 0
    %10053 = vmatpush2.bf16.msra.mxu0 %v8601
    %10054 = vmatprep.mubr.bf16.mxu0 %v10019
    %10055 = vmatmul.mubr.bf16.gmra.mxu0 %v10018
    %v10056 = vpop.f32.mrf.mxu0
    %v10057 = vadd.f32 %v8747, %v10056
    %v10058 = vpop.f32.mrf.mxu0
    %v10059 = vpop.f32.mrf.mxu0
    %v10060 = vadd.f32 %v8748, %v10059
    %v10061 = vpop.f32.mrf.mxu0
    %10062 = vdwg.mxu0
    %10063 = vmatprep.subr.bf16.mxu0 0
    %10064 = vmatpush1.bf16.msra.mxu0 %v8616
    %10065 = vmatprep.subr.bf16.mxu0 0
    %10066 = vmatpush1.bf16.msra.mxu0 %v8615
    %10067 = vmatprep.subr.bf16.mxu0 0
    %10068 = vmatpush1.bf16.msra.mxu0 %v8614
    %10069 = vmatprep.subr.bf16.mxu0 0
    %10070 = vmatpush1.bf16.msra.mxu0 %v8613
    %10071 = vmatprep.subr.bf16.mxu0 0
    %10072 = vmatpush1.bf16.msra.mxu0 %v8612
    %10073 = vmatprep.subr.bf16.mxu0 0
    %10074 = vmatpush1.bf16.msra.mxu0 %v8611
    %10075 = vmatprep.subr.bf16.mxu0 0
    %10076 = vmatpush1.bf16.msra.mxu0 %v8610
    %10077 = vmatprep.subr.bf16.mxu0 0
    %10078 = vmatpush1.bf16.msra.mxu0 %v8609
    %10079 = vmatprep.subr.bf16.mxu0 0
    %10080 = vmatpush2.bf16.msra.mxu0 %v8624
    %10081 = vmatprep.subr.bf16.mxu0 0
    %10082 = vmatpush2.bf16.msra.mxu0 %v8623
    %10083 = vmatprep.subr.bf16.mxu0 0
    %10084 = vmatpush2.bf16.msra.mxu0 %v8622
    %10085 = vmatprep.subr.bf16.mxu0 0
    %10086 = vmatpush2.bf16.msra.mxu0 %v8621
    %10087 = vmatprep.subr.bf16.mxu0 0
    %10088 = vmatpush2.bf16.msra.mxu0 %v8620
    %10089 = vmatprep.subr.bf16.mxu0 0
    %10090 = vmatpush2.bf16.msra.mxu0 %v8619
    %10091 = vmatprep.subr.bf16.mxu0 0
    %10092 = vmatpush2.bf16.msra.mxu0 %v8618
    %10093 = vmatprep.subr.bf16.mxu0 0
    %10094 = vmatpush2.bf16.msra.mxu0 %v8617
    %10095 = vmatprep.mubr.bf16.mxu0 %v10021
    %10096 = vmatmul.mubr.bf16.gmra.mxu0 %v10020
    %v10097 = vpop.f32.mrf.mxu0
    %v10098 = vadd.f32 %v10057, %v10097
    %v10099 = vpop.f32.mrf.mxu0
    %v10100 = vpop.f32.mrf.mxu0
    %v10101 = vadd.f32 %v10060, %v10100
    %v10102 = vpop.f32.mrf.mxu0
    %10103 = vdwg.mxu0
    %v10104 = vmul.f32 %v8739, %v10098
    %v10105 = vmul.f32 %v8739, %v10101
    %v10106 = vsub.f32 %v8742, %v10104
    %v10107 = vsub.f32 %v8743, %v10105
    %s10108 = ssub.f32 1.0, %s153
    %s10109 = smul.f32 %s10108, 0.25
    %s10110 = sadd.f32 %s10109, %s153
    %v10111 = vstv %s10110
    %v10112 = vrcp.pop %v10111
    %s10113 = vtos %v10112
    %v10114 = vstv %s10113
    %v10115 = vrcp.pop %v10114
    %s10116 = vtos %v10115
    %s10117 = smul.f32 %s149, %s10116
    %v10118 = vstv %s10117
    %v10119 = vmul.f32 %v10118, %v10106
    %v10120 = vmul.f32 %v10118, %v10107
    %v10121 = vsub.f32 %v10119, %v10104
    %v10122 = vsub.f32 %v10120, %v10105
    %v10123 = vmul.f32 %v8744, %v10121
    %v10124 = vmul.f32 %v8744, %v10122
    %v10125 = vadd.f32 %v8747, %v10123
    %v10126 = vadd.f32 %v8748, %v10124
    %v10127 = vpack.c.bf16 %v10126, %v10125
    %v10129 = vsel %vm3098, %v10127, 0
    %10131 = vmatprep.subr.bf16.mxu0 0
    %10132 = vmatpush1.bf16.msra.mxu0 0
    %10133 = vmatprep.subr.bf16.mxu0 0
    %10134 = vmatpush1.bf16.msra.mxu0 0
    %10135 = vmatprep.subr.bf16.mxu0 0
    %10136 = vmatpush1.bf16.msra.mxu0 0
    %10137 = vmatprep.subr.bf16.mxu0 0
    %10138 = vmatpush1.bf16.msra.mxu0 0
    %10139 = vmatprep.subr.bf16.mxu0 0
    %10140 = vmatpush1.bf16.msra.mxu0 0
    %10141 = vmatprep.subr.bf16.mxu0 0
    %10142 = vmatpush1.bf16.msra.mxu0 0
    %10143 = vmatprep.subr.bf16.mxu0 0
    %10144 = vmatpush1.bf16.msra.mxu0 0
    %10145 = vmatprep.subr.bf16.mxu0 %v3107
    %10146 = vmatpush1.bf16.msra.mxu0 %v3104
    %10147 = vmatprep.subr.bf16.mxu0 0
    %10148 = vmatpush2.bf16.msra.mxu0 0
    %10149 = vmatprep.subr.bf16.mxu0 0
    %10150 = vmatpush2.bf16.msra.mxu0 0
    %10151 = vmatprep.subr.bf16.mxu0 0
    %10152 = vmatpush2.bf16.msra.mxu0 0
    %10153 = vmatprep.subr.bf16.mxu0 0
    %10154 = vmatpush2.bf16.msra.mxu0 0
    %10155 = vmatprep.subr.bf16.mxu0 0
    %10156 = vmatpush2.bf16.msra.mxu0 0
    %10157 = vmatprep.subr.bf16.mxu0 0
    %10158 = vmatpush2.bf16.msra.mxu0 0
    %10159 = vmatprep.subr.bf16.mxu0 0
    %10160 = vmatpush2.bf16.msra.mxu0 0
    %10161 = vmatprep.subr.bf16.mxu0 0
    %10162 = vmatpush2.bf16.msra.mxu0 0
    %10163 = vmatprep.mubr.bf16.mxu0 0
    %10164 = vmatmul.mubr.bf16.gmra.mxu0 %v10129
    %v10165 = vpop.f32.mrf.mxu0
    %v10166 = vadd.f32 %v3071, %v10165
    %v10167 = vpop.f32.mrf.mxu0
    %v10168 = vadd.f32 %v3075, %v10167
    %v10169 = vpop.f32.mrf.mxu0
    %v10170 = vadd.f32 %v3071, %v10169
    %v10171 = vpop.f32.mrf.mxu0
    %v10172 = vadd.f32 %v3075, %v10171
    %10173 = vdwg.mxu0
    %10174 = vmatprep.subr.bf16.mxu0 0
    %10175 = vmatpush1.bf16.msra.mxu0 0
    %10176 = vmatprep.subr.bf16.mxu0 0
    %10177 = vmatpush1.bf16.msra.mxu0 0
    %10178 = vmatprep.subr.bf16.mxu0 0
    %10179 = vmatpush1.bf16.msra.mxu0 0
    %10180 = vmatprep.subr.bf16.mxu0 0
    %10181 = vmatpush1.bf16.msra.mxu0 0
    %10182 = vmatprep.subr.bf16.mxu0 0
    %10183 = vmatpush1.bf16.msra.mxu0 0
    %10184 = vmatprep.subr.bf16.mxu0 0
    %10185 = vmatpush1.bf16.msra.mxu0 0
    %10186 = vmatprep.subr.bf16.mxu0 0
    %10187 = vmatpush1.bf16.msra.mxu0 0
    %10188 = vmatprep.subr.bf16.mxu0 %v3113
    %10189 = vmatpush1.bf16.msra.mxu0 %v3110
    %10190 = vmatprep.subr.bf16.mxu0 0
    %10191 = vmatpush2.bf16.msra.mxu0 0
    %10192 = vmatprep.subr.bf16.mxu0 0
    %10193 = vmatpush2.bf16.msra.mxu0 0
    %10194 = vmatprep.subr.bf16.mxu0 0
    %10195 = vmatpush2.bf16.msra.mxu0 0
    %10196 = vmatprep.subr.bf16.mxu0 0
    %10197 = vmatpush2.bf16.msra.mxu0 0
    %10198 = vmatprep.subr.bf16.mxu0 0
    %10199 = vmatpush2.bf16.msra.mxu0 0
    %10200 = vmatprep.subr.bf16.mxu0 0
    %10201 = vmatpush2.bf16.msra.mxu0 0
    %10202 = vmatprep.subr.bf16.mxu0 0
    %10203 = vmatpush2.bf16.msra.mxu0 0
    %10204 = vmatprep.subr.bf16.mxu0 0
    %10205 = vmatpush2.bf16.msra.mxu0 0
    %10206 = vmatprep.mubr.bf16.mxu0 0
    %10207 = vmatmul.mubr.bf16.gmra.mxu0 %v10129
    %v10208 = vpop.f32.mrf.mxu0
    %v10209 = vadd.f32 %v3079, %v10208
    %v10210 = vpop.f32.mrf.mxu0
    %v10211 = vadd.f32 %v3083, %v10210
    %v10212 = vpop.f32.mrf.mxu0
    %v10213 = vadd.f32 %v3079, %v10212
    %v10214 = vpop.f32.mrf.mxu0
    %v10215 = vadd.f32 %v3083, %v10214
    %10216 = vdwg.mxu0
    %v10217 = vmax.f32 %v10166, 0.0
    %v10218 = vmax.f32 %v10168, 0.0
    %v10219 = vmax.f32 %v10209, 0.0
    %v10220 = vmax.f32 %v10211, 0.0
    %v10221 = vmax.f32 %v10170, 0.0
    %v10222 = vmax.f32 %v10172, 0.0
    %v10223 = vmax.f32 %v10213, 0.0
    %v10224 = vmax.f32 %v10215, 0.0
    %v10225 = vpack.c.bf16 %v10221, %v10217
    %v10226 = vpack.c.bf16 %v10222, %v10218
    %v10227 = vpack.c.bf16 %v10223, %v10219
    %v10228 = vpack.c.bf16 %v10224, %v10220
    %10229 = vmatprep.subr.bf16.mxu0 %v4336
    %10230 = vmatpush1.bf16.msra.mxu0 %v4335
    %10231 = vmatprep.subr.bf16.mxu0 %v4328
    %10232 = vmatpush1.bf16.msra.mxu0 %v4327
    %10233 = vmatprep.subr.bf16.mxu0 %v4320
    %10234 = vmatpush1.bf16.msra.mxu0 %v4319
    %10235 = vmatprep.subr.bf16.mxu0 %v4312
    %10236 = vmatpush1.bf16.msra.mxu0 %v4311
    %10237 = vmatprep.subr.bf16.mxu0 %v4304
    %10238 = vmatpush1.bf16.msra.mxu0 %v4303
    %10239 = vmatprep.subr.bf16.mxu0 %v4296
    %10240 = vmatpush1.bf16.msra.mxu0 %v4295
    %10241 = vmatprep.subr.bf16.mxu0 %v4288
    %10242 = vmatpush1.bf16.msra.mxu0 %v4287
    %10243 = vmatprep.subr.bf16.mxu0 %v4280
    %10244 = vmatpush1.bf16.msra.mxu0 %v4279
    %10245 = vmatprep.subr.bf16.mxu0 %v4400
    %10246 = vmatpush2.bf16.msra.mxu0 %v4399
    %10247 = vmatprep.subr.bf16.mxu0 %v4392
    %10248 = vmatpush2.bf16.msra.mxu0 %v4391
    %10249 = vmatprep.subr.bf16.mxu0 %v4384
    %10250 = vmatpush2.bf16.msra.mxu0 %v4383
    %10251 = vmatprep.subr.bf16.mxu0 %v4376
    %10252 = vmatpush2.bf16.msra.mxu0 %v4375
    %10253 = vmatprep.subr.bf16.mxu0 %v4368
    %10254 = vmatpush2.bf16.msra.mxu0 %v4367
    %10255 = vmatprep.subr.bf16.mxu0 %v4360
    %10256 = vmatpush2.bf16.msra.mxu0 %v4359
    %10257 = vmatprep.subr.bf16.mxu0 %v4352
    %10258 = vmatpush2.bf16.msra.mxu0 %v4351
    %10259 = vmatprep.subr.bf16.mxu0 %v4344
    %10260 = vmatpush2.bf16.msra.mxu0 %v4343
    %10261 = vmatprep.mubr.bf16.mxu0 %v10226
    %10262 = vmatmul.mubr.bf16.gmra.mxu0 %v10225
    %v10263 = vpop.f32.mrf.mxu0
    %v10264 = vadd.f32 %v3474, %v10263
    %v10265 = vpop.f32.mrf.mxu0
    %v10266 = vadd.f32 %v3478, %v10265
    %v10267 = vpop.f32.mrf.mxu0
    %v10268 = vadd.f32 %v3474, %v10267
    %v10269 = vpop.f32.mrf.mxu0
    %v10270 = vadd.f32 %v3478, %v10269
    %10271 = vdwg.mxu0
    %10272 = vmatprep.subr.bf16.mxu0 %v4464
    %10273 = vmatpush1.bf16.msra.mxu0 %v4463
    %10274 = vmatprep.subr.bf16.mxu0 %v4456
    %10275 = vmatpush1.bf16.msra.mxu0 %v4455
    %10276 = vmatprep.subr.bf16.mxu0 %v4448
    %10277 = vmatpush1.bf16.msra.mxu0 %v4447
    %10278 = vmatprep.subr.bf16.mxu0 %v4440
    %10279 = vmatpush1.bf16.msra.mxu0 %v4439
    %10280 = vmatprep.subr.bf16.mxu0 %v4432
    %10281 = vmatpush1.bf16.msra.mxu0 %v4431
    %10282 = vmatprep.subr.bf16.mxu0 %v4424
    %10283 = vmatpush1.bf16.msra.mxu0 %v4423
    %10284 = vmatprep.subr.bf16.mxu0 %v4416
    %10285 = vmatpush1.bf16.msra.mxu0 %v4415
    %10286 = vmatprep.subr.bf16.mxu0 %v4408
    %10287 = vmatpush1.bf16.msra.mxu0 %v4407
    %10288 = vmatprep.subr.bf16.mxu0 %v4528
    %10289 = vmatpush2.bf16.msra.mxu0 %v4527
    %10290 = vmatprep.subr.bf16.mxu0 %v4520
    %10291 = vmatpush2.bf16.msra.mxu0 %v4519
    %10292 = vmatprep.subr.bf16.mxu0 %v4512
    %10293 = vmatpush2.bf16.msra.mxu0 %v4511
    %10294 = vmatprep.subr.bf16.mxu0 %v4504
    %10295 = vmatpush2.bf16.msra.mxu0 %v4503
    %10296 = vmatprep.subr.bf16.mxu0 %v4496
    %10297 = vmatpush2.bf16.msra.mxu0 %v4495
    %10298 = vmatprep.subr.bf16.mxu0 %v4488
    %10299 = vmatpush2.bf16.msra.mxu0 %v4487
    %10300 = vmatprep.subr.bf16.mxu0 %v4480
    %10301 = vmatpush2.bf16.msra.mxu0 %v4479
    %10302 = vmatprep.subr.bf16.mxu0 %v4472
    %10303 = vmatpush2.bf16.msra.mxu0 %v4471
    %10304 = vmatprep.mubr.bf16.mxu0 %v10228
    %10305 = vmatmul.mubr.bf16.gmra.mxu0 %v10227
    %v10306 = vpop.f32.mrf.mxu0
    %v10307 = vadd.f32 %v10264, %v10306
    %v10308 = vpop.f32.mrf.mxu0
    %v10309 = vadd.f32 %v10266, %v10308
    %v10310 = vpop.f32.mrf.mxu0
    %v10311 = vadd.f32 %v10268, %v10310
    %v10312 = vpop.f32.mrf.mxu0
    %v10313 = vadd.f32 %v10270, %v10312
    %10314 = vdwg.mxu0
    %10315 = vmatprep.subr.bf16.mxu0 %v4338
    %10316 = vmatpush1.bf16.msra.mxu0 %v4337
    %10317 = vmatprep.subr.bf16.mxu0 %v4330
    %10318 = vmatpush1.bf16.msra.mxu0 %v4329
    %10319 = vmatprep.subr.bf16.mxu0 %v4322
    %10320 = vmatpush1.bf16.msra.mxu0 %v4321
    %10321 = vmatprep.subr.bf16.mxu0 %v4314
    %10322 = vmatpush1.bf16.msra.mxu0 %v4313
    %10323 = vmatprep.subr.bf16.mxu0 %v4306
    %10324 = vmatpush1.bf16.msra.mxu0 %v4305
    %10325 = vmatprep.subr.bf16.mxu0 %v4298
    %10326 = vmatpush1.bf16.msra.mxu0 %v4297
    %10327 = vmatprep.subr.bf16.mxu0 %v4290
    %10328 = vmatpush1.bf16.msra.mxu0 %v4289
    %10329 = vmatprep.subr.bf16.mxu0 %v4282
    %10330 = vmatpush1.bf16.msra.mxu0 %v4281
    %10331 = vmatprep.subr.bf16.mxu0 %v4402
    %10332 = vmatpush2.bf16.msra.mxu0 %v4401
    %10333 = vmatprep.subr.bf16.mxu0 %v4394
    %10334 = vmatpush2.bf16.msra.mxu0 %v4393
    %10335 = vmatprep.subr.bf16.mxu0 %v4386
    %10336 = vmatpush2.bf16.msra.mxu0 %v4385
    %10337 = vmatprep.subr.bf16.mxu0 %v4378
    %10338 = vmatpush2.bf16.msra.mxu0 %v4377
    %10339 = vmatprep.subr.bf16.mxu0 %v4370
    %10340 = vmatpush2.bf16.msra.mxu0 %v4369
    %10341 = vmatprep.subr.bf16.mxu0 %v4362
    %10342 = vmatpush2.bf16.msra.mxu0 %v4361
    %10343 = vmatprep.subr.bf16.mxu0 %v4354
    %10344 = vmatpush2.bf16.msra.mxu0 %v4353
    %10345 = vmatprep.subr.bf16.mxu0 %v4346
    %10346 = vmatpush2.bf16.msra.mxu0 %v4345
    %10347 = vmatprep.mubr.bf16.mxu0 %v10226
    %10348 = vmatmul.mubr.bf16.gmra.mxu0 %v10225
    %v10349 = vpop.f32.mrf.mxu0
    %v10350 = vadd.f32 %v3482, %v10349
    %v10351 = vpop.f32.mrf.mxu0
    %v10352 = vadd.f32 %v3486, %v10351
    %v10353 = vpop.f32.mrf.mxu0
    %v10354 = vadd.f32 %v3482, %v10353
    %v10355 = vpop.f32.mrf.mxu0
    %v10356 = vadd.f32 %v3486, %v10355
    %10357 = vdwg.mxu0
    %10358 = vmatprep.subr.bf16.mxu0 %v4466
    %10359 = vmatpush1.bf16.msra.mxu0 %v4465
    %10360 = vmatprep.subr.bf16.mxu0 %v4458
    %10361 = vmatpush1.bf16.msra.mxu0 %v4457
    %10362 = vmatprep.subr.bf16.mxu0 %v4450
    %10363 = vmatpush1.bf16.msra.mxu0 %v4449
    %10364 = vmatprep.subr.bf16.mxu0 %v4442
    %10365 = vmatpush1.bf16.msra.mxu0 %v4441
    %10366 = vmatprep.subr.bf16.mxu0 %v4434
    %10367 = vmatpush1.bf16.msra.mxu0 %v4433
    %10368 = vmatprep.subr.bf16.mxu0 %v4426
    %10369 = vmatpush1.bf16.msra.mxu0 %v4425
    %10370 = vmatprep.subr.bf16.mxu0 %v4418
    %10371 = vmatpush1.bf16.msra.mxu0 %v4417
    %10372 = vmatprep.subr.bf16.mxu0 %v4410
    %10373 = vmatpush1.bf16.msra.mxu0 %v4409
    %10374 = vmatprep.subr.bf16.mxu0 %v4530
    %10375 = vmatpush2.bf16.msra.mxu0 %v4529
    %10376 = vmatprep.subr.bf16.mxu0 %v4522
    %10377 = vmatpush2.bf16.msra.mxu0 %v4521
    %10378 = vmatprep.subr.bf16.mxu0 %v4514
    %10379 = vmatpush2.bf16.msra.mxu0 %v4513
    %10380 = vmatprep.subr.bf16.mxu0 %v4506
    %10381 = vmatpush2.bf16.msra.mxu0 %v4505
    %10382 = vmatprep.subr.bf16.mxu0 %v4498
    %10383 = vmatpush2.bf16.msra.mxu0 %v4497
    %10384 = vmatprep.subr.bf16.mxu0 %v4490
    %10385 = vmatpush2.bf16.msra.mxu0 %v4489
    %10386 = vmatprep.subr.bf16.mxu0 %v4482
    %10387 = vmatpush2.bf16.msra.mxu0 %v4481
    %10388 = vmatprep.subr.bf16.mxu0 %v4474
    %10389 = vmatpush2.bf16.msra.mxu0 %v4473
    %10390 = vmatprep.mubr.bf16.mxu0 %v10228
    %10391 = vmatmul.mubr.bf16.gmra.mxu0 %v10227
    %v10392 = vpop.f32.mrf.mxu0
    %v10393 = vadd.f32 %v10350, %v10392
    %v10394 = vpop.f32.mrf.mxu0
    %v10395 = vadd.f32 %v10352, %v10394
    %v10396 = vpop.f32.mrf.mxu0
    %v10397 = vadd.f32 %v10354, %v10396
    %v10398 = vpop.f32.mrf.mxu0
    %v10399 = vadd.f32 %v10356, %v10398
    %10400 = vdwg.mxu0
    %10401 = vmatprep.subr.bf16.mxu0 %v4340
    %10402 = vmatpush1.bf16.msra.mxu0 %v4339
    %10403 = vmatprep.subr.bf16.mxu0 %v4332
    %10404 = vmatpush1.bf16.msra.mxu0 %v4331
    %10405 = vmatprep.subr.bf16.mxu0 %v4324
    %10406 = vmatpush1.bf16.msra.mxu0 %v4323
    %10407 = vmatprep.subr.bf16.mxu0 %v4316
    %10408 = vmatpush1.bf16.msra.mxu0 %v4315
    %10409 = vmatprep.subr.bf16.mxu0 %v4308
    %10410 = vmatpush1.bf16.msra.mxu0 %v4307
    %10411 = vmatprep.subr.bf16.mxu0 %v4300
    %10412 = vmatpush1.bf16.msra.mxu0 %v4299
    %10413 = vmatprep.subr.bf16.mxu0 %v4292
    %10414 = vmatpush1.bf16.msra.mxu0 %v4291
    %10415 = vmatprep.subr.bf16.mxu0 %v4284
    %10416 = vmatpush1.bf16.msra.mxu0 %v4283
    %10417 = vmatprep.subr.bf16.mxu0 %v4404
    %10418 = vmatpush2.bf16.msra.mxu0 %v4403
    %10419 = vmatprep.subr.bf16.mxu0 %v4396
    %10420 = vmatpush2.bf16.msra.mxu0 %v4395
    %10421 = vmatprep.subr.bf16.mxu0 %v4388
    %10422 = vmatpush2.bf16.msra.mxu0 %v4387
    %10423 = vmatprep.subr.bf16.mxu0 %v4380
    %10424 = vmatpush2.bf16.msra.mxu0 %v4379
    %10425 = vmatprep.subr.bf16.mxu0 %v4372
    %10426 = vmatpush2.bf16.msra.mxu0 %v4371
    %10427 = vmatprep.subr.bf16.mxu0 %v4364
    %10428 = vmatpush2.bf16.msra.mxu0 %v4363
    %10429 = vmatprep.subr.bf16.mxu0 %v4356
    %10430 = vmatpush2.bf16.msra.mxu0 %v4355
    %10431 = vmatprep.subr.bf16.mxu0 %v4348
    %10432 = vmatpush2.bf16.msra.mxu0 %v4347
    %10433 = vmatprep.mubr.bf16.mxu0 %v10226
    %10434 = vmatmul.mubr.bf16.gmra.mxu0 %v10225
    %v10435 = vpop.f32.mrf.mxu0
    %v10436 = vadd.f32 %v3490, %v10435
    %v10437 = vpop.f32.mrf.mxu0
    %v10438 = vadd.f32 %v3494, %v10437
    %v10439 = vpop.f32.mrf.mxu0
    %v10440 = vadd.f32 %v3490, %v10439
    %v10441 = vpop.f32.mrf.mxu0
    %v10442 = vadd.f32 %v3494, %v10441
    %10443 = vdwg.mxu0
    %10444 = vmatprep.subr.bf16.mxu0 %v4468
    %10445 = vmatpush1.bf16.msra.mxu0 %v4467
    %10446 = vmatprep.subr.bf16.mxu0 %v4460
    %10447 = vmatpush1.bf16.msra.mxu0 %v4459
    %10448 = vmatprep.subr.bf16.mxu0 %v4452
    %10449 = vmatpush1.bf16.msra.mxu0 %v4451
    %10450 = vmatprep.subr.bf16.mxu0 %v4444
    %10451 = vmatpush1.bf16.msra.mxu0 %v4443
    %10452 = vmatprep.subr.bf16.mxu0 %v4436
    %10453 = vmatpush1.bf16.msra.mxu0 %v4435
    %10454 = vmatprep.subr.bf16.mxu0 %v4428
    %10455 = vmatpush1.bf16.msra.mxu0 %v4427
    %10456 = vmatprep.subr.bf16.mxu0 %v4420
    %10457 = vmatpush1.bf16.msra.mxu0 %v4419
    %10458 = vmatprep.subr.bf16.mxu0 %v4412
    %10459 = vmatpush1.bf16.msra.mxu0 %v4411
    %10460 = vmatprep.subr.bf16.mxu0 %v4532
    %10461 = vmatpush2.bf16.msra.mxu0 %v4531
    %10462 = vmatprep.subr.bf16.mxu0 %v4524
    %10463 = vmatpush2.bf16.msra.mxu0 %v4523
    %10464 = vmatprep.subr.bf16.mxu0 %v4516
    %10465 = vmatpush2.bf16.msra.mxu0 %v4515
    %10466 = vmatprep.subr.bf16.mxu0 %v4508
    %10467 = vmatpush2.bf16.msra.mxu0 %v4507
    %10468 = vmatprep.subr.bf16.mxu0 %v4500
    %10469 = vmatpush2.bf16.msra.mxu0 %v4499
    %10470 = vmatprep.subr.bf16.mxu0 %v4492
    %10471 = vmatpush2.bf16.msra.mxu0 %v4491
    %10472 = vmatprep.subr.bf16.mxu0 %v4484
    %10473 = vmatpush2.bf16.msra.mxu0 %v4483
    %10474 = vmatprep.subr.bf16.mxu0 %v4476
    %10475 = vmatpush2.bf16.msra.mxu0 %v4475
    %10476 = vmatprep.mubr.bf16.mxu0 %v10228
    %10477 = vmatmul.mubr.bf16.gmra.mxu0 %v10227
    %v10478 = vpop.f32.mrf.mxu0
    %v10479 = vadd.f32 %v10436, %v10478
    %v10480 = vpop.f32.mrf.mxu0
    %v10481 = vadd.f32 %v10438, %v10480
    %v10482 = vpop.f32.mrf.mxu0
    %v10483 = vadd.f32 %v10440, %v10482
    %v10484 = vpop.f32.mrf.mxu0
    %v10485 = vadd.f32 %v10442, %v10484
    %10486 = vdwg.mxu0
    %10487 = vmatprep.subr.bf16.mxu0 %v4342
    %10488 = vmatpush1.bf16.msra.mxu0 %v4341
    %10489 = vmatprep.subr.bf16.mxu0 %v4334
    %10490 = vmatpush1.bf16.msra.mxu0 %v4333
    %10491 = vmatprep.subr.bf16.mxu0 %v4326
    %10492 = vmatpush1.bf16.msra.mxu0 %v4325
    %10493 = vmatprep.subr.bf16.mxu0 %v4318
    %10494 = vmatpush1.bf16.msra.mxu0 %v4317
    %10495 = vmatprep.subr.bf16.mxu0 %v4310
    %10496 = vmatpush1.bf16.msra.mxu0 %v4309
    %10497 = vmatprep.subr.bf16.mxu0 %v4302
    %10498 = vmatpush1.bf16.msra.mxu0 %v4301
    %10499 = vmatprep.subr.bf16.mxu0 %v4294
    %10500 = vmatpush1.bf16.msra.mxu0 %v4293
    %10501 = vmatprep.subr.bf16.mxu0 %v4286
    %10502 = vmatpush1.bf16.msra.mxu0 %v4285
    %10503 = vmatprep.subr.bf16.mxu0 %v4406
    %10504 = vmatpush2.bf16.msra.mxu0 %v4405
    %10505 = vmatprep.subr.bf16.mxu0 %v4398
    %10506 = vmatpush2.bf16.msra.mxu0 %v4397
    %10507 = vmatprep.subr.bf16.mxu0 %v4390
    %10508 = vmatpush2.bf16.msra.mxu0 %v4389
    %10509 = vmatprep.subr.bf16.mxu0 %v4382
    %10510 = vmatpush2.bf16.msra.mxu0 %v4381
    %10511 = vmatprep.subr.bf16.mxu0 %v4374
    %10512 = vmatpush2.bf16.msra.mxu0 %v4373
    %10513 = vmatprep.subr.bf16.mxu0 %v4366
    %10514 = vmatpush2.bf16.msra.mxu0 %v4365
    %10515 = vmatprep.subr.bf16.mxu0 %v4358
    %10516 = vmatpush2.bf16.msra.mxu0 %v4357
    %10517 = vmatprep.subr.bf16.mxu0 %v4350
    %10518 = vmatpush2.bf16.msra.mxu0 %v4349
    %10519 = vmatprep.mubr.bf16.mxu0 %v10226
    %10520 = vmatmul.mubr.bf16.gmra.mxu0 %v10225
    %v10521 = vpop.f32.mrf.mxu0
    %v10522 = vadd.f32 %v3498, %v10521
    %v10523 = vpop.f32.mrf.mxu0
    %v10524 = vadd.f32 %v3502, %v10523
    %v10525 = vpop.f32.mrf.mxu0
    %v10526 = vadd.f32 %v3498, %v10525
    %v10527 = vpop.f32.mrf.mxu0
    %v10528 = vadd.f32 %v3502, %v10527
    %10529 = vdwg.mxu0
    %10530 = vmatprep.subr.bf16.mxu0 %v4470
    %10531 = vmatpush1.bf16.msra.mxu0 %v4469
    %10532 = vmatprep.subr.bf16.mxu0 %v4462
    %10533 = vmatpush1.bf16.msra.mxu0 %v4461
    %10534 = vmatprep.subr.bf16.mxu0 %v4454
    %10535 = vmatpush1.bf16.msra.mxu0 %v4453
    %10536 = vmatprep.subr.bf16.mxu0 %v4446
    %10537 = vmatpush1.bf16.msra.mxu0 %v4445
    %10538 = vmatprep.subr.bf16.mxu0 %v4438
    %10539 = vmatpush1.bf16.msra.mxu0 %v4437
    %10540 = vmatprep.subr.bf16.mxu0 %v4430
    %10541 = vmatpush1.bf16.msra.mxu0 %v4429
    %10542 = vmatprep.subr.bf16.mxu0 %v4422
    %10543 = vmatpush1.bf16.msra.mxu0 %v4421
    %10544 = vmatprep.subr.bf16.mxu0 %v4414
    %10545 = vmatpush1.bf16.msra.mxu0 %v4413
    %10546 = vmatprep.subr.bf16.mxu0 %v4534
    %10547 = vmatpush2.bf16.msra.mxu0 %v4533
    %10548 = vmatprep.subr.bf16.mxu0 %v4526
    %10549 = vmatpush2.bf16.msra.mxu0 %v4525
    %10550 = vmatprep.subr.bf16.mxu0 %v4518
    %10551 = vmatpush2.bf16.msra.mxu0 %v4517
    %10552 = vmatprep.subr.bf16.mxu0 %v4510
    %10553 = vmatpush2.bf16.msra.mxu0 %v4509
    %10554 = vmatprep.subr.bf16.mxu0 %v4502
    %10555 = vmatpush2.bf16.msra.mxu0 %v4501
    %10556 = vmatprep.subr.bf16.mxu0 %v4494
    %10557 = vmatpush2.bf16.msra.mxu0 %v4493
    %10558 = vmatprep.subr.bf16.mxu0 %v4486
    %10559 = vmatpush2.bf16.msra.mxu0 %v4485
    %10560 = vmatprep.subr.bf16.mxu0 %v4478
    %10561 = vmatpush2.bf16.msra.mxu0 %v4477
    %10562 = vmatprep.mubr.bf16.mxu0 %v10228
    %10563 = vmatmul.mubr.bf16.gmra.mxu0 %v10227
    %v10564 = vpop.f32.mrf.mxu0
    %v10565 = vadd.f32 %v10522, %v10564
    %v10566 = vpop.f32.mrf.mxu0
    %v10567 = vadd.f32 %v10524, %v10566
    %v10568 = vpop.f32.mrf.mxu0
    %v10569 = vadd.f32 %v10526, %v10568
    %v10570 = vpop.f32.mrf.mxu0
    %v10571 = vadd.f32 %v10528, %v10570
    %10572 = vdwg.mxu0
    %v10573 = vmax.f32 %v10307, 0.0
    %v10574 = vmax.f32 %v10309, 0.0
    %v10575 = vmax.f32 %v10393, 0.0
    %v10576 = vmax.f32 %v10395, 0.0
    %v10577 = vmax.f32 %v10479, 0.0
    %v10578 = vmax.f32 %v10481, 0.0
    %v10579 = vmax.f32 %v10565, 0.0
    %v10580 = vmax.f32 %v10567, 0.0
    %v10581 = vmax.f32 %v10311, 0.0
    %v10582 = vmax.f32 %v10313, 0.0
    %v10583 = vmax.f32 %v10397, 0.0
    %v10584 = vmax.f32 %v10399, 0.0
    %v10585 = vmax.f32 %v10483, 0.0
    %v10586 = vmax.f32 %v10485, 0.0
    %v10587 = vmax.f32 %v10569, 0.0
    %v10588 = vmax.f32 %v10571, 0.0
    %v10589 = vpack.c.bf16 %v10581, %v10573
    %v10590 = vpack.c.bf16 %v10582, %v10574
    %v10591 = vpack.c.bf16 %v10583, %v10575
    %v10592 = vpack.c.bf16 %v10584, %v10576
    %v10593 = vpack.c.bf16 %v10585, %v10577
    %v10594 = vpack.c.bf16 %v10586, %v10578
    %v10595 = vpack.c.bf16 %v10587, %v10579
    %v10596 = vpack.c.bf16 %v10588, %v10580
    %10597 = vmatprep.subr.bf16.mxu0 0
    %10598 = vmatpush1.bf16.msra.mxu0 %v5557
    %10599 = vmatprep.subr.bf16.mxu0 0
    %10600 = vmatpush1.bf16.msra.mxu0 %v5556
    %10601 = vmatprep.subr.bf16.mxu0 0
    %10602 = vmatpush1.bf16.msra.mxu0 %v5555
    %10603 = vmatprep.subr.bf16.mxu0 0
    %10604 = vmatpush1.bf16.msra.mxu0 %v5554
    %10605 = vmatprep.subr.bf16.mxu0 0
    %10606 = vmatpush1.bf16.msra.mxu0 %v5553
    %10607 = vmatprep.subr.bf16.mxu0 0
    %10608 = vmatpush1.bf16.msra.mxu0 %v5552
    %10609 = vmatprep.subr.bf16.mxu0 0
    %10610 = vmatpush1.bf16.msra.mxu0 %v5551
    %10611 = vmatprep.subr.bf16.mxu0 0
    %10612 = vmatpush1.bf16.msra.mxu0 %v5550
    %10613 = vmatprep.subr.bf16.mxu0 0
    %10614 = vmatpush2.bf16.msra.mxu0 %v5565
    %10615 = vmatprep.subr.bf16.mxu0 0
    %10616 = vmatpush2.bf16.msra.mxu0 %v5564
    %10617 = vmatprep.subr.bf16.mxu0 0
    %10618 = vmatpush2.bf16.msra.mxu0 %v5563
    %10619 = vmatprep.subr.bf16.mxu0 0
    %10620 = vmatpush2.bf16.msra.mxu0 %v5562
    %10621 = vmatprep.subr.bf16.mxu0 0
    %10622 = vmatpush2.bf16.msra.mxu0 %v5561
    %10623 = vmatprep.subr.bf16.mxu0 0
    %10624 = vmatpush2.bf16.msra.mxu0 %v5560
    %10625 = vmatprep.subr.bf16.mxu0 0
    %10626 = vmatpush2.bf16.msra.mxu0 %v5559
    %10627 = vmatprep.subr.bf16.mxu0 0
    %10628 = vmatpush2.bf16.msra.mxu0 %v5558
    %10629 = vmatprep.mubr.bf16.mxu0 %v10590
    %10630 = vmatmul.mubr.bf16.gmra.mxu0 %v10589
    %v10631 = vpop.f32.mrf.mxu0
    %v10632 = vadd.f32 %v5292, %v10631
    %v10633 = vpop.f32.mrf.mxu0
    %v10634 = vpop.f32.mrf.mxu0
    %v10635 = vadd.f32 %v5292, %v10634
    %v10636 = vpop.f32.mrf.mxu0
    %10637 = vdwg.mxu0
    %10638 = vmatprep.subr.bf16.mxu0 0
    %10639 = vmatpush1.bf16.msra.mxu0 %v5573
    %10640 = vmatprep.subr.bf16.mxu0 0
    %10641 = vmatpush1.bf16.msra.mxu0 %v5572
    %10642 = vmatprep.subr.bf16.mxu0 0
    %10643 = vmatpush1.bf16.msra.mxu0 %v5571
    %10644 = vmatprep.subr.bf16.mxu0 0
    %10645 = vmatpush1.bf16.msra.mxu0 %v5570
    %10646 = vmatprep.subr.bf16.mxu0 0
    %10647 = vmatpush1.bf16.msra.mxu0 %v5569
    %10648 = vmatprep.subr.bf16.mxu0 0
    %10649 = vmatpush1.bf16.msra.mxu0 %v5568
    %10650 = vmatprep.subr.bf16.mxu0 0
    %10651 = vmatpush1.bf16.msra.mxu0 %v5567
    %10652 = vmatprep.subr.bf16.mxu0 0
    %10653 = vmatpush1.bf16.msra.mxu0 %v5566
    %10654 = vmatprep.subr.bf16.mxu0 0
    %10655 = vmatpush2.bf16.msra.mxu0 %v5581
    %10656 = vmatprep.subr.bf16.mxu0 0
    %10657 = vmatpush2.bf16.msra.mxu0 %v5580
    %10658 = vmatprep.subr.bf16.mxu0 0
    %10659 = vmatpush2.bf16.msra.mxu0 %v5579
    %10660 = vmatprep.subr.bf16.mxu0 0
    %10661 = vmatpush2.bf16.msra.mxu0 %v5578
    %10662 = vmatprep.subr.bf16.mxu0 0
    %10663 = vmatpush2.bf16.msra.mxu0 %v5577
    %10664 = vmatprep.subr.bf16.mxu0 0
    %10665 = vmatpush2.bf16.msra.mxu0 %v5576
    %10666 = vmatprep.subr.bf16.mxu0 0
    %10667 = vmatpush2.bf16.msra.mxu0 %v5575
    %10668 = vmatprep.subr.bf16.mxu0 0
    %10669 = vmatpush2.bf16.msra.mxu0 %v5574
    %10670 = vmatprep.mubr.bf16.mxu0 %v10592
    %10671 = vmatmul.mubr.bf16.gmra.mxu0 %v10591
    %v10672 = vpop.f32.mrf.mxu0
    %v10673 = vadd.f32 %v10632, %v10672
    %v10674 = vpop.f32.mrf.mxu0
    %v10675 = vpop.f32.mrf.mxu0
    %v10676 = vadd.f32 %v10635, %v10675
    %v10677 = vpop.f32.mrf.mxu0
    %10678 = vdwg.mxu0
    %10679 = vmatprep.subr.bf16.mxu0 0
    %10680 = vmatpush1.bf16.msra.mxu0 %v5589
    %10681 = vmatprep.subr.bf16.mxu0 0
    %10682 = vmatpush1.bf16.msra.mxu0 %v5588
    %10683 = vmatprep.subr.bf16.mxu0 0
    %10684 = vmatpush1.bf16.msra.mxu0 %v5587
    %10685 = vmatprep.subr.bf16.mxu0 0
    %10686 = vmatpush1.bf16.msra.mxu0 %v5586
    %10687 = vmatprep.subr.bf16.mxu0 0
    %10688 = vmatpush1.bf16.msra.mxu0 %v5585
    %10689 = vmatprep.subr.bf16.mxu0 0
    %10690 = vmatpush1.bf16.msra.mxu0 %v5584
    %10691 = vmatprep.subr.bf16.mxu0 0
    %10692 = vmatpush1.bf16.msra.mxu0 %v5583
    %10693 = vmatprep.subr.bf16.mxu0 0
    %10694 = vmatpush1.bf16.msra.mxu0 %v5582
    %10695 = vmatprep.subr.bf16.mxu0 0
    %10696 = vmatpush2.bf16.msra.mxu0 %v5597
    %10697 = vmatprep.subr.bf16.mxu0 0
    %10698 = vmatpush2.bf16.msra.mxu0 %v5596
    %10699 = vmatprep.subr.bf16.mxu0 0
    %10700 = vmatpush2.bf16.msra.mxu0 %v5595
    %10701 = vmatprep.subr.bf16.mxu0 0
    %10702 = vmatpush2.bf16.msra.mxu0 %v5594
    %10703 = vmatprep.subr.bf16.mxu0 0
    %10704 = vmatpush2.bf16.msra.mxu0 %v5593
    %10705 = vmatprep.subr.bf16.mxu0 0
    %10706 = vmatpush2.bf16.msra.mxu0 %v5592
    %10707 = vmatprep.subr.bf16.mxu0 0
    %10708 = vmatpush2.bf16.msra.mxu0 %v5591
    %10709 = vmatprep.subr.bf16.mxu0 0
    %10710 = vmatpush2.bf16.msra.mxu0 %v5590
    %10711 = vmatprep.mubr.bf16.mxu0 %v10594
    %10712 = vmatmul.mubr.bf16.gmra.mxu0 %v10593
    %v10713 = vpop.f32.mrf.mxu0
    %v10714 = vadd.f32 %v10673, %v10713
    %v10715 = vpop.f32.mrf.mxu0
    %v10716 = vpop.f32.mrf.mxu0
    %v10717 = vadd.f32 %v10676, %v10716
    %v10718 = vpop.f32.mrf.mxu0
    %10719 = vdwg.mxu0
    %10720 = vmatprep.subr.bf16.mxu0 0
    %10721 = vmatpush1.bf16.msra.mxu0 %v5605
    %10722 = vmatprep.subr.bf16.mxu0 0
    %10723 = vmatpush1.bf16.msra.mxu0 %v5604
    %10724 = vmatprep.subr.bf16.mxu0 0
    %10725 = vmatpush1.bf16.msra.mxu0 %v5603
    %10726 = vmatprep.subr.bf16.mxu0 0
    %10727 = vmatpush1.bf16.msra.mxu0 %v5602
    %10728 = vmatprep.subr.bf16.mxu0 0
    %10729 = vmatpush1.bf16.msra.mxu0 %v5601
    %10730 = vmatprep.subr.bf16.mxu0 0
    %10731 = vmatpush1.bf16.msra.mxu0 %v5600
    %10732 = vmatprep.subr.bf16.mxu0 0
    %10733 = vmatpush1.bf16.msra.mxu0 %v5599
    %10734 = vmatprep.subr.bf16.mxu0 0
    %10735 = vmatpush1.bf16.msra.mxu0 %v5598
    %10736 = vmatprep.subr.bf16.mxu0 0
    %10737 = vmatpush2.bf16.msra.mxu0 %v5613
    %10738 = vmatprep.subr.bf16.mxu0 0
    %10739 = vmatpush2.bf16.msra.mxu0 %v5612
    %10740 = vmatprep.subr.bf16.mxu0 0
    %10741 = vmatpush2.bf16.msra.mxu0 %v5611
    %10742 = vmatprep.subr.bf16.mxu0 0
    %10743 = vmatpush2.bf16.msra.mxu0 %v5610
    %10744 = vmatprep.subr.bf16.mxu0 0
    %10745 = vmatpush2.bf16.msra.mxu0 %v5609
    %10746 = vmatprep.subr.bf16.mxu0 0
    %10747 = vmatpush2.bf16.msra.mxu0 %v5608
    %10748 = vmatprep.subr.bf16.mxu0 0
    %10749 = vmatpush2.bf16.msra.mxu0 %v5607
    %10750 = vmatprep.subr.bf16.mxu0 0
    %10751 = vmatpush2.bf16.msra.mxu0 %v5606
    %10752 = vmatprep.mubr.bf16.mxu0 %v10596
    %10753 = vmatmul.mubr.bf16.gmra.mxu0 %v10595
    %v10754 = vpop.f32.mrf.mxu0
    %v10755 = vadd.f32 %v10714, %v10754
    %v10756 = vpop.f32.mrf.mxu0
    %v10757 = vpop.f32.mrf.mxu0
    %v10758 = vadd.f32 %v10717, %v10757
    %v10759 = vpop.f32.mrf.mxu0
    %10760 = vdwg.mxu0
    %v10761 = vxor.u32 %v10755, 2147483648
    %v10762 = vxor.u32 %v10758, 2147483648
    %v10763 = vmul.f32 %v10761, 1.442695
    %v10764 = vpow.pop %v10763
    %v10765 = vmul.f32 %v10762, 1.442695
    %v10766 = vpow.pop %v10765
    %v10767 = vadd.f32 %v10764, 1.0
    %v10768 = vadd.f32 %v10766, 1.0
    %v10769 = vrcp.pop %v10767
    %v10770 = vmul.f32 1.0, %v10769
    %v10771 = vrcp.pop %v10768
    %v10772 = vmul.f32 1.0, %v10771
    %v10773 = vsub.f32 %v10770, %v154
    %v10774 = vsub.f32 %v10772, %v155
    %v10775 = vpack.c.bf16 %v10774, %v10773
    %10776 = vmatprep.subr.bf16.mxu0 %v6170
    %10777 = vmatpush1.bf16.msra.mxu0 %v6169
    %10778 = vmatprep.subr.bf16.mxu0 %v6162
    %10779 = vmatpush1.bf16.msra.mxu0 %v6161
    %10780 = vmatprep.subr.bf16.mxu0 %v6154
    %10781 = vmatpush1.bf16.msra.mxu0 %v6153
    %10782 = vmatprep.subr.bf16.mxu0 %v6146
    %10783 = vmatpush1.bf16.msra.mxu0 %v6145
    %10784 = vmatprep.subr.bf16.mxu0 %v6138
    %10785 = vmatpush1.bf16.msra.mxu0 %v6137
    %10786 = vmatprep.subr.bf16.mxu0 %v6130
    %10787 = vmatpush1.bf16.msra.mxu0 %v6129
    %10788 = vmatprep.subr.bf16.mxu0 %v6122
    %10789 = vmatpush1.bf16.msra.mxu0 %v6121
    %10790 = vmatprep.subr.bf16.mxu0 %v6114
    %10791 = vmatpush1.bf16.msra.mxu0 %v6113
    %10792 = vmatprep.subr.bf16.mxu0 0
    %10793 = vmatpush2.bf16.msra.mxu0 0
    %10794 = vmatprep.subr.bf16.mxu0 0
    %10795 = vmatpush2.bf16.msra.mxu0 0
    %10796 = vmatprep.subr.bf16.mxu0 0
    %10797 = vmatpush2.bf16.msra.mxu0 0
    %10798 = vmatprep.subr.bf16.mxu0 0
    %10799 = vmatpush2.bf16.msra.mxu0 0
    %10800 = vmatprep.subr.bf16.mxu0 0
    %10801 = vmatpush2.bf16.msra.mxu0 0
    %10802 = vmatprep.subr.bf16.mxu0 0
    %10803 = vmatpush2.bf16.msra.mxu0 0
    %10804 = vmatprep.subr.bf16.mxu0 0
    %10805 = vmatpush2.bf16.msra.mxu0 0
    %10806 = vmatprep.subr.bf16.mxu0 0
    %10807 = vmatpush2.bf16.msra.mxu0 0
    %10808 = vmatprep.mubr.bf16.mxu0 0
    %10809 = vmatmul.mubr.bf16.gmra.mxu0 %v10775
    %v10810 = vpop.f32.mrf.mxu0
    %v10811 = vadd.f32 0.0, %v10810
    %v10812 = vpop.f32.mrf.mxu0
    %v10813 = vadd.f32 0.0, %v10812
    %v10814 = vpop.f32.mrf.mxu0
    %v10815 = vadd.f32 0.0, %v10814
    %v10816 = vpop.f32.mrf.mxu0
    %v10817 = vadd.f32 0.0, %v10816
    %10818 = vdwg.mxu0
    %10819 = vmatprep.subr.bf16.mxu0 %v6172
    %10820 = vmatpush1.bf16.msra.mxu0 %v6171
    %10821 = vmatprep.subr.bf16.mxu0 %v6164
    %10822 = vmatpush1.bf16.msra.mxu0 %v6163
    %10823 = vmatprep.subr.bf16.mxu0 %v6156
    %10824 = vmatpush1.bf16.msra.mxu0 %v6155
    %10825 = vmatprep.subr.bf16.mxu0 %v6148
    %10826 = vmatpush1.bf16.msra.mxu0 %v6147
    %10827 = vmatprep.subr.bf16.mxu0 %v6140
    %10828 = vmatpush1.bf16.msra.mxu0 %v6139
    %10829 = vmatprep.subr.bf16.mxu0 %v6132
    %10830 = vmatpush1.bf16.msra.mxu0 %v6131
    %10831 = vmatprep.subr.bf16.mxu0 %v6124
    %10832 = vmatpush1.bf16.msra.mxu0 %v6123
    %10833 = vmatprep.subr.bf16.mxu0 %v6116
    %10834 = vmatpush1.bf16.msra.mxu0 %v6115
    %10835 = vmatprep.subr.bf16.mxu0 0
    %10836 = vmatpush2.bf16.msra.mxu0 0
    %10837 = vmatprep.subr.bf16.mxu0 0
    %10838 = vmatpush2.bf16.msra.mxu0 0
    %10839 = vmatprep.subr.bf16.mxu0 0
    %10840 = vmatpush2.bf16.msra.mxu0 0
    %10841 = vmatprep.subr.bf16.mxu0 0
    %10842 = vmatpush2.bf16.msra.mxu0 0
    %10843 = vmatprep.subr.bf16.mxu0 0
    %10844 = vmatpush2.bf16.msra.mxu0 0
    %10845 = vmatprep.subr.bf16.mxu0 0
    %10846 = vmatpush2.bf16.msra.mxu0 0
    %10847 = vmatprep.subr.bf16.mxu0 0
    %10848 = vmatpush2.bf16.msra.mxu0 0
    %10849 = vmatprep.subr.bf16.mxu0 0
    %10850 = vmatpush2.bf16.msra.mxu0 0
    %10851 = vmatprep.mubr.bf16.mxu0 0
    %10852 = vmatmul.mubr.bf16.gmra.mxu0 %v10775
    %v10853 = vpop.f32.mrf.mxu0
    %v10854 = vadd.f32 0.0, %v10853
    %v10855 = vpop.f32.mrf.mxu0
    %v10856 = vadd.f32 0.0, %v10855
    %v10857 = vpop.f32.mrf.mxu0
    %v10858 = vadd.f32 0.0, %v10857
    %v10859 = vpop.f32.mrf.mxu0
    %v10860 = vadd.f32 0.0, %v10859
    %10861 = vdwg.mxu0
    %10862 = vmatprep.subr.bf16.mxu0 %v6174
    %10863 = vmatpush1.bf16.msra.mxu0 %v6173
    %10864 = vmatprep.subr.bf16.mxu0 %v6166
    %10865 = vmatpush1.bf16.msra.mxu0 %v6165
    %10866 = vmatprep.subr.bf16.mxu0 %v6158
    %10867 = vmatpush1.bf16.msra.mxu0 %v6157
    %10868 = vmatprep.subr.bf16.mxu0 %v6150
    %10869 = vmatpush1.bf16.msra.mxu0 %v6149
    %10870 = vmatprep.subr.bf16.mxu0 %v6142
    %10871 = vmatpush1.bf16.msra.mxu0 %v6141
    %10872 = vmatprep.subr.bf16.mxu0 %v6134
    %10873 = vmatpush1.bf16.msra.mxu0 %v6133
    %10874 = vmatprep.subr.bf16.mxu0 %v6126
    %10875 = vmatpush1.bf16.msra.mxu0 %v6125
    %10876 = vmatprep.subr.bf16.mxu0 %v6118
    %10877 = vmatpush1.bf16.msra.mxu0 %v6117
    %10878 = vmatprep.subr.bf16.mxu0 0
    %10879 = vmatpush2.bf16.msra.mxu0 0
    %10880 = vmatprep.subr.bf16.mxu0 0
    %10881 = vmatpush2.bf16.msra.mxu0 0
    %10882 = vmatprep.subr.bf16.mxu0 0
    %10883 = vmatpush2.bf16.msra.mxu0 0
    %10884 = vmatprep.subr.bf16.mxu0 0
    %10885 = vmatpush2.bf16.msra.mxu0 0
    %10886 = vmatprep.subr.bf16.mxu0 0
    %10887 = vmatpush2.bf16.msra.mxu0 0
    %10888 = vmatprep.subr.bf16.mxu0 0
    %10889 = vmatpush2.bf16.msra.mxu0 0
    %10890 = vmatprep.subr.bf16.mxu0 0
    %10891 = vmatpush2.bf16.msra.mxu0 0
    %10892 = vmatprep.subr.bf16.mxu0 0
    %10893 = vmatpush2.bf16.msra.mxu0 0
    %10894 = vmatprep.mubr.bf16.mxu0 0
    %10895 = vmatmul.mubr.bf16.gmra.mxu0 %v10775
    %v10896 = vpop.f32.mrf.mxu0
    %v10897 = vadd.f32 0.0, %v10896
    %v10898 = vpop.f32.mrf.mxu0
    %v10899 = vadd.f32 0.0, %v10898
    %v10900 = vpop.f32.mrf.mxu0
    %v10901 = vadd.f32 0.0, %v10900
    %v10902 = vpop.f32.mrf.mxu0
    %v10903 = vadd.f32 0.0, %v10902
    %10904 = vdwg.mxu0
    %10905 = vmatprep.subr.bf16.mxu0 %v6176
    %10906 = vmatpush1.bf16.msra.mxu0 %v6175
    %10907 = vmatprep.subr.bf16.mxu0 %v6168
    %10908 = vmatpush1.bf16.msra.mxu0 %v6167
    %10909 = vmatprep.subr.bf16.mxu0 %v6160
    %10910 = vmatpush1.bf16.msra.mxu0 %v6159
    %10911 = vmatprep.subr.bf16.mxu0 %v6152
    %10912 = vmatpush1.bf16.msra.mxu0 %v6151
    %10913 = vmatprep.subr.bf16.mxu0 %v6144
    %10914 = vmatpush1.bf16.msra.mxu0 %v6143
    %10915 = vmatprep.subr.bf16.mxu0 %v6136
    %10916 = vmatpush1.bf16.msra.mxu0 %v6135
    %10917 = vmatprep.subr.bf16.mxu0 %v6128
    %10918 = vmatpush1.bf16.msra.mxu0 %v6127
    %10919 = vmatprep.subr.bf16.mxu0 %v6120
    %10920 = vmatpush1.bf16.msra.mxu0 %v6119
    %10921 = vmatprep.subr.bf16.mxu0 0
    %10922 = vmatpush2.bf16.msra.mxu0 0
    %10923 = vmatprep.subr.bf16.mxu0 0
    %10924 = vmatpush2.bf16.msra.mxu0 0
    %10925 = vmatprep.subr.bf16.mxu0 0
    %10926 = vmatpush2.bf16.msra.mxu0 0
    %10927 = vmatprep.subr.bf16.mxu0 0
    %10928 = vmatpush2.bf16.msra.mxu0 0
    %10929 = vmatprep.subr.bf16.mxu0 0
    %10930 = vmatpush2.bf16.msra.mxu0 0
    %10931 = vmatprep.subr.bf16.mxu0 0
    %10932 = vmatpush2.bf16.msra.mxu0 0
    %10933 = vmatprep.subr.bf16.mxu0 0
    %10934 = vmatpush2.bf16.msra.mxu0 0
    %10935 = vmatprep.subr.bf16.mxu0 0
    %10936 = vmatpush2.bf16.msra.mxu0 0
    %10937 = vmatprep.mubr.bf16.mxu0 0
    %10938 = vmatmul.mubr.bf16.gmra.mxu0 %v10775
    %v10939 = vpop.f32.mrf.mxu0
    %v10940 = vadd.f32 0.0, %v10939
    %v10941 = vpop.f32.mrf.mxu0
    %v10942 = vadd.f32 0.0, %v10941
    %v10943 = vpop.f32.mrf.mxu0
    %v10944 = vadd.f32 0.0, %v10943
    %v10945 = vpop.f32.mrf.mxu0
    %v10946 = vadd.f32 0.0, %v10945
    %10947 = vdwg.mxu0
    %vm10948 = vcmp.gt.f32.partialorder %v10573, 0.0
    %vm10949 = vcmp.gt.f32.partialorder %v10574, 0.0
    %vm10950 = vcmp.gt.f32.partialorder %v10575, 0.0
    %vm10951 = vcmp.gt.f32.partialorder %v10576, 0.0
    %vm10952 = vcmp.gt.f32.partialorder %v10577, 0.0
    %vm10953 = vcmp.gt.f32.partialorder %v10578, 0.0
    %vm10954 = vcmp.gt.f32.partialorder %v10579, 0.0
    %vm10955 = vcmp.gt.f32.partialorder %v10580, 0.0
    %vm10956 = vcmp.gt.f32.partialorder %v10581, 0.0
    %vm10957 = vcmp.gt.f32.partialorder %v10582, 0.0
    %vm10958 = vcmp.gt.f32.partialorder %v10583, 0.0
    %vm10959 = vcmp.gt.f32.partialorder %v10584, 0.0
    %vm10960 = vcmp.gt.f32.partialorder %v10585, 0.0
    %vm10961 = vcmp.gt.f32.partialorder %v10586, 0.0
    %vm10962 = vcmp.gt.f32.partialorder %v10587, 0.0
    %vm10963 = vcmp.gt.f32.partialorder %v10588, 0.0
    %v10964 = vsel %vm10948, 1, 0
    %v10965 = vsel %vm10949, 1, 0
    %v10966 = vsel %vm10950, 1, 0
    %v10967 = vsel %vm10951, 1, 0
    %v10968 = vsel %vm10952, 1, 0
    %v10969 = vsel %vm10953, 1, 0
    %v10970 = vsel %vm10954, 1, 0
    %v10971 = vsel %vm10955, 1, 0
    %v10972 = vsel %vm10956, 1, 0
    %v10973 = vsel %vm10957, 1, 0
    %v10974 = vsel %vm10958, 1, 0
    %v10975 = vsel %vm10959, 1, 0
    %v10976 = vsel %vm10960, 1, 0
    %v10977 = vsel %vm10961, 1, 0
    %v10978 = vsel %vm10962, 1, 0
    %v10979 = vsel %vm10963, 1, 0
    %v10980 = vcvt.s32.f32 %v10964
    %v10981 = vcvt.s32.f32 %v10965
    %v10982 = vcvt.s32.f32 %v10966
    %v10983 = vcvt.s32.f32 %v10967
    %v10984 = vcvt.s32.f32 %v10968
    %v10985 = vcvt.s32.f32 %v10969
    %v10986 = vcvt.s32.f32 %v10970
    %v10987 = vcvt.s32.f32 %v10971
    %v10988 = vcvt.s32.f32 %v10972
    %v10989 = vcvt.s32.f32 %v10973
    %v10990 = vcvt.s32.f32 %v10974
    %v10991 = vcvt.s32.f32 %v10975
    %v10992 = vcvt.s32.f32 %v10976
    %v10993 = vcvt.s32.f32 %v10977
    %v10994 = vcvt.s32.f32 %v10978
    %v10995 = vcvt.s32.f32 %v10979
    %v10996 = vmul.f32 %v10811, %v10980
    %v10997 = vmul.f32 %v10813, %v10981
    %v10998 = vmul.f32 %v10854, %v10982
    %v10999 = vmul.f32 %v10856, %v10983
    %v11000 = vmul.f32 %v10897, %v10984
    %v11001 = vmul.f32 %v10899, %v10985
    %v11002 = vmul.f32 %v10940, %v10986
    %v11003 = vmul.f32 %v10942, %v10987
    %v11004 = vmul.f32 %v10815, %v10988
    %v11005 = vmul.f32 %v10817, %v10989
    %v11006 = vmul.f32 %v10858, %v10990
    %v11007 = vmul.f32 %v10860, %v10991
    %v11008 = vmul.f32 %v10901, %v10992
    %v11009 = vmul.f32 %v10903, %v10993
    %v11010 = vmul.f32 %v10944, %v10994
    %v11011 = vmul.f32 %v10946, %v10995
    %v11012 = vpack.c.bf16 %v11004, %v10996
    %v11013 = vpack.c.bf16 %v11005, %v10997
    %v11014 = vpack.c.bf16 %v11006, %v10998
    %v11015 = vpack.c.bf16 %v11007, %v10999
    %v11016 = vpack.c.bf16 %v11008, %v11000
    %v11017 = vpack.c.bf16 %v11009, %v11001
    %v11018 = vpack.c.bf16 %v11010, %v11002
    %v11019 = vpack.c.bf16 %v11011, %v11003
    %11020 = vmatprep.subr.bf16.mxu0 %v7538
    %11021 = vmatpush1.bf16.msra.mxu0 %v7537
    %11022 = vmatprep.subr.bf16.mxu0 %v7534
    %11023 = vmatpush1.bf16.msra.mxu0 %v7533
    %11024 = vmatprep.subr.bf16.mxu0 %v7530
    %11025 = vmatpush1.bf16.msra.mxu0 %v7529
    %11026 = vmatprep.subr.bf16.mxu0 %v7526
    %11027 = vmatpush1.bf16.msra.mxu0 %v7525
    %11028 = vmatprep.subr.bf16.mxu0 %v7522
    %11029 = vmatpush1.bf16.msra.mxu0 %v7521
    %11030 = vmatprep.subr.bf16.mxu0 %v7518
    %11031 = vmatpush1.bf16.msra.mxu0 %v7517
    %11032 = vmatprep.subr.bf16.mxu0 %v7514
    %11033 = vmatpush1.bf16.msra.mxu0 %v7513
    %11034 = vmatprep.subr.bf16.mxu0 %v7510
    %11035 = vmatpush1.bf16.msra.mxu0 %v7509
    %11036 = vmatprep.subr.bf16.mxu0 %v7570
    %11037 = vmatpush2.bf16.msra.mxu0 %v7569
    %11038 = vmatprep.subr.bf16.mxu0 %v7566
    %11039 = vmatpush2.bf16.msra.mxu0 %v7565
    %11040 = vmatprep.subr.bf16.mxu0 %v7562
    %11041 = vmatpush2.bf16.msra.mxu0 %v7561
    %11042 = vmatprep.subr.bf16.mxu0 %v7558
    %11043 = vmatpush2.bf16.msra.mxu0 %v7557
    %11044 = vmatprep.subr.bf16.mxu0 %v7554
    %11045 = vmatpush2.bf16.msra.mxu0 %v7553
    %11046 = vmatprep.subr.bf16.mxu0 %v7550
    %11047 = vmatpush2.bf16.msra.mxu0 %v7549
    %11048 = vmatprep.subr.bf16.mxu0 %v7546
    %11049 = vmatpush2.bf16.msra.mxu0 %v7545
    %11050 = vmatprep.subr.bf16.mxu0 %v7542
    %11051 = vmatpush2.bf16.msra.mxu0 %v7541
    %11052 = vmatprep.mubr.bf16.mxu0 %v11013
    %11053 = vmatmul.mubr.bf16.gmra.mxu0 %v11012
    %v11054 = vpop.f32.mrf.mxu0
    %v11055 = vadd.f32 0.0, %v11054
    %v11056 = vpop.f32.mrf.mxu0
    %v11057 = vadd.f32 0.0, %v11056
    %v11058 = vpop.f32.mrf.mxu0
    %v11059 = vadd.f32 0.0, %v11058
    %v11060 = vpop.f32.mrf.mxu0
    %v11061 = vadd.f32 0.0, %v11060
    %11062 = vdwg.mxu0
    %11063 = vmatprep.subr.bf16.mxu0 %v7602
    %11064 = vmatpush1.bf16.msra.mxu0 %v7601
    %11065 = vmatprep.subr.bf16.mxu0 %v7598
    %11066 = vmatpush1.bf16.msra.mxu0 %v7597
    %11067 = vmatprep.subr.bf16.mxu0 %v7594
    %11068 = vmatpush1.bf16.msra.mxu0 %v7593
    %11069 = vmatprep.subr.bf16.mxu0 %v7590
    %11070 = vmatpush1.bf16.msra.mxu0 %v7589
    %11071 = vmatprep.subr.bf16.mxu0 %v7586
    %11072 = vmatpush1.bf16.msra.mxu0 %v7585
    %11073 = vmatprep.subr.bf16.mxu0 %v7582
    %11074 = vmatpush1.bf16.msra.mxu0 %v7581
    %11075 = vmatprep.subr.bf16.mxu0 %v7578
    %11076 = vmatpush1.bf16.msra.mxu0 %v7577
    %11077 = vmatprep.subr.bf16.mxu0 %v7574
    %11078 = vmatpush1.bf16.msra.mxu0 %v7573
    %11079 = vmatprep.subr.bf16.mxu0 %v7634
    %11080 = vmatpush2.bf16.msra.mxu0 %v7633
    %11081 = vmatprep.subr.bf16.mxu0 %v7630
    %11082 = vmatpush2.bf16.msra.mxu0 %v7629
    %11083 = vmatprep.subr.bf16.mxu0 %v7626
    %11084 = vmatpush2.bf16.msra.mxu0 %v7625
    %11085 = vmatprep.subr.bf16.mxu0 %v7622
    %11086 = vmatpush2.bf16.msra.mxu0 %v7621
    %11087 = vmatprep.subr.bf16.mxu0 %v7618
    %11088 = vmatpush2.bf16.msra.mxu0 %v7617
    %11089 = vmatprep.subr.bf16.mxu0 %v7614
    %11090 = vmatpush2.bf16.msra.mxu0 %v7613
    %11091 = vmatprep.subr.bf16.mxu0 %v7610
    %11092 = vmatpush2.bf16.msra.mxu0 %v7609
    %11093 = vmatprep.subr.bf16.mxu0 %v7606
    %11094 = vmatpush2.bf16.msra.mxu0 %v7605
    %11095 = vmatprep.mubr.bf16.mxu0 %v11015
    %11096 = vmatmul.mubr.bf16.gmra.mxu0 %v11014
    %v11097 = vpop.f32.mrf.mxu0
    %v11098 = vadd.f32 %v11055, %v11097
    %v11099 = vpop.f32.mrf.mxu0
    %v11100 = vadd.f32 %v11057, %v11099
    %v11101 = vpop.f32.mrf.mxu0
    %v11102 = vadd.f32 %v11059, %v11101
    %v11103 = vpop.f32.mrf.mxu0
    %v11104 = vadd.f32 %v11061, %v11103
    %11105 = vdwg.mxu0
    %11106 = vmatprep.subr.bf16.mxu0 %v7666
    %11107 = vmatpush1.bf16.msra.mxu0 %v7665
    %11108 = vmatprep.subr.bf16.mxu0 %v7662
    %11109 = vmatpush1.bf16.msra.mxu0 %v7661
    %11110 = vmatprep.subr.bf16.mxu0 %v7658
    %11111 = vmatpush1.bf16.msra.mxu0 %v7657
    %11112 = vmatprep.subr.bf16.mxu0 %v7654
    %11113 = vmatpush1.bf16.msra.mxu0 %v7653
    %11114 = vmatprep.subr.bf16.mxu0 %v7650
    %11115 = vmatpush1.bf16.msra.mxu0 %v7649
    %11116 = vmatprep.subr.bf16.mxu0 %v7646
    %11117 = vmatpush1.bf16.msra.mxu0 %v7645
    %11118 = vmatprep.subr.bf16.mxu0 %v7642
    %11119 = vmatpush1.bf16.msra.mxu0 %v7641
    %11120 = vmatprep.subr.bf16.mxu0 %v7638
    %11121 = vmatpush1.bf16.msra.mxu0 %v7637
    %11122 = vmatprep.subr.bf16.mxu0 %v7698
    %11123 = vmatpush2.bf16.msra.mxu0 %v7697
    %11124 = vmatprep.subr.bf16.mxu0 %v7694
    %11125 = vmatpush2.bf16.msra.mxu0 %v7693
    %11126 = vmatprep.subr.bf16.mxu0 %v7690
    %11127 = vmatpush2.bf16.msra.mxu0 %v7689
    %11128 = vmatprep.subr.bf16.mxu0 %v7686
    %11129 = vmatpush2.bf16.msra.mxu0 %v7685
    %11130 = vmatprep.subr.bf16.mxu0 %v7682
    %11131 = vmatpush2.bf16.msra.mxu0 %v7681
    %11132 = vmatprep.subr.bf16.mxu0 %v7678
    %11133 = vmatpush2.bf16.msra.mxu0 %v7677
    %11134 = vmatprep.subr.bf16.mxu0 %v7674
    %11135 = vmatpush2.bf16.msra.mxu0 %v7673
    %11136 = vmatprep.subr.bf16.mxu0 %v7670
    %11137 = vmatpush2.bf16.msra.mxu0 %v7669
    %11138 = vmatprep.mubr.bf16.mxu0 %v11017
    %11139 = vmatmul.mubr.bf16.gmra.mxu0 %v11016
    %v11140 = vpop.f32.mrf.mxu0
    %v11141 = vadd.f32 %v11098, %v11140
    %v11142 = vpop.f32.mrf.mxu0
    %v11143 = vadd.f32 %v11100, %v11142
    %v11144 = vpop.f32.mrf.mxu0
    %v11145 = vadd.f32 %v11102, %v11144
    %v11146 = vpop.f32.mrf.mxu0
    %v11147 = vadd.f32 %v11104, %v11146
    %11148 = vdwg.mxu0
    %11149 = vmatprep.subr.bf16.mxu0 %v7730
    %11150 = vmatpush1.bf16.msra.mxu0 %v7729
    %11151 = vmatprep.subr.bf16.mxu0 %v7726
    %11152 = vmatpush1.bf16.msra.mxu0 %v7725
    %11153 = vmatprep.subr.bf16.mxu0 %v7722
    %11154 = vmatpush1.bf16.msra.mxu0 %v7721
    %11155 = vmatprep.subr.bf16.mxu0 %v7718
    %11156 = vmatpush1.bf16.msra.mxu0 %v7717
    %11157 = vmatprep.subr.bf16.mxu0 %v7714
    %11158 = vmatpush1.bf16.msra.mxu0 %v7713
    %11159 = vmatprep.subr.bf16.mxu0 %v7710
    %11160 = vmatpush1.bf16.msra.mxu0 %v7709
    %11161 = vmatprep.subr.bf16.mxu0 %v7706
    %11162 = vmatpush1.bf16.msra.mxu0 %v7705
    %11163 = vmatprep.subr.bf16.mxu0 %v7702
    %11164 = vmatpush1.bf16.msra.mxu0 %v7701
    %11165 = vmatprep.subr.bf16.mxu0 %v7762
    %11166 = vmatpush2.bf16.msra.mxu0 %v7761
    %11167 = vmatprep.subr.bf16.mxu0 %v7758
    %11168 = vmatpush2.bf16.msra.mxu0 %v7757
    %11169 = vmatprep.subr.bf16.mxu0 %v7754
    %11170 = vmatpush2.bf16.msra.mxu0 %v7753
    %11171 = vmatprep.subr.bf16.mxu0 %v7750
    %11172 = vmatpush2.bf16.msra.mxu0 %v7749
    %11173 = vmatprep.subr.bf16.mxu0 %v7746
    %11174 = vmatpush2.bf16.msra.mxu0 %v7745
    %11175 = vmatprep.subr.bf16.mxu0 %v7742
    %11176 = vmatpush2.bf16.msra.mxu0 %v7741
    %11177 = vmatprep.subr.bf16.mxu0 %v7738
    %11178 = vmatpush2.bf16.msra.mxu0 %v7737
    %11179 = vmatprep.subr.bf16.mxu0 %v7734
    %11180 = vmatpush2.bf16.msra.mxu0 %v7733
    %11181 = vmatprep.mubr.bf16.mxu0 %v11019
    %11182 = vmatmul.mubr.bf16.gmra.mxu0 %v11018
    %v11183 = vpop.f32.mrf.mxu0
    %v11184 = vadd.f32 %v11141, %v11183
    %v11185 = vpop.f32.mrf.mxu0
    %v11186 = vadd.f32 %v11143, %v11185
    %v11187 = vpop.f32.mrf.mxu0
    %v11188 = vadd.f32 %v11145, %v11187
    %v11189 = vpop.f32.mrf.mxu0
    %v11190 = vadd.f32 %v11147, %v11189
    %11191 = vdwg.mxu0
    %11192 = vmatprep.subr.bf16.mxu0 %v7540
    %11193 = vmatpush1.bf16.msra.mxu0 %v7539
    %11194 = vmatprep.subr.bf16.mxu0 %v7536
    %11195 = vmatpush1.bf16.msra.mxu0 %v7535
    %11196 = vmatprep.subr.bf16.mxu0 %v7532
    %11197 = vmatpush1.bf16.msra.mxu0 %v7531
    %11198 = vmatprep.subr.bf16.mxu0 %v7528
    %11199 = vmatpush1.bf16.msra.mxu0 %v7527
    %11200 = vmatprep.subr.bf16.mxu0 %v7524
    %11201 = vmatpush1.bf16.msra.mxu0 %v7523
    %11202 = vmatprep.subr.bf16.mxu0 %v7520
    %11203 = vmatpush1.bf16.msra.mxu0 %v7519
    %11204 = vmatprep.subr.bf16.mxu0 %v7516
    %11205 = vmatpush1.bf16.msra.mxu0 %v7515
    %11206 = vmatprep.subr.bf16.mxu0 %v7512
    %11207 = vmatpush1.bf16.msra.mxu0 %v7511
    %11208 = vmatprep.subr.bf16.mxu0 %v7572
    %11209 = vmatpush2.bf16.msra.mxu0 %v7571
    %11210 = vmatprep.subr.bf16.mxu0 %v7568
    %11211 = vmatpush2.bf16.msra.mxu0 %v7567
    %11212 = vmatprep.subr.bf16.mxu0 %v7564
    %11213 = vmatpush2.bf16.msra.mxu0 %v7563
    %11214 = vmatprep.subr.bf16.mxu0 %v7560
    %11215 = vmatpush2.bf16.msra.mxu0 %v7559
    %11216 = vmatprep.subr.bf16.mxu0 %v7556
    %11217 = vmatpush2.bf16.msra.mxu0 %v7555
    %11218 = vmatprep.subr.bf16.mxu0 %v7552
    %11219 = vmatpush2.bf16.msra.mxu0 %v7551
    %11220 = vmatprep.subr.bf16.mxu0 %v7548
    %11221 = vmatpush2.bf16.msra.mxu0 %v7547
    %11222 = vmatprep.subr.bf16.mxu0 %v7544
    %11223 = vmatpush2.bf16.msra.mxu0 %v7543
    %11224 = vmatprep.mubr.bf16.mxu0 %v11013
    %11225 = vmatmul.mubr.bf16.gmra.mxu0 %v11012
    %v11226 = vpop.f32.mrf.mxu0
    %v11227 = vadd.f32 0.0, %v11226
    %v11228 = vpop.f32.mrf.mxu0
    %v11229 = vadd.f32 0.0, %v11228
    %v11230 = vpop.f32.mrf.mxu0
    %v11231 = vadd.f32 0.0, %v11230
    %v11232 = vpop.f32.mrf.mxu0
    %v11233 = vadd.f32 0.0, %v11232
    %11234 = vdwg.mxu0
    %11235 = vmatprep.subr.bf16.mxu0 %v7604
    %11236 = vmatpush1.bf16.msra.mxu0 %v7603
    %11237 = vmatprep.subr.bf16.mxu0 %v7600
    %11238 = vmatpush1.bf16.msra.mxu0 %v7599
    %11239 = vmatprep.subr.bf16.mxu0 %v7596
    %11240 = vmatpush1.bf16.msra.mxu0 %v7595
    %11241 = vmatprep.subr.bf16.mxu0 %v7592
    %11242 = vmatpush1.bf16.msra.mxu0 %v7591
    %11243 = vmatprep.subr.bf16.mxu0 %v7588
    %11244 = vmatpush1.bf16.msra.mxu0 %v7587
    %11245 = vmatprep.subr.bf16.mxu0 %v7584
    %11246 = vmatpush1.bf16.msra.mxu0 %v7583
    %11247 = vmatprep.subr.bf16.mxu0 %v7580
    %11248 = vmatpush1.bf16.msra.mxu0 %v7579
    %11249 = vmatprep.subr.bf16.mxu0 %v7576
    %11250 = vmatpush1.bf16.msra.mxu0 %v7575
    %11251 = vmatprep.subr.bf16.mxu0 %v7636
    %11252 = vmatpush2.bf16.msra.mxu0 %v7635
    %11253 = vmatprep.subr.bf16.mxu0 %v7632
    %11254 = vmatpush2.bf16.msra.mxu0 %v7631
    %11255 = vmatprep.subr.bf16.mxu0 %v7628
    %11256 = vmatpush2.bf16.msra.mxu0 %v7627
    %11257 = vmatprep.subr.bf16.mxu0 %v7624
    %11258 = vmatpush2.bf16.msra.mxu0 %v7623
    %11259 = vmatprep.subr.bf16.mxu0 %v7620
    %11260 = vmatpush2.bf16.msra.mxu0 %v7619
    %11261 = vmatprep.subr.bf16.mxu0 %v7616
    %11262 = vmatpush2.bf16.msra.mxu0 %v7615
    %11263 = vmatprep.subr.bf16.mxu0 %v7612
    %11264 = vmatpush2.bf16.msra.mxu0 %v7611
    %11265 = vmatprep.subr.bf16.mxu0 %v7608
    %11266 = vmatpush2.bf16.msra.mxu0 %v7607
    %11267 = vmatprep.mubr.bf16.mxu0 %v11015
    %11268 = vmatmul.mubr.bf16.gmra.mxu0 %v11014
    %v11269 = vpop.f32.mrf.mxu0
    %v11270 = vadd.f32 %v11227, %v11269
    %v11271 = vpop.f32.mrf.mxu0
    %v11272 = vadd.f32 %v11229, %v11271
    %v11273 = vpop.f32.mrf.mxu0
    %v11274 = vadd.f32 %v11231, %v11273
    %v11275 = vpop.f32.mrf.mxu0
    %v11276 = vadd.f32 %v11233, %v11275
    %11277 = vdwg.mxu0
    %11278 = vmatprep.subr.bf16.mxu0 %v7668
    %11279 = vmatpush1.bf16.msra.mxu0 %v7667
    %11280 = vmatprep.subr.bf16.mxu0 %v7664
    %11281 = vmatpush1.bf16.msra.mxu0 %v7663
    %11282 = vmatprep.subr.bf16.mxu0 %v7660
    %11283 = vmatpush1.bf16.msra.mxu0 %v7659
    %11284 = vmatprep.subr.bf16.mxu0 %v7656
    %11285 = vmatpush1.bf16.msra.mxu0 %v7655
    %11286 = vmatprep.subr.bf16.mxu0 %v7652
    %11287 = vmatpush1.bf16.msra.mxu0 %v7651
    %11288 = vmatprep.subr.bf16.mxu0 %v7648
    %11289 = vmatpush1.bf16.msra.mxu0 %v7647
    %11290 = vmatprep.subr.bf16.mxu0 %v7644
    %11291 = vmatpush1.bf16.msra.mxu0 %v7643
    %11292 = vmatprep.subr.bf16.mxu0 %v7640
    %11293 = vmatpush1.bf16.msra.mxu0 %v7639
    %11294 = vmatprep.subr.bf16.mxu0 %v7700
    %11295 = vmatpush2.bf16.msra.mxu0 %v7699
    %11296 = vmatprep.subr.bf16.mxu0 %v7696
    %11297 = vmatpush2.bf16.msra.mxu0 %v7695
    %11298 = vmatprep.subr.bf16.mxu0 %v7692
    %11299 = vmatpush2.bf16.msra.mxu0 %v7691
    %11300 = vmatprep.subr.bf16.mxu0 %v7688
    %11301 = vmatpush2.bf16.msra.mxu0 %v7687
    %11302 = vmatprep.subr.bf16.mxu0 %v7684
    %11303 = vmatpush2.bf16.msra.mxu0 %v7683
    %11304 = vmatprep.subr.bf16.mxu0 %v7680
    %11305 = vmatpush2.bf16.msra.mxu0 %v7679
    %11306 = vmatprep.subr.bf16.mxu0 %v7676
    %11307 = vmatpush2.bf16.msra.mxu0 %v7675
    %11308 = vmatprep.subr.bf16.mxu0 %v7672
    %11309 = vmatpush2.bf16.msra.mxu0 %v7671
    %11310 = vmatprep.mubr.bf16.mxu0 %v11017
    %11311 = vmatmul.mubr.bf16.gmra.mxu0 %v11016
    %v11312 = vpop.f32.mrf.mxu0
    %v11313 = vadd.f32 %v11270, %v11312
    %v11314 = vpop.f32.mrf.mxu0
    %v11315 = vadd.f32 %v11272, %v11314
    %v11316 = vpop.f32.mrf.mxu0
    %v11317 = vadd.f32 %v11274, %v11316
    %v11318 = vpop.f32.mrf.mxu0
    %v11319 = vadd.f32 %v11276, %v11318
    %11320 = vdwg.mxu0
    %11321 = vmatprep.subr.bf16.mxu0 %v7732
    %11322 = vmatpush1.bf16.msra.mxu0 %v7731
    %11323 = vmatprep.subr.bf16.mxu0 %v7728
    %11324 = vmatpush1.bf16.msra.mxu0 %v7727
    %11325 = vmatprep.subr.bf16.mxu0 %v7724
    %11326 = vmatpush1.bf16.msra.mxu0 %v7723
    %11327 = vmatprep.subr.bf16.mxu0 %v7720
    %11328 = vmatpush1.bf16.msra.mxu0 %v7719
    %11329 = vmatprep.subr.bf16.mxu0 %v7716
    %11330 = vmatpush1.bf16.msra.mxu0 %v7715
    %11331 = vmatprep.subr.bf16.mxu0 %v7712
    %11332 = vmatpush1.bf16.msra.mxu0 %v7711
    %11333 = vmatprep.subr.bf16.mxu0 %v7708
    %11334 = vmatpush1.bf16.msra.mxu0 %v7707
    %11335 = vmatprep.subr.bf16.mxu0 %v7704
    %11336 = vmatpush1.bf16.msra.mxu0 %v7703
    %11337 = vmatprep.subr.bf16.mxu0 %v7764
    %11338 = vmatpush2.bf16.msra.mxu0 %v7763
    %11339 = vmatprep.subr.bf16.mxu0 %v7760
    %11340 = vmatpush2.bf16.msra.mxu0 %v7759
    %11341 = vmatprep.subr.bf16.mxu0 %v7756
    %11342 = vmatpush2.bf16.msra.mxu0 %v7755
    %11343 = vmatprep.subr.bf16.mxu0 %v7752
    %11344 = vmatpush2.bf16.msra.mxu0 %v7751
    %11345 = vmatprep.subr.bf16.mxu0 %v7748
    %11346 = vmatpush2.bf16.msra.mxu0 %v7747
    %11347 = vmatprep.subr.bf16.mxu0 %v7744
    %11348 = vmatpush2.bf16.msra.mxu0 %v7743
    %11349 = vmatprep.subr.bf16.mxu0 %v7740
    %11350 = vmatpush2.bf16.msra.mxu0 %v7739
    %11351 = vmatprep.subr.bf16.mxu0 %v7736
    %11352 = vmatpush2.bf16.msra.mxu0 %v7735
    %11353 = vmatprep.mubr.bf16.mxu0 %v11019
    %11354 = vmatmul.mubr.bf16.gmra.mxu0 %v11018
    %v11355 = vpop.f32.mrf.mxu0
    %v11356 = vadd.f32 %v11313, %v11355
    %v11357 = vpop.f32.mrf.mxu0
    %v11358 = vadd.f32 %v11315, %v11357
    %v11359 = vpop.f32.mrf.mxu0
    %v11360 = vadd.f32 %v11317, %v11359
    %v11361 = vpop.f32.mrf.mxu0
    %v11362 = vadd.f32 %v11319, %v11361
    %11363 = vdwg.mxu0
    %vm11364 = vcmp.gt.f32.partialorder %v10217, 0.0
    %vm11365 = vcmp.gt.f32.partialorder %v10218, 0.0
    %vm11366 = vcmp.gt.f32.partialorder %v10219, 0.0
    %vm11367 = vcmp.gt.f32.partialorder %v10220, 0.0
    %vm11368 = vcmp.gt.f32.partialorder %v10221, 0.0
    %vm11369 = vcmp.gt.f32.partialorder %v10222, 0.0
    %vm11370 = vcmp.gt.f32.partialorder %v10223, 0.0
    %vm11371 = vcmp.gt.f32.partialorder %v10224, 0.0
    %v11372 = vsel %vm11364, 1, 0
    %v11373 = vsel %vm11365, 1, 0
    %v11374 = vsel %vm11366, 1, 0
    %v11375 = vsel %vm11367, 1, 0
    %v11376 = vsel %vm11368, 1, 0
    %v11377 = vsel %vm11369, 1, 0
    %v11378 = vsel %vm11370, 1, 0
    %v11379 = vsel %vm11371, 1, 0
    %v11380 = vcvt.s32.f32 %v11372
    %v11381 = vcvt.s32.f32 %v11373
    %v11382 = vcvt.s32.f32 %v11374
    %v11383 = vcvt.s32.f32 %v11375
    %v11384 = vcvt.s32.f32 %v11376
    %v11385 = vcvt.s32.f32 %v11377
    %v11386 = vcvt.s32.f32 %v11378
    %v11387 = vcvt.s32.f32 %v11379
    %v11388 = vmul.f32 %v11184, %v11380
    %v11389 = vmul.f32 %v11186, %v11381
    %v11390 = vmul.f32 %v11356, %v11382
    %v11391 = vmul.f32 %v11358, %v11383
    %v11392 = vmul.f32 %v11188, %v11384
    %v11393 = vmul.f32 %v11190, %v11385
    %v11394 = vmul.f32 %v11360, %v11386
    %v11395 = vmul.f32 %v11362, %v11387
    %v11396 = vpack.c.bf16 %v11392, %v11388
    %v11397 = vpack.c.bf16 %v11393, %v11389
    %v11398 = vpack.c.bf16 %v11394, %v11390
    %v11399 = vpack.c.bf16 %v11395, %v11391
    %11400 = vmatprep.subr.bf16.mxu0 0
    %11401 = vmatpush1.bf16.msra.mxu0 %v8600
    %11402 = vmatprep.subr.bf16.mxu0 0
    %11403 = vmatpush1.bf16.msra.mxu0 %v8599
    %11404 = vmatprep.subr.bf16.mxu0 0
    %11405 = vmatpush1.bf16.msra.mxu0 %v8598
    %11406 = vmatprep.subr.bf16.mxu0 0
    %11407 = vmatpush1.bf16.msra.mxu0 %v8597
    %11408 = vmatprep.subr.bf16.mxu0 0
    %11409 = vmatpush1.bf16.msra.mxu0 %v8596
    %11410 = vmatprep.subr.bf16.mxu0 0
    %11411 = vmatpush1.bf16.msra.mxu0 %v8595
    %11412 = vmatprep.subr.bf16.mxu0 0
    %11413 = vmatpush1.bf16.msra.mxu0 %v8594
    %11414 = vmatprep.subr.bf16.mxu0 0
    %11415 = vmatpush1.bf16.msra.mxu0 %v8593
    %11416 = vmatprep.subr.bf16.mxu0 0
    %11417 = vmatpush2.bf16.msra.mxu0 %v8608
    %11418 = vmatprep.subr.bf16.mxu0 0
    %11419 = vmatpush2.bf16.msra.mxu0 %v8607
    %11420 = vmatprep.subr.bf16.mxu0 0
    %11421 = vmatpush2.bf16.msra.mxu0 %v8606
    %11422 = vmatprep.subr.bf16.mxu0 0
    %11423 = vmatpush2.bf16.msra.mxu0 %v8605
    %11424 = vmatprep.subr.bf16.mxu0 0
    %11425 = vmatpush2.bf16.msra.mxu0 %v8604
    %11426 = vmatprep.subr.bf16.mxu0 0
    %11427 = vmatpush2.bf16.msra.mxu0 %v8603
    %11428 = vmatprep.subr.bf16.mxu0 0
    %11429 = vmatpush2.bf16.msra.mxu0 %v8602
    %11430 = vmatprep.subr.bf16.mxu0 0
    %11431 = vmatpush2.bf16.msra.mxu0 %v8601
    %11432 = vmatprep.mubr.bf16.mxu0 %v11397
    %11433 = vmatmul.mubr.bf16.gmra.mxu0 %v11396
    %v11434 = vpop.f32.mrf.mxu0
    %v11435 = vadd.f32 %v10125, %v11434
    %v11436 = vpop.f32.mrf.mxu0
    %v11437 = vpop.f32.mrf.mxu0
    %v11438 = vadd.f32 %v10126, %v11437
    %v11439 = vpop.f32.mrf.mxu0
    %11440 = vdwg.mxu0
    %11441 = vmatprep.subr.bf16.mxu0 0
    %11442 = vmatpush1.bf16.msra.mxu0 %v8616
    %11443 = vmatprep.subr.bf16.mxu0 0
    %11444 = vmatpush1.bf16.msra.mxu0 %v8615
    %11445 = vmatprep.subr.bf16.mxu0 0
    %11446 = vmatpush1.bf16.msra.mxu0 %v8614
    %11447 = vmatprep.subr.bf16.mxu0 0
    %11448 = vmatpush1.bf16.msra.mxu0 %v8613
    %11449 = vmatprep.subr.bf16.mxu0 0
    %11450 = vmatpush1.bf16.msra.mxu0 %v8612
    %11451 = vmatprep.subr.bf16.mxu0 0
    %11452 = vmatpush1.bf16.msra.mxu0 %v8611
    %11453 = vmatprep.subr.bf16.mxu0 0
    %11454 = vmatpush1.bf16.msra.mxu0 %v8610
    %11455 = vmatprep.subr.bf16.mxu0 0
    %11456 = vmatpush1.bf16.msra.mxu0 %v8609
    %11457 = vmatprep.subr.bf16.mxu0 0
    %11458 = vmatpush2.bf16.msra.mxu0 %v8624
    %11459 = vmatprep.subr.bf16.mxu0 0
    %11460 = vmatpush2.bf16.msra.mxu0 %v8623
    %11461 = vmatprep.subr.bf16.mxu0 0
    %11462 = vmatpush2.bf16.msra.mxu0 %v8622
    %11463 = vmatprep.subr.bf16.mxu0 0
    %11464 = vmatpush2.bf16.msra.mxu0 %v8621
    %11465 = vmatprep.subr.bf16.mxu0 0
    %11466 = vmatpush2.bf16.msra.mxu0 %v8620
    %11467 = vmatprep.subr.bf16.mxu0 0
    %11468 = vmatpush2.bf16.msra.mxu0 %v8619
    %11469 = vmatprep.subr.bf16.mxu0 0
    %11470 = vmatpush2.bf16.msra.mxu0 %v8618
    %11471 = vmatprep.subr.bf16.mxu0 0
    %11472 = vmatpush2.bf16.msra.mxu0 %v8617
    %11473 = vmatprep.mubr.bf16.mxu0 %v11399
    %11474 = vmatmul.mubr.bf16.gmra.mxu0 %v11398
    %v11475 = vpop.f32.mrf.mxu0
    %v11476 = vadd.f32 %v11435, %v11475
    %v11477 = vpop.f32.mrf.mxu0
    %v11478 = vpop.f32.mrf.mxu0
    %v11479 = vadd.f32 %v11438, %v11478
    %v11480 = vpop.f32.mrf.mxu0
    %11481 = vdwg.mxu0
    %v11482 = vmul.f32 %v8739, %v11476
    %v11483 = vmul.f32 %v8739, %v11479
    %v11484 = vsub.f32 %v10121, %v11482
    %v11485 = vsub.f32 %v10122, %v11483
    %s11486 = sadd.f32 %s10108, %s153
    %v11487 = vstv %s11486
    %v11488 = vrcp.pop %v11487
    %s11489 = vtos %v11488
    %v11490 = vstv %s11489
    %v11491 = vrcp.pop %v11490
    %s11492 = vtos %v11491
    %s11493 = smul.f32 %s10113, %s11492
    %v11494 = vstv %s11493
    %v11495 = vmul.f32 %v11494, %v11484
    %v11496 = vmul.f32 %v11494, %v11485
    %11497 = vst [vmem:[#allocation13] sm:$0xff] %v10770
    %11498 = vst [vmem:[#allocation13 + $0x8] sm:$0xff] %v10772
    %11499 = vst [vmem:[#allocation14] sm:$0xff] 0.0
    %11500 = vst [vmem:[#allocation14 + $0x8] sm:$0xff] 0.0
    %vm11501 = vcmask 130048
    %11502 = vst.msk [vmem:[#allocation14] sm:$0xff] %vm11501, %v3032
    %11503 = vst.msk [vmem:[#allocation14 + $0x8] sm:$0xff] %vm11501, %v3035
    %11506 = vrot.lane.b32.xlu0 %v10125, 16
    %v11507 = vpop.permute.xlu0 %11506
    %11508 = vrot.lane.b32.xlu0 %v10126, 16
    %v11509 = vpop.permute.xlu0 %11508
    %vm11512 = vcmask 195712
    %11513 = vst.msk [vmem:[#allocation14] sm:$0xff] %vm11512, %v11507
    %11514 = vst.msk [vmem:[#allocation14 + $0x8] sm:$0xff] %vm11512, %v11509
    %11517 = vrot.lane.b32.xlu0 %v3056, 24
    %v11518 = vpop.permute.xlu0 %11517
    %11519 = vrot.lane.b32.xlu0 %v3057, 24
    %v11520 = vpop.permute.xlu0 %11519
    %vm11523 = vcmask 261312
    %11524 = vst.msk [vmem:[#allocation14] sm:$0xff] %vm11523, %v11518
    %11525 = vst.msk [vmem:[#allocation14 + $0x8] sm:$0xff] %vm11523, %v11520
    %11528 = vrot.lane.b32.xlu0 %v11495, 32
    %v11529 = vpop.permute.xlu0 %11528
    %11530 = vrot.lane.b32.xlu0 %v11496, 32
    %v11531 = vpop.permute.xlu0 %11530
    %vm11534 = vcmask 326912
    %11535 = vst.msk [vmem:[#allocation14] sm:$0xff] %vm11534, %v11529
    %11536 = vst.msk [vmem:[#allocation14 + $0x8] sm:$0xff] %vm11534, %v11531
    // Predicated region
    $region102: #{tpu_custom_call.1} parent=1 // pred_check
      _
    $region103: #{tpu_custom_call.1} parent=1 // pred_check_branch
      %11538 = sbr.rel (0) target = $region105
    $region104: #{tpu_custom_call.1} parent=1 // pred_region
      %s11540 = ssub.s32 256, 256
      %11541 = vsyncadd [#allocation4], %s11540
      %s11542 = sshll.u32 [#allocation13], 4
      %s11543 = int_to_ptr.vmem [resolvable:$true] %s11542
      %11548 = dma.vmem_to_hbm [thread:$0]  %s11543, 256, %s19, [#allocation4], 128, 128, 8
    $region105: #{tpu_custom_call.1} parent=1 // pred_fallthru
      _
    // Predicated region
    $region106: #{tpu_custom_call.1} parent=1 // pred_check
      _
    $region107: #{tpu_custom_call.1} parent=1 // pred_check_branch
      %11550 = sbr.rel (0) target = $region109
    $region108: #{tpu_custom_call.1} parent=1 // pred_region
      %s11552 = ssub.s32 256, 256
      %11553 = vsyncadd [#allocation15], %s11552
      %s11554 = sshll.u32 [#allocation14], 4
      %s11555 = int_to_ptr.vmem [resolvable:$true] %s11554
      %11560 = dma.vmem_to_hbm [thread:$0]  %s11555, 256, %s20, [#allocation15], 128, 128, 8
    $region109: #{tpu_custom_call.1} parent=1 // pred_fallthru
      _
    // Predicated region
    $region110: #{tpu_custom_call.1} parent=1 // pred_check
      _
    $region111: #{tpu_custom_call.1} parent=1 // pred_check_branch
      %11562 = sbr.rel (0) target = $region113
    $region112: #{tpu_custom_call.1} parent=1 // pred_region
      %11563 = dma.done [#allocation4], 256
    $region113: #{tpu_custom_call.1} parent=1 // pred_fallthru
      _
    // Predicated region
    $region114: #{tpu_custom_call.1} parent=1 // pred_check
      _
    $region115: #{tpu_custom_call.1} parent=1 // pred_check_branch
      %11565 = sbr.rel (0) target = $region117
    $region116: #{tpu_custom_call.1} parent=1 // pred_region
      %11566 = dma.done [#allocation15], 256
    $region117: #{tpu_custom_call.1} parent=1 // pred_fallthru
      _
    %11567 = vsyncpa [#allocation3], 1
    %11568 = vsyncpa [#allocation8], 1
    %11569 = vsyncpa [#allocation11], 1
    %11570 = vsyncpa [#allocation4], 1
    %11571 = vsyncpa [#allocation15], 1
    %11572 = vsyncpa [#allocation5], 1

</llo_original>
